<compile_context>
chip_gen: v7x
topology: tpu7x:2x2x1
jax: 0.10.0
libtpu: 0.0.40
codegen_flags: <defaults>
</compile_context>

<pallas_src>
import jax
import jax.numpy as jnp
from jax import lax
from jax.experimental import pallas as pl
from jax.experimental.pallas import tpu as pltpu


# ------------------------------ fused kernel -------------------------------

def _dqn_kernel(p1_ref, w1_ref, b1_ref, w2_ref, b2_ref, w3_ref, b3_ref,
                sel_ref, f1a_ref, f1b_ref, fb1_ref, f2_ref, fb2_ref, f3_ref, fb3_ref,
                out_ref, ph_ref, t2_ref):
    f32 = jnp.float32
    bf16 = jnp.bfloat16

    # Zero the pooled-phase-slab tail rows that padded conv2 taps may read (they only feed the
    # unconsumed conv2 column ow2=9, but must be finite, not stale VMEM).
    for sh in range(2):
        for sw in range(2):
            ph_ref[sh, sw, 128:136, :] = jnp.zeros((8, 128), f32)
    # Zero the 8 pad rows of the conv2 im2col slab once (pool2 selector lanes there are zero,
    # but 0 * stale-NaN would still poison the gather).
    t2_ref[120:128, :] = jnp.zeros((8, 1152), bf16)

    # ---- conv1 (5x5, stride 4) + ReLU + fused 2x2 maxpool -------------------
    # Patch rows are ordered (oh, ow-parity-group [0,2,1,3], ow//4) so each 80-row block (one
    # conv-output row pair) pools as an elementwise max of four contiguous 20-row slices whose
    # result is already split by pooled-column parity.
    # NOTE: statically unrolled (proven to lower); switch to lax.fori_loop with pl.ds if the
    # bundle dump ever shows vreg spills here.
    w1 = w1_ref[...]
    b1 = b1_ref[...]
    for it in range(13):                                   # 13 * 160 = 2080 patch rows
        v = jnp.dot(p1_ref[it * 160:(it + 1) * 160, :], w1,
                    preferred_element_type=f32)            # (160,128)
        v = jnp.maximum(v + b1, 0.0)
        for k in range(2):                                 # pooled row = 2*it + k
            o = k * 80
            pooled = jnp.maximum(
                jnp.maximum(v[o:o + 20], v[o + 20:o + 40]),
                jnp.maximum(v[o + 40:o + 60], v[o + 60:o + 80]))     # (20,128)
            ph_ref[k, 0, it * 10:it * 10 + 10, :] = pooled[0:10]     # even pooled cols
            ph_ref[k, 1, it * 10:it * 10 + 10, :] = pooled[10:20]    # odd pooled cols

    # ---- conv2 (3x3, stride 2) + ReLU: in-kernel im2col into one (128,1152) slab, then a
    # single long-K MXU dot (no 9-step accumulator chain, one MXU drain).
    for idx in range(9):
        i, j = idx // 3, idx % 3
        s = (i // 2) * 10 + (j // 2)                       # tap offset into the phase slab
        t2_ref[0:120, idx * 128:(idx + 1) * 128] = (
            ph_ref[i % 2, j % 2, s:s + 120, :].astype(bf16))
    c2 = jnp.maximum(jnp.dot(t2_ref[...], w2_ref[...], preferred_element_type=f32)
                     + b2_ref[...], 0.0)                   # (128,128); rows 120..127 = relu(b2),
    c2b = c2.astype(bf16)                                  #   masked out by the sel lanes below

    # ---- 2x2 maxpool via precomputed one-hot row-gather dots -> (24,128), rows = ph2*4 + pw2
    p2 = None
    for o in range(4):
        g = jnp.dot(sel_ref[o].astype(bf16), c2b, preferred_element_type=f32)   # (24,128)
        p2 = g if p2 is None else jnp.maximum(p2, g)
    p2b = p2.astype(bf16)

    # ---- conv3 (3x3, stride 2) + ReLU -> (2,128): 9 independent M=24 dots, then cheap static
    # 2-row slice accumulation (rows 4i+j and 8+4i+j) on the VPU/XLU.
    r0 = jnp.zeros((1, 128), f32)
    r1 = jnp.zeros((1, 128), f32)
    for idx in range(9):
        i, j = idx // 3, idx % 3
        t = jnp.dot(p2b, w3_ref[idx], preferred_element_type=f32)    # (24,128)
        a = 4 * i + j
        r0 = r0 + t[a:a + 1, :]
        r1 = r1 + t[a + 8:a + 9, :]
    c3 = jnp.maximum(jnp.concatenate([r0, r1], axis=0) + b3_ref[...], 0.0).astype(bf16)

    # ---- fc1 with the torch.flatten (C,H,W) permutation folded into f1a / f1b rows.
    h = jnp.maximum(jnp.dot(c3[0:1, :], f1a_ref[...], preferred_element_type=f32)
                    + jnp.dot(c3[1:2, :], f1b_ref[...], preferred_element_type=f32)
                    + fb1_ref[...], 0.0)                              # (1,384)
    # ---- fc2 + fc3
    h = jnp.maximum(jnp.dot(h.astype(bf16), f2_ref[...], preferred_element_type=f32)
                    + fb2_ref[...], 0.0)                              # (1,128)
    out = jnp.dot(h.astype(bf16), f3_ref[...], preferred_element_type=f32) + fb3_ref[...]
    out_ref[...] = jnp.broadcast_to(out, (8, 128))


def _spec(shape):
    nd = len(shape)
    return pl.BlockSpec(shape, lambda i, nd=nd: (0,) * nd)


# ------------------------------- glue (JAX) --------------------------------

def dqn_forward(state_nchw, P):
    """Matches DQN.forward for a (1, 3, 210, 160) NCHW input; returns (6,) actions."""
    bf16 = jnp.bfloat16

    # conv1 im2col with the pool-friendly row ordering, sliced directly per ow-parity phase
    # (no jnp.take), in bf16 to halve the gather bytes.
    x = jnp.transpose(state_nchw[0], (1, 2, 0)).astype(bf16)       # (210,160,3) HWC
    x = jnp.pad(x, ((0, 4), (0, 4), (0, 0)))                       # (214,164,3), zero pad
    blocks = []
    for m in (0, 2, 1, 3):                                         # pooled-column parity order
        taps = [x[i:i + 205:4, j + 4 * m: j + 4 * m + 145: 16, :]  # (52,10,3) each
                for i in range(5) for j in range(5)]
        blocks.append(jnp.stack(taps, axis=2).reshape(52, 10, 75)) # cols = (kh,kw,cin)
    p = jnp.concatenate(blocks, axis=1)                            # (52,40,75)
    p1 = jnp.pad(p.reshape(2080, 75), ((0, 0), (0, 53)))           # (2080,128) bf16

    # Weights: lane-dense zero-padded, bf16 for the MXU. Biases stay f32.
    w1 = jnp.pad(P["cw1"].reshape(75, 32), ((0, 53), (0, 96))).astype(bf16)
    b1 = jnp.pad(P["cb1"], (0, 96)).reshape(1, 128)
    w2 = jnp.pad(P["cw2"].reshape(9, 32, 64),
                 ((0, 0), (0, 96), (0, 64))).astype(bf16).reshape(1152, 128)   # fused-K layout
    b2 = jnp.pad(P["cb2"], (0, 64)).reshape(1, 128)
    w3 = jnp.pad(P["cw3"].reshape(9, 64, 64),
                 ((0, 0), (0, 64), (0, 64))).astype(bf16)
    b3 = jnp.pad(P["cb3"], (0, 64)).reshape(1, 128)
    # torch.flatten (C,H,W): flat[2c+h] = conv3[c,h,0]; fold the permutation into fc1's rows.
    f1a = jnp.pad(P["fw1"][0::2, :], ((0, 64), (0, 84))).astype(bf16)    # (128,384), h = 0
    f1b = jnp.pad(P["fw1"][1::2, :], ((0, 64), (0, 84))).astype(bf16)    # (128,384), h = 1
    fb1 = jnp.pad(P["fb1"], (0, 84)).reshape(1, 384)
    f2 = jnp.pad(P["fw2"], ((0, 84), (0, 28))).astype(bf16)             # (384,128)
    fb2 = jnp.pad(P["fb2"], (0, 28)).reshape(1, 128)
    f3 = jnp.pad(P["fw3"], ((0, 28), (0, 122))).astype(bf16)            # (128,128)
    fb3 = jnp.pad(P["fb3"], (0, 122)).reshape(1, 128)

    # Precomputed pool2 one-hot row-gather matrices (input-independent -> constant under jit).
    rows = jnp.arange(24)
    base = 20 * (rows // 4) + 2 * (rows % 4)
    cols = jnp.arange(128)
    sel4 = jnp.stack([(cols[None, :] == (base + off)[:, None]).astype(jnp.float32)
                      for off in (0, 1, 10, 11)], axis=0)                # (4,24,128)

    out = pl.pallas_call(
        _dqn_kernel,
        grid=(1,),
        in_specs=[
            _spec((2080, 128)),                       # conv1 patches
            _spec((128, 128)), _spec((1, 128)),       # conv1 w, b
            _spec((1152, 128)), _spec((1, 128)),      # conv2 w (fused-K), b
            _spec((9, 128, 128)), _spec((1, 128)),    # conv3 w, b
            _spec((4, 24, 128)),                      # pool2 one-hot selectors
            _spec((128, 384)), _spec((128, 384)),     # fc1 w (flatten folded: h=0 / h=1)
            _spec((1, 384)),                          # fc1 b
            _spec((384, 128)), _spec((1, 128)),       # fc2
            _spec((128, 128)), _spec((1, 128)),       # fc3
        ],
        out_specs=_spec((8, 128)),
        out_shape=jax.ShapeDtypeStruct((8, 128), jnp.float32),
        scratch_shapes=[
            pltpu.VMEM((2, 2, 136, 128), jnp.float32),    # pool1 phase slabs
            pltpu.VMEM((128, 1152), jnp.bfloat16),        # conv2 im2col slab
        ],
        compiler_params=pltpu.CompilerParams(
            dimension_semantics=("arbitrary",),
            vmem_limit_bytes=8 * 1024 * 1024),
    )(p1, w1, b1, w2, b2, w3, b3, sel4, f1a, f1b, fb1, f2, fb2, f3, fb3)

    return out[0, :6]                                   # (n_actions,)


# --------------------------- pure-JAX reference ----------------------------

def _ref_maxpool(x):
    N, C, H, W = x.shape
    Hp, Wp = H // 2, W // 2
    return x[:, :, :2 * Hp, :2 * Wp].reshape(N, C, Hp, 2, Wp, 2).max(axis=(3, 5))


def ref_forward(state, P):
    dn = ("NCHW", "HWIO", "NCHW")
    hp = lax.Precision.HIGHEST
    x = lax.conv_general_dilated(state, P["cw1"], (4, 4), "VALID",
                                 dimension_numbers=dn, precision=hp)
    x = jax.nn.relu(x + P["cb1"].reshape(1, -1, 1, 1))
    x = _ref_maxpool(x)
    x = lax.conv_general_dilated(x, P["cw2"], (2, 2), "VALID",
                                 dimension_numbers=dn, precision=hp)
    x = jax.nn.relu(x + P["cb2"].reshape(1, -1, 1, 1))
    x = _ref_maxpool(x)
    x = lax.conv_general_dilated(x, P["cw3"], (2, 2), "VALID",
                                 dimension_numbers=dn, precision=hp)
    x = jax.nn.relu(x + P["cb3"].reshape(1, -1, 1, 1))
    x = x.reshape(-1)                                   # torch.flatten (C,H,W)
    x = jax.nn.relu(jnp.dot(x, P["fw1"], precision=hp) + P["fb1"])
    x = jax.nn.relu(jnp.dot(x, P["fw2"], precision=hp) + P["fb2"])
    return jnp.dot(x, P["fw3"], precision=hp) + P["fb3"]


# --------------------------------- params ----------------------------------

def init_params(key):
    ks = jax.random.split(key, 12)

    def w(k, shape, scale=0.1):
        return jax.random.normal(k, shape, jnp.float32) * scale

    # Conv weights stored HWIO; fc weights stored (in, out) (transposed vs torch).
    return {
        "cw1": w(ks[0], (5, 5, 3, 32)),   "cb1": w(ks[1], (32,)),
        "cw2": w(ks[2], (3, 3, 32, 64)),  "cb2": w(ks[3], (64,)),
        "cw3": w(ks[4], (3, 3, 64, 64)),  "cb3": w(ks[5], (64,)),
        "fw1": w(ks[6], (128, 300)),      "fb1": w(ks[7], (300,)),
        "fw2": w(ks[8], (300, 100)),      "fb2": w(ks[9], (100,)),
        "fw3": w(ks[10], (100, 6)),       "fb3": w(ks[11], (6,)),
    }


# ---------------------------------- main ------------------------------------

if __name__ == "__main__":
    key = jax.random.PRNGKey(0)
    pkey, xkey = jax.random.split(key)
    params = init_params(pkey)

    # Shape implied by the module: (1, 3, 210, 160) NCHW Atari frame
    # (conv3 output is 64 x 2 x 1 = 128 features, matching nn.Linear(128, 300)).
    state = jax.random.normal(xkey, (1, 3, 210, 160), jnp.float32)

    actions = jax.block_until_ready(jax.jit(dqn_forward)(state, params))
    assert actions.shape == (6,) and actions.dtype == jnp.float32

    ref = jax.block_until_ready(ref_forward(state, params))
    # bf16 MXU operands with f32 accumulation -> loose-ish tolerance vs. f32 reference.
    assert jnp.allclose(actions, ref, rtol=5e-2, atol=1e-2), (actions, ref)

    print("KERNEL_OK")
</pallas_src>

<mosaic_0001>
module attributes {stable_mosaic.version = 11 : i64} {
  func.func @_dqn_kernel(%arg0: i32, %arg1: memref<2080x128xbf16, #tpu.memory_space<vmem>>, %arg2: memref<128x128xbf16, #tpu.memory_space<vmem>>, %arg3: memref<1x128xf32, #tpu.memory_space<vmem>>, %arg4: memref<1152x128xbf16, #tpu.memory_space<vmem>>, %arg5: memref<1x128xf32, #tpu.memory_space<vmem>>, %arg6: memref<9x128x128xbf16, #tpu.memory_space<vmem>>, %arg7: memref<1x128xf32, #tpu.memory_space<vmem>>, %arg8: memref<4x24x128xf32, #tpu.memory_space<vmem>>, %arg9: memref<128x384xbf16, #tpu.memory_space<vmem>>, %arg10: memref<128x384xbf16, #tpu.memory_space<vmem>>, %arg11: memref<1x384xf32, #tpu.memory_space<vmem>>, %arg12: memref<384x128xbf16, #tpu.memory_space<vmem>>, %arg13: memref<1x128xf32, #tpu.memory_space<vmem>>, %arg14: memref<128x128xbf16, #tpu.memory_space<vmem>>, %arg15: memref<1x128xf32, #tpu.memory_space<vmem>>, %arg16: memref<8x128xf32, #tpu.memory_space<vmem>>, %arg17: memref<2x2x136x128xf32, #tpu.memory_space<vmem>>, %arg18: memref<128x1152xbf16, #tpu.memory_space<vmem>>) attributes {dimension_semantics = [#tpu.dimension_semantics<arbitrary>], iteration_bounds = array<i64: 1>, scalar_prefetch = 0 : i64, scratch_operands = 2 : i64, tpu.core_type = #tpu.core_type<tc>, window_params = [{pipeline_mode = #tpu.pipeline_mode<synchronous>, transform_indices = @transform_0, window_bounds = array<i64: 2080, 128>}, {pipeline_mode = #tpu.pipeline_mode<synchronous>, transform_indices = @transform_1, window_bounds = array<i64: 128, 128>}, {pipeline_mode = #tpu.pipeline_mode<synchronous>, transform_indices = @transform_2, window_bounds = array<i64: 1, 128>}, {pipeline_mode = #tpu.pipeline_mode<synchronous>, transform_indices = @transform_3, window_bounds = array<i64: 1152, 128>}, {pipeline_mode = #tpu.pipeline_mode<synchronous>, transform_indices = @transform_4, window_bounds = array<i64: 1, 128>}, {pipeline_mode = #tpu.pipeline_mode<synchronous>, transform_indices = @transform_5, window_bounds = array<i64: 9, 128, 128>}, {pipeline_mode = #tpu.pipeline_mode<synchronous>, transform_indices = @transform_6, window_bounds = array<i64: 1, 128>}, {pipeline_mode = #tpu.pipeline_mode<synchronous>, transform_indices = @transform_7, window_bounds = array<i64: 4, 24, 128>}, {pipeline_mode = #tpu.pipeline_mode<synchronous>, transform_indices = @transform_8, window_bounds = array<i64: 128, 384>}, {pipeline_mode = #tpu.pipeline_mode<synchronous>, transform_indices = @transform_9, window_bounds = array<i64: 128, 384>}, {pipeline_mode = #tpu.pipeline_mode<synchronous>, transform_indices = @transform_10, window_bounds = array<i64: 1, 384>}, {pipeline_mode = #tpu.pipeline_mode<synchronous>, transform_indices = @transform_11, window_bounds = array<i64: 384, 128>}, {pipeline_mode = #tpu.pipeline_mode<synchronous>, transform_indices = @transform_12, window_bounds = array<i64: 1, 128>}, {pipeline_mode = #tpu.pipeline_mode<synchronous>, transform_indices = @transform_13, window_bounds = array<i64: 128, 128>}, {pipeline_mode = #tpu.pipeline_mode<synchronous>, transform_indices = @transform_14, window_bounds = array<i64: 1, 128>}, {pipeline_mode = #tpu.pipeline_mode<synchronous>, transform_indices = @transform_15, window_bounds = array<i64: 8, 128>}]} {
    %cst = arith.constant 0.000000e+00 : f32
    %0 = vector.broadcast %cst : f32 to vector<8x128xf32>
    %c0 = arith.constant 0 : index
    %c0_0 = arith.constant 0 : index
    %c128 = arith.constant 128 : index
    %c0_1 = arith.constant 0 : index
    %1 = vector.load %arg17[%c0, %c0_0, %c128, %c0_1] : memref<2x2x136x128xf32, #tpu.memory_space<vmem>>, vector<1x1x8x128xf32>
    %2 = vector.shape_cast %1 : vector<1x1x8x128xf32> to vector<8x128xf32>
    %3 = vector.shape_cast %0 : vector<8x128xf32> to vector<1x1x8x128xf32>
    tpu.vector_store %arg17[%c0, %c0_0, %c128, %c0_1], %3 {strides = array<i32>} : memref<2x2x136x128xf32, #tpu.memory_space<vmem>>, vector<1x1x8x128xf32>,
    %cst_2 = arith.constant 0.000000e+00 : f32
    %4 = vector.broadcast %cst_2 : f32 to vector<8x128xf32>
    %c0_3 = arith.constant 0 : index
    %c1 = arith.constant 1 : index
    %c128_4 = arith.constant 128 : index
    %c0_5 = arith.constant 0 : index
    %5 = vector.load %arg17[%c0_3, %c1, %c128_4, %c0_5] : memref<2x2x136x128xf32, #tpu.memory_space<vmem>>, vector<1x1x8x128xf32>
    %6 = vector.shape_cast %5 : vector<1x1x8x128xf32> to vector<8x128xf32>
    %7 = vector.shape_cast %4 : vector<8x128xf32> to vector<1x1x8x128xf32>
    tpu.vector_store %arg17[%c0_3, %c1, %c128_4, %c0_5], %7 {strides = array<i32>} : memref<2x2x136x128xf32, #tpu.memory_space<vmem>>, vector<1x1x8x128xf32>,
    %cst_6 = arith.constant 0.000000e+00 : f32
    %8 = vector.broadcast %cst_6 : f32 to vector<8x128xf32>
    %c1_7 = arith.constant 1 : index
    %c0_8 = arith.constant 0 : index
    %c128_9 = arith.constant 128 : index
    %c0_10 = arith.constant 0 : index
    %9 = vector.load %arg17[%c1_7, %c0_8, %c128_9, %c0_10] : memref<2x2x136x128xf32, #tpu.memory_space<vmem>>, vector<1x1x8x128xf32>
    %10 = vector.shape_cast %9 : vector<1x1x8x128xf32> to vector<8x128xf32>
    %11 = vector.shape_cast %8 : vector<8x128xf32> to vector<1x1x8x128xf32>
    tpu.vector_store %arg17[%c1_7, %c0_8, %c128_9, %c0_10], %11 {strides = array<i32>} : memref<2x2x136x128xf32, #tpu.memory_space<vmem>>, vector<1x1x8x128xf32>,
    %cst_11 = arith.constant 0.000000e+00 : f32
    %12 = vector.broadcast %cst_11 : f32 to vector<8x128xf32>
    %c1_12 = arith.constant 1 : index
    %c1_13 = arith.constant 1 : index
    %c128_14 = arith.constant 128 : index
    %c0_15 = arith.constant 0 : index
    %13 = vector.load %arg17[%c1_12, %c1_13, %c128_14, %c0_15] : memref<2x2x136x128xf32, #tpu.memory_space<vmem>>, vector<1x1x8x128xf32>
    %14 = vector.shape_cast %13 : vector<1x1x8x128xf32> to vector<8x128xf32>
    %15 = vector.shape_cast %12 : vector<8x128xf32> to vector<1x1x8x128xf32>
    tpu.vector_store %arg17[%c1_12, %c1_13, %c128_14, %c0_15], %15 {strides = array<i32>} : memref<2x2x136x128xf32, #tpu.memory_space<vmem>>, vector<1x1x8x128xf32>,
    %cst_16 = arith.constant 0.000000e+00 : bf16
    %16 = vector.broadcast %cst_16 : bf16 to vector<8x1152xbf16>
    %c120 = arith.constant 120 : index
    %c0_17 = arith.constant 0 : index
    %17 = vector.load %arg18[%c120, %c0_17] : memref<128x1152xbf16, #tpu.memory_space<vmem>>, vector<8x1152xbf16>
    tpu.vector_store %arg18[%c120, %c0_17], %16 {strides = array<i32>} : memref<128x1152xbf16, #tpu.memory_space<vmem>>, vector<8x1152xbf16>,
    %c0_18 = arith.constant 0 : index
    %c0_19 = arith.constant 0 : index
    %18 = vector.load %arg2[%c0_18, %c0_19] : memref<128x128xbf16, #tpu.memory_space<vmem>>, vector<128x128xbf16>
    %c0_20 = arith.constant 0 : index
    %c0_21 = arith.constant 0 : index
    %19 = vector.load %arg3[%c0_20, %c0_21] : memref<1x128xf32, #tpu.memory_space<vmem>>, vector<1x128xf32>
    %c0_22 = arith.constant 0 : index
    %c0_23 = arith.constant 0 : index
    %20 = vector.load %arg1[%c0_22, %c0_23] : memref<2080x128xbf16, #tpu.memory_space<vmem>>, vector<160x128xbf16>
    %cst_24 = arith.constant dense<0.000000e+00> : vector<160x128xf32>
    %21 = tpu.matmul %20, %18, %cst_24 {dimension_numbers = #tpu.dot_dimension_numbers<[1], [0], [0], [1], [0, 0, 1, 1], [], []>} : vector<160x128xbf16>, vector<128x128xbf16>, vector<160x128xf32> -> vector<160x128xf32>
    %22 = vector.broadcast %19 : vector<1x128xf32> to vector<160x128xf32>
    %23 = arith.addf %21, %22 : vector<160x128xf32>
    %cst_25 = arith.constant 0.000000e+00 : f32
    %24 = vector.broadcast %cst_25 : f32 to vector<160x128xf32>
    %25 = arith.maximumf %23, %24 : vector<160x128xf32>
    %26 = vector.extract_strided_slice %25 {offsets = [0, 0], sizes = [20, 128], strides = [1, 1]} : vector<160x128xf32> to vector<20x128xf32>
    %27 = vector.extract_strided_slice %25 {offsets = [20, 0], sizes = [20, 128], strides = [1, 1]} : vector<160x128xf32> to vector<20x128xf32>
    %28 = arith.maximumf %26, %27 : vector<20x128xf32>
    %29 = vector.extract_strided_slice %25 {offsets = [40, 0], sizes = [20, 128], strides = [1, 1]} : vector<160x128xf32> to vector<20x128xf32>
    %30 = vector.extract_strided_slice %25 {offsets = [60, 0], sizes = [20, 128], strides = [1, 1]} : vector<160x128xf32> to vector<20x128xf32>
    %31 = arith.maximumf %29, %30 : vector<20x128xf32>
    %32 = arith.maximumf %28, %31 : vector<20x128xf32>
    %33 = vector.extract_strided_slice %32 {offsets = [0, 0], sizes = [10, 128], strides = [1, 1]} : vector<20x128xf32> to vector<10x128xf32>
    %c0_26 = arith.constant 0 : index
    %c0_27 = arith.constant 0 : index
    %c0_28 = arith.constant 0 : index
    %c0_29 = arith.constant 0 : index
    %34 = vector.load %arg17[%c0_26, %c0_27, %c0_28, %c0_29] : memref<2x2x136x128xf32, #tpu.memory_space<vmem>>, vector<1x1x10x128xf32>
    %35 = vector.shape_cast %34 : vector<1x1x10x128xf32> to vector<10x128xf32>
    %36 = vector.shape_cast %33 : vector<10x128xf32> to vector<1x1x10x128xf32>
    tpu.vector_store %arg17[%c0_26, %c0_27, %c0_28, %c0_29], %36 {strides = array<i32>} : memref<2x2x136x128xf32, #tpu.memory_space<vmem>>, vector<1x1x10x128xf32>,
    %37 = vector.extract_strided_slice %32 {offsets = [10, 0], sizes = [10, 128], strides = [1, 1]} : vector<20x128xf32> to vector<10x128xf32>
    %c0_30 = arith.constant 0 : index
    %c1_31 = arith.constant 1 : index
    %c0_32 = arith.constant 0 : index
    %c0_33 = arith.constant 0 : index
    %38 = vector.load %arg17[%c0_30, %c1_31, %c0_32, %c0_33] : memref<2x2x136x128xf32, #tpu.memory_space<vmem>>, vector<1x1x10x128xf32>
    %39 = vector.shape_cast %38 : vector<1x1x10x128xf32> to vector<10x128xf32>
    %40 = vector.shape_cast %37 : vector<10x128xf32> to vector<1x1x10x128xf32>
    tpu.vector_store %arg17[%c0_30, %c1_31, %c0_32, %c0_33], %40 {strides = array<i32>} : memref<2x2x136x128xf32, #tpu.memory_space<vmem>>, vector<1x1x10x128xf32>,
    %41 = vector.extract_strided_slice %25 {offsets = [80, 0], sizes = [20, 128], strides = [1, 1]} : vector<160x128xf32> to vector<20x128xf32>
    %42 = vector.extract_strided_slice %25 {offsets = [100, 0], sizes = [20, 128], strides = [1, 1]} : vector<160x128xf32> to vector<20x128xf32>
    %43 = arith.maximumf %41, %42 : vector<20x128xf32>
    %44 = vector.extract_strided_slice %25 {offsets = [120, 0], sizes = [20, 128], strides = [1, 1]} : vector<160x128xf32> to vector<20x128xf32>
    %45 = vector.extract_strided_slice %25 {offsets = [140, 0], sizes = [20, 128], strides = [1, 1]} : vector<160x128xf32> to vector<20x128xf32>
    %46 = arith.maximumf %44, %45 : vector<20x128xf32>
    %47 = arith.maximumf %43, %46 : vector<20x128xf32>
    %48 = vector.extract_strided_slice %47 {offsets = [0, 0], sizes = [10, 128], strides = [1, 1]} : vector<20x128xf32> to vector<10x128xf32>
    %c1_34 = arith.constant 1 : index
    %c0_35 = arith.constant 0 : index
    %c0_36 = arith.constant 0 : index
    %c0_37 = arith.constant 0 : index
    %49 = vector.load %arg17[%c1_34, %c0_35, %c0_36, %c0_37] : memref<2x2x136x128xf32, #tpu.memory_space<vmem>>, vector<1x1x10x128xf32>
    %50 = vector.shape_cast %49 : vector<1x1x10x128xf32> to vector<10x128xf32>
    %51 = vector.shape_cast %48 : vector<10x128xf32> to vector<1x1x10x128xf32>
    tpu.vector_store %arg17[%c1_34, %c0_35, %c0_36, %c0_37], %51 {strides = array<i32>} : memref<2x2x136x128xf32, #tpu.memory_space<vmem>>, vector<1x1x10x128xf32>,
    %52 = vector.extract_strided_slice %47 {offsets = [10, 0], sizes = [10, 128], strides = [1, 1]} : vector<20x128xf32> to vector<10x128xf32>
    %c1_38 = arith.constant 1 : index
    %c1_39 = arith.constant 1 : index
    %c0_40 = arith.constant 0 : index
    %c0_41 = arith.constant 0 : index
    %53 = vector.load %arg17[%c1_38, %c1_39, %c0_40, %c0_41] : memref<2x2x136x128xf32, #tpu.memory_space<vmem>>, vector<1x1x10x128xf32>
    %54 = vector.shape_cast %53 : vector<1x1x10x128xf32> to vector<10x128xf32>
    %55 = vector.shape_cast %52 : vector<10x128xf32> to vector<1x1x10x128xf32>
    tpu.vector_store %arg17[%c1_38, %c1_39, %c0_40, %c0_41], %55 {strides = array<i32>} : memref<2x2x136x128xf32, #tpu.memory_space<vmem>>, vector<1x1x10x128xf32>,
    %c160 = arith.constant 160 : index
    %c0_42 = arith.constant 0 : index
    %56 = vector.load %arg1[%c160, %c0_42] : memref<2080x128xbf16, #tpu.memory_space<vmem>>, vector<160x128xbf16>
    %cst_43 = arith.constant dense<0.000000e+00> : vector<160x128xf32>
    %57 = tpu.matmul %56, %18, %cst_43 {dimension_numbers = #tpu.dot_dimension_numbers<[1], [0], [0], [1], [0, 0, 1, 1], [], []>} : vector<160x128xbf16>, vector<128x128xbf16>, vector<160x128xf32> -> vector<160x128xf32>
    %58 = vector.broadcast %19 : vector<1x128xf32> to vector<160x128xf32>
    %59 = arith.addf %57, %58 : vector<160x128xf32>
    %cst_44 = arith.constant 0.000000e+00 : f32
    %60 = vector.broadcast %cst_44 : f32 to vector<160x128xf32>
    %61 = arith.maximumf %59, %60 : vector<160x128xf32>
    %62 = vector.extract_strided_slice %61 {offsets = [0, 0], sizes = [20, 128], strides = [1, 1]} : vector<160x128xf32> to vector<20x128xf32>
    %63 = vector.extract_strided_slice %61 {offsets = [20, 0], sizes = [20, 128], strides = [1, 1]} : vector<160x128xf32> to vector<20x128xf32>
    %64 = arith.maximumf %62, %63 : vector<20x128xf32>
    %65 = vector.extract_strided_slice %61 {offsets = [40, 0], sizes = [20, 128], strides = [1, 1]} : vector<160x128xf32> to vector<20x128xf32>
    %66 = vector.extract_strided_slice %61 {offsets = [60, 0], sizes = [20, 128], strides = [1, 1]} : vector<160x128xf32> to vector<20x128xf32>
    %67 = arith.maximumf %65, %66 : vector<20x128xf32>
    %68 = arith.maximumf %64, %67 : vector<20x128xf32>
    %69 = vector.extract_strided_slice %68 {offsets = [0, 0], sizes = [10, 128], strides = [1, 1]} : vector<20x128xf32> to vector<10x128xf32>
    %c0_45 = arith.constant 0 : index
    %c0_46 = arith.constant 0 : index
    %c10 = arith.constant 10 : index
    %c0_47 = arith.constant 0 : index
    %70 = vector.load %arg17[%c0_45, %c0_46, %c10, %c0_47] : memref<2x2x136x128xf32, #tpu.memory_space<vmem>>, vector<1x1x10x128xf32>
    %71 = vector.shape_cast %70 : vector<1x1x10x128xf32> to vector<10x128xf32>
    %72 = vector.shape_cast %69 : vector<10x128xf32> to vector<1x1x10x128xf32>
    tpu.vector_store %arg17[%c0_45, %c0_46, %c10, %c0_47], %72 {strides = array<i32>} : memref<2x2x136x128xf32, #tpu.memory_space<vmem>>, vector<1x1x10x128xf32>,
    %73 = vector.extract_strided_slice %68 {offsets = [10, 0], sizes = [10, 128], strides = [1, 1]} : vector<20x128xf32> to vector<10x128xf32>
    %c0_48 = arith.constant 0 : index
    %c1_49 = arith.constant 1 : index
    %c10_50 = arith.constant 10 : index
    %c0_51 = arith.constant 0 : index
    %74 = vector.load %arg17[%c0_48, %c1_49, %c10_50, %c0_51] : memref<2x2x136x128xf32, #tpu.memory_space<vmem>>, vector<1x1x10x128xf32>
    %75 = vector.shape_cast %74 : vector<1x1x10x128xf32> to vector<10x128xf32>
    %76 = vector.shape_cast %73 : vector<10x128xf32> to vector<1x1x10x128xf32>
    tpu.vector_store %arg17[%c0_48, %c1_49, %c10_50, %c0_51], %76 {strides = array<i32>} : memref<2x2x136x128xf32, #tpu.memory_space<vmem>>, vector<1x1x10x128xf32>,
    %77 = vector.extract_strided_slice %61 {offsets = [80, 0], sizes = [20, 128], strides = [1, 1]} : vector<160x128xf32> to vector<20x128xf32>
    %78 = vector.extract_strided_slice %61 {offsets = [100, 0], sizes = [20, 128], strides = [1, 1]} : vector<160x128xf32> to vector<20x128xf32>
    %79 = arith.maximumf %77, %78 : vector<20x128xf32>
    %80 = vector.extract_strided_slice %61 {offsets = [120, 0], sizes = [20, 128], strides = [1, 1]} : vector<160x128xf32> to vector<20x128xf32>
    %81 = vector.extract_strided_slice %61 {offsets = [140, 0], sizes = [20, 128], strides = [1, 1]} : vector<160x128xf32> to vector<20x128xf32>
    %82 = arith.maximumf %80, %81 : vector<20x128xf32>
    %83 = arith.maximumf %79, %82 : vector<20x128xf32>
    %84 = vector.extract_strided_slice %83 {offsets = [0, 0], sizes = [10, 128], strides = [1, 1]} : vector<20x128xf32> to vector<10x128xf32>
    %c1_52 = arith.constant 1 : index
    %c0_53 = arith.constant 0 : index
    %c10_54 = arith.constant 10 : index
    %c0_55 = arith.constant 0 : index
    %85 = vector.load %arg17[%c1_52, %c0_53, %c10_54, %c0_55] : memref<2x2x136x128xf32, #tpu.memory_space<vmem>>, vector<1x1x10x128xf32>
    %86 = vector.shape_cast %85 : vector<1x1x10x128xf32> to vector<10x128xf32>
    %87 = vector.shape_cast %84 : vector<10x128xf32> to vector<1x1x10x128xf32>
    tpu.vector_store %arg17[%c1_52, %c0_53, %c10_54, %c0_55], %87 {strides = array<i32>} : memref<2x2x136x128xf32, #tpu.memory_space<vmem>>, vector<1x1x10x128xf32>,
    %88 = vector.extract_strided_slice %83 {offsets = [10, 0], sizes = [10, 128], strides = [1, 1]} : vector<20x128xf32> to vector<10x128xf32>
    %c1_56 = arith.constant 1 : index
    %c1_57 = arith.constant 1 : index
    %c10_58 = arith.constant 10 : index
    %c0_59 = arith.constant 0 : index
    %89 = vector.load %arg17[%c1_56, %c1_57, %c10_58, %c0_59] : memref<2x2x136x128xf32, #tpu.memory_space<vmem>>, vector<1x1x10x128xf32>
    %90 = vector.shape_cast %89 : vector<1x1x10x128xf32> to vector<10x128xf32>
    %91 = vector.shape_cast %88 : vector<10x128xf32> to vector<1x1x10x128xf32>
    tpu.vector_store %arg17[%c1_56, %c1_57, %c10_58, %c0_59], %91 {strides = array<i32>} : memref<2x2x136x128xf32, #tpu.memory_space<vmem>>, vector<1x1x10x128xf32>,
    %c320 = arith.constant 320 : index
    %c0_60 = arith.constant 0 : index
    %92 = vector.load %arg1[%c320, %c0_60] : memref<2080x128xbf16, #tpu.memory_space<vmem>>, vector<160x128xbf16>
    %cst_61 = arith.constant dense<0.000000e+00> : vector<160x128xf32>
    %93 = tpu.matmul %92, %18, %cst_61 {dimension_numbers = #tpu.dot_dimension_numbers<[1], [0], [0], [1], [0, 0, 1, 1], [], []>} : vector<160x128xbf16>, vector<128x128xbf16>, vector<160x128xf32> -> vector<160x128xf32>
    %94 = vector.broadcast %19 : vector<1x128xf32> to vector<160x128xf32>
    %95 = arith.addf %93, %94 : vector<160x128xf32>
    %cst_62 = arith.constant 0.000000e+00 : f32
    %96 = vector.broadcast %cst_62 : f32 to vector<160x128xf32>
    %97 = arith.maximumf %95, %96 : vector<160x128xf32>
    %98 = vector.extract_strided_slice %97 {offsets = [0, 0], sizes = [20, 128], strides = [1, 1]} : vector<160x128xf32> to vector<20x128xf32>
    %99 = vector.extract_strided_slice %97 {offsets = [20, 0], sizes = [20, 128], strides = [1, 1]} : vector<160x128xf32> to vector<20x128xf32>
    %100 = arith.maximumf %98, %99 : vector<20x128xf32>
    %101 = vector.extract_strided_slice %97 {offsets = [40, 0], sizes = [20, 128], strides = [1, 1]} : vector<160x128xf32> to vector<20x128xf32>
    %102 = vector.extract_strided_slice %97 {offsets = [60, 0], sizes = [20, 128], strides = [1, 1]} : vector<160x128xf32> to vector<20x128xf32>
    %103 = arith.maximumf %101, %102 : vector<20x128xf32>
    %104 = arith.maximumf %100, %103 : vector<20x128xf32>
    %105 = vector.extract_strided_slice %104 {offsets = [0, 0], sizes = [10, 128], strides = [1, 1]} : vector<20x128xf32> to vector<10x128xf32>
    %c0_63 = arith.constant 0 : index
    %c0_64 = arith.constant 0 : index
    %c20 = arith.constant 20 : index
    %c0_65 = arith.constant 0 : index
    %106 = vector.load %arg17[%c0_63, %c0_64, %c20, %c0_65] : memref<2x2x136x128xf32, #tpu.memory_space<vmem>>, vector<1x1x10x128xf32>
    %107 = vector.shape_cast %106 : vector<1x1x10x128xf32> to vector<10x128xf32>
    %108 = vector.shape_cast %105 : vector<10x128xf32> to vector<1x1x10x128xf32>
    tpu.vector_store %arg17[%c0_63, %c0_64, %c20, %c0_65], %108 {strides = array<i32>} : memref<2x2x136x128xf32, #tpu.memory_space<vmem>>, vector<1x1x10x128xf32>,
    %109 = vector.extract_strided_slice %104 {offsets = [10, 0], sizes = [10, 128], strides = [1, 1]} : vector<20x128xf32> to vector<10x128xf32>
    %c0_66 = arith.constant 0 : index
    %c1_67 = arith.constant 1 : index
    %c20_68 = arith.constant 20 : index
    %c0_69 = arith.constant 0 : index
    %110 = vector.load %arg17[%c0_66, %c1_67, %c20_68, %c0_69] : memref<2x2x136x128xf32, #tpu.memory_space<vmem>>, vector<1x1x10x128xf32>
    %111 = vector.shape_cast %110 : vector<1x1x10x128xf32> to vector<10x128xf32>
    %112 = vector.shape_cast %109 : vector<10x128xf32> to vector<1x1x10x128xf32>
    tpu.vector_store %arg17[%c0_66, %c1_67, %c20_68, %c0_69], %112 {strides = array<i32>} : memref<2x2x136x128xf32, #tpu.memory_space<vmem>>, vector<1x1x10x128xf32>,
    %113 = vector.extract_strided_slice %97 {offsets = [80, 0], sizes = [20, 128], strides = [1, 1]} : vector<160x128xf32> to vector<20x128xf32>
    %114 = vector.extract_strided_slice %97 {offsets = [100, 0], sizes = [20, 128], strides = [1, 1]} : vector<160x128xf32> to vector<20x128xf32>
    %115 = arith.maximumf %113, %114 : vector<20x128xf32>
    %116 = vector.extract_strided_slice %97 {offsets = [120, 0], sizes = [20, 128], strides = [1, 1]} : vector<160x128xf32> to vector<20x128xf32>
    %117 = vector.extract_strided_slice %97 {offsets = [140, 0], sizes = [20, 128], strides = [1, 1]} : vector<160x128xf32> to vector<20x128xf32>
    %118 = arith.maximumf %116, %117 : vector<20x128xf32>
    %119 = arith.maximumf %115, %118 : vector<20x128xf32>
    %120 = vector.extract_strided_slice %119 {offsets = [0, 0], sizes = [10, 128], strides = [1, 1]} : vector<20x128xf32> to vector<10x128xf32>
    %c1_70 = arith.constant 1 : index
    %c0_71 = arith.constant 0 : index
    %c20_72 = arith.constant 20 : index
    %c0_73 = arith.constant 0 : index
    %121 = vector.load %arg17[%c1_70, %c0_71, %c20_72, %c0_73] : memref<2x2x136x128xf32, #tpu.memory_space<vmem>>, vector<1x1x10x128xf32>
    %122 = vector.shape_cast %121 : vector<1x1x10x128xf32> to vector<10x128xf32>
    %123 = vector.shape_cast %120 : vector<10x128xf32> to vector<1x1x10x128xf32>
    tpu.vector_store %arg17[%c1_70, %c0_71, %c20_72, %c0_73], %123 {strides = array<i32>} : memref<2x2x136x128xf32, #tpu.memory_space<vmem>>, vector<1x1x10x128xf32>,
    %124 = vector.extract_strided_slice %119 {offsets = [10, 0], sizes = [10, 128], strides = [1, 1]} : vector<20x128xf32> to vector<10x128xf32>
    %c1_74 = arith.constant 1 : index
    %c1_75 = arith.constant 1 : index
    %c20_76 = arith.constant 20 : index
    %c0_77 = arith.constant 0 : index
    %125 = vector.load %arg17[%c1_74, %c1_75, %c20_76, %c0_77] : memref<2x2x136x128xf32, #tpu.memory_space<vmem>>, vector<1x1x10x128xf32>
    %126 = vector.shape_cast %125 : vector<1x1x10x128xf32> to vector<10x128xf32>
    %127 = vector.shape_cast %124 : vector<10x128xf32> to vector<1x1x10x128xf32>
    tpu.vector_store %arg17[%c1_74, %c1_75, %c20_76, %c0_77], %127 {strides = array<i32>} : memref<2x2x136x128xf32, #tpu.memory_space<vmem>>, vector<1x1x10x128xf32>,
    %c480 = arith.constant 480 : index
    %c0_78 = arith.constant 0 : index
    %128 = vector.load %arg1[%c480, %c0_78] : memref<2080x128xbf16, #tpu.memory_space<vmem>>, vector<160x128xbf16>
    %cst_79 = arith.constant dense<0.000000e+00> : vector<160x128xf32>
    %129 = tpu.matmul %128, %18, %cst_79 {dimension_numbers = #tpu.dot_dimension_numbers<[1], [0], [0], [1], [0, 0, 1, 1], [], []>} : vector<160x128xbf16>, vector<128x128xbf16>, vector<160x128xf32> -> vector<160x128xf32>
    %130 = vector.broadcast %19 : vector<1x128xf32> to vector<160x128xf32>
    %131 = arith.addf %129, %130 : vector<160x128xf32>
    %cst_80 = arith.constant 0.000000e+00 : f32
    %132 = vector.broadcast %cst_80 : f32 to vector<160x128xf32>
    %133 = arith.maximumf %131, %132 : vector<160x128xf32>
    %134 = vector.extract_strided_slice %133 {offsets = [0, 0], sizes = [20, 128], strides = [1, 1]} : vector<160x128xf32> to vector<20x128xf32>
    %135 = vector.extract_strided_slice %133 {offsets = [20, 0], sizes = [20, 128], strides = [1, 1]} : vector<160x128xf32> to vector<20x128xf32>
    %136 = arith.maximumf %134, %135 : vector<20x128xf32>
    %137 = vector.extract_strided_slice %133 {offsets = [40, 0], sizes = [20, 128], strides = [1, 1]} : vector<160x128xf32> to vector<20x128xf32>
    %138 = vector.extract_strided_slice %133 {offsets = [60, 0], sizes = [20, 128], strides = [1, 1]} : vector<160x128xf32> to vector<20x128xf32>
    %139 = arith.maximumf %137, %138 : vector<20x128xf32>
    %140 = arith.maximumf %136, %139 : vector<20x128xf32>
    %141 = vector.extract_strided_slice %140 {offsets = [0, 0], sizes = [10, 128], strides = [1, 1]} : vector<20x128xf32> to vector<10x128xf32>
    %c0_81 = arith.constant 0 : index
    %c0_82 = arith.constant 0 : index
    %c30 = arith.constant 30 : index
    %c0_83 = arith.constant 0 : index
    %142 = vector.load %arg17[%c0_81, %c0_82, %c30, %c0_83] : memref<2x2x136x128xf32, #tpu.memory_space<vmem>>, vector<1x1x10x128xf32>
    %143 = vector.shape_cast %142 : vector<1x1x10x128xf32> to vector<10x128xf32>
    %144 = vector.shape_cast %141 : vector<10x128xf32> to vector<1x1x10x128xf32>
    tpu.vector_store %arg17[%c0_81, %c0_82, %c30, %c0_83], %144 {strides = array<i32>} : memref<2x2x136x128xf32, #tpu.memory_space<vmem>>, vector<1x1x10x128xf32>,
    %145 = vector.extract_strided_slice %140 {offsets = [10, 0], sizes = [10, 128], strides = [1, 1]} : vector<20x128xf32> to vector<10x128xf32>
    %c0_84 = arith.constant 0 : index
    %c1_85 = arith.constant 1 : index
    %c30_86 = arith.constant 30 : index
    %c0_87 = arith.constant 0 : index
    %146 = vector.load %arg17[%c0_84, %c1_85, %c30_86, %c0_87] : memref<2x2x136x128xf32, #tpu.memory_space<vmem>>, vector<1x1x10x128xf32>
    %147 = vector.shape_cast %146 : vector<1x1x10x128xf32> to vector<10x128xf32>
    %148 = vector.shape_cast %145 : vector<10x128xf32> to vector<1x1x10x128xf32>
    tpu.vector_store %arg17[%c0_84, %c1_85, %c30_86, %c0_87], %148 {strides = array<i32>} : memref<2x2x136x128xf32, #tpu.memory_space<vmem>>, vector<1x1x10x128xf32>,
    %149 = vector.extract_strided_slice %133 {offsets = [80, 0], sizes = [20, 128], strides = [1, 1]} : vector<160x128xf32> to vector<20x128xf32>
    %150 = vector.extract_strided_slice %133 {offsets = [100, 0], sizes = [20, 128], strides = [1, 1]} : vector<160x128xf32> to vector<20x128xf32>
    %151 = arith.maximumf %149, %150 : vector<20x128xf32>
    %152 = vector.extract_strided_slice %133 {offsets = [120, 0], sizes = [20, 128], strides = [1, 1]} : vector<160x128xf32> to vector<20x128xf32>
    %153 = vector.extract_strided_slice %133 {offsets = [140, 0], sizes = [20, 128], strides = [1, 1]} : vector<160x128xf32> to vector<20x128xf32>
    %154 = arith.maximumf %152, %153 : vector<20x128xf32>
    %155 = arith.maximumf %151, %154 : vector<20x128xf32>
    %156 = vector.extract_strided_slice %155 {offsets = [0, 0], sizes = [10, 128], strides = [1, 1]} : vector<20x128xf32> to vector<10x128xf32>
    %c1_88 = arith.constant 1 : index
    %c0_89 = arith.constant 0 : index
    %c30_90 = arith.constant 30 : index
    %c0_91 = arith.constant 0 : index
    %157 = vector.load %arg17[%c1_88, %c0_89, %c30_90, %c0_91] : memref<2x2x136x128xf32, #tpu.memory_space<vmem>>, vector<1x1x10x128xf32>
    %158 = vector.shape_cast %157 : vector<1x1x10x128xf32> to vector<10x128xf32>
    %159 = vector.shape_cast %156 : vector<10x128xf32> to vector<1x1x10x128xf32>
    tpu.vector_store %arg17[%c1_88, %c0_89, %c30_90, %c0_91], %159 {strides = array<i32>} : memref<2x2x136x128xf32, #tpu.memory_space<vmem>>, vector<1x1x10x128xf32>,
    %160 = vector.extract_strided_slice %155 {offsets = [10, 0], sizes = [10, 128], strides = [1, 1]} : vector<20x128xf32> to vector<10x128xf32>
    %c1_92 = arith.constant 1 : index
    %c1_93 = arith.constant 1 : index
    %c30_94 = arith.constant 30 : index
    %c0_95 = arith.constant 0 : index
    %161 = vector.load %arg17[%c1_92, %c1_93, %c30_94, %c0_95] : memref<2x2x136x128xf32, #tpu.memory_space<vmem>>, vector<1x1x10x128xf32>
    %162 = vector.shape_cast %161 : vector<1x1x10x128xf32> to vector<10x128xf32>
    %163 = vector.shape_cast %160 : vector<10x128xf32> to vector<1x1x10x128xf32>
    tpu.vector_store %arg17[%c1_92, %c1_93, %c30_94, %c0_95], %163 {strides = array<i32>} : memref<2x2x136x128xf32, #tpu.memory_space<vmem>>, vector<1x1x10x128xf32>,
    %c640 = arith.constant 640 : index
    %c0_96 = arith.constant 0 : index
    %164 = vector.load %arg1[%c640, %c0_96] : memref<2080x128xbf16, #tpu.memory_space<vmem>>, vector<160x128xbf16>
    %cst_97 = arith.constant dense<0.000000e+00> : vector<160x128xf32>
    %165 = tpu.matmul %164, %18, %cst_97 {dimension_numbers = #tpu.dot_dimension_numbers<[1], [0], [0], [1], [0, 0, 1, 1], [], []>} : vector<160x128xbf16>, vector<128x128xbf16>, vector<160x128xf32> -> vector<160x128xf32>
    %166 = vector.broadcast %19 : vector<1x128xf32> to vector<160x128xf32>
    %167 = arith.addf %165, %166 : vector<160x128xf32>
    %cst_98 = arith.constant 0.000000e+00 : f32
    %168 = vector.broadcast %cst_98 : f32 to vector<160x128xf32>
    %169 = arith.maximumf %167, %168 : vector<160x128xf32>
    %170 = vector.extract_strided_slice %169 {offsets = [0, 0], sizes = [20, 128], strides = [1, 1]} : vector<160x128xf32> to vector<20x128xf32>
    %171 = vector.extract_strided_slice %169 {offsets = [20, 0], sizes = [20, 128], strides = [1, 1]} : vector<160x128xf32> to vector<20x128xf32>
    %172 = arith.maximumf %170, %171 : vector<20x128xf32>
    %173 = vector.extract_strided_slice %169 {offsets = [40, 0], sizes = [20, 128], strides = [1, 1]} : vector<160x128xf32> to vector<20x128xf32>
    %174 = vector.extract_strided_slice %169 {offsets = [60, 0], sizes = [20, 128], strides = [1, 1]} : vector<160x128xf32> to vector<20x128xf32>
    %175 = arith.maximumf %173, %174 : vector<20x128xf32>
    %176 = arith.maximumf %172, %175 : vector<20x128xf32>
    %177 = vector.extract_strided_slice %176 {offsets = [0, 0], sizes = [10, 128], strides = [1, 1]} : vector<20x128xf32> to vector<10x128xf32>
    %c0_99 = arith.constant 0 : index
    %c0_100 = arith.constant 0 : index
    %c40 = arith.constant 40 : index
    %c0_101 = arith.constant 0 : index
    %178 = vector.load %arg17[%c0_99, %c0_100, %c40, %c0_101] : memref<2x2x136x128xf32, #tpu.memory_space<vmem>>, vector<1x1x10x128xf32>
    %179 = vector.shape_cast %178 : vector<1x1x10x128xf32> to vector<10x128xf32>
    %180 = vector.shape_cast %177 : vector<10x128xf32> to vector<1x1x10x128xf32>
    tpu.vector_store %arg17[%c0_99, %c0_100, %c40, %c0_101], %180 {strides = array<i32>} : memref<2x2x136x128xf32, #tpu.memory_space<vmem>>, vector<1x1x10x128xf32>,
    %181 = vector.extract_strided_slice %176 {offsets = [10, 0], sizes = [10, 128], strides = [1, 1]} : vector<20x128xf32> to vector<10x128xf32>
    %c0_102 = arith.constant 0 : index
    %c1_103 = arith.constant 1 : index
    %c40_104 = arith.constant 40 : index
    %c0_105 = arith.constant 0 : index
    %182 = vector.load %arg17[%c0_102, %c1_103, %c40_104, %c0_105] : memref<2x2x136x128xf32, #tpu.memory_space<vmem>>, vector<1x1x10x128xf32>
    %183 = vector.shape_cast %182 : vector<1x1x10x128xf32> to vector<10x128xf32>
    %184 = vector.shape_cast %181 : vector<10x128xf32> to vector<1x1x10x128xf32>
    tpu.vector_store %arg17[%c0_102, %c1_103, %c40_104, %c0_105], %184 {strides = array<i32>} : memref<2x2x136x128xf32, #tpu.memory_space<vmem>>, vector<1x1x10x128xf32>,
    %185 = vector.extract_strided_slice %169 {offsets = [80, 0], sizes = [20, 128], strides = [1, 1]} : vector<160x128xf32> to vector<20x128xf32>
    %186 = vector.extract_strided_slice %169 {offsets = [100, 0], sizes = [20, 128], strides = [1, 1]} : vector<160x128xf32> to vector<20x128xf32>
    %187 = arith.maximumf %185, %186 : vector<20x128xf32>
    %188 = vector.extract_strided_slice %169 {offsets = [120, 0], sizes = [20, 128], strides = [1, 1]} : vector<160x128xf32> to vector<20x128xf32>
    %189 = vector.extract_strided_slice %169 {offsets = [140, 0], sizes = [20, 128], strides = [1, 1]} : vector<160x128xf32> to vector<20x128xf32>
    %190 = arith.maximumf %188, %189 : vector<20x128xf32>
    %191 = arith.maximumf %187, %190 : vector<20x128xf32>
    %192 = vector.extract_strided_slice %191 {offsets = [0, 0], sizes = [10, 128], strides = [1, 1]} : vector<20x128xf32> to vector<10x128xf32>
    %c1_106 = arith.constant 1 : index
    %c0_107 = arith.constant 0 : index
    %c40_108 = arith.constant 40 : index
    %c0_109 = arith.constant 0 : index
    %193 = vector.load %arg17[%c1_106, %c0_107, %c40_108, %c0_109] : memref<2x2x136x128xf32, #tpu.memory_space<vmem>>, vector<1x1x10x128xf32>
    %194 = vector.shape_cast %193 : vector<1x1x10x128xf32> to vector<10x128xf32>
    %195 = vector.shape_cast %192 : vector<10x128xf32> to vector<1x1x10x128xf32>
    tpu.vector_store %arg17[%c1_106, %c0_107, %c40_108, %c0_109], %195 {strides = array<i32>} : memref<2x2x136x128xf32, #tpu.memory_space<vmem>>, vector<1x1x10x128xf32>,
    %196 = vector.extract_strided_slice %191 {offsets = [10, 0], sizes = [10, 128], strides = [1, 1]} : vector<20x128xf32> to vector<10x128xf32>
    %c1_110 = arith.constant 1 : index
    %c1_111 = arith.constant 1 : index
    %c40_112 = arith.constant 40 : index
    %c0_113 = arith.constant 0 : index
    %197 = vector.load %arg17[%c1_110, %c1_111, %c40_112, %c0_113] : memref<2x2x136x128xf32, #tpu.memory_space<vmem>>, vector<1x1x10x128xf32>
    %198 = vector.shape_cast %197 : vector<1x1x10x128xf32> to vector<10x128xf32>
    %199 = vector.shape_cast %196 : vector<10x128xf32> to vector<1x1x10x128xf32>
    tpu.vector_store %arg17[%c1_110, %c1_111, %c40_112, %c0_113], %199 {strides = array<i32>} : memref<2x2x136x128xf32, #tpu.memory_space<vmem>>, vector<1x1x10x128xf32>,
    %c800 = arith.constant 800 : index
    %c0_114 = arith.constant 0 : index
    %200 = vector.load %arg1[%c800, %c0_114] : memref<2080x128xbf16, #tpu.memory_space<vmem>>, vector<160x128xbf16>
    %cst_115 = arith.constant dense<0.000000e+00> : vector<160x128xf32>
    %201 = tpu.matmul %200, %18, %cst_115 {dimension_numbers = #tpu.dot_dimension_numbers<[1], [0], [0], [1], [0, 0, 1, 1], [], []>} : vector<160x128xbf16>, vector<128x128xbf16>, vector<160x128xf32> -> vector<160x128xf32>
    %202 = vector.broadcast %19 : vector<1x128xf32> to vector<160x128xf32>
    %203 = arith.addf %201, %202 : vector<160x128xf32>
    %cst_116 = arith.constant 0.000000e+00 : f32
    %204 = vector.broadcast %cst_116 : f32 to vector<160x128xf32>
    %205 = arith.maximumf %203, %204 : vector<160x128xf32>
    %206 = vector.extract_strided_slice %205 {offsets = [0, 0], sizes = [20, 128], strides = [1, 1]} : vector<160x128xf32> to vector<20x128xf32>
    %207 = vector.extract_strided_slice %205 {offsets = [20, 0], sizes = [20, 128], strides = [1, 1]} : vector<160x128xf32> to vector<20x128xf32>
    %208 = arith.maximumf %206, %207 : vector<20x128xf32>
    %209 = vector.extract_strided_slice %205 {offsets = [40, 0], sizes = [20, 128], strides = [1, 1]} : vector<160x128xf32> to vector<20x128xf32>
    %210 = vector.extract_strided_slice %205 {offsets = [60, 0], sizes = [20, 128], strides = [1, 1]} : vector<160x128xf32> to vector<20x128xf32>
    %211 = arith.maximumf %209, %210 : vector<20x128xf32>
    %212 = arith.maximumf %208, %211 : vector<20x128xf32>
    %213 = vector.extract_strided_slice %212 {offsets = [0, 0], sizes = [10, 128], strides = [1, 1]} : vector<20x128xf32> to vector<10x128xf32>
    %c0_117 = arith.constant 0 : index
    %c0_118 = arith.constant 0 : index
    %c50 = arith.constant 50 : index
    %c0_119 = arith.constant 0 : index
    %214 = vector.load %arg17[%c0_117, %c0_118, %c50, %c0_119] : memref<2x2x136x128xf32, #tpu.memory_space<vmem>>, vector<1x1x10x128xf32>
    %215 = vector.shape_cast %214 : vector<1x1x10x128xf32> to vector<10x128xf32>
    %216 = vector.shape_cast %213 : vector<10x128xf32> to vector<1x1x10x128xf32>
    tpu.vector_store %arg17[%c0_117, %c0_118, %c50, %c0_119], %216 {strides = array<i32>} : memref<2x2x136x128xf32, #tpu.memory_space<vmem>>, vector<1x1x10x128xf32>,
    %217 = vector.extract_strided_slice %212 {offsets = [10, 0], sizes = [10, 128], strides = [1, 1]} : vector<20x128xf32> to vector<10x128xf32>
    %c0_120 = arith.constant 0 : index
    %c1_121 = arith.constant 1 : index
    %c50_122 = arith.constant 50 : index
    %c0_123 = arith.constant 0 : index
    %218 = vector.load %arg17[%c0_120, %c1_121, %c50_122, %c0_123] : memref<2x2x136x128xf32, #tpu.memory_space<vmem>>, vector<1x1x10x128xf32>
    %219 = vector.shape_cast %218 : vector<1x1x10x128xf32> to vector<10x128xf32>
    %220 = vector.shape_cast %217 : vector<10x128xf32> to vector<1x1x10x128xf32>
    tpu.vector_store %arg17[%c0_120, %c1_121, %c50_122, %c0_123], %220 {strides = array<i32>} : memref<2x2x136x128xf32, #tpu.memory_space<vmem>>, vector<1x1x10x128xf32>,
    %221 = vector.extract_strided_slice %205 {offsets = [80, 0], sizes = [20, 128], strides = [1, 1]} : vector<160x128xf32> to vector<20x128xf32>
    %222 = vector.extract_strided_slice %205 {offsets = [100, 0], sizes = [20, 128], strides = [1, 1]} : vector<160x128xf32> to vector<20x128xf32>
    %223 = arith.maximumf %221, %222 : vector<20x128xf32>
    %224 = vector.extract_strided_slice %205 {offsets = [120, 0], sizes = [20, 128], strides = [1, 1]} : vector<160x128xf32> to vector<20x128xf32>
    %225 = vector.extract_strided_slice %205 {offsets = [140, 0], sizes = [20, 128], strides = [1, 1]} : vector<160x128xf32> to vector<20x128xf32>
    %226 = arith.maximumf %224, %225 : vector<20x128xf32>
    %227 = arith.maximumf %223, %226 : vector<20x128xf32>
    %228 = vector.extract_strided_slice %227 {offsets = [0, 0], sizes = [10, 128], strides = [1, 1]} : vector<20x128xf32> to vector<10x128xf32>
    %c1_124 = arith.constant 1 : index
    %c0_125 = arith.constant 0 : index
    %c50_126 = arith.constant 50 : index
    %c0_127 = arith.constant 0 : index
    %229 = vector.load %arg17[%c1_124, %c0_125, %c50_126, %c0_127] : memref<2x2x136x128xf32, #tpu.memory_space<vmem>>, vector<1x1x10x128xf32>
    %230 = vector.shape_cast %229 : vector<1x1x10x128xf32> to vector<10x128xf32>
    %231 = vector.shape_cast %228 : vector<10x128xf32> to vector<1x1x10x128xf32>
    tpu.vector_store %arg17[%c1_124, %c0_125, %c50_126, %c0_127], %231 {strides = array<i32>} : memref<2x2x136x128xf32, #tpu.memory_space<vmem>>, vector<1x1x10x128xf32>,
    %232 = vector.extract_strided_slice %227 {offsets = [10, 0], sizes = [10, 128], strides = [1, 1]} : vector<20x128xf32> to vector<10x128xf32>
    %c1_128 = arith.constant 1 : index
    %c1_129 = arith.constant 1 : index
    %c50_130 = arith.constant 50 : index
    %c0_131 = arith.constant 0 : index
    %233 = vector.load %arg17[%c1_128, %c1_129, %c50_130, %c0_131] : memref<2x2x136x128xf32, #tpu.memory_space<vmem>>, vector<1x1x10x128xf32>
    %234 = vector.shape_cast %233 : vector<1x1x10x128xf32> to vector<10x128xf32>
    %235 = vector.shape_cast %232 : vector<10x128xf32> to vector<1x1x10x128xf32>
    tpu.vector_store %arg17[%c1_128, %c1_129, %c50_130, %c0_131], %235 {strides = array<i32>} : memref<2x2x136x128xf32, #tpu.memory_space<vmem>>, vector<1x1x10x128xf32>,
    %c960 = arith.constant 960 : index
    %c0_132 = arith.constant 0 : index
    %236 = vector.load %arg1[%c960, %c0_132] : memref<2080x128xbf16, #tpu.memory_space<vmem>>, vector<160x128xbf16>
    %cst_133 = arith.constant dense<0.000000e+00> : vector<160x128xf32>
    %237 = tpu.matmul %236, %18, %cst_133 {dimension_numbers = #tpu.dot_dimension_numbers<[1], [0], [0], [1], [0, 0, 1, 1], [], []>} : vector<160x128xbf16>, vector<128x128xbf16>, vector<160x128xf32> -> vector<160x128xf32>
    %238 = vector.broadcast %19 : vector<1x128xf32> to vector<160x128xf32>
    %239 = arith.addf %237, %238 : vector<160x128xf32>
    %cst_134 = arith.constant 0.000000e+00 : f32
    %240 = vector.broadcast %cst_134 : f32 to vector<160x128xf32>
    %241 = arith.maximumf %239, %240 : vector<160x128xf32>
    %242 = vector.extract_strided_slice %241 {offsets = [0, 0], sizes = [20, 128], strides = [1, 1]} : vector<160x128xf32> to vector<20x128xf32>
    %243 = vector.extract_strided_slice %241 {offsets = [20, 0], sizes = [20, 128], strides = [1, 1]} : vector<160x128xf32> to vector<20x128xf32>
    %244 = arith.maximumf %242, %243 : vector<20x128xf32>
    %245 = vector.extract_strided_slice %241 {offsets = [40, 0], sizes = [20, 128], strides = [1, 1]} : vector<160x128xf32> to vector<20x128xf32>
    %246 = vector.extract_strided_slice %241 {offsets = [60, 0], sizes = [20, 128], strides = [1, 1]} : vector<160x128xf32> to vector<20x128xf32>
    %247 = arith.maximumf %245, %246 : vector<20x128xf32>
    %248 = arith.maximumf %244, %247 : vector<20x128xf32>
    %249 = vector.extract_strided_slice %248 {offsets = [0, 0], sizes = [10, 128], strides = [1, 1]} : vector<20x128xf32> to vector<10x128xf32>
    %c0_135 = arith.constant 0 : index
    %c0_136 = arith.constant 0 : index
    %c60 = arith.constant 60 : index
    %c0_137 = arith.constant 0 : index
    %250 = vector.load %arg17[%c0_135, %c0_136, %c60, %c0_137] : memref<2x2x136x128xf32, #tpu.memory_space<vmem>>, vector<1x1x10x128xf32>
    %251 = vector.shape_cast %250 : vector<1x1x10x128xf32> to vector<10x128xf32>
    %252 = vector.shape_cast %249 : vector<10x128xf32> to vector<1x1x10x128xf32>
    tpu.vector_store %arg17[%c0_135, %c0_136, %c60, %c0_137], %252 {strides = array<i32>} : memref<2x2x136x128xf32, #tpu.memory_space<vmem>>, vector<1x1x10x128xf32>,
    %253 = vector.extract_strided_slice %248 {offsets = [10, 0], sizes = [10, 128], strides = [1, 1]} : vector<20x128xf32> to vector<10x128xf32>
    %c0_138 = arith.constant 0 : index
    %c1_139 = arith.constant 1 : index
    %c60_140 = arith.constant 60 : index
    %c0_141 = arith.constant 0 : index
    %254 = vector.load %arg17[%c0_138, %c1_139, %c60_140, %c0_141] : memref<2x2x136x128xf32, #tpu.memory_space<vmem>>, vector<1x1x10x128xf32>
    %255 = vector.shape_cast %254 : vector<1x1x10x128xf32> to vector<10x128xf32>
    %256 = vector.shape_cast %253 : vector<10x128xf32> to vector<1x1x10x128xf32>
    tpu.vector_store %arg17[%c0_138, %c1_139, %c60_140, %c0_141], %256 {strides = array<i32>} : memref<2x2x136x128xf32, #tpu.memory_space<vmem>>, vector<1x1x10x128xf32>,
    %257 = vector.extract_strided_slice %241 {offsets = [80, 0], sizes = [20, 128], strides = [1, 1]} : vector<160x128xf32> to vector<20x128xf32>
    %258 = vector.extract_strided_slice %241 {offsets = [100, 0], sizes = [20, 128], strides = [1, 1]} : vector<160x128xf32> to vector<20x128xf32>
    %259 = arith.maximumf %257, %258 : vector<20x128xf32>
    %260 = vector.extract_strided_slice %241 {offsets = [120, 0], sizes = [20, 128], strides = [1, 1]} : vector<160x128xf32> to vector<20x128xf32>
    %261 = vector.extract_strided_slice %241 {offsets = [140, 0], sizes = [20, 128], strides = [1, 1]} : vector<160x128xf32> to vector<20x128xf32>
    %262 = arith.maximumf %260, %261 : vector<20x128xf32>
    %263 = arith.maximumf %259, %262 : vector<20x128xf32>
    %264 = vector.extract_strided_slice %263 {offsets = [0, 0], sizes = [10, 128], strides = [1, 1]} : vector<20x128xf32> to vector<10x128xf32>
    %c1_142 = arith.constant 1 : index
    %c0_143 = arith.constant 0 : index
    %c60_144 = arith.constant 60 : index
    %c0_145 = arith.constant 0 : index
    %265 = vector.load %arg17[%c1_142, %c0_143, %c60_144, %c0_145] : memref<2x2x136x128xf32, #tpu.memory_space<vmem>>, vector<1x1x10x128xf32>
    %266 = vector.shape_cast %265 : vector<1x1x10x128xf32> to vector<10x128xf32>
    %267 = vector.shape_cast %264 : vector<10x128xf32> to vector<1x1x10x128xf32>
    tpu.vector_store %arg17[%c1_142, %c0_143, %c60_144, %c0_145], %267 {strides = array<i32>} : memref<2x2x136x128xf32, #tpu.memory_space<vmem>>, vector<1x1x10x128xf32>,
    %268 = vector.extract_strided_slice %263 {offsets = [10, 0], sizes = [10, 128], strides = [1, 1]} : vector<20x128xf32> to vector<10x128xf32>
    %c1_146 = arith.constant 1 : index
    %c1_147 = arith.constant 1 : index
    %c60_148 = arith.constant 60 : index
    %c0_149 = arith.constant 0 : index
    %269 = vector.load %arg17[%c1_146, %c1_147, %c60_148, %c0_149] : memref<2x2x136x128xf32, #tpu.memory_space<vmem>>, vector<1x1x10x128xf32>
    %270 = vector.shape_cast %269 : vector<1x1x10x128xf32> to vector<10x128xf32>
    %271 = vector.shape_cast %268 : vector<10x128xf32> to vector<1x1x10x128xf32>
    tpu.vector_store %arg17[%c1_146, %c1_147, %c60_148, %c0_149], %271 {strides = array<i32>} : memref<2x2x136x128xf32, #tpu.memory_space<vmem>>, vector<1x1x10x128xf32>,
    %c1120 = arith.constant 1120 : index
    %c0_150 = arith.constant 0 : index
    %272 = vector.load %arg1[%c1120, %c0_150] : memref<2080x128xbf16, #tpu.memory_space<vmem>>, vector<160x128xbf16>
    %cst_151 = arith.constant dense<0.000000e+00> : vector<160x128xf32>
    %273 = tpu.matmul %272, %18, %cst_151 {dimension_numbers = #tpu.dot_dimension_numbers<[1], [0], [0], [1], [0, 0, 1, 1], [], []>} : vector<160x128xbf16>, vector<128x128xbf16>, vector<160x128xf32> -> vector<160x128xf32>
    %274 = vector.broadcast %19 : vector<1x128xf32> to vector<160x128xf32>
    %275 = arith.addf %273, %274 : vector<160x128xf32>
    %cst_152 = arith.constant 0.000000e+00 : f32
    %276 = vector.broadcast %cst_152 : f32 to vector<160x128xf32>
    %277 = arith.maximumf %275, %276 : vector<160x128xf32>
    %278 = vector.extract_strided_slice %277 {offsets = [0, 0], sizes = [20, 128], strides = [1, 1]} : vector<160x128xf32> to vector<20x128xf32>
    %279 = vector.extract_strided_slice %277 {offsets = [20, 0], sizes = [20, 128], strides = [1, 1]} : vector<160x128xf32> to vector<20x128xf32>
    %280 = arith.maximumf %278, %279 : vector<20x128xf32>
    %281 = vector.extract_strided_slice %277 {offsets = [40, 0], sizes = [20, 128], strides = [1, 1]} : vector<160x128xf32> to vector<20x128xf32>
    %282 = vector.extract_strided_slice %277 {offsets = [60, 0], sizes = [20, 128], strides = [1, 1]} : vector<160x128xf32> to vector<20x128xf32>
    %283 = arith.maximumf %281, %282 : vector<20x128xf32>
    %284 = arith.maximumf %280, %283 : vector<20x128xf32>
    %285 = vector.extract_strided_slice %284 {offsets = [0, 0], sizes = [10, 128], strides = [1, 1]} : vector<20x128xf32> to vector<10x128xf32>
    %c0_153 = arith.constant 0 : index
    %c0_154 = arith.constant 0 : index
    %c70 = arith.constant 70 : index
    %c0_155 = arith.constant 0 : index
    %286 = vector.load %arg17[%c0_153, %c0_154, %c70, %c0_155] : memref<2x2x136x128xf32, #tpu.memory_space<vmem>>, vector<1x1x10x128xf32>
    %287 = vector.shape_cast %286 : vector<1x1x10x128xf32> to vector<10x128xf32>
    %288 = vector.shape_cast %285 : vector<10x128xf32> to vector<1x1x10x128xf32>
    tpu.vector_store %arg17[%c0_153, %c0_154, %c70, %c0_155], %288 {strides = array<i32>} : memref<2x2x136x128xf32, #tpu.memory_space<vmem>>, vector<1x1x10x128xf32>,
    %289 = vector.extract_strided_slice %284 {offsets = [10, 0], sizes = [10, 128], strides = [1, 1]} : vector<20x128xf32> to vector<10x128xf32>
    %c0_156 = arith.constant 0 : index
    %c1_157 = arith.constant 1 : index
    %c70_158 = arith.constant 70 : index
    %c0_159 = arith.constant 0 : index
    %290 = vector.load %arg17[%c0_156, %c1_157, %c70_158, %c0_159] : memref<2x2x136x128xf32, #tpu.memory_space<vmem>>, vector<1x1x10x128xf32>
    %291 = vector.shape_cast %290 : vector<1x1x10x128xf32> to vector<10x128xf32>
    %292 = vector.shape_cast %289 : vector<10x128xf32> to vector<1x1x10x128xf32>
    tpu.vector_store %arg17[%c0_156, %c1_157, %c70_158, %c0_159], %292 {strides = array<i32>} : memref<2x2x136x128xf32, #tpu.memory_space<vmem>>, vector<1x1x10x128xf32>,
    %293 = vector.extract_strided_slice %277 {offsets = [80, 0], sizes = [20, 128], strides = [1, 1]} : vector<160x128xf32> to vector<20x128xf32>
    %294 = vector.extract_strided_slice %277 {offsets = [100, 0], sizes = [20, 128], strides = [1, 1]} : vector<160x128xf32> to vector<20x128xf32>
    %295 = arith.maximumf %293, %294 : vector<20x128xf32>
    %296 = vector.extract_strided_slice %277 {offsets = [120, 0], sizes = [20, 128], strides = [1, 1]} : vector<160x128xf32> to vector<20x128xf32>
    %297 = vector.extract_strided_slice %277 {offsets = [140, 0], sizes = [20, 128], strides = [1, 1]} : vector<160x128xf32> to vector<20x128xf32>
    %298 = arith.maximumf %296, %297 : vector<20x128xf32>
    %299 = arith.maximumf %295, %298 : vector<20x128xf32>
    %300 = vector.extract_strided_slice %299 {offsets = [0, 0], sizes = [10, 128], strides = [1, 1]} : vector<20x128xf32> to vector<10x128xf32>
    %c1_160 = arith.constant 1 : index
    %c0_161 = arith.constant 0 : index
    %c70_162 = arith.constant 70 : index
    %c0_163 = arith.constant 0 : index
    %301 = vector.load %arg17[%c1_160, %c0_161, %c70_162, %c0_163] : memref<2x2x136x128xf32, #tpu.memory_space<vmem>>, vector<1x1x10x128xf32>
    %302 = vector.shape_cast %301 : vector<1x1x10x128xf32> to vector<10x128xf32>
    %303 = vector.shape_cast %300 : vector<10x128xf32> to vector<1x1x10x128xf32>
    tpu.vector_store %arg17[%c1_160, %c0_161, %c70_162, %c0_163], %303 {strides = array<i32>} : memref<2x2x136x128xf32, #tpu.memory_space<vmem>>, vector<1x1x10x128xf32>,
    %304 = vector.extract_strided_slice %299 {offsets = [10, 0], sizes = [10, 128], strides = [1, 1]} : vector<20x128xf32> to vector<10x128xf32>
    %c1_164 = arith.constant 1 : index
    %c1_165 = arith.constant 1 : index
    %c70_166 = arith.constant 70 : index
    %c0_167 = arith.constant 0 : index
    %305 = vector.load %arg17[%c1_164, %c1_165, %c70_166, %c0_167] : memref<2x2x136x128xf32, #tpu.memory_space<vmem>>, vector<1x1x10x128xf32>
    %306 = vector.shape_cast %305 : vector<1x1x10x128xf32> to vector<10x128xf32>
    %307 = vector.shape_cast %304 : vector<10x128xf32> to vector<1x1x10x128xf32>
    tpu.vector_store %arg17[%c1_164, %c1_165, %c70_166, %c0_167], %307 {strides = array<i32>} : memref<2x2x136x128xf32, #tpu.memory_space<vmem>>, vector<1x1x10x128xf32>,
    %c1280 = arith.constant 1280 : index
    %c0_168 = arith.constant 0 : index
    %308 = vector.load %arg1[%c1280, %c0_168] : memref<2080x128xbf16, #tpu.memory_space<vmem>>, vector<160x128xbf16>
    %cst_169 = arith.constant dense<0.000000e+00> : vector<160x128xf32>
    %309 = tpu.matmul %308, %18, %cst_169 {dimension_numbers = #tpu.dot_dimension_numbers<[1], [0], [0], [1], [0, 0, 1, 1], [], []>} : vector<160x128xbf16>, vector<128x128xbf16>, vector<160x128xf32> -> vector<160x128xf32>
    %310 = vector.broadcast %19 : vector<1x128xf32> to vector<160x128xf32>
    %311 = arith.addf %309, %310 : vector<160x128xf32>
    %cst_170 = arith.constant 0.000000e+00 : f32
    %312 = vector.broadcast %cst_170 : f32 to vector<160x128xf32>
    %313 = arith.maximumf %311, %312 : vector<160x128xf32>
    %314 = vector.extract_strided_slice %313 {offsets = [0, 0], sizes = [20, 128], strides = [1, 1]} : vector<160x128xf32> to vector<20x128xf32>
    %315 = vector.extract_strided_slice %313 {offsets = [20, 0], sizes = [20, 128], strides = [1, 1]} : vector<160x128xf32> to vector<20x128xf32>
    %316 = arith.maximumf %314, %315 : vector<20x128xf32>
    %317 = vector.extract_strided_slice %313 {offsets = [40, 0], sizes = [20, 128], strides = [1, 1]} : vector<160x128xf32> to vector<20x128xf32>
    %318 = vector.extract_strided_slice %313 {offsets = [60, 0], sizes = [20, 128], strides = [1, 1]} : vector<160x128xf32> to vector<20x128xf32>
    %319 = arith.maximumf %317, %318 : vector<20x128xf32>
    %320 = arith.maximumf %316, %319 : vector<20x128xf32>
    %321 = vector.extract_strided_slice %320 {offsets = [0, 0], sizes = [10, 128], strides = [1, 1]} : vector<20x128xf32> to vector<10x128xf32>
    %c0_171 = arith.constant 0 : index
    %c0_172 = arith.constant 0 : index
    %c80 = arith.constant 80 : index
    %c0_173 = arith.constant 0 : index
    %322 = vector.load %arg17[%c0_171, %c0_172, %c80, %c0_173] : memref<2x2x136x128xf32, #tpu.memory_space<vmem>>, vector<1x1x10x128xf32>
    %323 = vector.shape_cast %322 : vector<1x1x10x128xf32> to vector<10x128xf32>
    %324 = vector.shape_cast %321 : vector<10x128xf32> to vector<1x1x10x128xf32>
    tpu.vector_store %arg17[%c0_171, %c0_172, %c80, %c0_173], %324 {strides = array<i32>} : memref<2x2x136x128xf32, #tpu.memory_space<vmem>>, vector<1x1x10x128xf32>,
    %325 = vector.extract_strided_slice %320 {offsets = [10, 0], sizes = [10, 128], strides = [1, 1]} : vector<20x128xf32> to vector<10x128xf32>
    %c0_174 = arith.constant 0 : index
    %c1_175 = arith.constant 1 : index
    %c80_176 = arith.constant 80 : index
    %c0_177 = arith.constant 0 : index
    %326 = vector.load %arg17[%c0_174, %c1_175, %c80_176, %c0_177] : memref<2x2x136x128xf32, #tpu.memory_space<vmem>>, vector<1x1x10x128xf32>
    %327 = vector.shape_cast %326 : vector<1x1x10x128xf32> to vector<10x128xf32>
    %328 = vector.shape_cast %325 : vector<10x128xf32> to vector<1x1x10x128xf32>
    tpu.vector_store %arg17[%c0_174, %c1_175, %c80_176, %c0_177], %328 {strides = array<i32>} : memref<2x2x136x128xf32, #tpu.memory_space<vmem>>, vector<1x1x10x128xf32>,
    %329 = vector.extract_strided_slice %313 {offsets = [80, 0], sizes = [20, 128], strides = [1, 1]} : vector<160x128xf32> to vector<20x128xf32>
    %330 = vector.extract_strided_slice %313 {offsets = [100, 0], sizes = [20, 128], strides = [1, 1]} : vector<160x128xf32> to vector<20x128xf32>
    %331 = arith.maximumf %329, %330 : vector<20x128xf32>
    %332 = vector.extract_strided_slice %313 {offsets = [120, 0], sizes = [20, 128], strides = [1, 1]} : vector<160x128xf32> to vector<20x128xf32>
    %333 = vector.extract_strided_slice %313 {offsets = [140, 0], sizes = [20, 128], strides = [1, 1]} : vector<160x128xf32> to vector<20x128xf32>
    %334 = arith.maximumf %332, %333 : vector<20x128xf32>
    %335 = arith.maximumf %331, %334 : vector<20x128xf32>
    %336 = vector.extract_strided_slice %335 {offsets = [0, 0], sizes = [10, 128], strides = [1, 1]} : vector<20x128xf32> to vector<10x128xf32>
    %c1_178 = arith.constant 1 : index
    %c0_179 = arith.constant 0 : index
    %c80_180 = arith.constant 80 : index
    %c0_181 = arith.constant 0 : index
    %337 = vector.load %arg17[%c1_178, %c0_179, %c80_180, %c0_181] : memref<2x2x136x128xf32, #tpu.memory_space<vmem>>, vector<1x1x10x128xf32>
    %338 = vector.shape_cast %337 : vector<1x1x10x128xf32> to vector<10x128xf32>
    %339 = vector.shape_cast %336 : vector<10x128xf32> to vector<1x1x10x128xf32>
    tpu.vector_store %arg17[%c1_178, %c0_179, %c80_180, %c0_181], %339 {strides = array<i32>} : memref<2x2x136x128xf32, #tpu.memory_space<vmem>>, vector<1x1x10x128xf32>,
    %340 = vector.extract_strided_slice %335 {offsets = [10, 0], sizes = [10, 128], strides = [1, 1]} : vector<20x128xf32> to vector<10x128xf32>
    %c1_182 = arith.constant 1 : index
    %c1_183 = arith.constant 1 : index
    %c80_184 = arith.constant 80 : index
    %c0_185 = arith.constant 0 : index
    %341 = vector.load %arg17[%c1_182, %c1_183, %c80_184, %c0_185] : memref<2x2x136x128xf32, #tpu.memory_space<vmem>>, vector<1x1x10x128xf32>
    %342 = vector.shape_cast %341 : vector<1x1x10x128xf32> to vector<10x128xf32>
    %343 = vector.shape_cast %340 : vector<10x128xf32> to vector<1x1x10x128xf32>
    tpu.vector_store %arg17[%c1_182, %c1_183, %c80_184, %c0_185], %343 {strides = array<i32>} : memref<2x2x136x128xf32, #tpu.memory_space<vmem>>, vector<1x1x10x128xf32>,
    %c1440 = arith.constant 1440 : index
    %c0_186 = arith.constant 0 : index
    %344 = vector.load %arg1[%c1440, %c0_186] : memref<2080x128xbf16, #tpu.memory_space<vmem>>, vector<160x128xbf16>
    %cst_187 = arith.constant dense<0.000000e+00> : vector<160x128xf32>
    %345 = tpu.matmul %344, %18, %cst_187 {dimension_numbers = #tpu.dot_dimension_numbers<[1], [0], [0], [1], [0, 0, 1, 1], [], []>} : vector<160x128xbf16>, vector<128x128xbf16>, vector<160x128xf32> -> vector<160x128xf32>
    %346 = vector.broadcast %19 : vector<1x128xf32> to vector<160x128xf32>
    %347 = arith.addf %345, %346 : vector<160x128xf32>
    %cst_188 = arith.constant 0.000000e+00 : f32
    %348 = vector.broadcast %cst_188 : f32 to vector<160x128xf32>
    %349 = arith.maximumf %347, %348 : vector<160x128xf32>
    %350 = vector.extract_strided_slice %349 {offsets = [0, 0], sizes = [20, 128], strides = [1, 1]} : vector<160x128xf32> to vector<20x128xf32>
    %351 = vector.extract_strided_slice %349 {offsets = [20, 0], sizes = [20, 128], strides = [1, 1]} : vector<160x128xf32> to vector<20x128xf32>
    %352 = arith.maximumf %350, %351 : vector<20x128xf32>
    %353 = vector.extract_strided_slice %349 {offsets = [40, 0], sizes = [20, 128], strides = [1, 1]} : vector<160x128xf32> to vector<20x128xf32>
    %354 = vector.extract_strided_slice %349 {offsets = [60, 0], sizes = [20, 128], strides = [1, 1]} : vector<160x128xf32> to vector<20x128xf32>
    %355 = arith.maximumf %353, %354 : vector<20x128xf32>
    %356 = arith.maximumf %352, %355 : vector<20x128xf32>
    %357 = vector.extract_strided_slice %356 {offsets = [0, 0], sizes = [10, 128], strides = [1, 1]} : vector<20x128xf32> to vector<10x128xf32>
    %c0_189 = arith.constant 0 : index
    %c0_190 = arith.constant 0 : index
    %c90 = arith.constant 90 : index
    %c0_191 = arith.constant 0 : index
    %358 = vector.load %arg17[%c0_189, %c0_190, %c90, %c0_191] : memref<2x2x136x128xf32, #tpu.memory_space<vmem>>, vector<1x1x10x128xf32>
    %359 = vector.shape_cast %358 : vector<1x1x10x128xf32> to vector<10x128xf32>
    %360 = vector.shape_cast %357 : vector<10x128xf32> to vector<1x1x10x128xf32>
    tpu.vector_store %arg17[%c0_189, %c0_190, %c90, %c0_191], %360 {strides = array<i32>} : memref<2x2x136x128xf32, #tpu.memory_space<vmem>>, vector<1x1x10x128xf32>,
    %361 = vector.extract_strided_slice %356 {offsets = [10, 0], sizes = [10, 128], strides = [1, 1]} : vector<20x128xf32> to vector<10x128xf32>
    %c0_192 = arith.constant 0 : index
    %c1_193 = arith.constant 1 : index
    %c90_194 = arith.constant 90 : index
    %c0_195 = arith.constant 0 : index
    %362 = vector.load %arg17[%c0_192, %c1_193, %c90_194, %c0_195] : memref<2x2x136x128xf32, #tpu.memory_space<vmem>>, vector<1x1x10x128xf32>
    %363 = vector.shape_cast %362 : vector<1x1x10x128xf32> to vector<10x128xf32>
    %364 = vector.shape_cast %361 : vector<10x128xf32> to vector<1x1x10x128xf32>
    tpu.vector_store %arg17[%c0_192, %c1_193, %c90_194, %c0_195], %364 {strides = array<i32>} : memref<2x2x136x128xf32, #tpu.memory_space<vmem>>, vector<1x1x10x128xf32>,
    %365 = vector.extract_strided_slice %349 {offsets = [80, 0], sizes = [20, 128], strides = [1, 1]} : vector<160x128xf32> to vector<20x128xf32>
    %366 = vector.extract_strided_slice %349 {offsets = [100, 0], sizes = [20, 128], strides = [1, 1]} : vector<160x128xf32> to vector<20x128xf32>
    %367 = arith.maximumf %365, %366 : vector<20x128xf32>
    %368 = vector.extract_strided_slice %349 {offsets = [120, 0], sizes = [20, 128], strides = [1, 1]} : vector<160x128xf32> to vector<20x128xf32>
    %369 = vector.extract_strided_slice %349 {offsets = [140, 0], sizes = [20, 128], strides = [1, 1]} : vector<160x128xf32> to vector<20x128xf32>
    %370 = arith.maximumf %368, %369 : vector<20x128xf32>
    %371 = arith.maximumf %367, %370 : vector<20x128xf32>
    %372 = vector.extract_strided_slice %371 {offsets = [0, 0], sizes = [10, 128], strides = [1, 1]} : vector<20x128xf32> to vector<10x128xf32>
    %c1_196 = arith.constant 1 : index
    %c0_197 = arith.constant 0 : index
    %c90_198 = arith.constant 90 : index
    %c0_199 = arith.constant 0 : index
    %373 = vector.load %arg17[%c1_196, %c0_197, %c90_198, %c0_199] : memref<2x2x136x128xf32, #tpu.memory_space<vmem>>, vector<1x1x10x128xf32>
    %374 = vector.shape_cast %373 : vector<1x1x10x128xf32> to vector<10x128xf32>
    %375 = vector.shape_cast %372 : vector<10x128xf32> to vector<1x1x10x128xf32>
    tpu.vector_store %arg17[%c1_196, %c0_197, %c90_198, %c0_199], %375 {strides = array<i32>} : memref<2x2x136x128xf32, #tpu.memory_space<vmem>>, vector<1x1x10x128xf32>,
    %376 = vector.extract_strided_slice %371 {offsets = [10, 0], sizes = [10, 128], strides = [1, 1]} : vector<20x128xf32> to vector<10x128xf32>
    %c1_200 = arith.constant 1 : index
    %c1_201 = arith.constant 1 : index
    %c90_202 = arith.constant 90 : index
    %c0_203 = arith.constant 0 : index
    %377 = vector.load %arg17[%c1_200, %c1_201, %c90_202, %c0_203] : memref<2x2x136x128xf32, #tpu.memory_space<vmem>>, vector<1x1x10x128xf32>
    %378 = vector.shape_cast %377 : vector<1x1x10x128xf32> to vector<10x128xf32>
    %379 = vector.shape_cast %376 : vector<10x128xf32> to vector<1x1x10x128xf32>
    tpu.vector_store %arg17[%c1_200, %c1_201, %c90_202, %c0_203], %379 {strides = array<i32>} : memref<2x2x136x128xf32, #tpu.memory_space<vmem>>, vector<1x1x10x128xf32>,
    %c1600 = arith.constant 1600 : index
    %c0_204 = arith.constant 0 : index
    %380 = vector.load %arg1[%c1600, %c0_204] : memref<2080x128xbf16, #tpu.memory_space<vmem>>, vector<160x128xbf16>
    %cst_205 = arith.constant dense<0.000000e+00> : vector<160x128xf32>
    %381 = tpu.matmul %380, %18, %cst_205 {dimension_numbers = #tpu.dot_dimension_numbers<[1], [0], [0], [1], [0, 0, 1, 1], [], []>} : vector<160x128xbf16>, vector<128x128xbf16>, vector<160x128xf32> -> vector<160x128xf32>
    %382 = vector.broadcast %19 : vector<1x128xf32> to vector<160x128xf32>
    %383 = arith.addf %381, %382 : vector<160x128xf32>
    %cst_206 = arith.constant 0.000000e+00 : f32
    %384 = vector.broadcast %cst_206 : f32 to vector<160x128xf32>
    %385 = arith.maximumf %383, %384 : vector<160x128xf32>
    %386 = vector.extract_strided_slice %385 {offsets = [0, 0], sizes = [20, 128], strides = [1, 1]} : vector<160x128xf32> to vector<20x128xf32>
    %387 = vector.extract_strided_slice %385 {offsets = [20, 0], sizes = [20, 128], strides = [1, 1]} : vector<160x128xf32> to vector<20x128xf32>
    %388 = arith.maximumf %386, %387 : vector<20x128xf32>
    %389 = vector.extract_strided_slice %385 {offsets = [40, 0], sizes = [20, 128], strides = [1, 1]} : vector<160x128xf32> to vector<20x128xf32>
    %390 = vector.extract_strided_slice %385 {offsets = [60, 0], sizes = [20, 128], strides = [1, 1]} : vector<160x128xf32> to vector<20x128xf32>
    %391 = arith.maximumf %389, %390 : vector<20x128xf32>
    %392 = arith.maximumf %388, %391 : vector<20x128xf32>
    %393 = vector.extract_strided_slice %392 {offsets = [0, 0], sizes = [10, 128], strides = [1, 1]} : vector<20x128xf32> to vector<10x128xf32>
    %c0_207 = arith.constant 0 : index
    %c0_208 = arith.constant 0 : index
    %c100 = arith.constant 100 : index
    %c0_209 = arith.constant 0 : index
    %394 = vector.load %arg17[%c0_207, %c0_208, %c100, %c0_209] : memref<2x2x136x128xf32, #tpu.memory_space<vmem>>, vector<1x1x10x128xf32>
    %395 = vector.shape_cast %394 : vector<1x1x10x128xf32> to vector<10x128xf32>
    %396 = vector.shape_cast %393 : vector<10x128xf32> to vector<1x1x10x128xf32>
    tpu.vector_store %arg17[%c0_207, %c0_208, %c100, %c0_209], %396 {strides = array<i32>} : memref<2x2x136x128xf32, #tpu.memory_space<vmem>>, vector<1x1x10x128xf32>,
    %397 = vector.extract_strided_slice %392 {offsets = [10, 0], sizes = [10, 128], strides = [1, 1]} : vector<20x128xf32> to vector<10x128xf32>
    %c0_210 = arith.constant 0 : index
    %c1_211 = arith.constant 1 : index
    %c100_212 = arith.constant 100 : index
    %c0_213 = arith.constant 0 : index
    %398 = vector.load %arg17[%c0_210, %c1_211, %c100_212, %c0_213] : memref<2x2x136x128xf32, #tpu.memory_space<vmem>>, vector<1x1x10x128xf32>
    %399 = vector.shape_cast %398 : vector<1x1x10x128xf32> to vector<10x128xf32>
    %400 = vector.shape_cast %397 : vector<10x128xf32> to vector<1x1x10x128xf32>
    tpu.vector_store %arg17[%c0_210, %c1_211, %c100_212, %c0_213], %400 {strides = array<i32>} : memref<2x2x136x128xf32, #tpu.memory_space<vmem>>, vector<1x1x10x128xf32>,
    %401 = vector.extract_strided_slice %385 {offsets = [80, 0], sizes = [20, 128], strides = [1, 1]} : vector<160x128xf32> to vector<20x128xf32>
    %402 = vector.extract_strided_slice %385 {offsets = [100, 0], sizes = [20, 128], strides = [1, 1]} : vector<160x128xf32> to vector<20x128xf32>
    %403 = arith.maximumf %401, %402 : vector<20x128xf32>
    %404 = vector.extract_strided_slice %385 {offsets = [120, 0], sizes = [20, 128], strides = [1, 1]} : vector<160x128xf32> to vector<20x128xf32>
    %405 = vector.extract_strided_slice %385 {offsets = [140, 0], sizes = [20, 128], strides = [1, 1]} : vector<160x128xf32> to vector<20x128xf32>
    %406 = arith.maximumf %404, %405 : vector<20x128xf32>
    %407 = arith.maximumf %403, %406 : vector<20x128xf32>
    %408 = vector.extract_strided_slice %407 {offsets = [0, 0], sizes = [10, 128], strides = [1, 1]} : vector<20x128xf32> to vector<10x128xf32>
    %c1_214 = arith.constant 1 : index
    %c0_215 = arith.constant 0 : index
    %c100_216 = arith.constant 100 : index
    %c0_217 = arith.constant 0 : index
    %409 = vector.load %arg17[%c1_214, %c0_215, %c100_216, %c0_217] : memref<2x2x136x128xf32, #tpu.memory_space<vmem>>, vector<1x1x10x128xf32>
    %410 = vector.shape_cast %409 : vector<1x1x10x128xf32> to vector<10x128xf32>
    %411 = vector.shape_cast %408 : vector<10x128xf32> to vector<1x1x10x128xf32>
    tpu.vector_store %arg17[%c1_214, %c0_215, %c100_216, %c0_217], %411 {strides = array<i32>} : memref<2x2x136x128xf32, #tpu.memory_space<vmem>>, vector<1x1x10x128xf32>,
    %412 = vector.extract_strided_slice %407 {offsets = [10, 0], sizes = [10, 128], strides = [1, 1]} : vector<20x128xf32> to vector<10x128xf32>
    %c1_218 = arith.constant 1 : index
    %c1_219 = arith.constant 1 : index
    %c100_220 = arith.constant 100 : index
    %c0_221 = arith.constant 0 : index
    %413 = vector.load %arg17[%c1_218, %c1_219, %c100_220, %c0_221] : memref<2x2x136x128xf32, #tpu.memory_space<vmem>>, vector<1x1x10x128xf32>
    %414 = vector.shape_cast %413 : vector<1x1x10x128xf32> to vector<10x128xf32>
    %415 = vector.shape_cast %412 : vector<10x128xf32> to vector<1x1x10x128xf32>
    tpu.vector_store %arg17[%c1_218, %c1_219, %c100_220, %c0_221], %415 {strides = array<i32>} : memref<2x2x136x128xf32, #tpu.memory_space<vmem>>, vector<1x1x10x128xf32>,
    %c1760 = arith.constant 1760 : index
    %c0_222 = arith.constant 0 : index
    %416 = vector.load %arg1[%c1760, %c0_222] : memref<2080x128xbf16, #tpu.memory_space<vmem>>, vector<160x128xbf16>
    %cst_223 = arith.constant dense<0.000000e+00> : vector<160x128xf32>
    %417 = tpu.matmul %416, %18, %cst_223 {dimension_numbers = #tpu.dot_dimension_numbers<[1], [0], [0], [1], [0, 0, 1, 1], [], []>} : vector<160x128xbf16>, vector<128x128xbf16>, vector<160x128xf32> -> vector<160x128xf32>
    %418 = vector.broadcast %19 : vector<1x128xf32> to vector<160x128xf32>
    %419 = arith.addf %417, %418 : vector<160x128xf32>
    %cst_224 = arith.constant 0.000000e+00 : f32
    %420 = vector.broadcast %cst_224 : f32 to vector<160x128xf32>
    %421 = arith.maximumf %419, %420 : vector<160x128xf32>
    %422 = vector.extract_strided_slice %421 {offsets = [0, 0], sizes = [20, 128], strides = [1, 1]} : vector<160x128xf32> to vector<20x128xf32>
    %423 = vector.extract_strided_slice %421 {offsets = [20, 0], sizes = [20, 128], strides = [1, 1]} : vector<160x128xf32> to vector<20x128xf32>
    %424 = arith.maximumf %422, %423 : vector<20x128xf32>
    %425 = vector.extract_strided_slice %421 {offsets = [40, 0], sizes = [20, 128], strides = [1, 1]} : vector<160x128xf32> to vector<20x128xf32>
    %426 = vector.extract_strided_slice %421 {offsets = [60, 0], sizes = [20, 128], strides = [1, 1]} : vector<160x128xf32> to vector<20x128xf32>
    %427 = arith.maximumf %425, %426 : vector<20x128xf32>
    %428 = arith.maximumf %424, %427 : vector<20x128xf32>
    %429 = vector.extract_strided_slice %428 {offsets = [0, 0], sizes = [10, 128], strides = [1, 1]} : vector<20x128xf32> to vector<10x128xf32>
    %c0_225 = arith.constant 0 : index
    %c0_226 = arith.constant 0 : index
    %c110 = arith.constant 110 : index
    %c0_227 = arith.constant 0 : index
    %430 = vector.load %arg17[%c0_225, %c0_226, %c110, %c0_227] : memref<2x2x136x128xf32, #tpu.memory_space<vmem>>, vector<1x1x10x128xf32>
    %431 = vector.shape_cast %430 : vector<1x1x10x128xf32> to vector<10x128xf32>
    %432 = vector.shape_cast %429 : vector<10x128xf32> to vector<1x1x10x128xf32>
    tpu.vector_store %arg17[%c0_225, %c0_226, %c110, %c0_227], %432 {strides = array<i32>} : memref<2x2x136x128xf32, #tpu.memory_space<vmem>>, vector<1x1x10x128xf32>,
    %433 = vector.extract_strided_slice %428 {offsets = [10, 0], sizes = [10, 128], strides = [1, 1]} : vector<20x128xf32> to vector<10x128xf32>
    %c0_228 = arith.constant 0 : index
    %c1_229 = arith.constant 1 : index
    %c110_230 = arith.constant 110 : index
    %c0_231 = arith.constant 0 : index
    %434 = vector.load %arg17[%c0_228, %c1_229, %c110_230, %c0_231] : memref<2x2x136x128xf32, #tpu.memory_space<vmem>>, vector<1x1x10x128xf32>
    %435 = vector.shape_cast %434 : vector<1x1x10x128xf32> to vector<10x128xf32>
    %436 = vector.shape_cast %433 : vector<10x128xf32> to vector<1x1x10x128xf32>
    tpu.vector_store %arg17[%c0_228, %c1_229, %c110_230, %c0_231], %436 {strides = array<i32>} : memref<2x2x136x128xf32, #tpu.memory_space<vmem>>, vector<1x1x10x128xf32>,
    %437 = vector.extract_strided_slice %421 {offsets = [80, 0], sizes = [20, 128], strides = [1, 1]} : vector<160x128xf32> to vector<20x128xf32>
    %438 = vector.extract_strided_slice %421 {offsets = [100, 0], sizes = [20, 128], strides = [1, 1]} : vector<160x128xf32> to vector<20x128xf32>
    %439 = arith.maximumf %437, %438 : vector<20x128xf32>
    %440 = vector.extract_strided_slice %421 {offsets = [120, 0], sizes = [20, 128], strides = [1, 1]} : vector<160x128xf32> to vector<20x128xf32>
    %441 = vector.extract_strided_slice %421 {offsets = [140, 0], sizes = [20, 128], strides = [1, 1]} : vector<160x128xf32> to vector<20x128xf32>
    %442 = arith.maximumf %440, %441 : vector<20x128xf32>
    %443 = arith.maximumf %439, %442 : vector<20x128xf32>
    %444 = vector.extract_strided_slice %443 {offsets = [0, 0], sizes = [10, 128], strides = [1, 1]} : vector<20x128xf32> to vector<10x128xf32>
    %c1_232 = arith.constant 1 : index
    %c0_233 = arith.constant 0 : index
    %c110_234 = arith.constant 110 : index
    %c0_235 = arith.constant 0 : index
    %445 = vector.load %arg17[%c1_232, %c0_233, %c110_234, %c0_235] : memref<2x2x136x128xf32, #tpu.memory_space<vmem>>, vector<1x1x10x128xf32>
    %446 = vector.shape_cast %445 : vector<1x1x10x128xf32> to vector<10x128xf32>
    %447 = vector.shape_cast %444 : vector<10x128xf32> to vector<1x1x10x128xf32>
    tpu.vector_store %arg17[%c1_232, %c0_233, %c110_234, %c0_235], %447 {strides = array<i32>} : memref<2x2x136x128xf32, #tpu.memory_space<vmem>>, vector<1x1x10x128xf32>,
    %448 = vector.extract_strided_slice %443 {offsets = [10, 0], sizes = [10, 128], strides = [1, 1]} : vector<20x128xf32> to vector<10x128xf32>
    %c1_236 = arith.constant 1 : index
    %c1_237 = arith.constant 1 : index
    %c110_238 = arith.constant 110 : index
    %c0_239 = arith.constant 0 : index
    %449 = vector.load %arg17[%c1_236, %c1_237, %c110_238, %c0_239] : memref<2x2x136x128xf32, #tpu.memory_space<vmem>>, vector<1x1x10x128xf32>
    %450 = vector.shape_cast %449 : vector<1x1x10x128xf32> to vector<10x128xf32>
    %451 = vector.shape_cast %448 : vector<10x128xf32> to vector<1x1x10x128xf32>
    tpu.vector_store %arg17[%c1_236, %c1_237, %c110_238, %c0_239], %451 {strides = array<i32>} : memref<2x2x136x128xf32, #tpu.memory_space<vmem>>, vector<1x1x10x128xf32>,
    %c1920 = arith.constant 1920 : index
    %c0_240 = arith.constant 0 : index
    %452 = vector.load %arg1[%c1920, %c0_240] : memref<2080x128xbf16, #tpu.memory_space<vmem>>, vector<160x128xbf16>
    %cst_241 = arith.constant dense<0.000000e+00> : vector<160x128xf32>
    %453 = tpu.matmul %452, %18, %cst_241 {dimension_numbers = #tpu.dot_dimension_numbers<[1], [0], [0], [1], [0, 0, 1, 1], [], []>} : vector<160x128xbf16>, vector<128x128xbf16>, vector<160x128xf32> -> vector<160x128xf32>
    %454 = vector.broadcast %19 : vector<1x128xf32> to vector<160x128xf32>
    %455 = arith.addf %453, %454 : vector<160x128xf32>
    %cst_242 = arith.constant 0.000000e+00 : f32
    %456 = vector.broadcast %cst_242 : f32 to vector<160x128xf32>
    %457 = arith.maximumf %455, %456 : vector<160x128xf32>
    %458 = vector.extract_strided_slice %457 {offsets = [0, 0], sizes = [20, 128], strides = [1, 1]} : vector<160x128xf32> to vector<20x128xf32>
    %459 = vector.extract_strided_slice %457 {offsets = [20, 0], sizes = [20, 128], strides = [1, 1]} : vector<160x128xf32> to vector<20x128xf32>
    %460 = arith.maximumf %458, %459 : vector<20x128xf32>
    %461 = vector.extract_strided_slice %457 {offsets = [40, 0], sizes = [20, 128], strides = [1, 1]} : vector<160x128xf32> to vector<20x128xf32>
    %462 = vector.extract_strided_slice %457 {offsets = [60, 0], sizes = [20, 128], strides = [1, 1]} : vector<160x128xf32> to vector<20x128xf32>
    %463 = arith.maximumf %461, %462 : vector<20x128xf32>
    %464 = arith.maximumf %460, %463 : vector<20x128xf32>
    %465 = vector.extract_strided_slice %464 {offsets = [0, 0], sizes = [10, 128], strides = [1, 1]} : vector<20x128xf32> to vector<10x128xf32>
    %c0_243 = arith.constant 0 : index
    %c0_244 = arith.constant 0 : index
    %c120_245 = arith.constant 120 : index
    %c0_246 = arith.constant 0 : index
    %466 = vector.load %arg17[%c0_243, %c0_244, %c120_245, %c0_246] : memref<2x2x136x128xf32, #tpu.memory_space<vmem>>, vector<1x1x10x128xf32>
    %467 = vector.shape_cast %466 : vector<1x1x10x128xf32> to vector<10x128xf32>
    %468 = vector.shape_cast %465 : vector<10x128xf32> to vector<1x1x10x128xf32>
    tpu.vector_store %arg17[%c0_243, %c0_244, %c120_245, %c0_246], %468 {strides = array<i32>} : memref<2x2x136x128xf32, #tpu.memory_space<vmem>>, vector<1x1x10x128xf32>,
    %469 = vector.extract_strided_slice %464 {offsets = [10, 0], sizes = [10, 128], strides = [1, 1]} : vector<20x128xf32> to vector<10x128xf32>
    %c0_247 = arith.constant 0 : index
    %c1_248 = arith.constant 1 : index
    %c120_249 = arith.constant 120 : index
    %c0_250 = arith.constant 0 : index
    %470 = vector.load %arg17[%c0_247, %c1_248, %c120_249, %c0_250] : memref<2x2x136x128xf32, #tpu.memory_space<vmem>>, vector<1x1x10x128xf32>
    %471 = vector.shape_cast %470 : vector<1x1x10x128xf32> to vector<10x128xf32>
    %472 = vector.shape_cast %469 : vector<10x128xf32> to vector<1x1x10x128xf32>
    tpu.vector_store %arg17[%c0_247, %c1_248, %c120_249, %c0_250], %472 {strides = array<i32>} : memref<2x2x136x128xf32, #tpu.memory_space<vmem>>, vector<1x1x10x128xf32>,
    %473 = vector.extract_strided_slice %457 {offsets = [80, 0], sizes = [20, 128], strides = [1, 1]} : vector<160x128xf32> to vector<20x128xf32>
    %474 = vector.extract_strided_slice %457 {offsets = [100, 0], sizes = [20, 128], strides = [1, 1]} : vector<160x128xf32> to vector<20x128xf32>
    %475 = arith.maximumf %473, %474 : vector<20x128xf32>
    %476 = vector.extract_strided_slice %457 {offsets = [120, 0], sizes = [20, 128], strides = [1, 1]} : vector<160x128xf32> to vector<20x128xf32>
    %477 = vector.extract_strided_slice %457 {offsets = [140, 0], sizes = [20, 128], strides = [1, 1]} : vector<160x128xf32> to vector<20x128xf32>
    %478 = arith.maximumf %476, %477 : vector<20x128xf32>
    %479 = arith.maximumf %475, %478 : vector<20x128xf32>
    %480 = vector.extract_strided_slice %479 {offsets = [0, 0], sizes = [10, 128], strides = [1, 1]} : vector<20x128xf32> to vector<10x128xf32>
    %c1_251 = arith.constant 1 : index
    %c0_252 = arith.constant 0 : index
    %c120_253 = arith.constant 120 : index
    %c0_254 = arith.constant 0 : index
    %481 = vector.load %arg17[%c1_251, %c0_252, %c120_253, %c0_254] : memref<2x2x136x128xf32, #tpu.memory_space<vmem>>, vector<1x1x10x128xf32>
    %482 = vector.shape_cast %481 : vector<1x1x10x128xf32> to vector<10x128xf32>
    %483 = vector.shape_cast %480 : vector<10x128xf32> to vector<1x1x10x128xf32>
    tpu.vector_store %arg17[%c1_251, %c0_252, %c120_253, %c0_254], %483 {strides = array<i32>} : memref<2x2x136x128xf32, #tpu.memory_space<vmem>>, vector<1x1x10x128xf32>,
    %484 = vector.extract_strided_slice %479 {offsets = [10, 0], sizes = [10, 128], strides = [1, 1]} : vector<20x128xf32> to vector<10x128xf32>
    %c1_255 = arith.constant 1 : index
    %c1_256 = arith.constant 1 : index
    %c120_257 = arith.constant 120 : index
    %c0_258 = arith.constant 0 : index
    %485 = vector.load %arg17[%c1_255, %c1_256, %c120_257, %c0_258] : memref<2x2x136x128xf32, #tpu.memory_space<vmem>>, vector<1x1x10x128xf32>
    %486 = vector.shape_cast %485 : vector<1x1x10x128xf32> to vector<10x128xf32>
    %487 = vector.shape_cast %484 : vector<10x128xf32> to vector<1x1x10x128xf32>
    tpu.vector_store %arg17[%c1_255, %c1_256, %c120_257, %c0_258], %487 {strides = array<i32>} : memref<2x2x136x128xf32, #tpu.memory_space<vmem>>, vector<1x1x10x128xf32>,
    %c0_259 = arith.constant 0 : index
    %c0_260 = arith.constant 0 : index
    %c0_261 = arith.constant 0 : index
    %c0_262 = arith.constant 0 : index
    %488 = vector.load %arg17[%c0_259, %c0_260, %c0_261, %c0_262] : memref<2x2x136x128xf32, #tpu.memory_space<vmem>>, vector<1x1x120x128xf32>
    %489 = vector.shape_cast %488 : vector<1x1x120x128xf32> to vector<120x128xf32>
    %490 = arith.truncf %489 : vector<120x128xf32> to vector<120x128xbf16>
    %c0_263 = arith.constant 0 : index
    %c0_264 = arith.constant 0 : index
    %491 = vector.load %arg18[%c0_263, %c0_264] : memref<128x1152xbf16, #tpu.memory_space<vmem>>, vector<120x128xbf16>
    tpu.vector_store %arg18[%c0_263, %c0_264], %490 {strides = array<i32>} : memref<128x1152xbf16, #tpu.memory_space<vmem>>, vector<120x128xbf16>,
    %c0_265 = arith.constant 0 : index
    %c1_266 = arith.constant 1 : index
    %c0_267 = arith.constant 0 : index
    %c0_268 = arith.constant 0 : index
    %492 = vector.load %arg17[%c0_265, %c1_266, %c0_267, %c0_268] : memref<2x2x136x128xf32, #tpu.memory_space<vmem>>, vector<1x1x120x128xf32>
    %493 = vector.shape_cast %492 : vector<1x1x120x128xf32> to vector<120x128xf32>
    %494 = arith.truncf %493 : vector<120x128xf32> to vector<120x128xbf16>
    %c0_269 = arith.constant 0 : index
    %c128_270 = arith.constant 128 : index
    %495 = vector.load %arg18[%c0_269, %c128_270] : memref<128x1152xbf16, #tpu.memory_space<vmem>>, vector<120x128xbf16>
    tpu.vector_store %arg18[%c0_269, %c128_270], %494 {strides = array<i32>} : memref<128x1152xbf16, #tpu.memory_space<vmem>>, vector<120x128xbf16>,
    %c0_271 = arith.constant 0 : index
    %c0_272 = arith.constant 0 : index
    %c1_273 = arith.constant 1 : index
    %c0_274 = arith.constant 0 : index
    %496 = vector.load %arg17[%c0_271, %c0_272, %c1_273, %c0_274] : memref<2x2x136x128xf32, #tpu.memory_space<vmem>>, vector<1x1x120x128xf32>
    %497 = vector.shape_cast %496 : vector<1x1x120x128xf32> to vector<120x128xf32>
    %498 = arith.truncf %497 : vector<120x128xf32> to vector<120x128xbf16>
    %c0_275 = arith.constant 0 : index
    %c256 = arith.constant 256 : index
    %499 = vector.load %arg18[%c0_275, %c256] : memref<128x1152xbf16, #tpu.memory_space<vmem>>, vector<120x128xbf16>
    tpu.vector_store %arg18[%c0_275, %c256], %498 {strides = array<i32>} : memref<128x1152xbf16, #tpu.memory_space<vmem>>, vector<120x128xbf16>,
    %c1_276 = arith.constant 1 : index
    %c0_277 = arith.constant 0 : index
    %c0_278 = arith.constant 0 : index
    %c0_279 = arith.constant 0 : index
    %500 = vector.load %arg17[%c1_276, %c0_277, %c0_278, %c0_279] : memref<2x2x136x128xf32, #tpu.memory_space<vmem>>, vector<1x1x120x128xf32>
    %501 = vector.shape_cast %500 : vector<1x1x120x128xf32> to vector<120x128xf32>
    %502 = arith.truncf %501 : vector<120x128xf32> to vector<120x128xbf16>
    %c0_280 = arith.constant 0 : index
    %c384 = arith.constant 384 : index
    %503 = vector.load %arg18[%c0_280, %c384] : memref<128x1152xbf16, #tpu.memory_space<vmem>>, vector<120x128xbf16>
    tpu.vector_store %arg18[%c0_280, %c384], %502 {strides = array<i32>} : memref<128x1152xbf16, #tpu.memory_space<vmem>>, vector<120x128xbf16>,
    %c1_281 = arith.constant 1 : index
    %c1_282 = arith.constant 1 : index
    %c0_283 = arith.constant 0 : index
    %c0_284 = arith.constant 0 : index
    %504 = vector.load %arg17[%c1_281, %c1_282, %c0_283, %c0_284] : memref<2x2x136x128xf32, #tpu.memory_space<vmem>>, vector<1x1x120x128xf32>
    %505 = vector.shape_cast %504 : vector<1x1x120x128xf32> to vector<120x128xf32>
    %506 = arith.truncf %505 : vector<120x128xf32> to vector<120x128xbf16>
    %c0_285 = arith.constant 0 : index
    %c512 = arith.constant 512 : index
    %507 = vector.load %arg18[%c0_285, %c512] : memref<128x1152xbf16, #tpu.memory_space<vmem>>, vector<120x128xbf16>
    tpu.vector_store %arg18[%c0_285, %c512], %506 {strides = array<i32>} : memref<128x1152xbf16, #tpu.memory_space<vmem>>, vector<120x128xbf16>,
    %c1_286 = arith.constant 1 : index
    %c0_287 = arith.constant 0 : index
    %c1_288 = arith.constant 1 : index
    %c0_289 = arith.constant 0 : index
    %508 = vector.load %arg17[%c1_286, %c0_287, %c1_288, %c0_289] : memref<2x2x136x128xf32, #tpu.memory_space<vmem>>, vector<1x1x120x128xf32>
    %509 = vector.shape_cast %508 : vector<1x1x120x128xf32> to vector<120x128xf32>
    %510 = arith.truncf %509 : vector<120x128xf32> to vector<120x128xbf16>
    %c0_290 = arith.constant 0 : index
    %c640_291 = arith.constant 640 : index
    %511 = vector.load %arg18[%c0_290, %c640_291] : memref<128x1152xbf16, #tpu.memory_space<vmem>>, vector<120x128xbf16>
    tpu.vector_store %arg18[%c0_290, %c640_291], %510 {strides = array<i32>} : memref<128x1152xbf16, #tpu.memory_space<vmem>>, vector<120x128xbf16>,
    %c0_292 = arith.constant 0 : index
    %c0_293 = arith.constant 0 : index
    %c10_294 = arith.constant 10 : index
    %c0_295 = arith.constant 0 : index
    %512 = vector.load %arg17[%c0_292, %c0_293, %c10_294, %c0_295] : memref<2x2x136x128xf32, #tpu.memory_space<vmem>>, vector<1x1x120x128xf32>
    %513 = vector.shape_cast %512 : vector<1x1x120x128xf32> to vector<120x128xf32>
    %514 = arith.truncf %513 : vector<120x128xf32> to vector<120x128xbf16>
    %c0_296 = arith.constant 0 : index
    %c768 = arith.constant 768 : index
    %515 = vector.load %arg18[%c0_296, %c768] : memref<128x1152xbf16, #tpu.memory_space<vmem>>, vector<120x128xbf16>
    tpu.vector_store %arg18[%c0_296, %c768], %514 {strides = array<i32>} : memref<128x1152xbf16, #tpu.memory_space<vmem>>, vector<120x128xbf16>,
    %c0_297 = arith.constant 0 : index
    %c1_298 = arith.constant 1 : index
    %c10_299 = arith.constant 10 : index
    %c0_300 = arith.constant 0 : index
    %516 = vector.load %arg17[%c0_297, %c1_298, %c10_299, %c0_300] : memref<2x2x136x128xf32, #tpu.memory_space<vmem>>, vector<1x1x120x128xf32>
    %517 = vector.shape_cast %516 : vector<1x1x120x128xf32> to vector<120x128xf32>
    %518 = arith.truncf %517 : vector<120x128xf32> to vector<120x128xbf16>
    %c0_301 = arith.constant 0 : index
    %c896 = arith.constant 896 : index
    %519 = vector.load %arg18[%c0_301, %c896] : memref<128x1152xbf16, #tpu.memory_space<vmem>>, vector<120x128xbf16>
    tpu.vector_store %arg18[%c0_301, %c896], %518 {strides = array<i32>} : memref<128x1152xbf16, #tpu.memory_space<vmem>>, vector<120x128xbf16>,
    %c0_302 = arith.constant 0 : index
    %c0_303 = arith.constant 0 : index
    %c11 = arith.constant 11 : index
    %c0_304 = arith.constant 0 : index
    %520 = vector.load %arg17[%c0_302, %c0_303, %c11, %c0_304] : memref<2x2x136x128xf32, #tpu.memory_space<vmem>>, vector<1x1x120x128xf32>
    %521 = vector.shape_cast %520 : vector<1x1x120x128xf32> to vector<120x128xf32>
    %522 = arith.truncf %521 : vector<120x128xf32> to vector<120x128xbf16>
    %c0_305 = arith.constant 0 : index
    %c1024 = arith.constant 1024 : index
    %523 = vector.load %arg18[%c0_305, %c1024] : memref<128x1152xbf16, #tpu.memory_space<vmem>>, vector<120x128xbf16>
    tpu.vector_store %arg18[%c0_305, %c1024], %522 {strides = array<i32>} : memref<128x1152xbf16, #tpu.memory_space<vmem>>, vector<120x128xbf16>,
    %c0_306 = arith.constant 0 : index
    %c0_307 = arith.constant 0 : index
    %524 = vector.load %arg18[%c0_306, %c0_307] : memref<128x1152xbf16, #tpu.memory_space<vmem>>, vector<128x1152xbf16>
    %c0_308 = arith.constant 0 : index
    %c0_309 = arith.constant 0 : index
    %525 = vector.load %arg4[%c0_308, %c0_309] : memref<1152x128xbf16, #tpu.memory_space<vmem>>, vector<1152x128xbf16>
    %cst_310 = arith.constant dense<0.000000e+00> : vector<128x128xf32>
    %526 = tpu.matmul %524, %525, %cst_310 {dimension_numbers = #tpu.dot_dimension_numbers<[1], [0], [0], [1], [0, 0, 1, 1], [], []>} : vector<128x1152xbf16>, vector<1152x128xbf16>, vector<128x128xf32> -> vector<128x128xf32>
    %c0_311 = arith.constant 0 : index
    %c0_312 = arith.constant 0 : index
    %527 = vector.load %arg5[%c0_311, %c0_312] : memref<1x128xf32, #tpu.memory_space<vmem>>, vector<1x128xf32>
    %528 = vector.broadcast %527 : vector<1x128xf32> to vector<128x128xf32>
    %529 = arith.addf %526, %528 : vector<128x128xf32>
    %cst_313 = arith.constant 0.000000e+00 : f32
    %530 = vector.broadcast %cst_313 : f32 to vector<128x128xf32>
    %531 = arith.maximumf %529, %530 : vector<128x128xf32>
    %532 = arith.truncf %531 : vector<128x128xf32> to vector<128x128xbf16>
    %c0_314 = arith.constant 0 : index
    %c0_315 = arith.constant 0 : index
    %c0_316 = arith.constant 0 : index
    %533 = vector.load %arg8[%c0_314, %c0_315, %c0_316] : memref<4x24x128xf32, #tpu.memory_space<vmem>>, vector<1x24x128xf32>
    %534 = vector.shape_cast %533 : vector<1x24x128xf32> to vector<24x128xf32>
    %535 = arith.truncf %534 : vector<24x128xf32> to vector<24x128xbf16>
    %cst_317 = arith.constant dense<0.000000e+00> : vector<24x128xf32>
    %536 = tpu.matmul %535, %532, %cst_317 {dimension_numbers = #tpu.dot_dimension_numbers<[1], [0], [0], [1], [0, 0, 1, 1], [], []>} : vector<24x128xbf16>, vector<128x128xbf16>, vector<24x128xf32> -> vector<24x128xf32>
    %c1_318 = arith.constant 1 : index
    %c0_319 = arith.constant 0 : index
    %c0_320 = arith.constant 0 : index
    %537 = vector.load %arg8[%c1_318, %c0_319, %c0_320] : memref<4x24x128xf32, #tpu.memory_space<vmem>>, vector<1x24x128xf32>
    %538 = vector.shape_cast %537 : vector<1x24x128xf32> to vector<24x128xf32>
    %539 = arith.truncf %538 : vector<24x128xf32> to vector<24x128xbf16>
    %cst_321 = arith.constant dense<0.000000e+00> : vector<24x128xf32>
    %540 = tpu.matmul %539, %532, %cst_321 {dimension_numbers = #tpu.dot_dimension_numbers<[1], [0], [0], [1], [0, 0, 1, 1], [], []>} : vector<24x128xbf16>, vector<128x128xbf16>, vector<24x128xf32> -> vector<24x128xf32>
    %541 = arith.maximumf %536, %540 : vector<24x128xf32>
    %c2 = arith.constant 2 : index
    %c0_322 = arith.constant 0 : index
    %c0_323 = arith.constant 0 : index
    %542 = vector.load %arg8[%c2, %c0_322, %c0_323] : memref<4x24x128xf32, #tpu.memory_space<vmem>>, vector<1x24x128xf32>
    %543 = vector.shape_cast %542 : vector<1x24x128xf32> to vector<24x128xf32>
    %544 = arith.truncf %543 : vector<24x128xf32> to vector<24x128xbf16>
    %cst_324 = arith.constant dense<0.000000e+00> : vector<24x128xf32>
    %545 = tpu.matmul %544, %532, %cst_324 {dimension_numbers = #tpu.dot_dimension_numbers<[1], [0], [0], [1], [0, 0, 1, 1], [], []>} : vector<24x128xbf16>, vector<128x128xbf16>, vector<24x128xf32> -> vector<24x128xf32>
    %546 = arith.maximumf %541, %545 : vector<24x128xf32>
    %c3 = arith.constant 3 : index
    %c0_325 = arith.constant 0 : index
    %c0_326 = arith.constant 0 : index
    %547 = vector.load %arg8[%c3, %c0_325, %c0_326] : memref<4x24x128xf32, #tpu.memory_space<vmem>>, vector<1x24x128xf32>
    %548 = vector.shape_cast %547 : vector<1x24x128xf32> to vector<24x128xf32>
    %549 = arith.truncf %548 : vector<24x128xf32> to vector<24x128xbf16>
    %cst_327 = arith.constant dense<0.000000e+00> : vector<24x128xf32>
    %550 = tpu.matmul %549, %532, %cst_327 {dimension_numbers = #tpu.dot_dimension_numbers<[1], [0], [0], [1], [0, 0, 1, 1], [], []>} : vector<24x128xbf16>, vector<128x128xbf16>, vector<24x128xf32> -> vector<24x128xf32>
    %551 = arith.maximumf %546, %550 : vector<24x128xf32>
    %552 = arith.truncf %551 : vector<24x128xf32> to vector<24x128xbf16>
    %cst_328 = arith.constant 0.000000e+00 : f32
    %553 = vector.broadcast %cst_328 : f32 to vector<1x128xf32>
    %cst_329 = arith.constant 0.000000e+00 : f32
    %554 = vector.broadcast %cst_329 : f32 to vector<1x128xf32>
    %c0_330 = arith.constant 0 : index
    %c0_331 = arith.constant 0 : index
    %c0_332 = arith.constant 0 : index
    %555 = vector.load %arg6[%c0_330, %c0_331, %c0_332] : memref<9x128x128xbf16, #tpu.memory_space<vmem>>, vector<1x128x128xbf16>
    %556 = vector.shape_cast %555 : vector<1x128x128xbf16> to vector<128x128xbf16>
    %cst_333 = arith.constant dense<0.000000e+00> : vector<24x128xf32>
    %557 = tpu.matmul %552, %556, %cst_333 {dimension_numbers = #tpu.dot_dimension_numbers<[1], [0], [0], [1], [0, 0, 1, 1], [], []>} : vector<24x128xbf16>, vector<128x128xbf16>, vector<24x128xf32> -> vector<24x128xf32>
    %558 = vector.extract_strided_slice %557 {offsets = [0, 0], sizes = [1, 128], strides = [1, 1]} : vector<24x128xf32> to vector<1x128xf32>
    %559 = arith.addf %553, %558 : vector<1x128xf32>
    %560 = vector.extract_strided_slice %557 {offsets = [8, 0], sizes = [1, 128], strides = [1, 1]} : vector<24x128xf32> to vector<1x128xf32>
    %561 = arith.addf %554, %560 : vector<1x128xf32>
    %c1_334 = arith.constant 1 : index
    %c0_335 = arith.constant 0 : index
    %c0_336 = arith.constant 0 : index
    %562 = vector.load %arg6[%c1_334, %c0_335, %c0_336] : memref<9x128x128xbf16, #tpu.memory_space<vmem>>, vector<1x128x128xbf16>
    %563 = vector.shape_cast %562 : vector<1x128x128xbf16> to vector<128x128xbf16>
    %cst_337 = arith.constant dense<0.000000e+00> : vector<24x128xf32>
    %564 = tpu.matmul %552, %563, %cst_337 {dimension_numbers = #tpu.dot_dimension_numbers<[1], [0], [0], [1], [0, 0, 1, 1], [], []>} : vector<24x128xbf16>, vector<128x128xbf16>, vector<24x128xf32> -> vector<24x128xf32>
    %565 = vector.extract_strided_slice %564 {offsets = [1, 0], sizes = [1, 128], strides = [1, 1]} : vector<24x128xf32> to vector<1x128xf32>
    %566 = arith.addf %559, %565 : vector<1x128xf32>
    %567 = vector.extract_strided_slice %564 {offsets = [9, 0], sizes = [1, 128], strides = [1, 1]} : vector<24x128xf32> to vector<1x128xf32>
    %568 = arith.addf %561, %567 : vector<1x128xf32>
    %c2_338 = arith.constant 2 : index
    %c0_339 = arith.constant 0 : index
    %c0_340 = arith.constant 0 : index
    %569 = vector.load %arg6[%c2_338, %c0_339, %c0_340] : memref<9x128x128xbf16, #tpu.memory_space<vmem>>, vector<1x128x128xbf16>
    %570 = vector.shape_cast %569 : vector<1x128x128xbf16> to vector<128x128xbf16>
    %cst_341 = arith.constant dense<0.000000e+00> : vector<24x128xf32>
    %571 = tpu.matmul %552, %570, %cst_341 {dimension_numbers = #tpu.dot_dimension_numbers<[1], [0], [0], [1], [0, 0, 1, 1], [], []>} : vector<24x128xbf16>, vector<128x128xbf16>, vector<24x128xf32> -> vector<24x128xf32>
    %572 = vector.extract_strided_slice %571 {offsets = [2, 0], sizes = [1, 128], strides = [1, 1]} : vector<24x128xf32> to vector<1x128xf32>
    %573 = arith.addf %566, %572 : vector<1x128xf32>
    %574 = vector.extract_strided_slice %571 {offsets = [10, 0], sizes = [1, 128], strides = [1, 1]} : vector<24x128xf32> to vector<1x128xf32>
    %575 = arith.addf %568, %574 : vector<1x128xf32>
    %c3_342 = arith.constant 3 : index
    %c0_343 = arith.constant 0 : index
    %c0_344 = arith.constant 0 : index
    %576 = vector.load %arg6[%c3_342, %c0_343, %c0_344] : memref<9x128x128xbf16, #tpu.memory_space<vmem>>, vector<1x128x128xbf16>
    %577 = vector.shape_cast %576 : vector<1x128x128xbf16> to vector<128x128xbf16>
    %cst_345 = arith.constant dense<0.000000e+00> : vector<24x128xf32>
    %578 = tpu.matmul %552, %577, %cst_345 {dimension_numbers = #tpu.dot_dimension_numbers<[1], [0], [0], [1], [0, 0, 1, 1], [], []>} : vector<24x128xbf16>, vector<128x128xbf16>, vector<24x128xf32> -> vector<24x128xf32>
    %579 = vector.extract_strided_slice %578 {offsets = [4, 0], sizes = [1, 128], strides = [1, 1]} : vector<24x128xf32> to vector<1x128xf32>
    %580 = arith.addf %573, %579 : vector<1x128xf32>
    %581 = vector.extract_strided_slice %578 {offsets = [12, 0], sizes = [1, 128], strides = [1, 1]} : vector<24x128xf32> to vector<1x128xf32>
    %582 = arith.addf %575, %581 : vector<1x128xf32>
    %c4 = arith.constant 4 : index
    %c0_346 = arith.constant 0 : index
    %c0_347 = arith.constant 0 : index
    %583 = vector.load %arg6[%c4, %c0_346, %c0_347] : memref<9x128x128xbf16, #tpu.memory_space<vmem>>, vector<1x128x128xbf16>
    %584 = vector.shape_cast %583 : vector<1x128x128xbf16> to vector<128x128xbf16>
    %cst_348 = arith.constant dense<0.000000e+00> : vector<24x128xf32>
    %585 = tpu.matmul %552, %584, %cst_348 {dimension_numbers = #tpu.dot_dimension_numbers<[1], [0], [0], [1], [0, 0, 1, 1], [], []>} : vector<24x128xbf16>, vector<128x128xbf16>, vector<24x128xf32> -> vector<24x128xf32>
    %586 = vector.extract_strided_slice %585 {offsets = [5, 0], sizes = [1, 128], strides = [1, 1]} : vector<24x128xf32> to vector<1x128xf32>
    %587 = arith.addf %580, %586 : vector<1x128xf32>
    %588 = vector.extract_strided_slice %585 {offsets = [13, 0], sizes = [1, 128], strides = [1, 1]} : vector<24x128xf32> to vector<1x128xf32>
    %589 = arith.addf %582, %588 : vector<1x128xf32>
    %c5 = arith.constant 5 : index
    %c0_349 = arith.constant 0 : index
    %c0_350 = arith.constant 0 : index
    %590 = vector.load %arg6[%c5, %c0_349, %c0_350] : memref<9x128x128xbf16, #tpu.memory_space<vmem>>, vector<1x128x128xbf16>
    %591 = vector.shape_cast %590 : vector<1x128x128xbf16> to vector<128x128xbf16>
    %cst_351 = arith.constant dense<0.000000e+00> : vector<24x128xf32>
    %592 = tpu.matmul %552, %591, %cst_351 {dimension_numbers = #tpu.dot_dimension_numbers<[1], [0], [0], [1], [0, 0, 1, 1], [], []>} : vector<24x128xbf16>, vector<128x128xbf16>, vector<24x128xf32> -> vector<24x128xf32>
    %593 = vector.extract_strided_slice %592 {offsets = [6, 0], sizes = [1, 128], strides = [1, 1]} : vector<24x128xf32> to vector<1x128xf32>
    %594 = arith.addf %587, %593 : vector<1x128xf32>
    %595 = vector.extract_strided_slice %592 {offsets = [14, 0], sizes = [1, 128], strides = [1, 1]} : vector<24x128xf32> to vector<1x128xf32>
    %596 = arith.addf %589, %595 : vector<1x128xf32>
    %c6 = arith.constant 6 : index
    %c0_352 = arith.constant 0 : index
    %c0_353 = arith.constant 0 : index
    %597 = vector.load %arg6[%c6, %c0_352, %c0_353] : memref<9x128x128xbf16, #tpu.memory_space<vmem>>, vector<1x128x128xbf16>
    %598 = vector.shape_cast %597 : vector<1x128x128xbf16> to vector<128x128xbf16>
    %cst_354 = arith.constant dense<0.000000e+00> : vector<24x128xf32>
    %599 = tpu.matmul %552, %598, %cst_354 {dimension_numbers = #tpu.dot_dimension_numbers<[1], [0], [0], [1], [0, 0, 1, 1], [], []>} : vector<24x128xbf16>, vector<128x128xbf16>, vector<24x128xf32> -> vector<24x128xf32>
    %600 = vector.extract_strided_slice %599 {offsets = [8, 0], sizes = [1, 128], strides = [1, 1]} : vector<24x128xf32> to vector<1x128xf32>
    %601 = arith.addf %594, %600 : vector<1x128xf32>
    %602 = vector.extract_strided_slice %599 {offsets = [16, 0], sizes = [1, 128], strides = [1, 1]} : vector<24x128xf32> to vector<1x128xf32>
    %603 = arith.addf %596, %602 : vector<1x128xf32>
    %c7 = arith.constant 7 : index
    %c0_355 = arith.constant 0 : index
    %c0_356 = arith.constant 0 : index
    %604 = vector.load %arg6[%c7, %c0_355, %c0_356] : memref<9x128x128xbf16, #tpu.memory_space<vmem>>, vector<1x128x128xbf16>
    %605 = vector.shape_cast %604 : vector<1x128x128xbf16> to vector<128x128xbf16>
    %cst_357 = arith.constant dense<0.000000e+00> : vector<24x128xf32>
    %606 = tpu.matmul %552, %605, %cst_357 {dimension_numbers = #tpu.dot_dimension_numbers<[1], [0], [0], [1], [0, 0, 1, 1], [], []>} : vector<24x128xbf16>, vector<128x128xbf16>, vector<24x128xf32> -> vector<24x128xf32>
    %607 = vector.extract_strided_slice %606 {offsets = [9, 0], sizes = [1, 128], strides = [1, 1]} : vector<24x128xf32> to vector<1x128xf32>
    %608 = arith.addf %601, %607 : vector<1x128xf32>
    %609 = vector.extract_strided_slice %606 {offsets = [17, 0], sizes = [1, 128], strides = [1, 1]} : vector<24x128xf32> to vector<1x128xf32>
    %610 = arith.addf %603, %609 : vector<1x128xf32>
    %c8 = arith.constant 8 : index
    %c0_358 = arith.constant 0 : index
    %c0_359 = arith.constant 0 : index
    %611 = vector.load %arg6[%c8, %c0_358, %c0_359] : memref<9x128x128xbf16, #tpu.memory_space<vmem>>, vector<1x128x128xbf16>
    %612 = vector.shape_cast %611 : vector<1x128x128xbf16> to vector<128x128xbf16>
    %cst_360 = arith.constant dense<0.000000e+00> : vector<24x128xf32>
    %613 = tpu.matmul %552, %612, %cst_360 {dimension_numbers = #tpu.dot_dimension_numbers<[1], [0], [0], [1], [0, 0, 1, 1], [], []>} : vector<24x128xbf16>, vector<128x128xbf16>, vector<24x128xf32> -> vector<24x128xf32>
    %614 = vector.extract_strided_slice %613 {offsets = [10, 0], sizes = [1, 128], strides = [1, 1]} : vector<24x128xf32> to vector<1x128xf32>
    %615 = arith.addf %608, %614 : vector<1x128xf32>
    %616 = vector.extract_strided_slice %613 {offsets = [18, 0], sizes = [1, 128], strides = [1, 1]} : vector<24x128xf32> to vector<1x128xf32>
    %617 = arith.addf %610, %616 : vector<1x128xf32>
    %618 = tpu.concatenate %615, %617 in 0 : vector<1x128xf32>, vector<1x128xf32> -> vector<2x128xf32>
    %c0_361 = arith.constant 0 : index
    %c0_362 = arith.constant 0 : index
    %619 = vector.load %arg7[%c0_361, %c0_362] : memref<1x128xf32, #tpu.memory_space<vmem>>, vector<1x128xf32>
    %620 = vector.broadcast %619 : vector<1x128xf32> to vector<2x128xf32>
    %621 = arith.addf %618, %620 : vector<2x128xf32>
    %cst_363 = arith.constant 0.000000e+00 : f32
    %622 = vector.broadcast %cst_363 : f32 to vector<2x128xf32>
    %623 = arith.maximumf %621, %622 : vector<2x128xf32>
    %624 = arith.truncf %623 : vector<2x128xf32> to vector<2x128xbf16>
    %625 = vector.extract_strided_slice %624 {offsets = [0, 0], sizes = [1, 128], strides = [1, 1]} : vector<2x128xbf16> to vector<1x128xbf16>
    %c0_364 = arith.constant 0 : index
    %c0_365 = arith.constant 0 : index
    %626 = vector.load %arg9[%c0_364, %c0_365] : memref<128x384xbf16, #tpu.memory_space<vmem>>, vector<128x384xbf16>
    %cst_366 = arith.constant dense<0.000000e+00> : vector<1x384xf32>
    %627 = tpu.matmul %625, %626, %cst_366 {dimension_numbers = #tpu.dot_dimension_numbers<[1], [0], [0], [1], [0, 0, 1, 1], [], []>} : vector<1x128xbf16>, vector<128x384xbf16>, vector<1x384xf32> -> vector<1x384xf32>
    %628 = vector.extract_strided_slice %624 {offsets = [1, 0], sizes = [1, 128], strides = [1, 1]} : vector<2x128xbf16> to vector<1x128xbf16>
    %c0_367 = arith.constant 0 : index
    %c0_368 = arith.constant 0 : index
    %629 = vector.load %arg10[%c0_367, %c0_368] : memref<128x384xbf16, #tpu.memory_space<vmem>>, vector<128x384xbf16>
    %cst_369 = arith.constant dense<0.000000e+00> : vector<1x384xf32>
    %630 = tpu.matmul %628, %629, %cst_369 {dimension_numbers = #tpu.dot_dimension_numbers<[1], [0], [0], [1], [0, 0, 1, 1], [], []>} : vector<1x128xbf16>, vector<128x384xbf16>, vector<1x384xf32> -> vector<1x384xf32>
    %631 = arith.addf %627, %630 : vector<1x384xf32>
    %c0_370 = arith.constant 0 : index
    %c0_371 = arith.constant 0 : index
    %632 = vector.load %arg11[%c0_370, %c0_371] : memref<1x384xf32, #tpu.memory_space<vmem>>, vector<1x384xf32>
    %633 = arith.addf %631, %632 : vector<1x384xf32>
    %cst_372 = arith.constant 0.000000e+00 : f32
    %634 = vector.broadcast %cst_372 : f32 to vector<1x384xf32>
    %635 = arith.maximumf %633, %634 : vector<1x384xf32>
    %636 = arith.truncf %635 : vector<1x384xf32> to vector<1x384xbf16>
    %c0_373 = arith.constant 0 : index
    %c0_374 = arith.constant 0 : index
    %637 = vector.load %arg12[%c0_373, %c0_374] : memref<384x128xbf16, #tpu.memory_space<vmem>>, vector<384x128xbf16>
    %cst_375 = arith.constant dense<0.000000e+00> : vector<1x128xf32>
    %638 = tpu.matmul %636, %637, %cst_375 {dimension_numbers = #tpu.dot_dimension_numbers<[1], [0], [0], [1], [0, 0, 1, 1], [], []>} : vector<1x384xbf16>, vector<384x128xbf16>, vector<1x128xf32> -> vector<1x128xf32>
    %c0_376 = arith.constant 0 : index
    %c0_377 = arith.constant 0 : index
    %639 = vector.load %arg13[%c0_376, %c0_377] : memref<1x128xf32, #tpu.memory_space<vmem>>, vector<1x128xf32>
    %640 = arith.addf %638, %639 : vector<1x128xf32>
    %cst_378 = arith.constant 0.000000e+00 : f32
    %641 = vector.broadcast %cst_378 : f32 to vector<1x128xf32>
    %642 = arith.maximumf %640, %641 : vector<1x128xf32>
    %643 = arith.truncf %642 : vector<1x128xf32> to vector<1x128xbf16>
    %c0_379 = arith.constant 0 : index
    %c0_380 = arith.constant 0 : index
    %644 = vector.load %arg14[%c0_379, %c0_380] : memref<128x128xbf16, #tpu.memory_space<vmem>>, vector<128x128xbf16>
    %cst_381 = arith.constant dense<0.000000e+00> : vector<1x128xf32>
    %645 = tpu.matmul %643, %644, %cst_381 {dimension_numbers = #tpu.dot_dimension_numbers<[1], [0], [0], [1], [0, 0, 1, 1], [], []>} : vector<1x128xbf16>, vector<128x128xbf16>, vector<1x128xf32> -> vector<1x128xf32>
    %c0_382 = arith.constant 0 : index
    %c0_383 = arith.constant 0 : index
    %646 = vector.load %arg15[%c0_382, %c0_383] : memref<1x128xf32, #tpu.memory_space<vmem>>, vector<1x128xf32>
    %647 = arith.addf %645, %646 : vector<1x128xf32>
    %648 = vector.shape_cast %647 : vector<1x128xf32> to vector<1x128xf32>
    %649 = vector.broadcast %648 : vector<1x128xf32> to vector<8x128xf32>
    %c0_384 = arith.constant 0 : index
    %c0_385 = arith.constant 0 : index
    %650 = vector.load %arg16[%c0_384, %c0_385] : memref<8x128xf32, #tpu.memory_space<vmem>>, vector<8x128xf32>
    tpu.vector_store %arg16[%c0_384, %c0_385], %649 {strides = array<i32>} : memref<8x128xf32, #tpu.memory_space<vmem>>, vector<8x128xf32>,
    return
  }
  func.func @transform_0(%arg0: i32) -> (i32, i32) {
    %c0_i32 = arith.constant 0 : i32
    %c0_i32_0 = arith.constant 0 : i32
    %c0_i32_1 = arith.constant 0 : i32
    return %c0_i32, %c0_i32_0 : i32, i32
  }
  func.func @transform_1(%arg0: i32) -> (i32, i32) {
    %c0_i32 = arith.constant 0 : i32
    %c0_i32_0 = arith.constant 0 : i32
    %c0_i32_1 = arith.constant 0 : i32
    return %c0_i32, %c0_i32_0 : i32, i32
  }
  func.func @transform_2(%arg0: i32) -> (i32, i32) {
    %c0_i32 = arith.constant 0 : i32
    %c0_i32_0 = arith.constant 0 : i32
    %c0_i32_1 = arith.constant 0 : i32
    return %c0_i32, %c0_i32_0 : i32, i32
  }
  func.func @transform_3(%arg0: i32) -> (i32, i32) {
    %c0_i32 = arith.constant 0 : i32
    %c0_i32_0 = arith.constant 0 : i32
    %c0_i32_1 = arith.constant 0 : i32
    return %c0_i32, %c0_i32_0 : i32, i32
  }
  func.func @transform_4(%arg0: i32) -> (i32, i32) {
    %c0_i32 = arith.constant 0 : i32
    %c0_i32_0 = arith.constant 0 : i32
    %c0_i32_1 = arith.constant 0 : i32
    return %c0_i32, %c0_i32_0 : i32, i32
  }
  func.func @transform_5(%arg0: i32) -> (i32, i32, i32) {
    %c0_i32 = arith.constant 0 : i32
    %c0_i32_0 = arith.constant 0 : i32
    %c0_i32_1 = arith.constant 0 : i32
    %c0_i32_2 = arith.constant 0 : i32
    return %c0_i32, %c0_i32_0, %c0_i32_1 : i32, i32, i32
  }
  func.func @transform_6(%arg0: i32) -> (i32, i32) {
    %c0_i32 = arith.constant 0 : i32
    %c0_i32_0 = arith.constant 0 : i32
    %c0_i32_1 = arith.constant 0 : i32
    return %c0_i32, %c0_i32_0 : i32, i32
  }
  func.func @transform_7(%arg0: i32) -> (i32, i32, i32) {
    %c0_i32 = arith.constant 0 : i32
    %c0_i32_0 = arith.constant 0 : i32
    %c0_i32_1 = arith.constant 0 : i32
    %c0_i32_2 = arith.constant 0 : i32
    return %c0_i32, %c0_i32_0, %c0_i32_1 : i32, i32, i32
  }
  func.func @transform_8(%arg0: i32) -> (i32, i32) {
    %c0_i32 = arith.constant 0 : i32
    %c0_i32_0 = arith.constant 0 : i32
    %c0_i32_1 = arith.constant 0 : i32
    return %c0_i32, %c0_i32_0 : i32, i32
  }
  func.func @transform_9(%arg0: i32) -> (i32, i32) {
    %c0_i32 = arith.constant 0 : i32
    %c0_i32_0 = arith.constant 0 : i32
    %c0_i32_1 = arith.constant 0 : i32
    return %c0_i32, %c0_i32_0 : i32, i32
  }
  func.func @transform_10(%arg0: i32) -> (i32, i32) {
    %c0_i32 = arith.constant 0 : i32
    %c0_i32_0 = arith.constant 0 : i32
    %c0_i32_1 = arith.constant 0 : i32
    return %c0_i32, %c0_i32_0 : i32, i32
  }
  func.func @transform_11(%arg0: i32) -> (i32, i32) {
    %c0_i32 = arith.constant 0 : i32
    %c0_i32_0 = arith.constant 0 : i32
    %c0_i32_1 = arith.constant 0 : i32
    return %c0_i32, %c0_i32_0 : i32, i32
  }
  func.func @transform_12(%arg0: i32) -> (i32, i32) {
    %c0_i32 = arith.constant 0 : i32
    %c0_i32_0 = arith.constant 0 : i32
    %c0_i32_1 = arith.constant 0 : i32
    return %c0_i32, %c0_i32_0 : i32, i32
  }
  func.func @transform_13(%arg0: i32) -> (i32, i32) {
    %c0_i32 = arith.constant 0 : i32
    %c0_i32_0 = arith.constant 0 : i32
    %c0_i32_1 = arith.constant 0 : i32
    return %c0_i32, %c0_i32_0 : i32, i32
  }
  func.func @transform_14(%arg0: i32) -> (i32, i32) {
    %c0_i32 = arith.constant 0 : i32
    %c0_i32_0 = arith.constant 0 : i32
    %c0_i32_1 = arith.constant 0 : i32
    return %c0_i32, %c0_i32_0 : i32, i32
  }
  func.func @transform_15(%arg0: i32) -> (i32, i32) {
    %c0_i32 = arith.constant 0 : i32
    %c0_i32_0 = arith.constant 0 : i32
    %c0_i32_1 = arith.constant 0 : i32
    return %c0_i32, %c0_i32_0 : i32, i32
  }
}

</mosaic_0001>

<llo_original>
// kernel: dqn_forward.1
$region0: #{dqn_forward.1}
  #allocation0 [shape = 'u32[]', space=smem, size = 0x4, offset = 0x4, fixed_abs, tag = 'smem constant byte address 0x4 - core index']
  #allocation1 [shape = 'u32[144,128]{1,0:T(1,128)}', space=vmem, size = 0x12000, scoped, tag = 'internal scratch']
  #allocation2 [shape = 'f32[2,2,136,128]{3,2,1,0:T(8,128)}', space=vmem, size = 0x44000, scoped, tag = 'scratch operand']
  #allocation3 [shape = 'bf16[128,1152]{1,0:T(16,128)(2,1)}', space=vmem, size = 0x48000, scoped, tag = 'scratch operand']
  %s0 = inlined_call_operand.vmem [shape: bf16[2080,128], index: 0, kind: input, shape index: {}]
  %s1 = inlined_call_operand.vmem [shape: bf16[128,128], index: 1, kind: input, shape index: {}]
  %s2 = inlined_call_operand.vmem [shape: f32[1,128], index: 2, kind: input, shape index: {}]
  %s3 = inlined_call_operand.vmem [shape: bf16[1152,128], index: 3, kind: input, shape index: {}]
  %s4 = inlined_call_operand.vmem [shape: f32[1,128], index: 4, kind: input, shape index: {}]
  %s5 = inlined_call_operand.vmem [shape: bf16[9,128,128], index: 5, kind: input, shape index: {}]
  %s6 = inlined_call_operand.vmem [shape: f32[1,128], index: 6, kind: input, shape index: {}]
  %s7 = inlined_call_operand.vmem [shape: f32[4,24,128], index: 7, kind: input, shape index: {}]
  %s8 = inlined_call_operand.vmem [shape: bf16[128,384], index: 8, kind: input, shape index: {}]
  %s9 = inlined_call_operand.vmem [shape: bf16[128,384], index: 9, kind: input, shape index: {}]
  %s10 = inlined_call_operand.vmem [shape: f32[1,384], index: 10, kind: input, shape index: {}]
  %s11 = inlined_call_operand.vmem [shape: bf16[384,128], index: 11, kind: input, shape index: {}]
  %s12 = inlined_call_operand.vmem [shape: f32[1,128], index: 12, kind: input, shape index: {}]
  %s13 = inlined_call_operand.vmem [shape: bf16[128,128], index: 13, kind: input, shape index: {}]
  %s14 = inlined_call_operand.vmem [shape: f32[1,128], index: 14, kind: input, shape index: {}]
  %s15 = inlined_call_operand.vmem [shape: f32[8,128], index: 15, kind: output, shape index: {}]
  %s16 = sld [smem:[#allocation0]]
  $region70: #{dqn_forward.1} parent=0
    _
  %s18 = ssub.s32 1, %s16
  %s19 = scalar_select 0, %s18, %s16
  // Predicated region
  $region2: #{dqn_forward.1} parent=0 // pred_check
    _
  $region3: #{dqn_forward.1} parent=0 // pred_check_branch
    %21 = sbr.rel (0) target = $region5
  $region4: #{dqn_forward.1} parent=0 // pred_region
    _
  $region5: #{dqn_forward.1} parent=0 // pred_fallthru
    _
  // Predicated region
  $region6: #{dqn_forward.1} parent=0 // pred_check
    _
  $region7: #{dqn_forward.1} parent=0 // pred_check_branch
    %23 = sbr.rel (0) target = $region9
  $region8: #{dqn_forward.1} parent=0 // pred_region
    _
  $region9: #{dqn_forward.1} parent=0 // pred_fallthru
    _
  // Predicated region
  $region10: #{dqn_forward.1} parent=0 // pred_check
    _
  $region11: #{dqn_forward.1} parent=0 // pred_check_branch
    %25 = sbr.rel (0) target = $region13
  $region12: #{dqn_forward.1} parent=0 // pred_region
    _
  $region13: #{dqn_forward.1} parent=0 // pred_fallthru
    _
  // Predicated region
  $region14: #{dqn_forward.1} parent=0 // pred_check
    _
  $region15: #{dqn_forward.1} parent=0 // pred_check_branch
    %27 = sbr.rel (0) target = $region17
  $region16: #{dqn_forward.1} parent=0 // pred_region
    _
  $region17: #{dqn_forward.1} parent=0 // pred_fallthru
    _
  // Predicated region
  $region18: #{dqn_forward.1} parent=0 // pred_check
    _
  $region19: #{dqn_forward.1} parent=0 // pred_check_branch
    %29 = sbr.rel (0) target = $region21
  $region20: #{dqn_forward.1} parent=0 // pred_region
    _
  $region21: #{dqn_forward.1} parent=0 // pred_fallthru
    _
  // Predicated region
  $region22: #{dqn_forward.1} parent=0 // pred_check
    _
  $region23: #{dqn_forward.1} parent=0 // pred_check_branch
    %31 = sbr.rel (0) target = $region25
  $region24: #{dqn_forward.1} parent=0 // pred_region
    _
  $region25: #{dqn_forward.1} parent=0 // pred_fallthru
    _
  // Predicated region
  $region26: #{dqn_forward.1} parent=0 // pred_check
    _
  $region27: #{dqn_forward.1} parent=0 // pred_check_branch
    %33 = sbr.rel (0) target = $region29
  $region28: #{dqn_forward.1} parent=0 // pred_region
    _
  $region29: #{dqn_forward.1} parent=0 // pred_fallthru
    _
  // Predicated region
  $region30: #{dqn_forward.1} parent=0 // pred_check
    _
  $region31: #{dqn_forward.1} parent=0 // pred_check_branch
    %35 = sbr.rel (0) target = $region33
  $region32: #{dqn_forward.1} parent=0 // pred_region
    _
  $region33: #{dqn_forward.1} parent=0 // pred_fallthru
    _
  // Predicated region
  $region34: #{dqn_forward.1} parent=0 // pred_check
    _
  $region35: #{dqn_forward.1} parent=0 // pred_check_branch
    %37 = sbr.rel (0) target = $region37
  $region36: #{dqn_forward.1} parent=0 // pred_region
    _
  $region37: #{dqn_forward.1} parent=0 // pred_fallthru
    _
  // Predicated region
  $region38: #{dqn_forward.1} parent=0 // pred_check
    _
  $region39: #{dqn_forward.1} parent=0 // pred_check_branch
    %39 = sbr.rel (0) target = $region41
  $region40: #{dqn_forward.1} parent=0 // pred_region
    _
  $region41: #{dqn_forward.1} parent=0 // pred_fallthru
    _
  // Predicated region
  $region42: #{dqn_forward.1} parent=0 // pred_check
    _
  $region43: #{dqn_forward.1} parent=0 // pred_check_branch
    %41 = sbr.rel (0) target = $region45
  $region44: #{dqn_forward.1} parent=0 // pred_region
    _
  $region45: #{dqn_forward.1} parent=0 // pred_fallthru
    _
  // Predicated region
  $region46: #{dqn_forward.1} parent=0 // pred_check
    _
  $region47: #{dqn_forward.1} parent=0 // pred_check_branch
    %43 = sbr.rel (0) target = $region49
  $region48: #{dqn_forward.1} parent=0 // pred_region
    _
  $region49: #{dqn_forward.1} parent=0 // pred_fallthru
    _
  // Predicated region
  $region50: #{dqn_forward.1} parent=0 // pred_check
    _
  $region51: #{dqn_forward.1} parent=0 // pred_check_branch
    %45 = sbr.rel (0) target = $region53
  $region52: #{dqn_forward.1} parent=0 // pred_region
    _
  $region53: #{dqn_forward.1} parent=0 // pred_fallthru
    _
  // Predicated region
  $region54: #{dqn_forward.1} parent=0 // pred_check
    _
  $region55: #{dqn_forward.1} parent=0 // pred_check_branch
    %47 = sbr.rel (0) target = $region57
  $region56: #{dqn_forward.1} parent=0 // pred_region
    _
  $region57: #{dqn_forward.1} parent=0 // pred_fallthru
    _
  // Predicated region
  $region58: #{dqn_forward.1} parent=0 // pred_check
    _
  $region59: #{dqn_forward.1} parent=0 // pred_check_branch
    %49 = sbr.rel (0) target = $region61
  $region60: #{dqn_forward.1} parent=0 // pred_region
    _
  $region61: #{dqn_forward.1} parent=0 // pred_fallthru
    _
  %51 = vst [vmem:[#allocation2 + $0x80] sm:$0xff] 0.0
  %s52 = scalar_lea.vmem [#allocation2], 136
  %53 = vst [vmem:[%s52 + $0x80] sm:$0xff] 0.0
  %s54 = scalar_lea.vmem [#allocation2], 272
  %55 = vst [vmem:[%s54 + $0x80] sm:$0xff] 0.0
  %s56 = scalar_lea.vmem [#allocation2], 408
  %57 = vst [vmem:[%s56 + $0x80] sm:$0xff] 0.0
  %58 = vst [vmem:[#allocation3 + $0x1f8] sm:$0xf0] 0
  %59 = vst [vmem:[#allocation3 + $0x200] sm:$0xf0] 0
  %60 = vst [vmem:[#allocation3 + $0x208] sm:$0xf0] 0
  %61 = vst [vmem:[#allocation3 + $0x210] sm:$0xf0] 0
  %62 = vst [vmem:[#allocation3 + $0x218] sm:$0xf0] 0
  %63 = vst [vmem:[#allocation3 + $0x220] sm:$0xf0] 0
  %64 = vst [vmem:[#allocation3 + $0x228] sm:$0xf0] 0
  %65 = vst [vmem:[#allocation3 + $0x230] sm:$0xf0] 0
  %66 = vst [vmem:[#allocation3 + $0x238] sm:$0xf0] 0
  %v67 = vld [vmem:[%s1] sm:$0xf]
  %v68 = vld [vmem:[%s1 + $0x4] sm:$0xf]
  %v69 = vld [vmem:[%s1 + $0x8] sm:$0xf]
  %v70 = vld [vmem:[%s1 + $0xc] sm:$0xf]
  %v71 = vld [vmem:[%s1 + $0x10] sm:$0xf]
  %v72 = vld [vmem:[%s1 + $0x14] sm:$0xf]
  %v73 = vld [vmem:[%s1 + $0x18] sm:$0xf]
  %v74 = vld [vmem:[%s1 + $0x1c] sm:$0xf]
  %v75 = vld [vmem:[%s1 + $0x20] sm:$0xf]
  %v76 = vld [vmem:[%s1 + $0x24] sm:$0xf]
  %v77 = vld [vmem:[%s1 + $0x28] sm:$0xf]
  %v78 = vld [vmem:[%s1 + $0x2c] sm:$0xf]
  %v79 = vld [vmem:[%s1 + $0x30] sm:$0xf]
  %v80 = vld [vmem:[%s1 + $0x34] sm:$0xf]
  %v81 = vld [vmem:[%s1 + $0x38] sm:$0xf]
  %v82 = vld [vmem:[%s1 + $0x3c] sm:$0xf]
  %v83 = vld [vmem:[%s2] sm:$0x1]
  %v84 = vld [vmem:[%s0] sm:$0xf]
  %v85 = vld [vmem:[%s0 + $0x4] sm:$0xf]
  %v86 = vld [vmem:[%s0 + $0x8] sm:$0xf]
  %v87 = vld [vmem:[%s0 + $0xc] sm:$0xf]
  %v88 = vld [vmem:[%s0 + $0x10] sm:$0xf]
  %v89 = vld [vmem:[%s0 + $0x14] sm:$0xf]
  %v90 = vld [vmem:[%s0 + $0x18] sm:$0xf]
  %v91 = vld [vmem:[%s0 + $0x1c] sm:$0xf]
  %v92 = vld [vmem:[%s0 + $0x20] sm:$0xf]
  %v93 = vld [vmem:[%s0 + $0x24] sm:$0xf]
  %v94 = vld [vmem:[%s0 + $0x28] sm:$0xf]
  %v95 = vld [vmem:[%s0 + $0x2c] sm:$0xf]
  %v96 = vld [vmem:[%s0 + $0x30] sm:$0xf]
  %v97 = vld [vmem:[%s0 + $0x34] sm:$0xf]
  %v98 = vld [vmem:[%s0 + $0x38] sm:$0xf]
  %v99 = vld [vmem:[%s0 + $0x3c] sm:$0xf]
  %v100 = vld [vmem:[%s0 + $0x40] sm:$0xf]
  %v101 = vld [vmem:[%s0 + $0x44] sm:$0xf]
  %v102 = vld [vmem:[%s0 + $0x48] sm:$0xf]
  %v103 = vld [vmem:[%s0 + $0x4c] sm:$0xf]
  %v105 = vlaneseq
  %v106 = vshrl.u32 %v105, 7
  %v107 = vsub.s32 0, %v106
  %v108 = vrot.slane %v83, %v107
  %v130 = vunpack.c.l.b16 %v84
  %v131 = vunpack.c.l.b16 %v85
  %v132 = vunpack.c.l.b16 %v86
  %v133 = vunpack.c.l.b16 %v87
  %v134 = vunpack.c.l.b16 %v88
  %v135 = vunpack.c.l.b16 %v89
  %v136 = vunpack.c.l.b16 %v90
  %v137 = vunpack.c.l.b16 %v91
  %v138 = vunpack.c.l.b16 %v92
  %v139 = vunpack.c.l.b16 %v93
  %v140 = vunpack.c.l.b16 %v94
  %v141 = vunpack.c.l.b16 %v95
  %v142 = vunpack.c.l.b16 %v96
  %v143 = vunpack.c.l.b16 %v97
  %v144 = vunpack.c.l.b16 %v98
  %v145 = vunpack.c.l.b16 %v99
  %v146 = vunpack.c.l.b16 %v100
  %v147 = vunpack.c.l.b16 %v101
  %v148 = vunpack.c.l.b16 %v102
  %v149 = vunpack.c.l.b16 %v103
  %v150 = vpack.c.b16 %v131, %v130
  %v151 = vpack.c.b16 %v133, %v132
  %v152 = vpack.c.b16 %v135, %v134
  %v153 = vpack.c.b16 %v137, %v136
  %v154 = vpack.c.b16 %v139, %v138
  %v155 = vpack.c.b16 %v141, %v140
  %v156 = vpack.c.b16 %v143, %v142
  %v157 = vpack.c.b16 %v145, %v144
  %v158 = vpack.c.b16 %v147, %v146
  %v159 = vpack.c.b16 %v149, %v148
  %v186 = vunpack.c.l.b16 %v67
  %v187 = vunpack.c.l.b16 %v68
  %v188 = vunpack.c.l.b16 %v69
  %v189 = vunpack.c.l.b16 %v70
  %v190 = vunpack.c.l.b16 %v71
  %v191 = vunpack.c.l.b16 %v72
  %v192 = vunpack.c.l.b16 %v73
  %v193 = vunpack.c.l.b16 %v74
  %v194 = vunpack.c.l.b16 %v75
  %v195 = vunpack.c.l.b16 %v76
  %v196 = vunpack.c.l.b16 %v77
  %v197 = vunpack.c.l.b16 %v78
  %v198 = vunpack.c.l.b16 %v79
  %v199 = vunpack.c.l.b16 %v80
  %v200 = vunpack.c.l.b16 %v81
  %v201 = vunpack.c.l.b16 %v82
  %v202 = vpack.c.b16 %v187, %v186
  %v203 = vpack.c.b16 %v189, %v188
  %v204 = vpack.c.b16 %v191, %v190
  %v205 = vpack.c.b16 %v193, %v192
  %v206 = vpack.c.b16 %v195, %v194
  %v207 = vpack.c.b16 %v197, %v196
  %v208 = vpack.c.b16 %v199, %v198
  %v209 = vpack.c.b16 %v201, %v200
  %218 = vmatprep.subr.bf16.mxu0 0
  %219 = vmatpush1.bf16.msra.mxu0 %v202
  %220 = vmatprep.subr.bf16.mxu0 0
  %221 = vmatpush1.bf16.msra.mxu0 %v203
  %222 = vmatprep.subr.bf16.mxu0 0
  %223 = vmatpush1.bf16.msra.mxu0 %v204
  %224 = vmatprep.subr.bf16.mxu0 0
  %225 = vmatpush1.bf16.msra.mxu0 %v205
  %226 = vmatprep.subr.bf16.mxu0 0
  %227 = vmatpush1.bf16.msra.mxu0 %v206
  %228 = vmatprep.subr.bf16.mxu0 0
  %229 = vmatpush1.bf16.msra.mxu0 %v207
  %230 = vmatprep.subr.bf16.mxu0 0
  %231 = vmatpush1.bf16.msra.mxu0 %v208
  %232 = vmatprep.subr.bf16.mxu0 0
  %233 = vmatpush1.bf16.msra.mxu0 %v209
  %234 = vmatprep.subr.bf16.mxu0 0
  %235 = vmatpush1.bf16.msra.mxu0 0
  %236 = vmatprep.subr.bf16.mxu0 0
  %237 = vmatpush1.bf16.msra.mxu0 0
  %238 = vmatprep.subr.bf16.mxu0 0
  %239 = vmatpush1.bf16.msra.mxu0 0
  %240 = vmatprep.subr.bf16.mxu0 0
  %241 = vmatpush1.bf16.msra.mxu0 0
  %242 = vmatprep.subr.bf16.mxu0 0
  %243 = vmatpush1.bf16.msra.mxu0 0
  %244 = vmatprep.subr.bf16.mxu0 0
  %245 = vmatpush1.bf16.msra.mxu0 0
  %246 = vmatprep.subr.bf16.mxu0 0
  %247 = vmatpush1.bf16.msra.mxu0 0
  %248 = vmatprep.subr.bf16.mxu0 0
  %249 = vmatpush1.bf16.msra.mxu0 0
  %250 = vmatprep.mubr.bf16.mxu0 0
  %251 = vmatmul.mubr.bf16.gmra.mrb[0].mxu0 %v150
  %v252 = vpop.f32.mrb[0].mxu0
  %v253 = vadd.f32 %v108, %v252
  %v254 = vpop.f32.mrb[0].mxu0
  %v255 = vpop.f32.mrb[0].mxu0
  %v256 = vadd.f32 %v108, %v255
  %v257 = vpop.f32.mrb[0].mxu0
  %258 = vmatprep.mubr.bf16.mxu0 0
  %259 = vmatmul.mubr.bf16.gmra.mrb[0].mxu0 %v151
  %v260 = vpop.f32.mrb[0].mxu0
  %v261 = vadd.f32 %v108, %v260
  %v262 = vpop.f32.mrb[0].mxu0
  %v263 = vpop.f32.mrb[0].mxu0
  %v264 = vadd.f32 %v108, %v263
  %v265 = vpop.f32.mrb[0].mxu0
  %266 = vmatprep.mubr.bf16.mxu0 0
  %267 = vmatmul.mubr.bf16.gmra.mrb[0].mxu0 %v152
  %v268 = vpop.f32.mrb[0].mxu0
  %v269 = vadd.f32 %v108, %v268
  %v270 = vpop.f32.mrb[0].mxu0
  %v271 = vpop.f32.mrb[0].mxu0
  %v272 = vadd.f32 %v108, %v271
  %v273 = vpop.f32.mrb[0].mxu0
  %274 = vmatprep.mubr.bf16.mxu0 0
  %275 = vmatmul.mubr.bf16.gmra.mrb[0].mxu0 %v153
  %v276 = vpop.f32.mrb[0].mxu0
  %v277 = vadd.f32 %v108, %v276
  %v278 = vpop.f32.mrb[0].mxu0
  %v279 = vpop.f32.mrb[0].mxu0
  %v280 = vadd.f32 %v108, %v279
  %v281 = vpop.f32.mrb[0].mxu0
  %282 = vmatprep.mubr.bf16.mxu0 0
  %283 = vmatmul.mubr.bf16.gmra.mrb[0].mxu0 %v154
  %v284 = vpop.f32.mrb[0].mxu0
  %v285 = vadd.f32 %v108, %v284
  %v286 = vpop.f32.mrb[0].mxu0
  %v287 = vpop.f32.mrb[0].mxu0
  %v288 = vadd.f32 %v108, %v287
  %v289 = vpop.f32.mrb[0].mxu0
  %290 = vmatprep.mubr.bf16.mxu0 0
  %291 = vmatmul.mubr.bf16.gmra.mrb[0].mxu0 %v155
  %v292 = vpop.f32.mrb[0].mxu0
  %v293 = vadd.f32 %v108, %v292
  %v294 = vpop.f32.mrb[0].mxu0
  %v295 = vpop.f32.mrb[0].mxu0
  %v296 = vadd.f32 %v108, %v295
  %v297 = vpop.f32.mrb[0].mxu0
  %298 = vmatprep.mubr.bf16.mxu0 0
  %299 = vmatmul.mubr.bf16.gmra.mrb[0].mxu0 %v156
  %v300 = vpop.f32.mrb[0].mxu0
  %v301 = vadd.f32 %v108, %v300
  %v302 = vpop.f32.mrb[0].mxu0
  %v303 = vpop.f32.mrb[0].mxu0
  %v304 = vadd.f32 %v108, %v303
  %v305 = vpop.f32.mrb[0].mxu0
  %306 = vmatprep.mubr.bf16.mxu0 0
  %307 = vmatmul.mubr.bf16.gmra.mrb[0].mxu0 %v157
  %v308 = vpop.f32.mrb[0].mxu0
  %v309 = vadd.f32 %v108, %v308
  %v310 = vpop.f32.mrb[0].mxu0
  %v311 = vpop.f32.mrb[0].mxu0
  %v312 = vadd.f32 %v108, %v311
  %v313 = vpop.f32.mrb[0].mxu0
  %314 = vmatprep.mubr.bf16.mxu0 0
  %315 = vmatmul.mubr.bf16.gmra.mrb[0].mxu0 %v158
  %v316 = vpop.f32.mrb[0].mxu0
  %v317 = vadd.f32 %v108, %v316
  %v318 = vpop.f32.mrb[0].mxu0
  %v319 = vpop.f32.mrb[0].mxu0
  %v320 = vadd.f32 %v108, %v319
  %v321 = vpop.f32.mrb[0].mxu0
  %322 = vmatprep.mubr.bf16.mxu0 0
  %323 = vmatmul.mubr.bf16.gmra.mrb[0].mxu0 %v159
  %v324 = vpop.f32.mrb[0].mxu0
  %v325 = vadd.f32 %v108, %v324
  %v326 = vpop.f32.mrb[0].mxu0
  %v327 = vpop.f32.mrb[0].mxu0
  %v328 = vadd.f32 %v108, %v327
  %v329 = vpop.f32.mrb[0].mxu0
  %330 = vdwg.mxu0
  %v331 = vmax.f32 %v253, 0.0
  %v332 = vmax.f32 %v256, 0.0
  %v333 = vmax.f32 %v261, 0.0
  %v334 = vmax.f32 %v264, 0.0
  %v335 = vmax.f32 %v269, 0.0
  %v336 = vmax.f32 %v272, 0.0
  %v337 = vmax.f32 %v277, 0.0
  %v338 = vmax.f32 %v280, 0.0
  %v339 = vmax.f32 %v285, 0.0
  %v340 = vmax.f32 %v288, 0.0
  %v341 = vmax.f32 %v293, 0.0
  %v342 = vmax.f32 %v296, 0.0
  %v343 = vmax.f32 %v301, 0.0
  %v344 = vmax.f32 %v304, 0.0
  %v345 = vmax.f32 %v309, 0.0
  %v346 = vmax.f32 %v312, 0.0
  %v347 = vmax.f32 %v317, 0.0
  %v348 = vmax.f32 %v320, 0.0
  %v349 = vmax.f32 %v325, 0.0
  %v350 = vmax.f32 %v328, 0.0
  %vm354 = vcmask 1043456
  %v355 = vrot.slane %v333, 4
  %v356 = vrot.slane %v334, 4
  %v357 = vsel %vm354, %v355, %v356
  %v358 = vrot.slane %v335, 4
  %v359 = vsel %vm354, %v356, %v358
  %v363 = vmax.f32 %v331, %v357
  %v364 = vmax.f32 %v332, %v359
  %v365 = vmax.f32 %v333, %v358
  %v369 = vrot.slane %v338, 4
  %v370 = vrot.slane %v339, 4
  %v371 = vsel %vm354, %v369, %v370
  %v372 = vrot.slane %v340, 4
  %v373 = vsel %vm354, %v370, %v372
  %v377 = vmax.f32 %v336, %v371
  %v378 = vmax.f32 %v337, %v373
  %v379 = vmax.f32 %v338, %v372
  %v380 = vmax.f32 %v363, %v377
  %v381 = vmax.f32 %v364, %v378
  %v382 = vmax.f32 %v365, %v379
  %383 = vst [vmem:[#allocation2] sm:$0xff] %v380
  %384 = vst [vmem:[#allocation2 + $0x8] sm:$0x3] %v381
  %385 = vst [vmem:[%s52 - $0x2] sm:$0xfc] %v381
  %386 = vst [vmem:[%s52 + $0x6] sm:$0xf] %v382
  %v390 = vrot.slane %v343, 4
  %v391 = vrot.slane %v344, 4
  %v392 = vsel %vm354, %v390, %v391
  %v393 = vrot.slane %v345, 4
  %v394 = vsel %vm354, %v391, %v393
  %v398 = vmax.f32 %v341, %v392
  %v399 = vmax.f32 %v342, %v394
  %v400 = vmax.f32 %v343, %v393
  %v404 = vrot.slane %v348, 4
  %v405 = vrot.slane %v349, 4
  %v406 = vsel %vm354, %v404, %v405
  %v407 = vrot.slane %v350, 4
  %v408 = vsel %vm354, %v405, %v407
  %v412 = vmax.f32 %v346, %v406
  %v413 = vmax.f32 %v347, %v408
  %v414 = vmax.f32 %v348, %v407
  %v415 = vmax.f32 %v398, %v412
  %v416 = vmax.f32 %v399, %v413
  %v417 = vmax.f32 %v400, %v414
  %418 = vst [vmem:[%s54] sm:$0xff] %v415
  %419 = vst [vmem:[%s54 + $0x8] sm:$0x3] %v416
  %420 = vst [vmem:[%s56 - $0x2] sm:$0xfc] %v416
  %421 = vst [vmem:[%s56 + $0x6] sm:$0xf] %v417
  %v422 = vld [vmem:[%s0 + $0x50] sm:$0xf]
  %v423 = vld [vmem:[%s0 + $0x54] sm:$0xf]
  %v424 = vld [vmem:[%s0 + $0x58] sm:$0xf]
  %v425 = vld [vmem:[%s0 + $0x5c] sm:$0xf]
  %v426 = vld [vmem:[%s0 + $0x60] sm:$0xf]
  %v427 = vld [vmem:[%s0 + $0x64] sm:$0xf]
  %v428 = vld [vmem:[%s0 + $0x68] sm:$0xf]
  %v429 = vld [vmem:[%s0 + $0x6c] sm:$0xf]
  %v430 = vld [vmem:[%s0 + $0x70] sm:$0xf]
  %v431 = vld [vmem:[%s0 + $0x74] sm:$0xf]
  %v432 = vld [vmem:[%s0 + $0x78] sm:$0xf]
  %v433 = vld [vmem:[%s0 + $0x7c] sm:$0xf]
  %v434 = vld [vmem:[%s0 + $0x80] sm:$0xf]
  %v435 = vld [vmem:[%s0 + $0x84] sm:$0xf]
  %v436 = vld [vmem:[%s0 + $0x88] sm:$0xf]
  %v437 = vld [vmem:[%s0 + $0x8c] sm:$0xf]
  %v438 = vld [vmem:[%s0 + $0x90] sm:$0xf]
  %v439 = vld [vmem:[%s0 + $0x94] sm:$0xf]
  %v440 = vld [vmem:[%s0 + $0x98] sm:$0xf]
  %v441 = vld [vmem:[%s0 + $0x9c] sm:$0xf]
  %v462 = vunpack.c.l.b16 %v422
  %v463 = vunpack.c.l.b16 %v423
  %v464 = vunpack.c.l.b16 %v424
  %v465 = vunpack.c.l.b16 %v425
  %v466 = vunpack.c.l.b16 %v426
  %v467 = vunpack.c.l.b16 %v427
  %v468 = vunpack.c.l.b16 %v428
  %v469 = vunpack.c.l.b16 %v429
  %v470 = vunpack.c.l.b16 %v430
  %v471 = vunpack.c.l.b16 %v431
  %v472 = vunpack.c.l.b16 %v432
  %v473 = vunpack.c.l.b16 %v433
  %v474 = vunpack.c.l.b16 %v434
  %v475 = vunpack.c.l.b16 %v435
  %v476 = vunpack.c.l.b16 %v436
  %v477 = vunpack.c.l.b16 %v437
  %v478 = vunpack.c.l.b16 %v438
  %v479 = vunpack.c.l.b16 %v439
  %v480 = vunpack.c.l.b16 %v440
  %v481 = vunpack.c.l.b16 %v441
  %v482 = vpack.c.b16 %v463, %v462
  %v483 = vpack.c.b16 %v465, %v464
  %v484 = vpack.c.b16 %v467, %v466
  %v485 = vpack.c.b16 %v469, %v468
  %v486 = vpack.c.b16 %v471, %v470
  %v487 = vpack.c.b16 %v473, %v472
  %v488 = vpack.c.b16 %v475, %v474
  %v489 = vpack.c.b16 %v477, %v476
  %v490 = vpack.c.b16 %v479, %v478
  %v491 = vpack.c.b16 %v481, %v480
  %502 = vmatprep.subr.bf16.mxu0 0
  %503 = vmatpush1.bf16.msra.mxu0 %v202
  %504 = vmatprep.subr.bf16.mxu0 0
  %505 = vmatpush1.bf16.msra.mxu0 %v203
  %506 = vmatprep.subr.bf16.mxu0 0
  %507 = vmatpush1.bf16.msra.mxu0 %v204
  %508 = vmatprep.subr.bf16.mxu0 0
  %509 = vmatpush1.bf16.msra.mxu0 %v205
  %510 = vmatprep.subr.bf16.mxu0 0
  %511 = vmatpush1.bf16.msra.mxu0 %v206
  %512 = vmatprep.subr.bf16.mxu0 0
  %513 = vmatpush1.bf16.msra.mxu0 %v207
  %514 = vmatprep.subr.bf16.mxu0 0
  %515 = vmatpush1.bf16.msra.mxu0 %v208
  %516 = vmatprep.subr.bf16.mxu0 0
  %517 = vmatpush1.bf16.msra.mxu0 %v209
  %518 = vmatprep.subr.bf16.mxu0 0
  %519 = vmatpush1.bf16.msra.mxu0 0
  %520 = vmatprep.subr.bf16.mxu0 0
  %521 = vmatpush1.bf16.msra.mxu0 0
  %522 = vmatprep.subr.bf16.mxu0 0
  %523 = vmatpush1.bf16.msra.mxu0 0
  %524 = vmatprep.subr.bf16.mxu0 0
  %525 = vmatpush1.bf16.msra.mxu0 0
  %526 = vmatprep.subr.bf16.mxu0 0
  %527 = vmatpush1.bf16.msra.mxu0 0
  %528 = vmatprep.subr.bf16.mxu0 0
  %529 = vmatpush1.bf16.msra.mxu0 0
  %530 = vmatprep.subr.bf16.mxu0 0
  %531 = vmatpush1.bf16.msra.mxu0 0
  %532 = vmatprep.subr.bf16.mxu0 0
  %533 = vmatpush1.bf16.msra.mxu0 0
  %534 = vmatprep.mubr.bf16.mxu0 0
  %535 = vmatmul.mubr.bf16.gmra.mrb[0].mxu0 %v482
  %v536 = vpop.f32.mrb[0].mxu0
  %v537 = vadd.f32 %v108, %v536
  %v538 = vpop.f32.mrb[0].mxu0
  %v539 = vpop.f32.mrb[0].mxu0
  %v540 = vadd.f32 %v108, %v539
  %v541 = vpop.f32.mrb[0].mxu0
  %542 = vmatprep.mubr.bf16.mxu0 0
  %543 = vmatmul.mubr.bf16.gmra.mrb[0].mxu0 %v483
  %v544 = vpop.f32.mrb[0].mxu0
  %v545 = vadd.f32 %v108, %v544
  %v546 = vpop.f32.mrb[0].mxu0
  %v547 = vpop.f32.mrb[0].mxu0
  %v548 = vadd.f32 %v108, %v547
  %v549 = vpop.f32.mrb[0].mxu0
  %550 = vmatprep.mubr.bf16.mxu0 0
  %551 = vmatmul.mubr.bf16.gmra.mrb[0].mxu0 %v484
  %v552 = vpop.f32.mrb[0].mxu0
  %v553 = vadd.f32 %v108, %v552
  %v554 = vpop.f32.mrb[0].mxu0
  %v555 = vpop.f32.mrb[0].mxu0
  %v556 = vadd.f32 %v108, %v555
  %v557 = vpop.f32.mrb[0].mxu0
  %558 = vmatprep.mubr.bf16.mxu0 0
  %559 = vmatmul.mubr.bf16.gmra.mrb[0].mxu0 %v485
  %v560 = vpop.f32.mrb[0].mxu0
  %v561 = vadd.f32 %v108, %v560
  %v562 = vpop.f32.mrb[0].mxu0
  %v563 = vpop.f32.mrb[0].mxu0
  %v564 = vadd.f32 %v108, %v563
  %v565 = vpop.f32.mrb[0].mxu0
  %566 = vmatprep.mubr.bf16.mxu0 0
  %567 = vmatmul.mubr.bf16.gmra.mrb[0].mxu0 %v486
  %v568 = vpop.f32.mrb[0].mxu0
  %v569 = vadd.f32 %v108, %v568
  %v570 = vpop.f32.mrb[0].mxu0
  %v571 = vpop.f32.mrb[0].mxu0
  %v572 = vadd.f32 %v108, %v571
  %v573 = vpop.f32.mrb[0].mxu0
  %574 = vmatprep.mubr.bf16.mxu0 0
  %575 = vmatmul.mubr.bf16.gmra.mrb[0].mxu0 %v487
  %v576 = vpop.f32.mrb[0].mxu0
  %v577 = vadd.f32 %v108, %v576
  %v578 = vpop.f32.mrb[0].mxu0
  %v579 = vpop.f32.mrb[0].mxu0
  %v580 = vadd.f32 %v108, %v579
  %v581 = vpop.f32.mrb[0].mxu0
  %582 = vmatprep.mubr.bf16.mxu0 0
  %583 = vmatmul.mubr.bf16.gmra.mrb[0].mxu0 %v488
  %v584 = vpop.f32.mrb[0].mxu0
  %v585 = vadd.f32 %v108, %v584
  %v586 = vpop.f32.mrb[0].mxu0
  %v587 = vpop.f32.mrb[0].mxu0
  %v588 = vadd.f32 %v108, %v587
  %v589 = vpop.f32.mrb[0].mxu0
  %590 = vmatprep.mubr.bf16.mxu0 0
  %591 = vmatmul.mubr.bf16.gmra.mrb[0].mxu0 %v489
  %v592 = vpop.f32.mrb[0].mxu0
  %v593 = vadd.f32 %v108, %v592
  %v594 = vpop.f32.mrb[0].mxu0
  %v595 = vpop.f32.mrb[0].mxu0
  %v596 = vadd.f32 %v108, %v595
  %v597 = vpop.f32.mrb[0].mxu0
  %598 = vmatprep.mubr.bf16.mxu0 0
  %599 = vmatmul.mubr.bf16.gmra.mrb[0].mxu0 %v490
  %v600 = vpop.f32.mrb[0].mxu0
  %v601 = vadd.f32 %v108, %v600
  %v602 = vpop.f32.mrb[0].mxu0
  %v603 = vpop.f32.mrb[0].mxu0
  %v604 = vadd.f32 %v108, %v603
  %v605 = vpop.f32.mrb[0].mxu0
  %606 = vmatprep.mubr.bf16.mxu0 0
  %607 = vmatmul.mubr.bf16.gmra.mrb[0].mxu0 %v491
  %v608 = vpop.f32.mrb[0].mxu0
  %v609 = vadd.f32 %v108, %v608
  %v610 = vpop.f32.mrb[0].mxu0
  %v611 = vpop.f32.mrb[0].mxu0
  %v612 = vadd.f32 %v108, %v611
  %v613 = vpop.f32.mrb[0].mxu0
  %614 = vdwg.mxu0
  %v615 = vmax.f32 %v537, 0.0
  %v616 = vmax.f32 %v540, 0.0
  %v617 = vmax.f32 %v545, 0.0
  %v618 = vmax.f32 %v548, 0.0
  %v619 = vmax.f32 %v553, 0.0
  %v620 = vmax.f32 %v556, 0.0
  %v621 = vmax.f32 %v561, 0.0
  %v622 = vmax.f32 %v564, 0.0
  %v623 = vmax.f32 %v569, 0.0
  %v624 = vmax.f32 %v572, 0.0
  %v625 = vmax.f32 %v577, 0.0
  %v626 = vmax.f32 %v580, 0.0
  %v627 = vmax.f32 %v585, 0.0
  %v628 = vmax.f32 %v588, 0.0
  %v629 = vmax.f32 %v593, 0.0
  %v630 = vmax.f32 %v596, 0.0
  %v631 = vmax.f32 %v601, 0.0
  %v632 = vmax.f32 %v604, 0.0
  %v633 = vmax.f32 %v609, 0.0
  %v634 = vmax.f32 %v612, 0.0
  %v638 = vrot.slane %v617, 4
  %v639 = vrot.slane %v618, 4
  %v640 = vsel %vm354, %v638, %v639
  %v641 = vrot.slane %v619, 4
  %v642 = vsel %vm354, %v639, %v641
  %v646 = vmax.f32 %v615, %v640
  %v647 = vmax.f32 %v616, %v642
  %v648 = vmax.f32 %v617, %v641
  %v652 = vrot.slane %v622, 4
  %v653 = vrot.slane %v623, 4
  %v654 = vsel %vm354, %v652, %v653
  %v655 = vrot.slane %v624, 4
  %v656 = vsel %vm354, %v653, %v655
  %v660 = vmax.f32 %v620, %v654
  %v661 = vmax.f32 %v621, %v656
  %v662 = vmax.f32 %v622, %v655
  %v663 = vmax.f32 %v646, %v660
  %v664 = vmax.f32 %v647, %v661
  %v665 = vmax.f32 %v648, %v662
  %666 = vst [vmem:[#allocation2 + $0xa] sm:$0xff] %v663
  %667 = vst [vmem:[#allocation2 + $0x12] sm:$0x3] %v664
  %668 = vst [vmem:[%s52 + $0x8] sm:$0xfc] %v664
  %669 = vst [vmem:[%s52 + $0x10] sm:$0xf] %v665
  %v673 = vrot.slane %v627, 4
  %v674 = vrot.slane %v628, 4
  %v675 = vsel %vm354, %v673, %v674
  %v676 = vrot.slane %v629, 4
  %v677 = vsel %vm354, %v674, %v676
  %v681 = vmax.f32 %v625, %v675
  %v682 = vmax.f32 %v626, %v677
  %v683 = vmax.f32 %v627, %v676
  %v687 = vrot.slane %v632, 4
  %v688 = vrot.slane %v633, 4
  %v689 = vsel %vm354, %v687, %v688
  %v690 = vrot.slane %v634, 4
  %v691 = vsel %vm354, %v688, %v690
  %v695 = vmax.f32 %v630, %v689
  %v696 = vmax.f32 %v631, %v691
  %v697 = vmax.f32 %v632, %v690
  %v698 = vmax.f32 %v681, %v695
  %v699 = vmax.f32 %v682, %v696
  %v700 = vmax.f32 %v683, %v697
  %701 = vst [vmem:[%s54 + $0xa] sm:$0xff] %v698
  %702 = vst [vmem:[%s54 + $0x12] sm:$0x3] %v699
  %703 = vst [vmem:[%s56 + $0x8] sm:$0xfc] %v699
  %704 = vst [vmem:[%s56 + $0x10] sm:$0xf] %v700
  %v705 = vld [vmem:[%s0 + $0xa0] sm:$0xf]
  %v706 = vld [vmem:[%s0 + $0xa4] sm:$0xf]
  %v707 = vld [vmem:[%s0 + $0xa8] sm:$0xf]
  %v708 = vld [vmem:[%s0 + $0xac] sm:$0xf]
  %v709 = vld [vmem:[%s0 + $0xb0] sm:$0xf]
  %v710 = vld [vmem:[%s0 + $0xb4] sm:$0xf]
  %v711 = vld [vmem:[%s0 + $0xb8] sm:$0xf]
  %v712 = vld [vmem:[%s0 + $0xbc] sm:$0xf]
  %v713 = vld [vmem:[%s0 + $0xc0] sm:$0xf]
  %v714 = vld [vmem:[%s0 + $0xc4] sm:$0xf]
  %v715 = vld [vmem:[%s0 + $0xc8] sm:$0xf]
  %v716 = vld [vmem:[%s0 + $0xcc] sm:$0xf]
  %v717 = vld [vmem:[%s0 + $0xd0] sm:$0xf]
  %v718 = vld [vmem:[%s0 + $0xd4] sm:$0xf]
  %v719 = vld [vmem:[%s0 + $0xd8] sm:$0xf]
  %v720 = vld [vmem:[%s0 + $0xdc] sm:$0xf]
  %v721 = vld [vmem:[%s0 + $0xe0] sm:$0xf]
  %v722 = vld [vmem:[%s0 + $0xe4] sm:$0xf]
  %v723 = vld [vmem:[%s0 + $0xe8] sm:$0xf]
  %v724 = vld [vmem:[%s0 + $0xec] sm:$0xf]
  %v745 = vunpack.c.l.b16 %v705
  %v746 = vunpack.c.l.b16 %v706
  %v747 = vunpack.c.l.b16 %v707
  %v748 = vunpack.c.l.b16 %v708
  %v749 = vunpack.c.l.b16 %v709
  %v750 = vunpack.c.l.b16 %v710
  %v751 = vunpack.c.l.b16 %v711
  %v752 = vunpack.c.l.b16 %v712
  %v753 = vunpack.c.l.b16 %v713
  %v754 = vunpack.c.l.b16 %v714
  %v755 = vunpack.c.l.b16 %v715
  %v756 = vunpack.c.l.b16 %v716
  %v757 = vunpack.c.l.b16 %v717
  %v758 = vunpack.c.l.b16 %v718
  %v759 = vunpack.c.l.b16 %v719
  %v760 = vunpack.c.l.b16 %v720
  %v761 = vunpack.c.l.b16 %v721
  %v762 = vunpack.c.l.b16 %v722
  %v763 = vunpack.c.l.b16 %v723
  %v764 = vunpack.c.l.b16 %v724
  %v765 = vpack.c.b16 %v746, %v745
  %v766 = vpack.c.b16 %v748, %v747
  %v767 = vpack.c.b16 %v750, %v749
  %v768 = vpack.c.b16 %v752, %v751
  %v769 = vpack.c.b16 %v754, %v753
  %v770 = vpack.c.b16 %v756, %v755
  %v771 = vpack.c.b16 %v758, %v757
  %v772 = vpack.c.b16 %v760, %v759
  %v773 = vpack.c.b16 %v762, %v761
  %v774 = vpack.c.b16 %v764, %v763
  %785 = vmatprep.subr.bf16.mxu0 0
  %786 = vmatpush1.bf16.msra.mxu0 %v202
  %787 = vmatprep.subr.bf16.mxu0 0
  %788 = vmatpush1.bf16.msra.mxu0 %v203
  %789 = vmatprep.subr.bf16.mxu0 0
  %790 = vmatpush1.bf16.msra.mxu0 %v204
  %791 = vmatprep.subr.bf16.mxu0 0
  %792 = vmatpush1.bf16.msra.mxu0 %v205
  %793 = vmatprep.subr.bf16.mxu0 0
  %794 = vmatpush1.bf16.msra.mxu0 %v206
  %795 = vmatprep.subr.bf16.mxu0 0
  %796 = vmatpush1.bf16.msra.mxu0 %v207
  %797 = vmatprep.subr.bf16.mxu0 0
  %798 = vmatpush1.bf16.msra.mxu0 %v208
  %799 = vmatprep.subr.bf16.mxu0 0
  %800 = vmatpush1.bf16.msra.mxu0 %v209
  %801 = vmatprep.subr.bf16.mxu0 0
  %802 = vmatpush1.bf16.msra.mxu0 0
  %803 = vmatprep.subr.bf16.mxu0 0
  %804 = vmatpush1.bf16.msra.mxu0 0
  %805 = vmatprep.subr.bf16.mxu0 0
  %806 = vmatpush1.bf16.msra.mxu0 0
  %807 = vmatprep.subr.bf16.mxu0 0
  %808 = vmatpush1.bf16.msra.mxu0 0
  %809 = vmatprep.subr.bf16.mxu0 0
  %810 = vmatpush1.bf16.msra.mxu0 0
  %811 = vmatprep.subr.bf16.mxu0 0
  %812 = vmatpush1.bf16.msra.mxu0 0
  %813 = vmatprep.subr.bf16.mxu0 0
  %814 = vmatpush1.bf16.msra.mxu0 0
  %815 = vmatprep.subr.bf16.mxu0 0
  %816 = vmatpush1.bf16.msra.mxu0 0
  %817 = vmatprep.mubr.bf16.mxu0 0
  %818 = vmatmul.mubr.bf16.gmra.mrb[0].mxu0 %v765
  %v819 = vpop.f32.mrb[0].mxu0
  %v820 = vadd.f32 %v108, %v819
  %v821 = vpop.f32.mrb[0].mxu0
  %v822 = vpop.f32.mrb[0].mxu0
  %v823 = vadd.f32 %v108, %v822
  %v824 = vpop.f32.mrb[0].mxu0
  %825 = vmatprep.mubr.bf16.mxu0 0
  %826 = vmatmul.mubr.bf16.gmra.mrb[0].mxu0 %v766
  %v827 = vpop.f32.mrb[0].mxu0
  %v828 = vadd.f32 %v108, %v827
  %v829 = vpop.f32.mrb[0].mxu0
  %v830 = vpop.f32.mrb[0].mxu0
  %v831 = vadd.f32 %v108, %v830
  %v832 = vpop.f32.mrb[0].mxu0
  %833 = vmatprep.mubr.bf16.mxu0 0
  %834 = vmatmul.mubr.bf16.gmra.mrb[0].mxu0 %v767
  %v835 = vpop.f32.mrb[0].mxu0
  %v836 = vadd.f32 %v108, %v835
  %v837 = vpop.f32.mrb[0].mxu0
  %v838 = vpop.f32.mrb[0].mxu0
  %v839 = vadd.f32 %v108, %v838
  %v840 = vpop.f32.mrb[0].mxu0
  %841 = vmatprep.mubr.bf16.mxu0 0
  %842 = vmatmul.mubr.bf16.gmra.mrb[0].mxu0 %v768
  %v843 = vpop.f32.mrb[0].mxu0
  %v844 = vadd.f32 %v108, %v843
  %v845 = vpop.f32.mrb[0].mxu0
  %v846 = vpop.f32.mrb[0].mxu0
  %v847 = vadd.f32 %v108, %v846
  %v848 = vpop.f32.mrb[0].mxu0
  %849 = vmatprep.mubr.bf16.mxu0 0
  %850 = vmatmul.mubr.bf16.gmra.mrb[0].mxu0 %v769
  %v851 = vpop.f32.mrb[0].mxu0
  %v852 = vadd.f32 %v108, %v851
  %v853 = vpop.f32.mrb[0].mxu0
  %v854 = vpop.f32.mrb[0].mxu0
  %v855 = vadd.f32 %v108, %v854
  %v856 = vpop.f32.mrb[0].mxu0
  %857 = vmatprep.mubr.bf16.mxu0 0
  %858 = vmatmul.mubr.bf16.gmra.mrb[0].mxu0 %v770
  %v859 = vpop.f32.mrb[0].mxu0
  %v860 = vadd.f32 %v108, %v859
  %v861 = vpop.f32.mrb[0].mxu0
  %v862 = vpop.f32.mrb[0].mxu0
  %v863 = vadd.f32 %v108, %v862
  %v864 = vpop.f32.mrb[0].mxu0
  %865 = vmatprep.mubr.bf16.mxu0 0
  %866 = vmatmul.mubr.bf16.gmra.mrb[0].mxu0 %v771
  %v867 = vpop.f32.mrb[0].mxu0
  %v868 = vadd.f32 %v108, %v867
  %v869 = vpop.f32.mrb[0].mxu0
  %v870 = vpop.f32.mrb[0].mxu0
  %v871 = vadd.f32 %v108, %v870
  %v872 = vpop.f32.mrb[0].mxu0
  %873 = vmatprep.mubr.bf16.mxu0 0
  %874 = vmatmul.mubr.bf16.gmra.mrb[0].mxu0 %v772
  %v875 = vpop.f32.mrb[0].mxu0
  %v876 = vadd.f32 %v108, %v875
  %v877 = vpop.f32.mrb[0].mxu0
  %v878 = vpop.f32.mrb[0].mxu0
  %v879 = vadd.f32 %v108, %v878
  %v880 = vpop.f32.mrb[0].mxu0
  %881 = vmatprep.mubr.bf16.mxu0 0
  %882 = vmatmul.mubr.bf16.gmra.mrb[0].mxu0 %v773
  %v883 = vpop.f32.mrb[0].mxu0
  %v884 = vadd.f32 %v108, %v883
  %v885 = vpop.f32.mrb[0].mxu0
  %v886 = vpop.f32.mrb[0].mxu0
  %v887 = vadd.f32 %v108, %v886
  %v888 = vpop.f32.mrb[0].mxu0
  %889 = vmatprep.mubr.bf16.mxu0 0
  %890 = vmatmul.mubr.bf16.gmra.mrb[0].mxu0 %v774
  %v891 = vpop.f32.mrb[0].mxu0
  %v892 = vadd.f32 %v108, %v891
  %v893 = vpop.f32.mrb[0].mxu0
  %v894 = vpop.f32.mrb[0].mxu0
  %v895 = vadd.f32 %v108, %v894
  %v896 = vpop.f32.mrb[0].mxu0
  %897 = vdwg.mxu0
  %v898 = vmax.f32 %v820, 0.0
  %v899 = vmax.f32 %v823, 0.0
  %v900 = vmax.f32 %v828, 0.0
  %v901 = vmax.f32 %v831, 0.0
  %v902 = vmax.f32 %v836, 0.0
  %v903 = vmax.f32 %v839, 0.0
  %v904 = vmax.f32 %v844, 0.0
  %v905 = vmax.f32 %v847, 0.0
  %v906 = vmax.f32 %v852, 0.0
  %v907 = vmax.f32 %v855, 0.0
  %v908 = vmax.f32 %v860, 0.0
  %v909 = vmax.f32 %v863, 0.0
  %v910 = vmax.f32 %v868, 0.0
  %v911 = vmax.f32 %v871, 0.0
  %v912 = vmax.f32 %v876, 0.0
  %v913 = vmax.f32 %v879, 0.0
  %v914 = vmax.f32 %v884, 0.0
  %v915 = vmax.f32 %v887, 0.0
  %v916 = vmax.f32 %v892, 0.0
  %v917 = vmax.f32 %v895, 0.0
  %v921 = vrot.slane %v900, 4
  %v922 = vrot.slane %v901, 4
  %v923 = vsel %vm354, %v921, %v922
  %v924 = vrot.slane %v902, 4
  %v925 = vsel %vm354, %v922, %v924
  %v929 = vmax.f32 %v898, %v923
  %v930 = vmax.f32 %v899, %v925
  %v931 = vmax.f32 %v900, %v924
  %v935 = vrot.slane %v905, 4
  %v936 = vrot.slane %v906, 4
  %v937 = vsel %vm354, %v935, %v936
  %v938 = vrot.slane %v907, 4
  %v939 = vsel %vm354, %v936, %v938
  %v943 = vmax.f32 %v903, %v937
  %v944 = vmax.f32 %v904, %v939
  %v945 = vmax.f32 %v905, %v938
  %v946 = vmax.f32 %v929, %v943
  %v947 = vmax.f32 %v930, %v944
  %v948 = vmax.f32 %v931, %v945
  %949 = vst [vmem:[#allocation2 + $0x14] sm:$0xff] %v946
  %950 = vst [vmem:[#allocation2 + $0x1c] sm:$0x3] %v947
  %951 = vst [vmem:[%s52 + $0x12] sm:$0xfc] %v947
  %952 = vst [vmem:[%s52 + $0x1a] sm:$0xf] %v948
  %v956 = vrot.slane %v910, 4
  %v957 = vrot.slane %v911, 4
  %v958 = vsel %vm354, %v956, %v957
  %v959 = vrot.slane %v912, 4
  %v960 = vsel %vm354, %v957, %v959
  %v964 = vmax.f32 %v908, %v958
  %v965 = vmax.f32 %v909, %v960
  %v966 = vmax.f32 %v910, %v959
  %v970 = vrot.slane %v915, 4
  %v971 = vrot.slane %v916, 4
  %v972 = vsel %vm354, %v970, %v971
  %v973 = vrot.slane %v917, 4
  %v974 = vsel %vm354, %v971, %v973
  %v978 = vmax.f32 %v913, %v972
  %v979 = vmax.f32 %v914, %v974
  %v980 = vmax.f32 %v915, %v973
  %v981 = vmax.f32 %v964, %v978
  %v982 = vmax.f32 %v965, %v979
  %v983 = vmax.f32 %v966, %v980
  %984 = vst [vmem:[%s54 + $0x14] sm:$0xff] %v981
  %985 = vst [vmem:[%s54 + $0x1c] sm:$0x3] %v982
  %986 = vst [vmem:[%s56 + $0x12] sm:$0xfc] %v982
  %987 = vst [vmem:[%s56 + $0x1a] sm:$0xf] %v983
  %v988 = vld [vmem:[%s0 + $0xf0] sm:$0xf]
  %v989 = vld [vmem:[%s0 + $0xf4] sm:$0xf]
  %v990 = vld [vmem:[%s0 + $0xf8] sm:$0xf]
  %v991 = vld [vmem:[%s0 + $0xfc] sm:$0xf]
  %v992 = vld [vmem:[%s0 + $0x100] sm:$0xf]
  %v993 = vld [vmem:[%s0 + $0x104] sm:$0xf]
  %v994 = vld [vmem:[%s0 + $0x108] sm:$0xf]
  %v995 = vld [vmem:[%s0 + $0x10c] sm:$0xf]
  %v996 = vld [vmem:[%s0 + $0x110] sm:$0xf]
  %v997 = vld [vmem:[%s0 + $0x114] sm:$0xf]
  %v998 = vld [vmem:[%s0 + $0x118] sm:$0xf]
  %v999 = vld [vmem:[%s0 + $0x11c] sm:$0xf]
  %v1000 = vld [vmem:[%s0 + $0x120] sm:$0xf]
  %v1001 = vld [vmem:[%s0 + $0x124] sm:$0xf]
  %v1002 = vld [vmem:[%s0 + $0x128] sm:$0xf]
  %v1003 = vld [vmem:[%s0 + $0x12c] sm:$0xf]
  %v1004 = vld [vmem:[%s0 + $0x130] sm:$0xf]
  %v1005 = vld [vmem:[%s0 + $0x134] sm:$0xf]
  %v1006 = vld [vmem:[%s0 + $0x138] sm:$0xf]
  %v1007 = vld [vmem:[%s0 + $0x13c] sm:$0xf]
  %v1028 = vunpack.c.l.b16 %v988
  %v1029 = vunpack.c.l.b16 %v989
  %v1030 = vunpack.c.l.b16 %v990
  %v1031 = vunpack.c.l.b16 %v991
  %v1032 = vunpack.c.l.b16 %v992
  %v1033 = vunpack.c.l.b16 %v993
  %v1034 = vunpack.c.l.b16 %v994
  %v1035 = vunpack.c.l.b16 %v995
  %v1036 = vunpack.c.l.b16 %v996
  %v1037 = vunpack.c.l.b16 %v997
  %v1038 = vunpack.c.l.b16 %v998
  %v1039 = vunpack.c.l.b16 %v999
  %v1040 = vunpack.c.l.b16 %v1000
  %v1041 = vunpack.c.l.b16 %v1001
  %v1042 = vunpack.c.l.b16 %v1002
  %v1043 = vunpack.c.l.b16 %v1003
  %v1044 = vunpack.c.l.b16 %v1004
  %v1045 = vunpack.c.l.b16 %v1005
  %v1046 = vunpack.c.l.b16 %v1006
  %v1047 = vunpack.c.l.b16 %v1007
  %v1048 = vpack.c.b16 %v1029, %v1028
  %v1049 = vpack.c.b16 %v1031, %v1030
  %v1050 = vpack.c.b16 %v1033, %v1032
  %v1051 = vpack.c.b16 %v1035, %v1034
  %v1052 = vpack.c.b16 %v1037, %v1036
  %v1053 = vpack.c.b16 %v1039, %v1038
  %v1054 = vpack.c.b16 %v1041, %v1040
  %v1055 = vpack.c.b16 %v1043, %v1042
  %v1056 = vpack.c.b16 %v1045, %v1044
  %v1057 = vpack.c.b16 %v1047, %v1046
  %1068 = vmatprep.subr.bf16.mxu0 0
  %1069 = vmatpush1.bf16.msra.mxu0 %v202
  %1070 = vmatprep.subr.bf16.mxu0 0
  %1071 = vmatpush1.bf16.msra.mxu0 %v203
  %1072 = vmatprep.subr.bf16.mxu0 0
  %1073 = vmatpush1.bf16.msra.mxu0 %v204
  %1074 = vmatprep.subr.bf16.mxu0 0
  %1075 = vmatpush1.bf16.msra.mxu0 %v205
  %1076 = vmatprep.subr.bf16.mxu0 0
  %1077 = vmatpush1.bf16.msra.mxu0 %v206
  %1078 = vmatprep.subr.bf16.mxu0 0
  %1079 = vmatpush1.bf16.msra.mxu0 %v207
  %1080 = vmatprep.subr.bf16.mxu0 0
  %1081 = vmatpush1.bf16.msra.mxu0 %v208
  %1082 = vmatprep.subr.bf16.mxu0 0
  %1083 = vmatpush1.bf16.msra.mxu0 %v209
  %1084 = vmatprep.subr.bf16.mxu0 0
  %1085 = vmatpush1.bf16.msra.mxu0 0
  %1086 = vmatprep.subr.bf16.mxu0 0
  %1087 = vmatpush1.bf16.msra.mxu0 0
  %1088 = vmatprep.subr.bf16.mxu0 0
  %1089 = vmatpush1.bf16.msra.mxu0 0
  %1090 = vmatprep.subr.bf16.mxu0 0
  %1091 = vmatpush1.bf16.msra.mxu0 0
  %1092 = vmatprep.subr.bf16.mxu0 0
  %1093 = vmatpush1.bf16.msra.mxu0 0
  %1094 = vmatprep.subr.bf16.mxu0 0
  %1095 = vmatpush1.bf16.msra.mxu0 0
  %1096 = vmatprep.subr.bf16.mxu0 0
  %1097 = vmatpush1.bf16.msra.mxu0 0
  %1098 = vmatprep.subr.bf16.mxu0 0
  %1099 = vmatpush1.bf16.msra.mxu0 0
  %1100 = vmatprep.mubr.bf16.mxu0 0
  %1101 = vmatmul.mubr.bf16.gmra.mrb[0].mxu0 %v1048
  %v1102 = vpop.f32.mrb[0].mxu0
  %v1103 = vadd.f32 %v108, %v1102
  %v1104 = vpop.f32.mrb[0].mxu0
  %v1105 = vpop.f32.mrb[0].mxu0
  %v1106 = vadd.f32 %v108, %v1105
  %v1107 = vpop.f32.mrb[0].mxu0
  %1108 = vmatprep.mubr.bf16.mxu0 0
  %1109 = vmatmul.mubr.bf16.gmra.mrb[0].mxu0 %v1049
  %v1110 = vpop.f32.mrb[0].mxu0
  %v1111 = vadd.f32 %v108, %v1110
  %v1112 = vpop.f32.mrb[0].mxu0
  %v1113 = vpop.f32.mrb[0].mxu0
  %v1114 = vadd.f32 %v108, %v1113
  %v1115 = vpop.f32.mrb[0].mxu0
  %1116 = vmatprep.mubr.bf16.mxu0 0
  %1117 = vmatmul.mubr.bf16.gmra.mrb[0].mxu0 %v1050
  %v1118 = vpop.f32.mrb[0].mxu0
  %v1119 = vadd.f32 %v108, %v1118
  %v1120 = vpop.f32.mrb[0].mxu0
  %v1121 = vpop.f32.mrb[0].mxu0
  %v1122 = vadd.f32 %v108, %v1121
  %v1123 = vpop.f32.mrb[0].mxu0
  %1124 = vmatprep.mubr.bf16.mxu0 0
  %1125 = vmatmul.mubr.bf16.gmra.mrb[0].mxu0 %v1051
  %v1126 = vpop.f32.mrb[0].mxu0
  %v1127 = vadd.f32 %v108, %v1126
  %v1128 = vpop.f32.mrb[0].mxu0
  %v1129 = vpop.f32.mrb[0].mxu0
  %v1130 = vadd.f32 %v108, %v1129
  %v1131 = vpop.f32.mrb[0].mxu0
  %1132 = vmatprep.mubr.bf16.mxu0 0
  %1133 = vmatmul.mubr.bf16.gmra.mrb[0].mxu0 %v1052
  %v1134 = vpop.f32.mrb[0].mxu0
  %v1135 = vadd.f32 %v108, %v1134
  %v1136 = vpop.f32.mrb[0].mxu0
  %v1137 = vpop.f32.mrb[0].mxu0
  %v1138 = vadd.f32 %v108, %v1137
  %v1139 = vpop.f32.mrb[0].mxu0
  %1140 = vmatprep.mubr.bf16.mxu0 0
  %1141 = vmatmul.mubr.bf16.gmra.mrb[0].mxu0 %v1053
  %v1142 = vpop.f32.mrb[0].mxu0
  %v1143 = vadd.f32 %v108, %v1142
  %v1144 = vpop.f32.mrb[0].mxu0
  %v1145 = vpop.f32.mrb[0].mxu0
  %v1146 = vadd.f32 %v108, %v1145
  %v1147 = vpop.f32.mrb[0].mxu0
  %1148 = vmatprep.mubr.bf16.mxu0 0
  %1149 = vmatmul.mubr.bf16.gmra.mrb[0].mxu0 %v1054
  %v1150 = vpop.f32.mrb[0].mxu0
  %v1151 = vadd.f32 %v108, %v1150
  %v1152 = vpop.f32.mrb[0].mxu0
  %v1153 = vpop.f32.mrb[0].mxu0
  %v1154 = vadd.f32 %v108, %v1153
  %v1155 = vpop.f32.mrb[0].mxu0
  %1156 = vmatprep.mubr.bf16.mxu0 0
  %1157 = vmatmul.mubr.bf16.gmra.mrb[0].mxu0 %v1055
  %v1158 = vpop.f32.mrb[0].mxu0
  %v1159 = vadd.f32 %v108, %v1158
  %v1160 = vpop.f32.mrb[0].mxu0
  %v1161 = vpop.f32.mrb[0].mxu0
  %v1162 = vadd.f32 %v108, %v1161
  %v1163 = vpop.f32.mrb[0].mxu0
  %1164 = vmatprep.mubr.bf16.mxu0 0
  %1165 = vmatmul.mubr.bf16.gmra.mrb[0].mxu0 %v1056
  %v1166 = vpop.f32.mrb[0].mxu0
  %v1167 = vadd.f32 %v108, %v1166
  %v1168 = vpop.f32.mrb[0].mxu0
  %v1169 = vpop.f32.mrb[0].mxu0
  %v1170 = vadd.f32 %v108, %v1169
  %v1171 = vpop.f32.mrb[0].mxu0
  %1172 = vmatprep.mubr.bf16.mxu0 0
  %1173 = vmatmul.mubr.bf16.gmra.mrb[0].mxu0 %v1057
  %v1174 = vpop.f32.mrb[0].mxu0
  %v1175 = vadd.f32 %v108, %v1174
  %v1176 = vpop.f32.mrb[0].mxu0
  %v1177 = vpop.f32.mrb[0].mxu0
  %v1178 = vadd.f32 %v108, %v1177
  %v1179 = vpop.f32.mrb[0].mxu0
  %1180 = vdwg.mxu0
  %v1181 = vmax.f32 %v1103, 0.0
  %v1182 = vmax.f32 %v1106, 0.0
  %v1183 = vmax.f32 %v1111, 0.0
  %v1184 = vmax.f32 %v1114, 0.0
  %v1185 = vmax.f32 %v1119, 0.0
  %v1186 = vmax.f32 %v1122, 0.0
  %v1187 = vmax.f32 %v1127, 0.0
  %v1188 = vmax.f32 %v1130, 0.0
  %v1189 = vmax.f32 %v1135, 0.0
  %v1190 = vmax.f32 %v1138, 0.0
  %v1191 = vmax.f32 %v1143, 0.0
  %v1192 = vmax.f32 %v1146, 0.0
  %v1193 = vmax.f32 %v1151, 0.0
  %v1194 = vmax.f32 %v1154, 0.0
  %v1195 = vmax.f32 %v1159, 0.0
  %v1196 = vmax.f32 %v1162, 0.0
  %v1197 = vmax.f32 %v1167, 0.0
  %v1198 = vmax.f32 %v1170, 0.0
  %v1199 = vmax.f32 %v1175, 0.0
  %v1200 = vmax.f32 %v1178, 0.0
  %v1204 = vrot.slane %v1183, 4
  %v1205 = vrot.slane %v1184, 4
  %v1206 = vsel %vm354, %v1204, %v1205
  %v1207 = vrot.slane %v1185, 4
  %v1208 = vsel %vm354, %v1205, %v1207
  %v1212 = vmax.f32 %v1181, %v1206
  %v1213 = vmax.f32 %v1182, %v1208
  %v1214 = vmax.f32 %v1183, %v1207
  %v1218 = vrot.slane %v1188, 4
  %v1219 = vrot.slane %v1189, 4
  %v1220 = vsel %vm354, %v1218, %v1219
  %v1221 = vrot.slane %v1190, 4
  %v1222 = vsel %vm354, %v1219, %v1221
  %v1226 = vmax.f32 %v1186, %v1220
  %v1227 = vmax.f32 %v1187, %v1222
  %v1228 = vmax.f32 %v1188, %v1221
  %v1229 = vmax.f32 %v1212, %v1226
  %v1230 = vmax.f32 %v1213, %v1227
  %v1231 = vmax.f32 %v1214, %v1228
  %1232 = vst [vmem:[#allocation2 + $0x1e] sm:$0xff] %v1229
  %1233 = vst [vmem:[#allocation2 + $0x26] sm:$0x3] %v1230
  %1234 = vst [vmem:[%s52 + $0x1c] sm:$0xfc] %v1230
  %1235 = vst [vmem:[%s52 + $0x24] sm:$0xf] %v1231
  %v1239 = vrot.slane %v1193, 4
  %v1240 = vrot.slane %v1194, 4
  %v1241 = vsel %vm354, %v1239, %v1240
  %v1242 = vrot.slane %v1195, 4
  %v1243 = vsel %vm354, %v1240, %v1242
  %v1247 = vmax.f32 %v1191, %v1241
  %v1248 = vmax.f32 %v1192, %v1243
  %v1249 = vmax.f32 %v1193, %v1242
  %v1253 = vrot.slane %v1198, 4
  %v1254 = vrot.slane %v1199, 4
  %v1255 = vsel %vm354, %v1253, %v1254
  %v1256 = vrot.slane %v1200, 4
  %v1257 = vsel %vm354, %v1254, %v1256
  %v1261 = vmax.f32 %v1196, %v1255
  %v1262 = vmax.f32 %v1197, %v1257
  %v1263 = vmax.f32 %v1198, %v1256
  %v1264 = vmax.f32 %v1247, %v1261
  %v1265 = vmax.f32 %v1248, %v1262
  %v1266 = vmax.f32 %v1249, %v1263
  %1267 = vst [vmem:[%s54 + $0x1e] sm:$0xff] %v1264
  %1268 = vst [vmem:[%s54 + $0x26] sm:$0x3] %v1265
  %1269 = vst [vmem:[%s56 + $0x1c] sm:$0xfc] %v1265
  %1270 = vst [vmem:[%s56 + $0x24] sm:$0xf] %v1266
  %v1271 = vld [vmem:[%s0 + $0x140] sm:$0xf]
  %v1272 = vld [vmem:[%s0 + $0x144] sm:$0xf]
  %v1273 = vld [vmem:[%s0 + $0x148] sm:$0xf]
  %v1274 = vld [vmem:[%s0 + $0x14c] sm:$0xf]
  %v1275 = vld [vmem:[%s0 + $0x150] sm:$0xf]
  %v1276 = vld [vmem:[%s0 + $0x154] sm:$0xf]
  %v1277 = vld [vmem:[%s0 + $0x158] sm:$0xf]
  %v1278 = vld [vmem:[%s0 + $0x15c] sm:$0xf]
  %v1279 = vld [vmem:[%s0 + $0x160] sm:$0xf]
  %v1280 = vld [vmem:[%s0 + $0x164] sm:$0xf]
  %v1281 = vld [vmem:[%s0 + $0x168] sm:$0xf]
  %v1282 = vld [vmem:[%s0 + $0x16c] sm:$0xf]
  %v1283 = vld [vmem:[%s0 + $0x170] sm:$0xf]
  %v1284 = vld [vmem:[%s0 + $0x174] sm:$0xf]
  %v1285 = vld [vmem:[%s0 + $0x178] sm:$0xf]
  %v1286 = vld [vmem:[%s0 + $0x17c] sm:$0xf]
  %v1287 = vld [vmem:[%s0 + $0x180] sm:$0xf]
  %v1288 = vld [vmem:[%s0 + $0x184] sm:$0xf]
  %v1289 = vld [vmem:[%s0 + $0x188] sm:$0xf]
  %v1290 = vld [vmem:[%s0 + $0x18c] sm:$0xf]
  %v1311 = vunpack.c.l.b16 %v1271
  %v1312 = vunpack.c.l.b16 %v1272
  %v1313 = vunpack.c.l.b16 %v1273
  %v1314 = vunpack.c.l.b16 %v1274
  %v1315 = vunpack.c.l.b16 %v1275
  %v1316 = vunpack.c.l.b16 %v1276
  %v1317 = vunpack.c.l.b16 %v1277
  %v1318 = vunpack.c.l.b16 %v1278
  %v1319 = vunpack.c.l.b16 %v1279
  %v1320 = vunpack.c.l.b16 %v1280
  %v1321 = vunpack.c.l.b16 %v1281
  %v1322 = vunpack.c.l.b16 %v1282
  %v1323 = vunpack.c.l.b16 %v1283
  %v1324 = vunpack.c.l.b16 %v1284
  %v1325 = vunpack.c.l.b16 %v1285
  %v1326 = vunpack.c.l.b16 %v1286
  %v1327 = vunpack.c.l.b16 %v1287
  %v1328 = vunpack.c.l.b16 %v1288
  %v1329 = vunpack.c.l.b16 %v1289
  %v1330 = vunpack.c.l.b16 %v1290
  %v1331 = vpack.c.b16 %v1312, %v1311
  %v1332 = vpack.c.b16 %v1314, %v1313
  %v1333 = vpack.c.b16 %v1316, %v1315
  %v1334 = vpack.c.b16 %v1318, %v1317
  %v1335 = vpack.c.b16 %v1320, %v1319
  %v1336 = vpack.c.b16 %v1322, %v1321
  %v1337 = vpack.c.b16 %v1324, %v1323
  %v1338 = vpack.c.b16 %v1326, %v1325
  %v1339 = vpack.c.b16 %v1328, %v1327
  %v1340 = vpack.c.b16 %v1330, %v1329
  %1351 = vmatprep.subr.bf16.mxu0 0
  %1352 = vmatpush1.bf16.msra.mxu0 %v202
  %1353 = vmatprep.subr.bf16.mxu0 0
  %1354 = vmatpush1.bf16.msra.mxu0 %v203
  %1355 = vmatprep.subr.bf16.mxu0 0
  %1356 = vmatpush1.bf16.msra.mxu0 %v204
  %1357 = vmatprep.subr.bf16.mxu0 0
  %1358 = vmatpush1.bf16.msra.mxu0 %v205
  %1359 = vmatprep.subr.bf16.mxu0 0
  %1360 = vmatpush1.bf16.msra.mxu0 %v206
  %1361 = vmatprep.subr.bf16.mxu0 0
  %1362 = vmatpush1.bf16.msra.mxu0 %v207
  %1363 = vmatprep.subr.bf16.mxu0 0
  %1364 = vmatpush1.bf16.msra.mxu0 %v208
  %1365 = vmatprep.subr.bf16.mxu0 0
  %1366 = vmatpush1.bf16.msra.mxu0 %v209
  %1367 = vmatprep.subr.bf16.mxu0 0
  %1368 = vmatpush1.bf16.msra.mxu0 0
  %1369 = vmatprep.subr.bf16.mxu0 0
  %1370 = vmatpush1.bf16.msra.mxu0 0
  %1371 = vmatprep.subr.bf16.mxu0 0
  %1372 = vmatpush1.bf16.msra.mxu0 0
  %1373 = vmatprep.subr.bf16.mxu0 0
  %1374 = vmatpush1.bf16.msra.mxu0 0
  %1375 = vmatprep.subr.bf16.mxu0 0
  %1376 = vmatpush1.bf16.msra.mxu0 0
  %1377 = vmatprep.subr.bf16.mxu0 0
  %1378 = vmatpush1.bf16.msra.mxu0 0
  %1379 = vmatprep.subr.bf16.mxu0 0
  %1380 = vmatpush1.bf16.msra.mxu0 0
  %1381 = vmatprep.subr.bf16.mxu0 0
  %1382 = vmatpush1.bf16.msra.mxu0 0
  %1383 = vmatprep.mubr.bf16.mxu0 0
  %1384 = vmatmul.mubr.bf16.gmra.mrb[0].mxu0 %v1331
  %v1385 = vpop.f32.mrb[0].mxu0
  %v1386 = vadd.f32 %v108, %v1385
  %v1387 = vpop.f32.mrb[0].mxu0
  %v1388 = vpop.f32.mrb[0].mxu0
  %v1389 = vadd.f32 %v108, %v1388
  %v1390 = vpop.f32.mrb[0].mxu0
  %1391 = vmatprep.mubr.bf16.mxu0 0
  %1392 = vmatmul.mubr.bf16.gmra.mrb[0].mxu0 %v1332
  %v1393 = vpop.f32.mrb[0].mxu0
  %v1394 = vadd.f32 %v108, %v1393
  %v1395 = vpop.f32.mrb[0].mxu0
  %v1396 = vpop.f32.mrb[0].mxu0
  %v1397 = vadd.f32 %v108, %v1396
  %v1398 = vpop.f32.mrb[0].mxu0
  %1399 = vmatprep.mubr.bf16.mxu0 0
  %1400 = vmatmul.mubr.bf16.gmra.mrb[0].mxu0 %v1333
  %v1401 = vpop.f32.mrb[0].mxu0
  %v1402 = vadd.f32 %v108, %v1401
  %v1403 = vpop.f32.mrb[0].mxu0
  %v1404 = vpop.f32.mrb[0].mxu0
  %v1405 = vadd.f32 %v108, %v1404
  %v1406 = vpop.f32.mrb[0].mxu0
  %1407 = vmatprep.mubr.bf16.mxu0 0
  %1408 = vmatmul.mubr.bf16.gmra.mrb[0].mxu0 %v1334
  %v1409 = vpop.f32.mrb[0].mxu0
  %v1410 = vadd.f32 %v108, %v1409
  %v1411 = vpop.f32.mrb[0].mxu0
  %v1412 = vpop.f32.mrb[0].mxu0
  %v1413 = vadd.f32 %v108, %v1412
  %v1414 = vpop.f32.mrb[0].mxu0
  %1415 = vmatprep.mubr.bf16.mxu0 0
  %1416 = vmatmul.mubr.bf16.gmra.mrb[0].mxu0 %v1335
  %v1417 = vpop.f32.mrb[0].mxu0
  %v1418 = vadd.f32 %v108, %v1417
  %v1419 = vpop.f32.mrb[0].mxu0
  %v1420 = vpop.f32.mrb[0].mxu0
  %v1421 = vadd.f32 %v108, %v1420
  %v1422 = vpop.f32.mrb[0].mxu0
  %1423 = vmatprep.mubr.bf16.mxu0 0
  %1424 = vmatmul.mubr.bf16.gmra.mrb[0].mxu0 %v1336
  %v1425 = vpop.f32.mrb[0].mxu0
  %v1426 = vadd.f32 %v108, %v1425
  %v1427 = vpop.f32.mrb[0].mxu0
  %v1428 = vpop.f32.mrb[0].mxu0
  %v1429 = vadd.f32 %v108, %v1428
  %v1430 = vpop.f32.mrb[0].mxu0
  %1431 = vmatprep.mubr.bf16.mxu0 0
  %1432 = vmatmul.mubr.bf16.gmra.mrb[0].mxu0 %v1337
  %v1433 = vpop.f32.mrb[0].mxu0
  %v1434 = vadd.f32 %v108, %v1433
  %v1435 = vpop.f32.mrb[0].mxu0
  %v1436 = vpop.f32.mrb[0].mxu0
  %v1437 = vadd.f32 %v108, %v1436
  %v1438 = vpop.f32.mrb[0].mxu0
  %1439 = vmatprep.mubr.bf16.mxu0 0
  %1440 = vmatmul.mubr.bf16.gmra.mrb[0].mxu0 %v1338
  %v1441 = vpop.f32.mrb[0].mxu0
  %v1442 = vadd.f32 %v108, %v1441
  %v1443 = vpop.f32.mrb[0].mxu0
  %v1444 = vpop.f32.mrb[0].mxu0
  %v1445 = vadd.f32 %v108, %v1444
  %v1446 = vpop.f32.mrb[0].mxu0
  %1447 = vmatprep.mubr.bf16.mxu0 0
  %1448 = vmatmul.mubr.bf16.gmra.mrb[0].mxu0 %v1339
  %v1449 = vpop.f32.mrb[0].mxu0
  %v1450 = vadd.f32 %v108, %v1449
  %v1451 = vpop.f32.mrb[0].mxu0
  %v1452 = vpop.f32.mrb[0].mxu0
  %v1453 = vadd.f32 %v108, %v1452
  %v1454 = vpop.f32.mrb[0].mxu0
  %1455 = vmatprep.mubr.bf16.mxu0 0
  %1456 = vmatmul.mubr.bf16.gmra.mrb[0].mxu0 %v1340
  %v1457 = vpop.f32.mrb[0].mxu0
  %v1458 = vadd.f32 %v108, %v1457
  %v1459 = vpop.f32.mrb[0].mxu0
  %v1460 = vpop.f32.mrb[0].mxu0
  %v1461 = vadd.f32 %v108, %v1460
  %v1462 = vpop.f32.mrb[0].mxu0
  %1463 = vdwg.mxu0
  %v1464 = vmax.f32 %v1386, 0.0
  %v1465 = vmax.f32 %v1389, 0.0
  %v1466 = vmax.f32 %v1394, 0.0
  %v1467 = vmax.f32 %v1397, 0.0
  %v1468 = vmax.f32 %v1402, 0.0
  %v1469 = vmax.f32 %v1405, 0.0
  %v1470 = vmax.f32 %v1410, 0.0
  %v1471 = vmax.f32 %v1413, 0.0
  %v1472 = vmax.f32 %v1418, 0.0
  %v1473 = vmax.f32 %v1421, 0.0
  %v1474 = vmax.f32 %v1426, 0.0
  %v1475 = vmax.f32 %v1429, 0.0
  %v1476 = vmax.f32 %v1434, 0.0
  %v1477 = vmax.f32 %v1437, 0.0
  %v1478 = vmax.f32 %v1442, 0.0
  %v1479 = vmax.f32 %v1445, 0.0
  %v1480 = vmax.f32 %v1450, 0.0
  %v1481 = vmax.f32 %v1453, 0.0
  %v1482 = vmax.f32 %v1458, 0.0
  %v1483 = vmax.f32 %v1461, 0.0
  %v1487 = vrot.slane %v1466, 4
  %v1488 = vrot.slane %v1467, 4
  %v1489 = vsel %vm354, %v1487, %v1488
  %v1490 = vrot.slane %v1468, 4
  %v1491 = vsel %vm354, %v1488, %v1490
  %v1495 = vmax.f32 %v1464, %v1489
  %v1496 = vmax.f32 %v1465, %v1491
  %v1497 = vmax.f32 %v1466, %v1490
  %v1501 = vrot.slane %v1471, 4
  %v1502 = vrot.slane %v1472, 4
  %v1503 = vsel %vm354, %v1501, %v1502
  %v1504 = vrot.slane %v1473, 4
  %v1505 = vsel %vm354, %v1502, %v1504
  %v1509 = vmax.f32 %v1469, %v1503
  %v1510 = vmax.f32 %v1470, %v1505
  %v1511 = vmax.f32 %v1471, %v1504
  %v1512 = vmax.f32 %v1495, %v1509
  %v1513 = vmax.f32 %v1496, %v1510
  %v1514 = vmax.f32 %v1497, %v1511
  %1515 = vst [vmem:[#allocation2 + $0x28] sm:$0xff] %v1512
  %1516 = vst [vmem:[#allocation2 + $0x30] sm:$0x3] %v1513
  %1517 = vst [vmem:[%s52 + $0x26] sm:$0xfc] %v1513
  %1518 = vst [vmem:[%s52 + $0x2e] sm:$0xf] %v1514
  %v1522 = vrot.slane %v1476, 4
  %v1523 = vrot.slane %v1477, 4
  %v1524 = vsel %vm354, %v1522, %v1523
  %v1525 = vrot.slane %v1478, 4
  %v1526 = vsel %vm354, %v1523, %v1525
  %v1530 = vmax.f32 %v1474, %v1524
  %v1531 = vmax.f32 %v1475, %v1526
  %v1532 = vmax.f32 %v1476, %v1525
  %v1536 = vrot.slane %v1481, 4
  %v1537 = vrot.slane %v1482, 4
  %v1538 = vsel %vm354, %v1536, %v1537
  %v1539 = vrot.slane %v1483, 4
  %v1540 = vsel %vm354, %v1537, %v1539
  %v1544 = vmax.f32 %v1479, %v1538
  %v1545 = vmax.f32 %v1480, %v1540
  %v1546 = vmax.f32 %v1481, %v1539
  %v1547 = vmax.f32 %v1530, %v1544
  %v1548 = vmax.f32 %v1531, %v1545
  %v1549 = vmax.f32 %v1532, %v1546
  %1550 = vst [vmem:[%s54 + $0x28] sm:$0xff] %v1547
  %1551 = vst [vmem:[%s54 + $0x30] sm:$0x3] %v1548
  %1552 = vst [vmem:[%s56 + $0x26] sm:$0xfc] %v1548
  %1553 = vst [vmem:[%s56 + $0x2e] sm:$0xf] %v1549
  %v1554 = vld [vmem:[%s0 + $0x190] sm:$0xf]
  %v1555 = vld [vmem:[%s0 + $0x194] sm:$0xf]
  %v1556 = vld [vmem:[%s0 + $0x198] sm:$0xf]
  %v1557 = vld [vmem:[%s0 + $0x19c] sm:$0xf]
  %v1558 = vld [vmem:[%s0 + $0x1a0] sm:$0xf]
  %v1559 = vld [vmem:[%s0 + $0x1a4] sm:$0xf]
  %v1560 = vld [vmem:[%s0 + $0x1a8] sm:$0xf]
  %v1561 = vld [vmem:[%s0 + $0x1ac] sm:$0xf]
  %v1562 = vld [vmem:[%s0 + $0x1b0] sm:$0xf]
  %v1563 = vld [vmem:[%s0 + $0x1b4] sm:$0xf]
  %v1564 = vld [vmem:[%s0 + $0x1b8] sm:$0xf]
  %v1565 = vld [vmem:[%s0 + $0x1bc] sm:$0xf]
  %v1566 = vld [vmem:[%s0 + $0x1c0] sm:$0xf]
  %v1567 = vld [vmem:[%s0 + $0x1c4] sm:$0xf]
  %v1568 = vld [vmem:[%s0 + $0x1c8] sm:$0xf]
  %v1569 = vld [vmem:[%s0 + $0x1cc] sm:$0xf]
  %v1570 = vld [vmem:[%s0 + $0x1d0] sm:$0xf]
  %v1571 = vld [vmem:[%s0 + $0x1d4] sm:$0xf]
  %v1572 = vld [vmem:[%s0 + $0x1d8] sm:$0xf]
  %v1573 = vld [vmem:[%s0 + $0x1dc] sm:$0xf]
  %v1594 = vunpack.c.l.b16 %v1554
  %v1595 = vunpack.c.l.b16 %v1555
  %v1596 = vunpack.c.l.b16 %v1556
  %v1597 = vunpack.c.l.b16 %v1557
  %v1598 = vunpack.c.l.b16 %v1558
  %v1599 = vunpack.c.l.b16 %v1559
  %v1600 = vunpack.c.l.b16 %v1560
  %v1601 = vunpack.c.l.b16 %v1561
  %v1602 = vunpack.c.l.b16 %v1562
  %v1603 = vunpack.c.l.b16 %v1563
  %v1604 = vunpack.c.l.b16 %v1564
  %v1605 = vunpack.c.l.b16 %v1565
  %v1606 = vunpack.c.l.b16 %v1566
  %v1607 = vunpack.c.l.b16 %v1567
  %v1608 = vunpack.c.l.b16 %v1568
  %v1609 = vunpack.c.l.b16 %v1569
  %v1610 = vunpack.c.l.b16 %v1570
  %v1611 = vunpack.c.l.b16 %v1571
  %v1612 = vunpack.c.l.b16 %v1572
  %v1613 = vunpack.c.l.b16 %v1573
  %v1614 = vpack.c.b16 %v1595, %v1594
  %v1615 = vpack.c.b16 %v1597, %v1596
  %v1616 = vpack.c.b16 %v1599, %v1598
  %v1617 = vpack.c.b16 %v1601, %v1600
  %v1618 = vpack.c.b16 %v1603, %v1602
  %v1619 = vpack.c.b16 %v1605, %v1604
  %v1620 = vpack.c.b16 %v1607, %v1606
  %v1621 = vpack.c.b16 %v1609, %v1608
  %v1622 = vpack.c.b16 %v1611, %v1610
  %v1623 = vpack.c.b16 %v1613, %v1612
  %1634 = vmatprep.subr.bf16.mxu0 0
  %1635 = vmatpush1.bf16.msra.mxu0 %v202
  %1636 = vmatprep.subr.bf16.mxu0 0
  %1637 = vmatpush1.bf16.msra.mxu0 %v203
  %1638 = vmatprep.subr.bf16.mxu0 0
  %1639 = vmatpush1.bf16.msra.mxu0 %v204
  %1640 = vmatprep.subr.bf16.mxu0 0
  %1641 = vmatpush1.bf16.msra.mxu0 %v205
  %1642 = vmatprep.subr.bf16.mxu0 0
  %1643 = vmatpush1.bf16.msra.mxu0 %v206
  %1644 = vmatprep.subr.bf16.mxu0 0
  %1645 = vmatpush1.bf16.msra.mxu0 %v207
  %1646 = vmatprep.subr.bf16.mxu0 0
  %1647 = vmatpush1.bf16.msra.mxu0 %v208
  %1648 = vmatprep.subr.bf16.mxu0 0
  %1649 = vmatpush1.bf16.msra.mxu0 %v209
  %1650 = vmatprep.subr.bf16.mxu0 0
  %1651 = vmatpush1.bf16.msra.mxu0 0
  %1652 = vmatprep.subr.bf16.mxu0 0
  %1653 = vmatpush1.bf16.msra.mxu0 0
  %1654 = vmatprep.subr.bf16.mxu0 0
  %1655 = vmatpush1.bf16.msra.mxu0 0
  %1656 = vmatprep.subr.bf16.mxu0 0
  %1657 = vmatpush1.bf16.msra.mxu0 0
  %1658 = vmatprep.subr.bf16.mxu0 0
  %1659 = vmatpush1.bf16.msra.mxu0 0
  %1660 = vmatprep.subr.bf16.mxu0 0
  %1661 = vmatpush1.bf16.msra.mxu0 0
  %1662 = vmatprep.subr.bf16.mxu0 0
  %1663 = vmatpush1.bf16.msra.mxu0 0
  %1664 = vmatprep.subr.bf16.mxu0 0
  %1665 = vmatpush1.bf16.msra.mxu0 0
  %1666 = vmatprep.mubr.bf16.mxu0 0
  %1667 = vmatmul.mubr.bf16.gmra.mrb[0].mxu0 %v1614
  %v1668 = vpop.f32.mrb[0].mxu0
  %v1669 = vadd.f32 %v108, %v1668
  %v1670 = vpop.f32.mrb[0].mxu0
  %v1671 = vpop.f32.mrb[0].mxu0
  %v1672 = vadd.f32 %v108, %v1671
  %v1673 = vpop.f32.mrb[0].mxu0
  %1674 = vmatprep.mubr.bf16.mxu0 0
  %1675 = vmatmul.mubr.bf16.gmra.mrb[0].mxu0 %v1615
  %v1676 = vpop.f32.mrb[0].mxu0
  %v1677 = vadd.f32 %v108, %v1676
  %v1678 = vpop.f32.mrb[0].mxu0
  %v1679 = vpop.f32.mrb[0].mxu0
  %v1680 = vadd.f32 %v108, %v1679
  %v1681 = vpop.f32.mrb[0].mxu0
  %1682 = vmatprep.mubr.bf16.mxu0 0
  %1683 = vmatmul.mubr.bf16.gmra.mrb[0].mxu0 %v1616
  %v1684 = vpop.f32.mrb[0].mxu0
  %v1685 = vadd.f32 %v108, %v1684
  %v1686 = vpop.f32.mrb[0].mxu0
  %v1687 = vpop.f32.mrb[0].mxu0
  %v1688 = vadd.f32 %v108, %v1687
  %v1689 = vpop.f32.mrb[0].mxu0
  %1690 = vmatprep.mubr.bf16.mxu0 0
  %1691 = vmatmul.mubr.bf16.gmra.mrb[0].mxu0 %v1617
  %v1692 = vpop.f32.mrb[0].mxu0
  %v1693 = vadd.f32 %v108, %v1692
  %v1694 = vpop.f32.mrb[0].mxu0
  %v1695 = vpop.f32.mrb[0].mxu0
  %v1696 = vadd.f32 %v108, %v1695
  %v1697 = vpop.f32.mrb[0].mxu0
  %1698 = vmatprep.mubr.bf16.mxu0 0
  %1699 = vmatmul.mubr.bf16.gmra.mrb[0].mxu0 %v1618
  %v1700 = vpop.f32.mrb[0].mxu0
  %v1701 = vadd.f32 %v108, %v1700
  %v1702 = vpop.f32.mrb[0].mxu0
  %v1703 = vpop.f32.mrb[0].mxu0
  %v1704 = vadd.f32 %v108, %v1703
  %v1705 = vpop.f32.mrb[0].mxu0
  %1706 = vmatprep.mubr.bf16.mxu0 0
  %1707 = vmatmul.mubr.bf16.gmra.mrb[0].mxu0 %v1619
  %v1708 = vpop.f32.mrb[0].mxu0
  %v1709 = vadd.f32 %v108, %v1708
  %v1710 = vpop.f32.mrb[0].mxu0
  %v1711 = vpop.f32.mrb[0].mxu0
  %v1712 = vadd.f32 %v108, %v1711
  %v1713 = vpop.f32.mrb[0].mxu0
  %1714 = vmatprep.mubr.bf16.mxu0 0
  %1715 = vmatmul.mubr.bf16.gmra.mrb[0].mxu0 %v1620
  %v1716 = vpop.f32.mrb[0].mxu0
  %v1717 = vadd.f32 %v108, %v1716
  %v1718 = vpop.f32.mrb[0].mxu0
  %v1719 = vpop.f32.mrb[0].mxu0
  %v1720 = vadd.f32 %v108, %v1719
  %v1721 = vpop.f32.mrb[0].mxu0
  %1722 = vmatprep.mubr.bf16.mxu0 0
  %1723 = vmatmul.mubr.bf16.gmra.mrb[0].mxu0 %v1621
  %v1724 = vpop.f32.mrb[0].mxu0
  %v1725 = vadd.f32 %v108, %v1724
  %v1726 = vpop.f32.mrb[0].mxu0
  %v1727 = vpop.f32.mrb[0].mxu0
  %v1728 = vadd.f32 %v108, %v1727
  %v1729 = vpop.f32.mrb[0].mxu0
  %1730 = vmatprep.mubr.bf16.mxu0 0
  %1731 = vmatmul.mubr.bf16.gmra.mrb[0].mxu0 %v1622
  %v1732 = vpop.f32.mrb[0].mxu0
  %v1733 = vadd.f32 %v108, %v1732
  %v1734 = vpop.f32.mrb[0].mxu0
  %v1735 = vpop.f32.mrb[0].mxu0
  %v1736 = vadd.f32 %v108, %v1735
  %v1737 = vpop.f32.mrb[0].mxu0
  %1738 = vmatprep.mubr.bf16.mxu0 0
  %1739 = vmatmul.mubr.bf16.gmra.mrb[0].mxu0 %v1623
  %v1740 = vpop.f32.mrb[0].mxu0
  %v1741 = vadd.f32 %v108, %v1740
  %v1742 = vpop.f32.mrb[0].mxu0
  %v1743 = vpop.f32.mrb[0].mxu0
  %v1744 = vadd.f32 %v108, %v1743
  %v1745 = vpop.f32.mrb[0].mxu0
  %1746 = vdwg.mxu0
  %v1747 = vmax.f32 %v1669, 0.0
  %v1748 = vmax.f32 %v1672, 0.0
  %v1749 = vmax.f32 %v1677, 0.0
  %v1750 = vmax.f32 %v1680, 0.0
  %v1751 = vmax.f32 %v1685, 0.0
  %v1752 = vmax.f32 %v1688, 0.0
  %v1753 = vmax.f32 %v1693, 0.0
  %v1754 = vmax.f32 %v1696, 0.0
  %v1755 = vmax.f32 %v1701, 0.0
  %v1756 = vmax.f32 %v1704, 0.0
  %v1757 = vmax.f32 %v1709, 0.0
  %v1758 = vmax.f32 %v1712, 0.0
  %v1759 = vmax.f32 %v1717, 0.0
  %v1760 = vmax.f32 %v1720, 0.0
  %v1761 = vmax.f32 %v1725, 0.0
  %v1762 = vmax.f32 %v1728, 0.0
  %v1763 = vmax.f32 %v1733, 0.0
  %v1764 = vmax.f32 %v1736, 0.0
  %v1765 = vmax.f32 %v1741, 0.0
  %v1766 = vmax.f32 %v1744, 0.0
  %v1770 = vrot.slane %v1749, 4
  %v1771 = vrot.slane %v1750, 4
  %v1772 = vsel %vm354, %v1770, %v1771
  %v1773 = vrot.slane %v1751, 4
  %v1774 = vsel %vm354, %v1771, %v1773
  %v1778 = vmax.f32 %v1747, %v1772
  %v1779 = vmax.f32 %v1748, %v1774
  %v1780 = vmax.f32 %v1749, %v1773
  %v1784 = vrot.slane %v1754, 4
  %v1785 = vrot.slane %v1755, 4
  %v1786 = vsel %vm354, %v1784, %v1785
  %v1787 = vrot.slane %v1756, 4
  %v1788 = vsel %vm354, %v1785, %v1787
  %v1792 = vmax.f32 %v1752, %v1786
  %v1793 = vmax.f32 %v1753, %v1788
  %v1794 = vmax.f32 %v1754, %v1787
  %v1795 = vmax.f32 %v1778, %v1792
  %v1796 = vmax.f32 %v1779, %v1793
  %v1797 = vmax.f32 %v1780, %v1794
  %1798 = vst [vmem:[#allocation2 + $0x32] sm:$0xff] %v1795
  %1799 = vst [vmem:[#allocation2 + $0x3a] sm:$0x3] %v1796
  %1800 = vst [vmem:[%s52 + $0x30] sm:$0xfc] %v1796
  %1801 = vst [vmem:[%s52 + $0x38] sm:$0xf] %v1797
  %v1805 = vrot.slane %v1759, 4
  %v1806 = vrot.slane %v1760, 4
  %v1807 = vsel %vm354, %v1805, %v1806
  %v1808 = vrot.slane %v1761, 4
  %v1809 = vsel %vm354, %v1806, %v1808
  %v1813 = vmax.f32 %v1757, %v1807
  %v1814 = vmax.f32 %v1758, %v1809
  %v1815 = vmax.f32 %v1759, %v1808
  %v1819 = vrot.slane %v1764, 4
  %v1820 = vrot.slane %v1765, 4
  %v1821 = vsel %vm354, %v1819, %v1820
  %v1822 = vrot.slane %v1766, 4
  %v1823 = vsel %vm354, %v1820, %v1822
  %v1827 = vmax.f32 %v1762, %v1821
  %v1828 = vmax.f32 %v1763, %v1823
  %v1829 = vmax.f32 %v1764, %v1822
  %v1830 = vmax.f32 %v1813, %v1827
  %v1831 = vmax.f32 %v1814, %v1828
  %v1832 = vmax.f32 %v1815, %v1829
  %1833 = vst [vmem:[%s54 + $0x32] sm:$0xff] %v1830
  %1834 = vst [vmem:[%s54 + $0x3a] sm:$0x3] %v1831
  %1835 = vst [vmem:[%s56 + $0x30] sm:$0xfc] %v1831
  %1836 = vst [vmem:[%s56 + $0x38] sm:$0xf] %v1832
  %v1837 = vld [vmem:[%s0 + $0x1e0] sm:$0xf]
  %v1838 = vld [vmem:[%s0 + $0x1e4] sm:$0xf]
  %v1839 = vld [vmem:[%s0 + $0x1e8] sm:$0xf]
  %v1840 = vld [vmem:[%s0 + $0x1ec] sm:$0xf]
  %v1841 = vld [vmem:[%s0 + $0x1f0] sm:$0xf]
  %v1842 = vld [vmem:[%s0 + $0x1f4] sm:$0xf]
  %v1843 = vld [vmem:[%s0 + $0x1f8] sm:$0xf]
  %v1844 = vld [vmem:[%s0 + $0x1fc] sm:$0xf]
  %v1845 = vld [vmem:[%s0 + $0x200] sm:$0xf]
  %v1846 = vld [vmem:[%s0 + $0x204] sm:$0xf]
  %v1847 = vld [vmem:[%s0 + $0x208] sm:$0xf]
  %v1848 = vld [vmem:[%s0 + $0x20c] sm:$0xf]
  %v1849 = vld [vmem:[%s0 + $0x210] sm:$0xf]
  %v1850 = vld [vmem:[%s0 + $0x214] sm:$0xf]
  %v1851 = vld [vmem:[%s0 + $0x218] sm:$0xf]
  %v1852 = vld [vmem:[%s0 + $0x21c] sm:$0xf]
  %v1853 = vld [vmem:[%s0 + $0x220] sm:$0xf]
  %v1854 = vld [vmem:[%s0 + $0x224] sm:$0xf]
  %v1855 = vld [vmem:[%s0 + $0x228] sm:$0xf]
  %v1856 = vld [vmem:[%s0 + $0x22c] sm:$0xf]
  %v1877 = vunpack.c.l.b16 %v1837
  %v1878 = vunpack.c.l.b16 %v1838
  %v1879 = vunpack.c.l.b16 %v1839
  %v1880 = vunpack.c.l.b16 %v1840
  %v1881 = vunpack.c.l.b16 %v1841
  %v1882 = vunpack.c.l.b16 %v1842
  %v1883 = vunpack.c.l.b16 %v1843
  %v1884 = vunpack.c.l.b16 %v1844
  %v1885 = vunpack.c.l.b16 %v1845
  %v1886 = vunpack.c.l.b16 %v1846
  %v1887 = vunpack.c.l.b16 %v1847
  %v1888 = vunpack.c.l.b16 %v1848
  %v1889 = vunpack.c.l.b16 %v1849
  %v1890 = vunpack.c.l.b16 %v1850
  %v1891 = vunpack.c.l.b16 %v1851
  %v1892 = vunpack.c.l.b16 %v1852
  %v1893 = vunpack.c.l.b16 %v1853
  %v1894 = vunpack.c.l.b16 %v1854
  %v1895 = vunpack.c.l.b16 %v1855
  %v1896 = vunpack.c.l.b16 %v1856
  %v1897 = vpack.c.b16 %v1878, %v1877
  %v1898 = vpack.c.b16 %v1880, %v1879
  %v1899 = vpack.c.b16 %v1882, %v1881
  %v1900 = vpack.c.b16 %v1884, %v1883
  %v1901 = vpack.c.b16 %v1886, %v1885
  %v1902 = vpack.c.b16 %v1888, %v1887
  %v1903 = vpack.c.b16 %v1890, %v1889
  %v1904 = vpack.c.b16 %v1892, %v1891
  %v1905 = vpack.c.b16 %v1894, %v1893
  %v1906 = vpack.c.b16 %v1896, %v1895
  %1917 = vmatprep.subr.bf16.mxu0 0
  %1918 = vmatpush1.bf16.msra.mxu0 %v202
  %1919 = vmatprep.subr.bf16.mxu0 0
  %1920 = vmatpush1.bf16.msra.mxu0 %v203
  %1921 = vmatprep.subr.bf16.mxu0 0
  %1922 = vmatpush1.bf16.msra.mxu0 %v204
  %1923 = vmatprep.subr.bf16.mxu0 0
  %1924 = vmatpush1.bf16.msra.mxu0 %v205
  %1925 = vmatprep.subr.bf16.mxu0 0
  %1926 = vmatpush1.bf16.msra.mxu0 %v206
  %1927 = vmatprep.subr.bf16.mxu0 0
  %1928 = vmatpush1.bf16.msra.mxu0 %v207
  %1929 = vmatprep.subr.bf16.mxu0 0
  %1930 = vmatpush1.bf16.msra.mxu0 %v208
  %1931 = vmatprep.subr.bf16.mxu0 0
  %1932 = vmatpush1.bf16.msra.mxu0 %v209
  %1933 = vmatprep.subr.bf16.mxu0 0
  %1934 = vmatpush1.bf16.msra.mxu0 0
  %1935 = vmatprep.subr.bf16.mxu0 0
  %1936 = vmatpush1.bf16.msra.mxu0 0
  %1937 = vmatprep.subr.bf16.mxu0 0
  %1938 = vmatpush1.bf16.msra.mxu0 0
  %1939 = vmatprep.subr.bf16.mxu0 0
  %1940 = vmatpush1.bf16.msra.mxu0 0
  %1941 = vmatprep.subr.bf16.mxu0 0
  %1942 = vmatpush1.bf16.msra.mxu0 0
  %1943 = vmatprep.subr.bf16.mxu0 0
  %1944 = vmatpush1.bf16.msra.mxu0 0
  %1945 = vmatprep.subr.bf16.mxu0 0
  %1946 = vmatpush1.bf16.msra.mxu0 0
  %1947 = vmatprep.subr.bf16.mxu0 0
  %1948 = vmatpush1.bf16.msra.mxu0 0
  %1949 = vmatprep.mubr.bf16.mxu0 0
  %1950 = vmatmul.mubr.bf16.gmra.mrb[0].mxu0 %v1897
  %v1951 = vpop.f32.mrb[0].mxu0
  %v1952 = vadd.f32 %v108, %v1951
  %v1953 = vpop.f32.mrb[0].mxu0
  %v1954 = vpop.f32.mrb[0].mxu0
  %v1955 = vadd.f32 %v108, %v1954
  %v1956 = vpop.f32.mrb[0].mxu0
  %1957 = vmatprep.mubr.bf16.mxu0 0
  %1958 = vmatmul.mubr.bf16.gmra.mrb[0].mxu0 %v1898
  %v1959 = vpop.f32.mrb[0].mxu0
  %v1960 = vadd.f32 %v108, %v1959
  %v1961 = vpop.f32.mrb[0].mxu0
  %v1962 = vpop.f32.mrb[0].mxu0
  %v1963 = vadd.f32 %v108, %v1962
  %v1964 = vpop.f32.mrb[0].mxu0
  %1965 = vmatprep.mubr.bf16.mxu0 0
  %1966 = vmatmul.mubr.bf16.gmra.mrb[0].mxu0 %v1899
  %v1967 = vpop.f32.mrb[0].mxu0
  %v1968 = vadd.f32 %v108, %v1967
  %v1969 = vpop.f32.mrb[0].mxu0
  %v1970 = vpop.f32.mrb[0].mxu0
  %v1971 = vadd.f32 %v108, %v1970
  %v1972 = vpop.f32.mrb[0].mxu0
  %1973 = vmatprep.mubr.bf16.mxu0 0
  %1974 = vmatmul.mubr.bf16.gmra.mrb[0].mxu0 %v1900
  %v1975 = vpop.f32.mrb[0].mxu0
  %v1976 = vadd.f32 %v108, %v1975
  %v1977 = vpop.f32.mrb[0].mxu0
  %v1978 = vpop.f32.mrb[0].mxu0
  %v1979 = vadd.f32 %v108, %v1978
  %v1980 = vpop.f32.mrb[0].mxu0
  %1981 = vmatprep.mubr.bf16.mxu0 0
  %1982 = vmatmul.mubr.bf16.gmra.mrb[0].mxu0 %v1901
  %v1983 = vpop.f32.mrb[0].mxu0
  %v1984 = vadd.f32 %v108, %v1983
  %v1985 = vpop.f32.mrb[0].mxu0
  %v1986 = vpop.f32.mrb[0].mxu0
  %v1987 = vadd.f32 %v108, %v1986
  %v1988 = vpop.f32.mrb[0].mxu0
  %1989 = vmatprep.mubr.bf16.mxu0 0
  %1990 = vmatmul.mubr.bf16.gmra.mrb[0].mxu0 %v1902
  %v1991 = vpop.f32.mrb[0].mxu0
  %v1992 = vadd.f32 %v108, %v1991
  %v1993 = vpop.f32.mrb[0].mxu0
  %v1994 = vpop.f32.mrb[0].mxu0
  %v1995 = vadd.f32 %v108, %v1994
  %v1996 = vpop.f32.mrb[0].mxu0
  %1997 = vmatprep.mubr.bf16.mxu0 0
  %1998 = vmatmul.mubr.bf16.gmra.mrb[0].mxu0 %v1903
  %v1999 = vpop.f32.mrb[0].mxu0
  %v2000 = vadd.f32 %v108, %v1999
  %v2001 = vpop.f32.mrb[0].mxu0
  %v2002 = vpop.f32.mrb[0].mxu0
  %v2003 = vadd.f32 %v108, %v2002
  %v2004 = vpop.f32.mrb[0].mxu0
  %2005 = vmatprep.mubr.bf16.mxu0 0
  %2006 = vmatmul.mubr.bf16.gmra.mrb[0].mxu0 %v1904
  %v2007 = vpop.f32.mrb[0].mxu0
  %v2008 = vadd.f32 %v108, %v2007
  %v2009 = vpop.f32.mrb[0].mxu0
  %v2010 = vpop.f32.mrb[0].mxu0
  %v2011 = vadd.f32 %v108, %v2010
  %v2012 = vpop.f32.mrb[0].mxu0
  %2013 = vmatprep.mubr.bf16.mxu0 0
  %2014 = vmatmul.mubr.bf16.gmra.mrb[0].mxu0 %v1905
  %v2015 = vpop.f32.mrb[0].mxu0
  %v2016 = vadd.f32 %v108, %v2015
  %v2017 = vpop.f32.mrb[0].mxu0
  %v2018 = vpop.f32.mrb[0].mxu0
  %v2019 = vadd.f32 %v108, %v2018
  %v2020 = vpop.f32.mrb[0].mxu0
  %2021 = vmatprep.mubr.bf16.mxu0 0
  %2022 = vmatmul.mubr.bf16.gmra.mrb[0].mxu0 %v1906
  %v2023 = vpop.f32.mrb[0].mxu0
  %v2024 = vadd.f32 %v108, %v2023
  %v2025 = vpop.f32.mrb[0].mxu0
  %v2026 = vpop.f32.mrb[0].mxu0
  %v2027 = vadd.f32 %v108, %v2026
  %v2028 = vpop.f32.mrb[0].mxu0
  %2029 = vdwg.mxu0
  %v2030 = vmax.f32 %v1952, 0.0
  %v2031 = vmax.f32 %v1955, 0.0
  %v2032 = vmax.f32 %v1960, 0.0
  %v2033 = vmax.f32 %v1963, 0.0
  %v2034 = vmax.f32 %v1968, 0.0
  %v2035 = vmax.f32 %v1971, 0.0
  %v2036 = vmax.f32 %v1976, 0.0
  %v2037 = vmax.f32 %v1979, 0.0
  %v2038 = vmax.f32 %v1984, 0.0
  %v2039 = vmax.f32 %v1987, 0.0
  %v2040 = vmax.f32 %v1992, 0.0
  %v2041 = vmax.f32 %v1995, 0.0
  %v2042 = vmax.f32 %v2000, 0.0
  %v2043 = vmax.f32 %v2003, 0.0
  %v2044 = vmax.f32 %v2008, 0.0
  %v2045 = vmax.f32 %v2011, 0.0
  %v2046 = vmax.f32 %v2016, 0.0
  %v2047 = vmax.f32 %v2019, 0.0
  %v2048 = vmax.f32 %v2024, 0.0
  %v2049 = vmax.f32 %v2027, 0.0
  %v2053 = vrot.slane %v2032, 4
  %v2054 = vrot.slane %v2033, 4
  %v2055 = vsel %vm354, %v2053, %v2054
  %v2056 = vrot.slane %v2034, 4
  %v2057 = vsel %vm354, %v2054, %v2056
  %v2061 = vmax.f32 %v2030, %v2055
  %v2062 = vmax.f32 %v2031, %v2057
  %v2063 = vmax.f32 %v2032, %v2056
  %v2067 = vrot.slane %v2037, 4
  %v2068 = vrot.slane %v2038, 4
  %v2069 = vsel %vm354, %v2067, %v2068
  %v2070 = vrot.slane %v2039, 4
  %v2071 = vsel %vm354, %v2068, %v2070
  %v2075 = vmax.f32 %v2035, %v2069
  %v2076 = vmax.f32 %v2036, %v2071
  %v2077 = vmax.f32 %v2037, %v2070
  %v2078 = vmax.f32 %v2061, %v2075
  %v2079 = vmax.f32 %v2062, %v2076
  %v2080 = vmax.f32 %v2063, %v2077
  %2081 = vst [vmem:[#allocation2 + $0x3c] sm:$0xff] %v2078
  %2082 = vst [vmem:[#allocation2 + $0x44] sm:$0x3] %v2079
  %2083 = vst [vmem:[%s52 + $0x3a] sm:$0xfc] %v2079
  %2084 = vst [vmem:[%s52 + $0x42] sm:$0xf] %v2080
  %v2088 = vrot.slane %v2042, 4
  %v2089 = vrot.slane %v2043, 4
  %v2090 = vsel %vm354, %v2088, %v2089
  %v2091 = vrot.slane %v2044, 4
  %v2092 = vsel %vm354, %v2089, %v2091
  %v2096 = vmax.f32 %v2040, %v2090
  %v2097 = vmax.f32 %v2041, %v2092
  %v2098 = vmax.f32 %v2042, %v2091
  %v2102 = vrot.slane %v2047, 4
  %v2103 = vrot.slane %v2048, 4
  %v2104 = vsel %vm354, %v2102, %v2103
  %v2105 = vrot.slane %v2049, 4
  %v2106 = vsel %vm354, %v2103, %v2105
  %v2110 = vmax.f32 %v2045, %v2104
  %v2111 = vmax.f32 %v2046, %v2106
  %v2112 = vmax.f32 %v2047, %v2105
  %v2113 = vmax.f32 %v2096, %v2110
  %v2114 = vmax.f32 %v2097, %v2111
  %v2115 = vmax.f32 %v2098, %v2112
  %2116 = vst [vmem:[%s54 + $0x3c] sm:$0xff] %v2113
  %2117 = vst [vmem:[%s54 + $0x44] sm:$0x3] %v2114
  %2118 = vst [vmem:[%s56 + $0x3a] sm:$0xfc] %v2114
  %2119 = vst [vmem:[%s56 + $0x42] sm:$0xf] %v2115
  %v2120 = vld [vmem:[%s0 + $0x230] sm:$0xf]
  %v2121 = vld [vmem:[%s0 + $0x234] sm:$0xf]
  %v2122 = vld [vmem:[%s0 + $0x238] sm:$0xf]
  %v2123 = vld [vmem:[%s0 + $0x23c] sm:$0xf]
  %v2124 = vld [vmem:[%s0 + $0x240] sm:$0xf]
  %v2125 = vld [vmem:[%s0 + $0x244] sm:$0xf]
  %v2126 = vld [vmem:[%s0 + $0x248] sm:$0xf]
  %v2127 = vld [vmem:[%s0 + $0x24c] sm:$0xf]
  %v2128 = vld [vmem:[%s0 + $0x250] sm:$0xf]
  %v2129 = vld [vmem:[%s0 + $0x254] sm:$0xf]
  %v2130 = vld [vmem:[%s0 + $0x258] sm:$0xf]
  %v2131 = vld [vmem:[%s0 + $0x25c] sm:$0xf]
  %v2132 = vld [vmem:[%s0 + $0x260] sm:$0xf]
  %v2133 = vld [vmem:[%s0 + $0x264] sm:$0xf]
  %v2134 = vld [vmem:[%s0 + $0x268] sm:$0xf]
  %v2135 = vld [vmem:[%s0 + $0x26c] sm:$0xf]
  %v2136 = vld [vmem:[%s0 + $0x270] sm:$0xf]
  %v2137 = vld [vmem:[%s0 + $0x274] sm:$0xf]
  %v2138 = vld [vmem:[%s0 + $0x278] sm:$0xf]
  %v2139 = vld [vmem:[%s0 + $0x27c] sm:$0xf]
  %v2160 = vunpack.c.l.b16 %v2120
  %v2161 = vunpack.c.l.b16 %v2121
  %v2162 = vunpack.c.l.b16 %v2122
  %v2163 = vunpack.c.l.b16 %v2123
  %v2164 = vunpack.c.l.b16 %v2124
  %v2165 = vunpack.c.l.b16 %v2125
  %v2166 = vunpack.c.l.b16 %v2126
  %v2167 = vunpack.c.l.b16 %v2127
  %v2168 = vunpack.c.l.b16 %v2128
  %v2169 = vunpack.c.l.b16 %v2129
  %v2170 = vunpack.c.l.b16 %v2130
  %v2171 = vunpack.c.l.b16 %v2131
  %v2172 = vunpack.c.l.b16 %v2132
  %v2173 = vunpack.c.l.b16 %v2133
  %v2174 = vunpack.c.l.b16 %v2134
  %v2175 = vunpack.c.l.b16 %v2135
  %v2176 = vunpack.c.l.b16 %v2136
  %v2177 = vunpack.c.l.b16 %v2137
  %v2178 = vunpack.c.l.b16 %v2138
  %v2179 = vunpack.c.l.b16 %v2139
  %v2180 = vpack.c.b16 %v2161, %v2160
  %v2181 = vpack.c.b16 %v2163, %v2162
  %v2182 = vpack.c.b16 %v2165, %v2164
  %v2183 = vpack.c.b16 %v2167, %v2166
  %v2184 = vpack.c.b16 %v2169, %v2168
  %v2185 = vpack.c.b16 %v2171, %v2170
  %v2186 = vpack.c.b16 %v2173, %v2172
  %v2187 = vpack.c.b16 %v2175, %v2174
  %v2188 = vpack.c.b16 %v2177, %v2176
  %v2189 = vpack.c.b16 %v2179, %v2178
  %2200 = vmatprep.subr.bf16.mxu0 0
  %2201 = vmatpush1.bf16.msra.mxu0 %v202
  %2202 = vmatprep.subr.bf16.mxu0 0
  %2203 = vmatpush1.bf16.msra.mxu0 %v203
  %2204 = vmatprep.subr.bf16.mxu0 0
  %2205 = vmatpush1.bf16.msra.mxu0 %v204
  %2206 = vmatprep.subr.bf16.mxu0 0
  %2207 = vmatpush1.bf16.msra.mxu0 %v205
  %2208 = vmatprep.subr.bf16.mxu0 0
  %2209 = vmatpush1.bf16.msra.mxu0 %v206
  %2210 = vmatprep.subr.bf16.mxu0 0
  %2211 = vmatpush1.bf16.msra.mxu0 %v207
  %2212 = vmatprep.subr.bf16.mxu0 0
  %2213 = vmatpush1.bf16.msra.mxu0 %v208
  %2214 = vmatprep.subr.bf16.mxu0 0
  %2215 = vmatpush1.bf16.msra.mxu0 %v209
  %2216 = vmatprep.subr.bf16.mxu0 0
  %2217 = vmatpush1.bf16.msra.mxu0 0
  %2218 = vmatprep.subr.bf16.mxu0 0
  %2219 = vmatpush1.bf16.msra.mxu0 0
  %2220 = vmatprep.subr.bf16.mxu0 0
  %2221 = vmatpush1.bf16.msra.mxu0 0
  %2222 = vmatprep.subr.bf16.mxu0 0
  %2223 = vmatpush1.bf16.msra.mxu0 0
  %2224 = vmatprep.subr.bf16.mxu0 0
  %2225 = vmatpush1.bf16.msra.mxu0 0
  %2226 = vmatprep.subr.bf16.mxu0 0
  %2227 = vmatpush1.bf16.msra.mxu0 0
  %2228 = vmatprep.subr.bf16.mxu0 0
  %2229 = vmatpush1.bf16.msra.mxu0 0
  %2230 = vmatprep.subr.bf16.mxu0 0
  %2231 = vmatpush1.bf16.msra.mxu0 0
  %2232 = vmatprep.mubr.bf16.mxu0 0
  %2233 = vmatmul.mubr.bf16.gmra.mrb[0].mxu0 %v2180
  %v2234 = vpop.f32.mrb[0].mxu0
  %v2235 = vadd.f32 %v108, %v2234
  %v2236 = vpop.f32.mrb[0].mxu0
  %v2237 = vpop.f32.mrb[0].mxu0
  %v2238 = vadd.f32 %v108, %v2237
  %v2239 = vpop.f32.mrb[0].mxu0
  %2240 = vmatprep.mubr.bf16.mxu0 0
  %2241 = vmatmul.mubr.bf16.gmra.mrb[0].mxu0 %v2181
  %v2242 = vpop.f32.mrb[0].mxu0
  %v2243 = vadd.f32 %v108, %v2242
  %v2244 = vpop.f32.mrb[0].mxu0
  %v2245 = vpop.f32.mrb[0].mxu0
  %v2246 = vadd.f32 %v108, %v2245
  %v2247 = vpop.f32.mrb[0].mxu0
  %2248 = vmatprep.mubr.bf16.mxu0 0
  %2249 = vmatmul.mubr.bf16.gmra.mrb[0].mxu0 %v2182
  %v2250 = vpop.f32.mrb[0].mxu0
  %v2251 = vadd.f32 %v108, %v2250
  %v2252 = vpop.f32.mrb[0].mxu0
  %v2253 = vpop.f32.mrb[0].mxu0
  %v2254 = vadd.f32 %v108, %v2253
  %v2255 = vpop.f32.mrb[0].mxu0
  %2256 = vmatprep.mubr.bf16.mxu0 0
  %2257 = vmatmul.mubr.bf16.gmra.mrb[0].mxu0 %v2183
  %v2258 = vpop.f32.mrb[0].mxu0
  %v2259 = vadd.f32 %v108, %v2258
  %v2260 = vpop.f32.mrb[0].mxu0
  %v2261 = vpop.f32.mrb[0].mxu0
  %v2262 = vadd.f32 %v108, %v2261
  %v2263 = vpop.f32.mrb[0].mxu0
  %2264 = vmatprep.mubr.bf16.mxu0 0
  %2265 = vmatmul.mubr.bf16.gmra.mrb[0].mxu0 %v2184
  %v2266 = vpop.f32.mrb[0].mxu0
  %v2267 = vadd.f32 %v108, %v2266
  %v2268 = vpop.f32.mrb[0].mxu0
  %v2269 = vpop.f32.mrb[0].mxu0
  %v2270 = vadd.f32 %v108, %v2269
  %v2271 = vpop.f32.mrb[0].mxu0
  %2272 = vmatprep.mubr.bf16.mxu0 0
  %2273 = vmatmul.mubr.bf16.gmra.mrb[0].mxu0 %v2185
  %v2274 = vpop.f32.mrb[0].mxu0
  %v2275 = vadd.f32 %v108, %v2274
  %v2276 = vpop.f32.mrb[0].mxu0
  %v2277 = vpop.f32.mrb[0].mxu0
  %v2278 = vadd.f32 %v108, %v2277
  %v2279 = vpop.f32.mrb[0].mxu0
  %2280 = vmatprep.mubr.bf16.mxu0 0
  %2281 = vmatmul.mubr.bf16.gmra.mrb[0].mxu0 %v2186
  %v2282 = vpop.f32.mrb[0].mxu0
  %v2283 = vadd.f32 %v108, %v2282
  %v2284 = vpop.f32.mrb[0].mxu0
  %v2285 = vpop.f32.mrb[0].mxu0
  %v2286 = vadd.f32 %v108, %v2285
  %v2287 = vpop.f32.mrb[0].mxu0
  %2288 = vmatprep.mubr.bf16.mxu0 0
  %2289 = vmatmul.mubr.bf16.gmra.mrb[0].mxu0 %v2187
  %v2290 = vpop.f32.mrb[0].mxu0
  %v2291 = vadd.f32 %v108, %v2290
  %v2292 = vpop.f32.mrb[0].mxu0
  %v2293 = vpop.f32.mrb[0].mxu0
  %v2294 = vadd.f32 %v108, %v2293
  %v2295 = vpop.f32.mrb[0].mxu0
  %2296 = vmatprep.mubr.bf16.mxu0 0
  %2297 = vmatmul.mubr.bf16.gmra.mrb[0].mxu0 %v2188
  %v2298 = vpop.f32.mrb[0].mxu0
  %v2299 = vadd.f32 %v108, %v2298
  %v2300 = vpop.f32.mrb[0].mxu0
  %v2301 = vpop.f32.mrb[0].mxu0
  %v2302 = vadd.f32 %v108, %v2301
  %v2303 = vpop.f32.mrb[0].mxu0
  %2304 = vmatprep.mubr.bf16.mxu0 0
  %2305 = vmatmul.mubr.bf16.gmra.mrb[0].mxu0 %v2189
  %v2306 = vpop.f32.mrb[0].mxu0
  %v2307 = vadd.f32 %v108, %v2306
  %v2308 = vpop.f32.mrb[0].mxu0
  %v2309 = vpop.f32.mrb[0].mxu0
  %v2310 = vadd.f32 %v108, %v2309
  %v2311 = vpop.f32.mrb[0].mxu0
  %2312 = vdwg.mxu0
  %v2313 = vmax.f32 %v2235, 0.0
  %v2314 = vmax.f32 %v2238, 0.0
  %v2315 = vmax.f32 %v2243, 0.0
  %v2316 = vmax.f32 %v2246, 0.0
  %v2317 = vmax.f32 %v2251, 0.0
  %v2318 = vmax.f32 %v2254, 0.0
  %v2319 = vmax.f32 %v2259, 0.0
  %v2320 = vmax.f32 %v2262, 0.0
  %v2321 = vmax.f32 %v2267, 0.0
  %v2322 = vmax.f32 %v2270, 0.0
  %v2323 = vmax.f32 %v2275, 0.0
  %v2324 = vmax.f32 %v2278, 0.0
  %v2325 = vmax.f32 %v2283, 0.0
  %v2326 = vmax.f32 %v2286, 0.0
  %v2327 = vmax.f32 %v2291, 0.0
  %v2328 = vmax.f32 %v2294, 0.0
  %v2329 = vmax.f32 %v2299, 0.0
  %v2330 = vmax.f32 %v2302, 0.0
  %v2331 = vmax.f32 %v2307, 0.0
  %v2332 = vmax.f32 %v2310, 0.0
  %v2336 = vrot.slane %v2315, 4
  %v2337 = vrot.slane %v2316, 4
  %v2338 = vsel %vm354, %v2336, %v2337
  %v2339 = vrot.slane %v2317, 4
  %v2340 = vsel %vm354, %v2337, %v2339
  %v2344 = vmax.f32 %v2313, %v2338
  %v2345 = vmax.f32 %v2314, %v2340
  %v2346 = vmax.f32 %v2315, %v2339
  %v2350 = vrot.slane %v2320, 4
  %v2351 = vrot.slane %v2321, 4
  %v2352 = vsel %vm354, %v2350, %v2351
  %v2353 = vrot.slane %v2322, 4
  %v2354 = vsel %vm354, %v2351, %v2353
  %v2358 = vmax.f32 %v2318, %v2352
  %v2359 = vmax.f32 %v2319, %v2354
  %v2360 = vmax.f32 %v2320, %v2353
  %v2361 = vmax.f32 %v2344, %v2358
  %v2362 = vmax.f32 %v2345, %v2359
  %v2363 = vmax.f32 %v2346, %v2360
  %2364 = vst [vmem:[#allocation2 + $0x46] sm:$0xff] %v2361
  %2365 = vst [vmem:[#allocation2 + $0x4e] sm:$0x3] %v2362
  %2366 = vst [vmem:[%s52 + $0x44] sm:$0xfc] %v2362
  %2367 = vst [vmem:[%s52 + $0x4c] sm:$0xf] %v2363
  %v2371 = vrot.slane %v2325, 4
  %v2372 = vrot.slane %v2326, 4
  %v2373 = vsel %vm354, %v2371, %v2372
  %v2374 = vrot.slane %v2327, 4
  %v2375 = vsel %vm354, %v2372, %v2374
  %v2379 = vmax.f32 %v2323, %v2373
  %v2380 = vmax.f32 %v2324, %v2375
  %v2381 = vmax.f32 %v2325, %v2374
  %v2385 = vrot.slane %v2330, 4
  %v2386 = vrot.slane %v2331, 4
  %v2387 = vsel %vm354, %v2385, %v2386
  %v2388 = vrot.slane %v2332, 4
  %v2389 = vsel %vm354, %v2386, %v2388
  %v2393 = vmax.f32 %v2328, %v2387
  %v2394 = vmax.f32 %v2329, %v2389
  %v2395 = vmax.f32 %v2330, %v2388
  %v2396 = vmax.f32 %v2379, %v2393
  %v2397 = vmax.f32 %v2380, %v2394
  %v2398 = vmax.f32 %v2381, %v2395
  %2399 = vst [vmem:[%s54 + $0x46] sm:$0xff] %v2396
  %2400 = vst [vmem:[%s54 + $0x4e] sm:$0x3] %v2397
  %2401 = vst [vmem:[%s56 + $0x44] sm:$0xfc] %v2397
  %2402 = vst [vmem:[%s56 + $0x4c] sm:$0xf] %v2398
  %v2403 = vld [vmem:[%s0 + $0x280] sm:$0xf]
  %v2404 = vld [vmem:[%s0 + $0x284] sm:$0xf]
  %v2405 = vld [vmem:[%s0 + $0x288] sm:$0xf]
  %v2406 = vld [vmem:[%s0 + $0x28c] sm:$0xf]
  %v2407 = vld [vmem:[%s0 + $0x290] sm:$0xf]
  %v2408 = vld [vmem:[%s0 + $0x294] sm:$0xf]
  %v2409 = vld [vmem:[%s0 + $0x298] sm:$0xf]
  %v2410 = vld [vmem:[%s0 + $0x29c] sm:$0xf]
  %v2411 = vld [vmem:[%s0 + $0x2a0] sm:$0xf]
  %v2412 = vld [vmem:[%s0 + $0x2a4] sm:$0xf]
  %v2413 = vld [vmem:[%s0 + $0x2a8] sm:$0xf]
  %v2414 = vld [vmem:[%s0 + $0x2ac] sm:$0xf]
  %v2415 = vld [vmem:[%s0 + $0x2b0] sm:$0xf]
  %v2416 = vld [vmem:[%s0 + $0x2b4] sm:$0xf]
  %v2417 = vld [vmem:[%s0 + $0x2b8] sm:$0xf]
  %v2418 = vld [vmem:[%s0 + $0x2bc] sm:$0xf]
  %v2419 = vld [vmem:[%s0 + $0x2c0] sm:$0xf]
  %v2420 = vld [vmem:[%s0 + $0x2c4] sm:$0xf]
  %v2421 = vld [vmem:[%s0 + $0x2c8] sm:$0xf]
  %v2422 = vld [vmem:[%s0 + $0x2cc] sm:$0xf]
  %v2443 = vunpack.c.l.b16 %v2403
  %v2444 = vunpack.c.l.b16 %v2404
  %v2445 = vunpack.c.l.b16 %v2405
  %v2446 = vunpack.c.l.b16 %v2406
  %v2447 = vunpack.c.l.b16 %v2407
  %v2448 = vunpack.c.l.b16 %v2408
  %v2449 = vunpack.c.l.b16 %v2409
  %v2450 = vunpack.c.l.b16 %v2410
  %v2451 = vunpack.c.l.b16 %v2411
  %v2452 = vunpack.c.l.b16 %v2412
  %v2453 = vunpack.c.l.b16 %v2413
  %v2454 = vunpack.c.l.b16 %v2414
  %v2455 = vunpack.c.l.b16 %v2415
  %v2456 = vunpack.c.l.b16 %v2416
  %v2457 = vunpack.c.l.b16 %v2417
  %v2458 = vunpack.c.l.b16 %v2418
  %v2459 = vunpack.c.l.b16 %v2419
  %v2460 = vunpack.c.l.b16 %v2420
  %v2461 = vunpack.c.l.b16 %v2421
  %v2462 = vunpack.c.l.b16 %v2422
  %v2463 = vpack.c.b16 %v2444, %v2443
  %v2464 = vpack.c.b16 %v2446, %v2445
  %v2465 = vpack.c.b16 %v2448, %v2447
  %v2466 = vpack.c.b16 %v2450, %v2449
  %v2467 = vpack.c.b16 %v2452, %v2451
  %v2468 = vpack.c.b16 %v2454, %v2453
  %v2469 = vpack.c.b16 %v2456, %v2455
  %v2470 = vpack.c.b16 %v2458, %v2457
  %v2471 = vpack.c.b16 %v2460, %v2459
  %v2472 = vpack.c.b16 %v2462, %v2461
  %2483 = vmatprep.subr.bf16.mxu0 0
  %2484 = vmatpush1.bf16.msra.mxu0 %v202
  %2485 = vmatprep.subr.bf16.mxu0 0
  %2486 = vmatpush1.bf16.msra.mxu0 %v203
  %2487 = vmatprep.subr.bf16.mxu0 0
  %2488 = vmatpush1.bf16.msra.mxu0 %v204
  %2489 = vmatprep.subr.bf16.mxu0 0
  %2490 = vmatpush1.bf16.msra.mxu0 %v205
  %2491 = vmatprep.subr.bf16.mxu0 0
  %2492 = vmatpush1.bf16.msra.mxu0 %v206
  %2493 = vmatprep.subr.bf16.mxu0 0
  %2494 = vmatpush1.bf16.msra.mxu0 %v207
  %2495 = vmatprep.subr.bf16.mxu0 0
  %2496 = vmatpush1.bf16.msra.mxu0 %v208
  %2497 = vmatprep.subr.bf16.mxu0 0
  %2498 = vmatpush1.bf16.msra.mxu0 %v209
  %2499 = vmatprep.subr.bf16.mxu0 0
  %2500 = vmatpush1.bf16.msra.mxu0 0
  %2501 = vmatprep.subr.bf16.mxu0 0
  %2502 = vmatpush1.bf16.msra.mxu0 0
  %2503 = vmatprep.subr.bf16.mxu0 0
  %2504 = vmatpush1.bf16.msra.mxu0 0
  %2505 = vmatprep.subr.bf16.mxu0 0
  %2506 = vmatpush1.bf16.msra.mxu0 0
  %2507 = vmatprep.subr.bf16.mxu0 0
  %2508 = vmatpush1.bf16.msra.mxu0 0
  %2509 = vmatprep.subr.bf16.mxu0 0
  %2510 = vmatpush1.bf16.msra.mxu0 0
  %2511 = vmatprep.subr.bf16.mxu0 0
  %2512 = vmatpush1.bf16.msra.mxu0 0
  %2513 = vmatprep.subr.bf16.mxu0 0
  %2514 = vmatpush1.bf16.msra.mxu0 0
  %2515 = vmatprep.mubr.bf16.mxu0 0
  %2516 = vmatmul.mubr.bf16.gmra.mrb[0].mxu0 %v2463
  %v2517 = vpop.f32.mrb[0].mxu0
  %v2518 = vadd.f32 %v108, %v2517
  %v2519 = vpop.f32.mrb[0].mxu0
  %v2520 = vpop.f32.mrb[0].mxu0
  %v2521 = vadd.f32 %v108, %v2520
  %v2522 = vpop.f32.mrb[0].mxu0
  %2523 = vmatprep.mubr.bf16.mxu0 0
  %2524 = vmatmul.mubr.bf16.gmra.mrb[0].mxu0 %v2464
  %v2525 = vpop.f32.mrb[0].mxu0
  %v2526 = vadd.f32 %v108, %v2525
  %v2527 = vpop.f32.mrb[0].mxu0
  %v2528 = vpop.f32.mrb[0].mxu0
  %v2529 = vadd.f32 %v108, %v2528
  %v2530 = vpop.f32.mrb[0].mxu0
  %2531 = vmatprep.mubr.bf16.mxu0 0
  %2532 = vmatmul.mubr.bf16.gmra.mrb[0].mxu0 %v2465
  %v2533 = vpop.f32.mrb[0].mxu0
  %v2534 = vadd.f32 %v108, %v2533
  %v2535 = vpop.f32.mrb[0].mxu0
  %v2536 = vpop.f32.mrb[0].mxu0
  %v2537 = vadd.f32 %v108, %v2536
  %v2538 = vpop.f32.mrb[0].mxu0
  %2539 = vmatprep.mubr.bf16.mxu0 0
  %2540 = vmatmul.mubr.bf16.gmra.mrb[0].mxu0 %v2466
  %v2541 = vpop.f32.mrb[0].mxu0
  %v2542 = vadd.f32 %v108, %v2541
  %v2543 = vpop.f32.mrb[0].mxu0
  %v2544 = vpop.f32.mrb[0].mxu0
  %v2545 = vadd.f32 %v108, %v2544
  %v2546 = vpop.f32.mrb[0].mxu0
  %2547 = vmatprep.mubr.bf16.mxu0 0
  %2548 = vmatmul.mubr.bf16.gmra.mrb[0].mxu0 %v2467
  %v2549 = vpop.f32.mrb[0].mxu0
  %v2550 = vadd.f32 %v108, %v2549
  %v2551 = vpop.f32.mrb[0].mxu0
  %v2552 = vpop.f32.mrb[0].mxu0
  %v2553 = vadd.f32 %v108, %v2552
  %v2554 = vpop.f32.mrb[0].mxu0
  %2555 = vmatprep.mubr.bf16.mxu0 0
  %2556 = vmatmul.mubr.bf16.gmra.mrb[0].mxu0 %v2468
  %v2557 = vpop.f32.mrb[0].mxu0
  %v2558 = vadd.f32 %v108, %v2557
  %v2559 = vpop.f32.mrb[0].mxu0
  %v2560 = vpop.f32.mrb[0].mxu0
  %v2561 = vadd.f32 %v108, %v2560
  %v2562 = vpop.f32.mrb[0].mxu0
  %2563 = vmatprep.mubr.bf16.mxu0 0
  %2564 = vmatmul.mubr.bf16.gmra.mrb[0].mxu0 %v2469
  %v2565 = vpop.f32.mrb[0].mxu0
  %v2566 = vadd.f32 %v108, %v2565
  %v2567 = vpop.f32.mrb[0].mxu0
  %v2568 = vpop.f32.mrb[0].mxu0
  %v2569 = vadd.f32 %v108, %v2568
  %v2570 = vpop.f32.mrb[0].mxu0
  %2571 = vmatprep.mubr.bf16.mxu0 0
  %2572 = vmatmul.mubr.bf16.gmra.mrb[0].mxu0 %v2470
  %v2573 = vpop.f32.mrb[0].mxu0
  %v2574 = vadd.f32 %v108, %v2573
  %v2575 = vpop.f32.mrb[0].mxu0
  %v2576 = vpop.f32.mrb[0].mxu0
  %v2577 = vadd.f32 %v108, %v2576
  %v2578 = vpop.f32.mrb[0].mxu0
  %2579 = vmatprep.mubr.bf16.mxu0 0
  %2580 = vmatmul.mubr.bf16.gmra.mrb[0].mxu0 %v2471
  %v2581 = vpop.f32.mrb[0].mxu0
  %v2582 = vadd.f32 %v108, %v2581
  %v2583 = vpop.f32.mrb[0].mxu0
  %v2584 = vpop.f32.mrb[0].mxu0
  %v2585 = vadd.f32 %v108, %v2584
  %v2586 = vpop.f32.mrb[0].mxu0
  %2587 = vmatprep.mubr.bf16.mxu0 0
  %2588 = vmatmul.mubr.bf16.gmra.mrb[0].mxu0 %v2472
  %v2589 = vpop.f32.mrb[0].mxu0
  %v2590 = vadd.f32 %v108, %v2589
  %v2591 = vpop.f32.mrb[0].mxu0
  %v2592 = vpop.f32.mrb[0].mxu0
  %v2593 = vadd.f32 %v108, %v2592
  %v2594 = vpop.f32.mrb[0].mxu0
  %2595 = vdwg.mxu0
  %v2596 = vmax.f32 %v2518, 0.0
  %v2597 = vmax.f32 %v2521, 0.0
  %v2598 = vmax.f32 %v2526, 0.0
  %v2599 = vmax.f32 %v2529, 0.0
  %v2600 = vmax.f32 %v2534, 0.0
  %v2601 = vmax.f32 %v2537, 0.0
  %v2602 = vmax.f32 %v2542, 0.0
  %v2603 = vmax.f32 %v2545, 0.0
  %v2604 = vmax.f32 %v2550, 0.0
  %v2605 = vmax.f32 %v2553, 0.0
  %v2606 = vmax.f32 %v2558, 0.0
  %v2607 = vmax.f32 %v2561, 0.0
  %v2608 = vmax.f32 %v2566, 0.0
  %v2609 = vmax.f32 %v2569, 0.0
  %v2610 = vmax.f32 %v2574, 0.0
  %v2611 = vmax.f32 %v2577, 0.0
  %v2612 = vmax.f32 %v2582, 0.0
  %v2613 = vmax.f32 %v2585, 0.0
  %v2614 = vmax.f32 %v2590, 0.0
  %v2615 = vmax.f32 %v2593, 0.0
  %v2619 = vrot.slane %v2598, 4
  %v2620 = vrot.slane %v2599, 4
  %v2621 = vsel %vm354, %v2619, %v2620
  %v2622 = vrot.slane %v2600, 4
  %v2623 = vsel %vm354, %v2620, %v2622
  %v2627 = vmax.f32 %v2596, %v2621
  %v2628 = vmax.f32 %v2597, %v2623
  %v2629 = vmax.f32 %v2598, %v2622
  %v2633 = vrot.slane %v2603, 4
  %v2634 = vrot.slane %v2604, 4
  %v2635 = vsel %vm354, %v2633, %v2634
  %v2636 = vrot.slane %v2605, 4
  %v2637 = vsel %vm354, %v2634, %v2636
  %v2641 = vmax.f32 %v2601, %v2635
  %v2642 = vmax.f32 %v2602, %v2637
  %v2643 = vmax.f32 %v2603, %v2636
  %v2644 = vmax.f32 %v2627, %v2641
  %v2645 = vmax.f32 %v2628, %v2642
  %v2646 = vmax.f32 %v2629, %v2643
  %2647 = vst [vmem:[#allocation2 + $0x50] sm:$0xff] %v2644
  %2648 = vst [vmem:[#allocation2 + $0x58] sm:$0x3] %v2645
  %2649 = vst [vmem:[%s52 + $0x4e] sm:$0xfc] %v2645
  %2650 = vst [vmem:[%s52 + $0x56] sm:$0xf] %v2646
  %v2654 = vrot.slane %v2608, 4
  %v2655 = vrot.slane %v2609, 4
  %v2656 = vsel %vm354, %v2654, %v2655
  %v2657 = vrot.slane %v2610, 4
  %v2658 = vsel %vm354, %v2655, %v2657
  %v2662 = vmax.f32 %v2606, %v2656
  %v2663 = vmax.f32 %v2607, %v2658
  %v2664 = vmax.f32 %v2608, %v2657
  %v2668 = vrot.slane %v2613, 4
  %v2669 = vrot.slane %v2614, 4
  %v2670 = vsel %vm354, %v2668, %v2669
  %v2671 = vrot.slane %v2615, 4
  %v2672 = vsel %vm354, %v2669, %v2671
  %v2676 = vmax.f32 %v2611, %v2670
  %v2677 = vmax.f32 %v2612, %v2672
  %v2678 = vmax.f32 %v2613, %v2671
  %v2679 = vmax.f32 %v2662, %v2676
  %v2680 = vmax.f32 %v2663, %v2677
  %v2681 = vmax.f32 %v2664, %v2678
  %2682 = vst [vmem:[%s54 + $0x50] sm:$0xff] %v2679
  %2683 = vst [vmem:[%s54 + $0x58] sm:$0x3] %v2680
  %2684 = vst [vmem:[%s56 + $0x4e] sm:$0xfc] %v2680
  %2685 = vst [vmem:[%s56 + $0x56] sm:$0xf] %v2681
  %v2686 = vld [vmem:[%s0 + $0x2d0] sm:$0xf]
  %v2687 = vld [vmem:[%s0 + $0x2d4] sm:$0xf]
  %v2688 = vld [vmem:[%s0 + $0x2d8] sm:$0xf]
  %v2689 = vld [vmem:[%s0 + $0x2dc] sm:$0xf]
  %v2690 = vld [vmem:[%s0 + $0x2e0] sm:$0xf]
  %v2691 = vld [vmem:[%s0 + $0x2e4] sm:$0xf]
  %v2692 = vld [vmem:[%s0 + $0x2e8] sm:$0xf]
  %v2693 = vld [vmem:[%s0 + $0x2ec] sm:$0xf]
  %v2694 = vld [vmem:[%s0 + $0x2f0] sm:$0xf]
  %v2695 = vld [vmem:[%s0 + $0x2f4] sm:$0xf]
  %v2696 = vld [vmem:[%s0 + $0x2f8] sm:$0xf]
  %v2697 = vld [vmem:[%s0 + $0x2fc] sm:$0xf]
  %v2698 = vld [vmem:[%s0 + $0x300] sm:$0xf]
  %v2699 = vld [vmem:[%s0 + $0x304] sm:$0xf]
  %v2700 = vld [vmem:[%s0 + $0x308] sm:$0xf]
  %v2701 = vld [vmem:[%s0 + $0x30c] sm:$0xf]
  %v2702 = vld [vmem:[%s0 + $0x310] sm:$0xf]
  %v2703 = vld [vmem:[%s0 + $0x314] sm:$0xf]
  %v2704 = vld [vmem:[%s0 + $0x318] sm:$0xf]
  %v2705 = vld [vmem:[%s0 + $0x31c] sm:$0xf]
  %v2726 = vunpack.c.l.b16 %v2686
  %v2727 = vunpack.c.l.b16 %v2687
  %v2728 = vunpack.c.l.b16 %v2688
  %v2729 = vunpack.c.l.b16 %v2689
  %v2730 = vunpack.c.l.b16 %v2690
  %v2731 = vunpack.c.l.b16 %v2691
  %v2732 = vunpack.c.l.b16 %v2692
  %v2733 = vunpack.c.l.b16 %v2693
  %v2734 = vunpack.c.l.b16 %v2694
  %v2735 = vunpack.c.l.b16 %v2695
  %v2736 = vunpack.c.l.b16 %v2696
  %v2737 = vunpack.c.l.b16 %v2697
  %v2738 = vunpack.c.l.b16 %v2698
  %v2739 = vunpack.c.l.b16 %v2699
  %v2740 = vunpack.c.l.b16 %v2700
  %v2741 = vunpack.c.l.b16 %v2701
  %v2742 = vunpack.c.l.b16 %v2702
  %v2743 = vunpack.c.l.b16 %v2703
  %v2744 = vunpack.c.l.b16 %v2704
  %v2745 = vunpack.c.l.b16 %v2705
  %v2746 = vpack.c.b16 %v2727, %v2726
  %v2747 = vpack.c.b16 %v2729, %v2728
  %v2748 = vpack.c.b16 %v2731, %v2730
  %v2749 = vpack.c.b16 %v2733, %v2732
  %v2750 = vpack.c.b16 %v2735, %v2734
  %v2751 = vpack.c.b16 %v2737, %v2736
  %v2752 = vpack.c.b16 %v2739, %v2738
  %v2753 = vpack.c.b16 %v2741, %v2740
  %v2754 = vpack.c.b16 %v2743, %v2742
  %v2755 = vpack.c.b16 %v2745, %v2744
  %2766 = vmatprep.subr.bf16.mxu0 0
  %2767 = vmatpush1.bf16.msra.mxu0 %v202
  %2768 = vmatprep.subr.bf16.mxu0 0
  %2769 = vmatpush1.bf16.msra.mxu0 %v203
  %2770 = vmatprep.subr.bf16.mxu0 0
  %2771 = vmatpush1.bf16.msra.mxu0 %v204
  %2772 = vmatprep.subr.bf16.mxu0 0
  %2773 = vmatpush1.bf16.msra.mxu0 %v205
  %2774 = vmatprep.subr.bf16.mxu0 0
  %2775 = vmatpush1.bf16.msra.mxu0 %v206
  %2776 = vmatprep.subr.bf16.mxu0 0
  %2777 = vmatpush1.bf16.msra.mxu0 %v207
  %2778 = vmatprep.subr.bf16.mxu0 0
  %2779 = vmatpush1.bf16.msra.mxu0 %v208
  %2780 = vmatprep.subr.bf16.mxu0 0
  %2781 = vmatpush1.bf16.msra.mxu0 %v209
  %2782 = vmatprep.subr.bf16.mxu0 0
  %2783 = vmatpush1.bf16.msra.mxu0 0
  %2784 = vmatprep.subr.bf16.mxu0 0
  %2785 = vmatpush1.bf16.msra.mxu0 0
  %2786 = vmatprep.subr.bf16.mxu0 0
  %2787 = vmatpush1.bf16.msra.mxu0 0
  %2788 = vmatprep.subr.bf16.mxu0 0
  %2789 = vmatpush1.bf16.msra.mxu0 0
  %2790 = vmatprep.subr.bf16.mxu0 0
  %2791 = vmatpush1.bf16.msra.mxu0 0
  %2792 = vmatprep.subr.bf16.mxu0 0
  %2793 = vmatpush1.bf16.msra.mxu0 0
  %2794 = vmatprep.subr.bf16.mxu0 0
  %2795 = vmatpush1.bf16.msra.mxu0 0
  %2796 = vmatprep.subr.bf16.mxu0 0
  %2797 = vmatpush1.bf16.msra.mxu0 0
  %2798 = vmatprep.mubr.bf16.mxu0 0
  %2799 = vmatmul.mubr.bf16.gmra.mrb[0].mxu0 %v2746
  %v2800 = vpop.f32.mrb[0].mxu0
  %v2801 = vadd.f32 %v108, %v2800
  %v2802 = vpop.f32.mrb[0].mxu0
  %v2803 = vpop.f32.mrb[0].mxu0
  %v2804 = vadd.f32 %v108, %v2803
  %v2805 = vpop.f32.mrb[0].mxu0
  %2806 = vmatprep.mubr.bf16.mxu0 0
  %2807 = vmatmul.mubr.bf16.gmra.mrb[0].mxu0 %v2747
  %v2808 = vpop.f32.mrb[0].mxu0
  %v2809 = vadd.f32 %v108, %v2808
  %v2810 = vpop.f32.mrb[0].mxu0
  %v2811 = vpop.f32.mrb[0].mxu0
  %v2812 = vadd.f32 %v108, %v2811
  %v2813 = vpop.f32.mrb[0].mxu0
  %2814 = vmatprep.mubr.bf16.mxu0 0
  %2815 = vmatmul.mubr.bf16.gmra.mrb[0].mxu0 %v2748
  %v2816 = vpop.f32.mrb[0].mxu0
  %v2817 = vadd.f32 %v108, %v2816
  %v2818 = vpop.f32.mrb[0].mxu0
  %v2819 = vpop.f32.mrb[0].mxu0
  %v2820 = vadd.f32 %v108, %v2819
  %v2821 = vpop.f32.mrb[0].mxu0
  %2822 = vmatprep.mubr.bf16.mxu0 0
  %2823 = vmatmul.mubr.bf16.gmra.mrb[0].mxu0 %v2749
  %v2824 = vpop.f32.mrb[0].mxu0
  %v2825 = vadd.f32 %v108, %v2824
  %v2826 = vpop.f32.mrb[0].mxu0
  %v2827 = vpop.f32.mrb[0].mxu0
  %v2828 = vadd.f32 %v108, %v2827
  %v2829 = vpop.f32.mrb[0].mxu0
  %2830 = vmatprep.mubr.bf16.mxu0 0
  %2831 = vmatmul.mubr.bf16.gmra.mrb[0].mxu0 %v2750
  %v2832 = vpop.f32.mrb[0].mxu0
  %v2833 = vadd.f32 %v108, %v2832
  %v2834 = vpop.f32.mrb[0].mxu0
  %v2835 = vpop.f32.mrb[0].mxu0
  %v2836 = vadd.f32 %v108, %v2835
  %v2837 = vpop.f32.mrb[0].mxu0
  %2838 = vmatprep.mubr.bf16.mxu0 0
  %2839 = vmatmul.mubr.bf16.gmra.mrb[0].mxu0 %v2751
  %v2840 = vpop.f32.mrb[0].mxu0
  %v2841 = vadd.f32 %v108, %v2840
  %v2842 = vpop.f32.mrb[0].mxu0
  %v2843 = vpop.f32.mrb[0].mxu0
  %v2844 = vadd.f32 %v108, %v2843
  %v2845 = vpop.f32.mrb[0].mxu0
  %2846 = vmatprep.mubr.bf16.mxu0 0
  %2847 = vmatmul.mubr.bf16.gmra.mrb[0].mxu0 %v2752
  %v2848 = vpop.f32.mrb[0].mxu0
  %v2849 = vadd.f32 %v108, %v2848
  %v2850 = vpop.f32.mrb[0].mxu0
  %v2851 = vpop.f32.mrb[0].mxu0
  %v2852 = vadd.f32 %v108, %v2851
  %v2853 = vpop.f32.mrb[0].mxu0
  %2854 = vmatprep.mubr.bf16.mxu0 0
  %2855 = vmatmul.mubr.bf16.gmra.mrb[0].mxu0 %v2753
  %v2856 = vpop.f32.mrb[0].mxu0
  %v2857 = vadd.f32 %v108, %v2856
  %v2858 = vpop.f32.mrb[0].mxu0
  %v2859 = vpop.f32.mrb[0].mxu0
  %v2860 = vadd.f32 %v108, %v2859
  %v2861 = vpop.f32.mrb[0].mxu0
  %2862 = vmatprep.mubr.bf16.mxu0 0
  %2863 = vmatmul.mubr.bf16.gmra.mrb[0].mxu0 %v2754
  %v2864 = vpop.f32.mrb[0].mxu0
  %v2865 = vadd.f32 %v108, %v2864
  %v2866 = vpop.f32.mrb[0].mxu0
  %v2867 = vpop.f32.mrb[0].mxu0
  %v2868 = vadd.f32 %v108, %v2867
  %v2869 = vpop.f32.mrb[0].mxu0
  %2870 = vmatprep.mubr.bf16.mxu0 0
  %2871 = vmatmul.mubr.bf16.gmra.mrb[0].mxu0 %v2755
  %v2872 = vpop.f32.mrb[0].mxu0
  %v2873 = vadd.f32 %v108, %v2872
  %v2874 = vpop.f32.mrb[0].mxu0
  %v2875 = vpop.f32.mrb[0].mxu0
  %v2876 = vadd.f32 %v108, %v2875
  %v2877 = vpop.f32.mrb[0].mxu0
  %2878 = vdwg.mxu0
  %v2879 = vmax.f32 %v2801, 0.0
  %v2880 = vmax.f32 %v2804, 0.0
  %v2881 = vmax.f32 %v2809, 0.0
  %v2882 = vmax.f32 %v2812, 0.0
  %v2883 = vmax.f32 %v2817, 0.0
  %v2884 = vmax.f32 %v2820, 0.0
  %v2885 = vmax.f32 %v2825, 0.0
  %v2886 = vmax.f32 %v2828, 0.0
  %v2887 = vmax.f32 %v2833, 0.0
  %v2888 = vmax.f32 %v2836, 0.0
  %v2889 = vmax.f32 %v2841, 0.0
  %v2890 = vmax.f32 %v2844, 0.0
  %v2891 = vmax.f32 %v2849, 0.0
  %v2892 = vmax.f32 %v2852, 0.0
  %v2893 = vmax.f32 %v2857, 0.0
  %v2894 = vmax.f32 %v2860, 0.0
  %v2895 = vmax.f32 %v2865, 0.0
  %v2896 = vmax.f32 %v2868, 0.0
  %v2897 = vmax.f32 %v2873, 0.0
  %v2898 = vmax.f32 %v2876, 0.0
  %v2902 = vrot.slane %v2881, 4
  %v2903 = vrot.slane %v2882, 4
  %v2904 = vsel %vm354, %v2902, %v2903
  %v2905 = vrot.slane %v2883, 4
  %v2906 = vsel %vm354, %v2903, %v2905
  %v2910 = vmax.f32 %v2879, %v2904
  %v2911 = vmax.f32 %v2880, %v2906
  %v2912 = vmax.f32 %v2881, %v2905
  %v2916 = vrot.slane %v2886, 4
  %v2917 = vrot.slane %v2887, 4
  %v2918 = vsel %vm354, %v2916, %v2917
  %v2919 = vrot.slane %v2888, 4
  %v2920 = vsel %vm354, %v2917, %v2919
  %v2924 = vmax.f32 %v2884, %v2918
  %v2925 = vmax.f32 %v2885, %v2920
  %v2926 = vmax.f32 %v2886, %v2919
  %v2927 = vmax.f32 %v2910, %v2924
  %v2928 = vmax.f32 %v2911, %v2925
  %v2929 = vmax.f32 %v2912, %v2926
  %2930 = vst [vmem:[#allocation2 + $0x5a] sm:$0xff] %v2927
  %2931 = vst [vmem:[#allocation2 + $0x62] sm:$0x3] %v2928
  %2932 = vst [vmem:[%s52 + $0x58] sm:$0xfc] %v2928
  %2933 = vst [vmem:[%s52 + $0x60] sm:$0xf] %v2929
  %v2937 = vrot.slane %v2891, 4
  %v2938 = vrot.slane %v2892, 4
  %v2939 = vsel %vm354, %v2937, %v2938
  %v2940 = vrot.slane %v2893, 4
  %v2941 = vsel %vm354, %v2938, %v2940
  %v2945 = vmax.f32 %v2889, %v2939
  %v2946 = vmax.f32 %v2890, %v2941
  %v2947 = vmax.f32 %v2891, %v2940
  %v2951 = vrot.slane %v2896, 4
  %v2952 = vrot.slane %v2897, 4
  %v2953 = vsel %vm354, %v2951, %v2952
  %v2954 = vrot.slane %v2898, 4
  %v2955 = vsel %vm354, %v2952, %v2954
  %v2959 = vmax.f32 %v2894, %v2953
  %v2960 = vmax.f32 %v2895, %v2955
  %v2961 = vmax.f32 %v2896, %v2954
  %v2962 = vmax.f32 %v2945, %v2959
  %v2963 = vmax.f32 %v2946, %v2960
  %v2964 = vmax.f32 %v2947, %v2961
  %2965 = vst [vmem:[%s54 + $0x5a] sm:$0xff] %v2962
  %2966 = vst [vmem:[%s54 + $0x62] sm:$0x3] %v2963
  %2967 = vst [vmem:[%s56 + $0x58] sm:$0xfc] %v2963
  %2968 = vst [vmem:[%s56 + $0x60] sm:$0xf] %v2964
  %v2969 = vld [vmem:[%s0 + $0x320] sm:$0xf]
  %v2970 = vld [vmem:[%s0 + $0x324] sm:$0xf]
  %v2971 = vld [vmem:[%s0 + $0x328] sm:$0xf]
  %v2972 = vld [vmem:[%s0 + $0x32c] sm:$0xf]
  %v2973 = vld [vmem:[%s0 + $0x330] sm:$0xf]
  %v2974 = vld [vmem:[%s0 + $0x334] sm:$0xf]
  %v2975 = vld [vmem:[%s0 + $0x338] sm:$0xf]
  %v2976 = vld [vmem:[%s0 + $0x33c] sm:$0xf]
  %v2977 = vld [vmem:[%s0 + $0x340] sm:$0xf]
  %v2978 = vld [vmem:[%s0 + $0x344] sm:$0xf]
  %v2979 = vld [vmem:[%s0 + $0x348] sm:$0xf]
  %v2980 = vld [vmem:[%s0 + $0x34c] sm:$0xf]
  %v2981 = vld [vmem:[%s0 + $0x350] sm:$0xf]
  %v2982 = vld [vmem:[%s0 + $0x354] sm:$0xf]
  %v2983 = vld [vmem:[%s0 + $0x358] sm:$0xf]
  %v2984 = vld [vmem:[%s0 + $0x35c] sm:$0xf]
  %v2985 = vld [vmem:[%s0 + $0x360] sm:$0xf]
  %v2986 = vld [vmem:[%s0 + $0x364] sm:$0xf]
  %v2987 = vld [vmem:[%s0 + $0x368] sm:$0xf]
  %v2988 = vld [vmem:[%s0 + $0x36c] sm:$0xf]
  %v3009 = vunpack.c.l.b16 %v2969
  %v3010 = vunpack.c.l.b16 %v2970
  %v3011 = vunpack.c.l.b16 %v2971
  %v3012 = vunpack.c.l.b16 %v2972
  %v3013 = vunpack.c.l.b16 %v2973
  %v3014 = vunpack.c.l.b16 %v2974
  %v3015 = vunpack.c.l.b16 %v2975
  %v3016 = vunpack.c.l.b16 %v2976
  %v3017 = vunpack.c.l.b16 %v2977
  %v3018 = vunpack.c.l.b16 %v2978
  %v3019 = vunpack.c.l.b16 %v2979
  %v3020 = vunpack.c.l.b16 %v2980
  %v3021 = vunpack.c.l.b16 %v2981
  %v3022 = vunpack.c.l.b16 %v2982
  %v3023 = vunpack.c.l.b16 %v2983
  %v3024 = vunpack.c.l.b16 %v2984
  %v3025 = vunpack.c.l.b16 %v2985
  %v3026 = vunpack.c.l.b16 %v2986
  %v3027 = vunpack.c.l.b16 %v2987
  %v3028 = vunpack.c.l.b16 %v2988
  %v3029 = vpack.c.b16 %v3010, %v3009
  %v3030 = vpack.c.b16 %v3012, %v3011
  %v3031 = vpack.c.b16 %v3014, %v3013
  %v3032 = vpack.c.b16 %v3016, %v3015
  %v3033 = vpack.c.b16 %v3018, %v3017
  %v3034 = vpack.c.b16 %v3020, %v3019
  %v3035 = vpack.c.b16 %v3022, %v3021
  %v3036 = vpack.c.b16 %v3024, %v3023
  %v3037 = vpack.c.b16 %v3026, %v3025
  %v3038 = vpack.c.b16 %v3028, %v3027
  %3049 = vmatprep.subr.bf16.mxu0 0
  %3050 = vmatpush1.bf16.msra.mxu0 %v202
  %3051 = vmatprep.subr.bf16.mxu0 0
  %3052 = vmatpush1.bf16.msra.mxu0 %v203
  %3053 = vmatprep.subr.bf16.mxu0 0
  %3054 = vmatpush1.bf16.msra.mxu0 %v204
  %3055 = vmatprep.subr.bf16.mxu0 0
  %3056 = vmatpush1.bf16.msra.mxu0 %v205
  %3057 = vmatprep.subr.bf16.mxu0 0
  %3058 = vmatpush1.bf16.msra.mxu0 %v206
  %3059 = vmatprep.subr.bf16.mxu0 0
  %3060 = vmatpush1.bf16.msra.mxu0 %v207
  %3061 = vmatprep.subr.bf16.mxu0 0
  %3062 = vmatpush1.bf16.msra.mxu0 %v208
  %3063 = vmatprep.subr.bf16.mxu0 0
  %3064 = vmatpush1.bf16.msra.mxu0 %v209
  %3065 = vmatprep.subr.bf16.mxu0 0
  %3066 = vmatpush1.bf16.msra.mxu0 0
  %3067 = vmatprep.subr.bf16.mxu0 0
  %3068 = vmatpush1.bf16.msra.mxu0 0
  %3069 = vmatprep.subr.bf16.mxu0 0
  %3070 = vmatpush1.bf16.msra.mxu0 0
  %3071 = vmatprep.subr.bf16.mxu0 0
  %3072 = vmatpush1.bf16.msra.mxu0 0
  %3073 = vmatprep.subr.bf16.mxu0 0
  %3074 = vmatpush1.bf16.msra.mxu0 0
  %3075 = vmatprep.subr.bf16.mxu0 0
  %3076 = vmatpush1.bf16.msra.mxu0 0
  %3077 = vmatprep.subr.bf16.mxu0 0
  %3078 = vmatpush1.bf16.msra.mxu0 0
  %3079 = vmatprep.subr.bf16.mxu0 0
  %3080 = vmatpush1.bf16.msra.mxu0 0
  %3081 = vmatprep.mubr.bf16.mxu0 0
  %3082 = vmatmul.mubr.bf16.gmra.mrb[0].mxu0 %v3029
  %v3083 = vpop.f32.mrb[0].mxu0
  %v3084 = vadd.f32 %v108, %v3083
  %v3085 = vpop.f32.mrb[0].mxu0
  %v3086 = vpop.f32.mrb[0].mxu0
  %v3087 = vadd.f32 %v108, %v3086
  %v3088 = vpop.f32.mrb[0].mxu0
  %3089 = vmatprep.mubr.bf16.mxu0 0
  %3090 = vmatmul.mubr.bf16.gmra.mrb[0].mxu0 %v3030
  %v3091 = vpop.f32.mrb[0].mxu0
  %v3092 = vadd.f32 %v108, %v3091
  %v3093 = vpop.f32.mrb[0].mxu0
  %v3094 = vpop.f32.mrb[0].mxu0
  %v3095 = vadd.f32 %v108, %v3094
  %v3096 = vpop.f32.mrb[0].mxu0
  %3097 = vmatprep.mubr.bf16.mxu0 0
  %3098 = vmatmul.mubr.bf16.gmra.mrb[0].mxu0 %v3031
  %v3099 = vpop.f32.mrb[0].mxu0
  %v3100 = vadd.f32 %v108, %v3099
  %v3101 = vpop.f32.mrb[0].mxu0
  %v3102 = vpop.f32.mrb[0].mxu0
  %v3103 = vadd.f32 %v108, %v3102
  %v3104 = vpop.f32.mrb[0].mxu0
  %3105 = vmatprep.mubr.bf16.mxu0 0
  %3106 = vmatmul.mubr.bf16.gmra.mrb[0].mxu0 %v3032
  %v3107 = vpop.f32.mrb[0].mxu0
  %v3108 = vadd.f32 %v108, %v3107
  %v3109 = vpop.f32.mrb[0].mxu0
  %v3110 = vpop.f32.mrb[0].mxu0
  %v3111 = vadd.f32 %v108, %v3110
  %v3112 = vpop.f32.mrb[0].mxu0
  %3113 = vmatprep.mubr.bf16.mxu0 0
  %3114 = vmatmul.mubr.bf16.gmra.mrb[0].mxu0 %v3033
  %v3115 = vpop.f32.mrb[0].mxu0
  %v3116 = vadd.f32 %v108, %v3115
  %v3117 = vpop.f32.mrb[0].mxu0
  %v3118 = vpop.f32.mrb[0].mxu0
  %v3119 = vadd.f32 %v108, %v3118
  %v3120 = vpop.f32.mrb[0].mxu0
  %3121 = vmatprep.mubr.bf16.mxu0 0
  %3122 = vmatmul.mubr.bf16.gmra.mrb[0].mxu0 %v3034
  %v3123 = vpop.f32.mrb[0].mxu0
  %v3124 = vadd.f32 %v108, %v3123
  %v3125 = vpop.f32.mrb[0].mxu0
  %v3126 = vpop.f32.mrb[0].mxu0
  %v3127 = vadd.f32 %v108, %v3126
  %v3128 = vpop.f32.mrb[0].mxu0
  %3129 = vmatprep.mubr.bf16.mxu0 0
  %3130 = vmatmul.mubr.bf16.gmra.mrb[0].mxu0 %v3035
  %v3131 = vpop.f32.mrb[0].mxu0
  %v3132 = vadd.f32 %v108, %v3131
  %v3133 = vpop.f32.mrb[0].mxu0
  %v3134 = vpop.f32.mrb[0].mxu0
  %v3135 = vadd.f32 %v108, %v3134
  %v3136 = vpop.f32.mrb[0].mxu0
  %3137 = vmatprep.mubr.bf16.mxu0 0
  %3138 = vmatmul.mubr.bf16.gmra.mrb[0].mxu0 %v3036
  %v3139 = vpop.f32.mrb[0].mxu0
  %v3140 = vadd.f32 %v108, %v3139
  %v3141 = vpop.f32.mrb[0].mxu0
  %v3142 = vpop.f32.mrb[0].mxu0
  %v3143 = vadd.f32 %v108, %v3142
  %v3144 = vpop.f32.mrb[0].mxu0
  %3145 = vmatprep.mubr.bf16.mxu0 0
  %3146 = vmatmul.mubr.bf16.gmra.mrb[0].mxu0 %v3037
  %v3147 = vpop.f32.mrb[0].mxu0
  %v3148 = vadd.f32 %v108, %v3147
  %v3149 = vpop.f32.mrb[0].mxu0
  %v3150 = vpop.f32.mrb[0].mxu0
  %v3151 = vadd.f32 %v108, %v3150
  %v3152 = vpop.f32.mrb[0].mxu0
  %3153 = vmatprep.mubr.bf16.mxu0 0
  %3154 = vmatmul.mubr.bf16.gmra.mrb[0].mxu0 %v3038
  %v3155 = vpop.f32.mrb[0].mxu0
  %v3156 = vadd.f32 %v108, %v3155
  %v3157 = vpop.f32.mrb[0].mxu0
  %v3158 = vpop.f32.mrb[0].mxu0
  %v3159 = vadd.f32 %v108, %v3158
  %v3160 = vpop.f32.mrb[0].mxu0
  %3161 = vdwg.mxu0
  %v3162 = vmax.f32 %v3084, 0.0
  %v3163 = vmax.f32 %v3087, 0.0
  %v3164 = vmax.f32 %v3092, 0.0
  %v3165 = vmax.f32 %v3095, 0.0
  %v3166 = vmax.f32 %v3100, 0.0
  %v3167 = vmax.f32 %v3103, 0.0
  %v3168 = vmax.f32 %v3108, 0.0
  %v3169 = vmax.f32 %v3111, 0.0
  %v3170 = vmax.f32 %v3116, 0.0
  %v3171 = vmax.f32 %v3119, 0.0
  %v3172 = vmax.f32 %v3124, 0.0
  %v3173 = vmax.f32 %v3127, 0.0
  %v3174 = vmax.f32 %v3132, 0.0
  %v3175 = vmax.f32 %v3135, 0.0
  %v3176 = vmax.f32 %v3140, 0.0
  %v3177 = vmax.f32 %v3143, 0.0
  %v3178 = vmax.f32 %v3148, 0.0
  %v3179 = vmax.f32 %v3151, 0.0
  %v3180 = vmax.f32 %v3156, 0.0
  %v3181 = vmax.f32 %v3159, 0.0
  %v3185 = vrot.slane %v3164, 4
  %v3186 = vrot.slane %v3165, 4
  %v3187 = vsel %vm354, %v3185, %v3186
  %v3188 = vrot.slane %v3166, 4
  %v3189 = vsel %vm354, %v3186, %v3188
  %v3193 = vmax.f32 %v3162, %v3187
  %v3194 = vmax.f32 %v3163, %v3189
  %v3195 = vmax.f32 %v3164, %v3188
  %v3199 = vrot.slane %v3169, 4
  %v3200 = vrot.slane %v3170, 4
  %v3201 = vsel %vm354, %v3199, %v3200
  %v3202 = vrot.slane %v3171, 4
  %v3203 = vsel %vm354, %v3200, %v3202
  %v3207 = vmax.f32 %v3167, %v3201
  %v3208 = vmax.f32 %v3168, %v3203
  %v3209 = vmax.f32 %v3169, %v3202
  %v3210 = vmax.f32 %v3193, %v3207
  %v3211 = vmax.f32 %v3194, %v3208
  %v3212 = vmax.f32 %v3195, %v3209
  %3213 = vst [vmem:[#allocation2 + $0x64] sm:$0xff] %v3210
  %3214 = vst [vmem:[#allocation2 + $0x6c] sm:$0x3] %v3211
  %3215 = vst [vmem:[%s52 + $0x62] sm:$0xfc] %v3211
  %3216 = vst [vmem:[%s52 + $0x6a] sm:$0xf] %v3212
  %v3220 = vrot.slane %v3174, 4
  %v3221 = vrot.slane %v3175, 4
  %v3222 = vsel %vm354, %v3220, %v3221
  %v3223 = vrot.slane %v3176, 4
  %v3224 = vsel %vm354, %v3221, %v3223
  %v3228 = vmax.f32 %v3172, %v3222
  %v3229 = vmax.f32 %v3173, %v3224
  %v3230 = vmax.f32 %v3174, %v3223
  %v3234 = vrot.slane %v3179, 4
  %v3235 = vrot.slane %v3180, 4
  %v3236 = vsel %vm354, %v3234, %v3235
  %v3237 = vrot.slane %v3181, 4
  %v3238 = vsel %vm354, %v3235, %v3237
  %v3242 = vmax.f32 %v3177, %v3236
  %v3243 = vmax.f32 %v3178, %v3238
  %v3244 = vmax.f32 %v3179, %v3237
  %v3245 = vmax.f32 %v3228, %v3242
  %v3246 = vmax.f32 %v3229, %v3243
  %v3247 = vmax.f32 %v3230, %v3244
  %3248 = vst [vmem:[%s54 + $0x64] sm:$0xff] %v3245
  %3249 = vst [vmem:[%s54 + $0x6c] sm:$0x3] %v3246
  %3250 = vst [vmem:[%s56 + $0x62] sm:$0xfc] %v3246
  %3251 = vst [vmem:[%s56 + $0x6a] sm:$0xf] %v3247
  %v3252 = vld [vmem:[%s0 + $0x370] sm:$0xf]
  %v3253 = vld [vmem:[%s0 + $0x374] sm:$0xf]
  %v3254 = vld [vmem:[%s0 + $0x378] sm:$0xf]
  %v3255 = vld [vmem:[%s0 + $0x37c] sm:$0xf]
  %v3256 = vld [vmem:[%s0 + $0x380] sm:$0xf]
  %v3257 = vld [vmem:[%s0 + $0x384] sm:$0xf]
  %v3258 = vld [vmem:[%s0 + $0x388] sm:$0xf]
  %v3259 = vld [vmem:[%s0 + $0x38c] sm:$0xf]
  %v3260 = vld [vmem:[%s0 + $0x390] sm:$0xf]
  %v3261 = vld [vmem:[%s0 + $0x394] sm:$0xf]
  %v3262 = vld [vmem:[%s0 + $0x398] sm:$0xf]
  %v3263 = vld [vmem:[%s0 + $0x39c] sm:$0xf]
  %v3264 = vld [vmem:[%s0 + $0x3a0] sm:$0xf]
  %v3265 = vld [vmem:[%s0 + $0x3a4] sm:$0xf]
  %v3266 = vld [vmem:[%s0 + $0x3a8] sm:$0xf]
  %v3267 = vld [vmem:[%s0 + $0x3ac] sm:$0xf]
  %v3268 = vld [vmem:[%s0 + $0x3b0] sm:$0xf]
  %v3269 = vld [vmem:[%s0 + $0x3b4] sm:$0xf]
  %v3270 = vld [vmem:[%s0 + $0x3b8] sm:$0xf]
  %v3271 = vld [vmem:[%s0 + $0x3bc] sm:$0xf]
  %v3292 = vunpack.c.l.b16 %v3252
  %v3293 = vunpack.c.l.b16 %v3253
  %v3294 = vunpack.c.l.b16 %v3254
  %v3295 = vunpack.c.l.b16 %v3255
  %v3296 = vunpack.c.l.b16 %v3256
  %v3297 = vunpack.c.l.b16 %v3257
  %v3298 = vunpack.c.l.b16 %v3258
  %v3299 = vunpack.c.l.b16 %v3259
  %v3300 = vunpack.c.l.b16 %v3260
  %v3301 = vunpack.c.l.b16 %v3261
  %v3302 = vunpack.c.l.b16 %v3262
  %v3303 = vunpack.c.l.b16 %v3263
  %v3304 = vunpack.c.l.b16 %v3264
  %v3305 = vunpack.c.l.b16 %v3265
  %v3306 = vunpack.c.l.b16 %v3266
  %v3307 = vunpack.c.l.b16 %v3267
  %v3308 = vunpack.c.l.b16 %v3268
  %v3309 = vunpack.c.l.b16 %v3269
  %v3310 = vunpack.c.l.b16 %v3270
  %v3311 = vunpack.c.l.b16 %v3271
  %v3312 = vpack.c.b16 %v3293, %v3292
  %v3313 = vpack.c.b16 %v3295, %v3294
  %v3314 = vpack.c.b16 %v3297, %v3296
  %v3315 = vpack.c.b16 %v3299, %v3298
  %v3316 = vpack.c.b16 %v3301, %v3300
  %v3317 = vpack.c.b16 %v3303, %v3302
  %v3318 = vpack.c.b16 %v3305, %v3304
  %v3319 = vpack.c.b16 %v3307, %v3306
  %v3320 = vpack.c.b16 %v3309, %v3308
  %v3321 = vpack.c.b16 %v3311, %v3310
  %3332 = vmatprep.subr.bf16.mxu0 0
  %3333 = vmatpush1.bf16.msra.mxu0 %v202
  %3334 = vmatprep.subr.bf16.mxu0 0
  %3335 = vmatpush1.bf16.msra.mxu0 %v203
  %3336 = vmatprep.subr.bf16.mxu0 0
  %3337 = vmatpush1.bf16.msra.mxu0 %v204
  %3338 = vmatprep.subr.bf16.mxu0 0
  %3339 = vmatpush1.bf16.msra.mxu0 %v205
  %3340 = vmatprep.subr.bf16.mxu0 0
  %3341 = vmatpush1.bf16.msra.mxu0 %v206
  %3342 = vmatprep.subr.bf16.mxu0 0
  %3343 = vmatpush1.bf16.msra.mxu0 %v207
  %3344 = vmatprep.subr.bf16.mxu0 0
  %3345 = vmatpush1.bf16.msra.mxu0 %v208
  %3346 = vmatprep.subr.bf16.mxu0 0
  %3347 = vmatpush1.bf16.msra.mxu0 %v209
  %3348 = vmatprep.subr.bf16.mxu0 0
  %3349 = vmatpush1.bf16.msra.mxu0 0
  %3350 = vmatprep.subr.bf16.mxu0 0
  %3351 = vmatpush1.bf16.msra.mxu0 0
  %3352 = vmatprep.subr.bf16.mxu0 0
  %3353 = vmatpush1.bf16.msra.mxu0 0
  %3354 = vmatprep.subr.bf16.mxu0 0
  %3355 = vmatpush1.bf16.msra.mxu0 0
  %3356 = vmatprep.subr.bf16.mxu0 0
  %3357 = vmatpush1.bf16.msra.mxu0 0
  %3358 = vmatprep.subr.bf16.mxu0 0
  %3359 = vmatpush1.bf16.msra.mxu0 0
  %3360 = vmatprep.subr.bf16.mxu0 0
  %3361 = vmatpush1.bf16.msra.mxu0 0
  %3362 = vmatprep.subr.bf16.mxu0 0
  %3363 = vmatpush1.bf16.msra.mxu0 0
  %3364 = vmatprep.mubr.bf16.mxu0 0
  %3365 = vmatmul.mubr.bf16.gmra.mrb[0].mxu0 %v3312
  %v3366 = vpop.f32.mrb[0].mxu0
  %v3367 = vadd.f32 %v108, %v3366
  %v3368 = vpop.f32.mrb[0].mxu0
  %v3369 = vpop.f32.mrb[0].mxu0
  %v3370 = vadd.f32 %v108, %v3369
  %v3371 = vpop.f32.mrb[0].mxu0
  %3372 = vmatprep.mubr.bf16.mxu0 0
  %3373 = vmatmul.mubr.bf16.gmra.mrb[0].mxu0 %v3313
  %v3374 = vpop.f32.mrb[0].mxu0
  %v3375 = vadd.f32 %v108, %v3374
  %v3376 = vpop.f32.mrb[0].mxu0
  %v3377 = vpop.f32.mrb[0].mxu0
  %v3378 = vadd.f32 %v108, %v3377
  %v3379 = vpop.f32.mrb[0].mxu0
  %3380 = vmatprep.mubr.bf16.mxu0 0
  %3381 = vmatmul.mubr.bf16.gmra.mrb[0].mxu0 %v3314
  %v3382 = vpop.f32.mrb[0].mxu0
  %v3383 = vadd.f32 %v108, %v3382
  %v3384 = vpop.f32.mrb[0].mxu0
  %v3385 = vpop.f32.mrb[0].mxu0
  %v3386 = vadd.f32 %v108, %v3385
  %v3387 = vpop.f32.mrb[0].mxu0
  %3388 = vmatprep.mubr.bf16.mxu0 0
  %3389 = vmatmul.mubr.bf16.gmra.mrb[0].mxu0 %v3315
  %v3390 = vpop.f32.mrb[0].mxu0
  %v3391 = vadd.f32 %v108, %v3390
  %v3392 = vpop.f32.mrb[0].mxu0
  %v3393 = vpop.f32.mrb[0].mxu0
  %v3394 = vadd.f32 %v108, %v3393
  %v3395 = vpop.f32.mrb[0].mxu0
  %3396 = vmatprep.mubr.bf16.mxu0 0
  %3397 = vmatmul.mubr.bf16.gmra.mrb[0].mxu0 %v3316
  %v3398 = vpop.f32.mrb[0].mxu0
  %v3399 = vadd.f32 %v108, %v3398
  %v3400 = vpop.f32.mrb[0].mxu0
  %v3401 = vpop.f32.mrb[0].mxu0
  %v3402 = vadd.f32 %v108, %v3401
  %v3403 = vpop.f32.mrb[0].mxu0
  %3404 = vmatprep.mubr.bf16.mxu0 0
  %3405 = vmatmul.mubr.bf16.gmra.mrb[0].mxu0 %v3317
  %v3406 = vpop.f32.mrb[0].mxu0
  %v3407 = vadd.f32 %v108, %v3406
  %v3408 = vpop.f32.mrb[0].mxu0
  %v3409 = vpop.f32.mrb[0].mxu0
  %v3410 = vadd.f32 %v108, %v3409
  %v3411 = vpop.f32.mrb[0].mxu0
  %3412 = vmatprep.mubr.bf16.mxu0 0
  %3413 = vmatmul.mubr.bf16.gmra.mrb[0].mxu0 %v3318
  %v3414 = vpop.f32.mrb[0].mxu0
  %v3415 = vadd.f32 %v108, %v3414
  %v3416 = vpop.f32.mrb[0].mxu0
  %v3417 = vpop.f32.mrb[0].mxu0
  %v3418 = vadd.f32 %v108, %v3417
  %v3419 = vpop.f32.mrb[0].mxu0
  %3420 = vmatprep.mubr.bf16.mxu0 0
  %3421 = vmatmul.mubr.bf16.gmra.mrb[0].mxu0 %v3319
  %v3422 = vpop.f32.mrb[0].mxu0
  %v3423 = vadd.f32 %v108, %v3422
  %v3424 = vpop.f32.mrb[0].mxu0
  %v3425 = vpop.f32.mrb[0].mxu0
  %v3426 = vadd.f32 %v108, %v3425
  %v3427 = vpop.f32.mrb[0].mxu0
  %3428 = vmatprep.mubr.bf16.mxu0 0
  %3429 = vmatmul.mubr.bf16.gmra.mrb[0].mxu0 %v3320
  %v3430 = vpop.f32.mrb[0].mxu0
  %v3431 = vadd.f32 %v108, %v3430
  %v3432 = vpop.f32.mrb[0].mxu0
  %v3433 = vpop.f32.mrb[0].mxu0
  %v3434 = vadd.f32 %v108, %v3433
  %v3435 = vpop.f32.mrb[0].mxu0
  %3436 = vmatprep.mubr.bf16.mxu0 0
  %3437 = vmatmul.mubr.bf16.gmra.mrb[0].mxu0 %v3321
  %v3438 = vpop.f32.mrb[0].mxu0
  %v3439 = vadd.f32 %v108, %v3438
  %v3440 = vpop.f32.mrb[0].mxu0
  %v3441 = vpop.f32.mrb[0].mxu0
  %v3442 = vadd.f32 %v108, %v3441
  %v3443 = vpop.f32.mrb[0].mxu0
  %3444 = vdwg.mxu0
  %v3445 = vmax.f32 %v3367, 0.0
  %v3446 = vmax.f32 %v3370, 0.0
  %v3447 = vmax.f32 %v3375, 0.0
  %v3448 = vmax.f32 %v3378, 0.0
  %v3449 = vmax.f32 %v3383, 0.0
  %v3450 = vmax.f32 %v3386, 0.0
  %v3451 = vmax.f32 %v3391, 0.0
  %v3452 = vmax.f32 %v3394, 0.0
  %v3453 = vmax.f32 %v3399, 0.0
  %v3454 = vmax.f32 %v3402, 0.0
  %v3455 = vmax.f32 %v3407, 0.0
  %v3456 = vmax.f32 %v3410, 0.0
  %v3457 = vmax.f32 %v3415, 0.0
  %v3458 = vmax.f32 %v3418, 0.0
  %v3459 = vmax.f32 %v3423, 0.0
  %v3460 = vmax.f32 %v3426, 0.0
  %v3461 = vmax.f32 %v3431, 0.0
  %v3462 = vmax.f32 %v3434, 0.0
  %v3463 = vmax.f32 %v3439, 0.0
  %v3464 = vmax.f32 %v3442, 0.0
  %v3468 = vrot.slane %v3447, 4
  %v3469 = vrot.slane %v3448, 4
  %v3470 = vsel %vm354, %v3468, %v3469
  %v3471 = vrot.slane %v3449, 4
  %v3472 = vsel %vm354, %v3469, %v3471
  %v3476 = vmax.f32 %v3445, %v3470
  %v3477 = vmax.f32 %v3446, %v3472
  %v3478 = vmax.f32 %v3447, %v3471
  %v3482 = vrot.slane %v3452, 4
  %v3483 = vrot.slane %v3453, 4
  %v3484 = vsel %vm354, %v3482, %v3483
  %v3485 = vrot.slane %v3454, 4
  %v3486 = vsel %vm354, %v3483, %v3485
  %v3490 = vmax.f32 %v3450, %v3484
  %v3491 = vmax.f32 %v3451, %v3486
  %v3492 = vmax.f32 %v3452, %v3485
  %v3493 = vmax.f32 %v3476, %v3490
  %v3494 = vmax.f32 %v3477, %v3491
  %v3495 = vmax.f32 %v3478, %v3492
  %3496 = vst [vmem:[#allocation2 + $0x6e] sm:$0xff] %v3493
  %3497 = vst [vmem:[#allocation2 + $0x76] sm:$0x3] %v3494
  %3498 = vst [vmem:[%s52 + $0x6c] sm:$0xfc] %v3494
  %3499 = vst [vmem:[%s52 + $0x74] sm:$0xf] %v3495
  %v3503 = vrot.slane %v3457, 4
  %v3504 = vrot.slane %v3458, 4
  %v3505 = vsel %vm354, %v3503, %v3504
  %v3506 = vrot.slane %v3459, 4
  %v3507 = vsel %vm354, %v3504, %v3506
  %v3511 = vmax.f32 %v3455, %v3505
  %v3512 = vmax.f32 %v3456, %v3507
  %v3513 = vmax.f32 %v3457, %v3506
  %v3517 = vrot.slane %v3462, 4
  %v3518 = vrot.slane %v3463, 4
  %v3519 = vsel %vm354, %v3517, %v3518
  %v3520 = vrot.slane %v3464, 4
  %v3521 = vsel %vm354, %v3518, %v3520
  %v3525 = vmax.f32 %v3460, %v3519
  %v3526 = vmax.f32 %v3461, %v3521
  %v3527 = vmax.f32 %v3462, %v3520
  %v3528 = vmax.f32 %v3511, %v3525
  %v3529 = vmax.f32 %v3512, %v3526
  %v3530 = vmax.f32 %v3513, %v3527
  %3531 = vst [vmem:[%s54 + $0x6e] sm:$0xff] %v3528
  %3532 = vst [vmem:[%s54 + $0x76] sm:$0x3] %v3529
  %3533 = vst [vmem:[%s56 + $0x6c] sm:$0xfc] %v3529
  %3534 = vst [vmem:[%s56 + $0x74] sm:$0xf] %v3530
  %v3535 = vld [vmem:[%s0 + $0x3c0] sm:$0xf]
  %v3536 = vld [vmem:[%s0 + $0x3c4] sm:$0xf]
  %v3537 = vld [vmem:[%s0 + $0x3c8] sm:$0xf]
  %v3538 = vld [vmem:[%s0 + $0x3cc] sm:$0xf]
  %v3539 = vld [vmem:[%s0 + $0x3d0] sm:$0xf]
  %v3540 = vld [vmem:[%s0 + $0x3d4] sm:$0xf]
  %v3541 = vld [vmem:[%s0 + $0x3d8] sm:$0xf]
  %v3542 = vld [vmem:[%s0 + $0x3dc] sm:$0xf]
  %v3543 = vld [vmem:[%s0 + $0x3e0] sm:$0xf]
  %v3544 = vld [vmem:[%s0 + $0x3e4] sm:$0xf]
  %v3545 = vld [vmem:[%s0 + $0x3e8] sm:$0xf]
  %v3546 = vld [vmem:[%s0 + $0x3ec] sm:$0xf]
  %v3547 = vld [vmem:[%s0 + $0x3f0] sm:$0xf]
  %v3548 = vld [vmem:[%s0 + $0x3f4] sm:$0xf]
  %v3549 = vld [vmem:[%s0 + $0x3f8] sm:$0xf]
  %v3550 = vld [vmem:[%s0 + $0x3fc] sm:$0xf]
  %v3551 = vld [vmem:[%s0 + $0x400] sm:$0xf]
  %v3552 = vld [vmem:[%s0 + $0x404] sm:$0xf]
  %v3553 = vld [vmem:[%s0 + $0x408] sm:$0xf]
  %v3554 = vld [vmem:[%s0 + $0x40c] sm:$0xf]
  %v3575 = vunpack.c.l.b16 %v3535
  %v3576 = vunpack.c.l.b16 %v3536
  %v3577 = vunpack.c.l.b16 %v3537
  %v3578 = vunpack.c.l.b16 %v3538
  %v3579 = vunpack.c.l.b16 %v3539
  %v3580 = vunpack.c.l.b16 %v3540
  %v3581 = vunpack.c.l.b16 %v3541
  %v3582 = vunpack.c.l.b16 %v3542
  %v3583 = vunpack.c.l.b16 %v3543
  %v3584 = vunpack.c.l.b16 %v3544
  %v3585 = vunpack.c.l.b16 %v3545
  %v3586 = vunpack.c.l.b16 %v3546
  %v3587 = vunpack.c.l.b16 %v3547
  %v3588 = vunpack.c.l.b16 %v3548
  %v3589 = vunpack.c.l.b16 %v3549
  %v3590 = vunpack.c.l.b16 %v3550
  %v3591 = vunpack.c.l.b16 %v3551
  %v3592 = vunpack.c.l.b16 %v3552
  %v3593 = vunpack.c.l.b16 %v3553
  %v3594 = vunpack.c.l.b16 %v3554
  %v3595 = vpack.c.b16 %v3576, %v3575
  %v3596 = vpack.c.b16 %v3578, %v3577
  %v3597 = vpack.c.b16 %v3580, %v3579
  %v3598 = vpack.c.b16 %v3582, %v3581
  %v3599 = vpack.c.b16 %v3584, %v3583
  %v3600 = vpack.c.b16 %v3586, %v3585
  %v3601 = vpack.c.b16 %v3588, %v3587
  %v3602 = vpack.c.b16 %v3590, %v3589
  %v3603 = vpack.c.b16 %v3592, %v3591
  %v3604 = vpack.c.b16 %v3594, %v3593
  %3615 = vmatprep.subr.bf16.mxu0 0
  %3616 = vmatpush1.bf16.msra.mxu0 %v202
  %3617 = vmatprep.subr.bf16.mxu0 0
  %3618 = vmatpush1.bf16.msra.mxu0 %v203
  %3619 = vmatprep.subr.bf16.mxu0 0
  %3620 = vmatpush1.bf16.msra.mxu0 %v204
  %3621 = vmatprep.subr.bf16.mxu0 0
  %3622 = vmatpush1.bf16.msra.mxu0 %v205
  %3623 = vmatprep.subr.bf16.mxu0 0
  %3624 = vmatpush1.bf16.msra.mxu0 %v206
  %3625 = vmatprep.subr.bf16.mxu0 0
  %3626 = vmatpush1.bf16.msra.mxu0 %v207
  %3627 = vmatprep.subr.bf16.mxu0 0
  %3628 = vmatpush1.bf16.msra.mxu0 %v208
  %3629 = vmatprep.subr.bf16.mxu0 0
  %3630 = vmatpush1.bf16.msra.mxu0 %v209
  %3631 = vmatprep.subr.bf16.mxu0 0
  %3632 = vmatpush1.bf16.msra.mxu0 0
  %3633 = vmatprep.subr.bf16.mxu0 0
  %3634 = vmatpush1.bf16.msra.mxu0 0
  %3635 = vmatprep.subr.bf16.mxu0 0
  %3636 = vmatpush1.bf16.msra.mxu0 0
  %3637 = vmatprep.subr.bf16.mxu0 0
  %3638 = vmatpush1.bf16.msra.mxu0 0
  %3639 = vmatprep.subr.bf16.mxu0 0
  %3640 = vmatpush1.bf16.msra.mxu0 0
  %3641 = vmatprep.subr.bf16.mxu0 0
  %3642 = vmatpush1.bf16.msra.mxu0 0
  %3643 = vmatprep.subr.bf16.mxu0 0
  %3644 = vmatpush1.bf16.msra.mxu0 0
  %3645 = vmatprep.subr.bf16.mxu0 0
  %3646 = vmatpush1.bf16.msra.mxu0 0
  %3647 = vmatprep.mubr.bf16.mxu0 0
  %3648 = vmatmul.mubr.bf16.gmra.mrb[0].mxu0 %v3595
  %v3649 = vpop.f32.mrb[0].mxu0
  %v3650 = vadd.f32 %v108, %v3649
  %v3651 = vpop.f32.mrb[0].mxu0
  %v3652 = vpop.f32.mrb[0].mxu0
  %v3653 = vadd.f32 %v108, %v3652
  %v3654 = vpop.f32.mrb[0].mxu0
  %3655 = vmatprep.mubr.bf16.mxu0 0
  %3656 = vmatmul.mubr.bf16.gmra.mrb[0].mxu0 %v3596
  %v3657 = vpop.f32.mrb[0].mxu0
  %v3658 = vadd.f32 %v108, %v3657
  %v3659 = vpop.f32.mrb[0].mxu0
  %v3660 = vpop.f32.mrb[0].mxu0
  %v3661 = vadd.f32 %v108, %v3660
  %v3662 = vpop.f32.mrb[0].mxu0
  %3663 = vmatprep.mubr.bf16.mxu0 0
  %3664 = vmatmul.mubr.bf16.gmra.mrb[0].mxu0 %v3597
  %v3665 = vpop.f32.mrb[0].mxu0
  %v3666 = vadd.f32 %v108, %v3665
  %v3667 = vpop.f32.mrb[0].mxu0
  %v3668 = vpop.f32.mrb[0].mxu0
  %v3669 = vadd.f32 %v108, %v3668
  %v3670 = vpop.f32.mrb[0].mxu0
  %3671 = vmatprep.mubr.bf16.mxu0 0
  %3672 = vmatmul.mubr.bf16.gmra.mrb[0].mxu0 %v3598
  %v3673 = vpop.f32.mrb[0].mxu0
  %v3674 = vadd.f32 %v108, %v3673
  %v3675 = vpop.f32.mrb[0].mxu0
  %v3676 = vpop.f32.mrb[0].mxu0
  %v3677 = vadd.f32 %v108, %v3676
  %v3678 = vpop.f32.mrb[0].mxu0
  %3679 = vmatprep.mubr.bf16.mxu0 0
  %3680 = vmatmul.mubr.bf16.gmra.mrb[0].mxu0 %v3599
  %v3681 = vpop.f32.mrb[0].mxu0
  %v3682 = vadd.f32 %v108, %v3681
  %v3683 = vpop.f32.mrb[0].mxu0
  %v3684 = vpop.f32.mrb[0].mxu0
  %v3685 = vadd.f32 %v108, %v3684
  %v3686 = vpop.f32.mrb[0].mxu0
  %3687 = vmatprep.mubr.bf16.mxu0 0
  %3688 = vmatmul.mubr.bf16.gmra.mrb[0].mxu0 %v3600
  %v3689 = vpop.f32.mrb[0].mxu0
  %v3690 = vadd.f32 %v108, %v3689
  %v3691 = vpop.f32.mrb[0].mxu0
  %v3692 = vpop.f32.mrb[0].mxu0
  %v3693 = vadd.f32 %v108, %v3692
  %v3694 = vpop.f32.mrb[0].mxu0
  %3695 = vmatprep.mubr.bf16.mxu0 0
  %3696 = vmatmul.mubr.bf16.gmra.mrb[0].mxu0 %v3601
  %v3697 = vpop.f32.mrb[0].mxu0
  %v3698 = vadd.f32 %v108, %v3697
  %v3699 = vpop.f32.mrb[0].mxu0
  %v3700 = vpop.f32.mrb[0].mxu0
  %v3701 = vadd.f32 %v108, %v3700
  %v3702 = vpop.f32.mrb[0].mxu0
  %3703 = vmatprep.mubr.bf16.mxu0 0
  %3704 = vmatmul.mubr.bf16.gmra.mrb[0].mxu0 %v3602
  %v3705 = vpop.f32.mrb[0].mxu0
  %v3706 = vadd.f32 %v108, %v3705
  %v3707 = vpop.f32.mrb[0].mxu0
  %v3708 = vpop.f32.mrb[0].mxu0
  %v3709 = vadd.f32 %v108, %v3708
  %v3710 = vpop.f32.mrb[0].mxu0
  %3711 = vmatprep.mubr.bf16.mxu0 0
  %3712 = vmatmul.mubr.bf16.gmra.mrb[0].mxu0 %v3603
  %v3713 = vpop.f32.mrb[0].mxu0
  %v3714 = vadd.f32 %v108, %v3713
  %v3715 = vpop.f32.mrb[0].mxu0
  %v3716 = vpop.f32.mrb[0].mxu0
  %v3717 = vadd.f32 %v108, %v3716
  %v3718 = vpop.f32.mrb[0].mxu0
  %3719 = vmatprep.mubr.bf16.mxu0 0
  %3720 = vmatmul.mubr.bf16.gmra.mrb[0].mxu0 %v3604
  %v3721 = vpop.f32.mrb[0].mxu0
  %v3722 = vadd.f32 %v108, %v3721
  %v3723 = vpop.f32.mrb[0].mxu0
  %v3724 = vpop.f32.mrb[0].mxu0
  %v3725 = vadd.f32 %v108, %v3724
  %v3726 = vpop.f32.mrb[0].mxu0
  %3727 = vdwg.mxu0
  %v3728 = vmax.f32 %v3650, 0.0
  %v3729 = vmax.f32 %v3653, 0.0
  %v3730 = vmax.f32 %v3658, 0.0
  %v3731 = vmax.f32 %v3661, 0.0
  %v3732 = vmax.f32 %v3666, 0.0
  %v3733 = vmax.f32 %v3669, 0.0
  %v3734 = vmax.f32 %v3674, 0.0
  %v3735 = vmax.f32 %v3677, 0.0
  %v3736 = vmax.f32 %v3682, 0.0
  %v3737 = vmax.f32 %v3685, 0.0
  %v3738 = vmax.f32 %v3690, 0.0
  %v3739 = vmax.f32 %v3693, 0.0
  %v3740 = vmax.f32 %v3698, 0.0
  %v3741 = vmax.f32 %v3701, 0.0
  %v3742 = vmax.f32 %v3706, 0.0
  %v3743 = vmax.f32 %v3709, 0.0
  %v3744 = vmax.f32 %v3714, 0.0
  %v3745 = vmax.f32 %v3717, 0.0
  %v3746 = vmax.f32 %v3722, 0.0
  %v3747 = vmax.f32 %v3725, 0.0
  %v3751 = vrot.slane %v3730, 4
  %v3752 = vrot.slane %v3731, 4
  %v3753 = vsel %vm354, %v3751, %v3752
  %v3754 = vrot.slane %v3732, 4
  %v3755 = vsel %vm354, %v3752, %v3754
  %v3759 = vmax.f32 %v3728, %v3753
  %v3760 = vmax.f32 %v3729, %v3755
  %v3761 = vmax.f32 %v3730, %v3754
  %v3765 = vrot.slane %v3735, 4
  %v3766 = vrot.slane %v3736, 4
  %v3767 = vsel %vm354, %v3765, %v3766
  %v3768 = vrot.slane %v3737, 4
  %v3769 = vsel %vm354, %v3766, %v3768
  %v3773 = vmax.f32 %v3733, %v3767
  %v3774 = vmax.f32 %v3734, %v3769
  %v3775 = vmax.f32 %v3735, %v3768
  %v3776 = vmax.f32 %v3759, %v3773
  %v3777 = vmax.f32 %v3760, %v3774
  %v3778 = vmax.f32 %v3761, %v3775
  %3779 = vst [vmem:[#allocation2 + $0x78] sm:$0xff] %v3776
  %3780 = vst [vmem:[#allocation2 + $0x80] sm:$0x3] %v3777
  %3781 = vst [vmem:[%s52 + $0x76] sm:$0xfc] %v3777
  %3782 = vst [vmem:[%s52 + $0x7e] sm:$0xf] %v3778
  %v3786 = vrot.slane %v3740, 4
  %v3787 = vrot.slane %v3741, 4
  %v3788 = vsel %vm354, %v3786, %v3787
  %v3789 = vrot.slane %v3742, 4
  %v3790 = vsel %vm354, %v3787, %v3789
  %v3794 = vmax.f32 %v3738, %v3788
  %v3795 = vmax.f32 %v3739, %v3790
  %v3796 = vmax.f32 %v3740, %v3789
  %v3800 = vrot.slane %v3745, 4
  %v3801 = vrot.slane %v3746, 4
  %v3802 = vsel %vm354, %v3800, %v3801
  %v3803 = vrot.slane %v3747, 4
  %v3804 = vsel %vm354, %v3801, %v3803
  %v3808 = vmax.f32 %v3743, %v3802
  %v3809 = vmax.f32 %v3744, %v3804
  %v3810 = vmax.f32 %v3745, %v3803
  %v3811 = vmax.f32 %v3794, %v3808
  %v3812 = vmax.f32 %v3795, %v3809
  %v3813 = vmax.f32 %v3796, %v3810
  %3814 = vst [vmem:[%s54 + $0x78] sm:$0xff] %v3811
  %3815 = vst [vmem:[%s54 + $0x80] sm:$0x3] %v3812
  %3816 = vst [vmem:[%s56 + $0x76] sm:$0xfc] %v3812
  %3817 = vst [vmem:[%s56 + $0x7e] sm:$0xf] %v3813
  %v3818 = vld [vmem:[#allocation2] sm:$0xff]
  %v3819 = vld [vmem:[#allocation2 + $0x8] sm:$0xff]
  %v3820 = vld [vmem:[#allocation2 + $0x10] sm:$0xff]
  %v3821 = vld [vmem:[#allocation2 + $0x18] sm:$0xff]
  %v3822 = vld [vmem:[#allocation2 + $0x20] sm:$0xff]
  %v3823 = vld [vmem:[#allocation2 + $0x28] sm:$0xff]
  %v3824 = vld [vmem:[#allocation2 + $0x30] sm:$0xff]
  %v3825 = vld [vmem:[#allocation2 + $0x38] sm:$0xff]
  %v3826 = vld [vmem:[#allocation2 + $0x40] sm:$0xff]
  %v3827 = vld [vmem:[#allocation2 + $0x48] sm:$0xff]
  %v3828 = vld [vmem:[#allocation2 + $0x50] sm:$0xff]
  %v3829 = vld [vmem:[#allocation2 + $0x58] sm:$0xff]
  %v3830 = vld [vmem:[#allocation2 + $0x60] sm:$0xff]
  %v3831 = vld [vmem:[#allocation2 + $0x68] sm:$0xff]
  %v3832 = vld [vmem:[#allocation2 + $0x70] sm:$0xff]
  %v3833 = vpack.c.bf16 %v3819, %v3818
  %v3834 = vpack.c.bf16 %v3821, %v3820
  %v3835 = vpack.c.bf16 %v3823, %v3822
  %v3836 = vpack.c.bf16 %v3825, %v3824
  %v3837 = vpack.c.bf16 %v3827, %v3826
  %v3838 = vpack.c.bf16 %v3829, %v3828
  %v3839 = vpack.c.bf16 %v3831, %v3830
  %v3840 = vpack.c.bf16 %v3832, %v3832
  %3841 = vst [vmem:[#allocation3] sm:$0xff] %v3833
  %3842 = vst [vmem:[#allocation3 + $0x48] sm:$0xff] %v3834
  %3843 = vst [vmem:[#allocation3 + $0x90] sm:$0xff] %v3835
  %3844 = vst [vmem:[#allocation3 + $0xd8] sm:$0xff] %v3836
  %3845 = vst [vmem:[#allocation3 + $0x120] sm:$0xff] %v3837
  %3846 = vst [vmem:[#allocation3 + $0x168] sm:$0xff] %v3838
  %3847 = vst [vmem:[#allocation3 + $0x1b0] sm:$0xff] %v3839
  %3848 = vst [vmem:[#allocation3 + $0x1f8] sm:$0xf] %v3840
  %v3849 = vld [vmem:[%s52] sm:$0xff]
  %v3850 = vld [vmem:[%s52 + $0x8] sm:$0xff]
  %v3851 = vld [vmem:[%s52 + $0x10] sm:$0xff]
  %v3852 = vld [vmem:[%s52 + $0x18] sm:$0xff]
  %v3853 = vld [vmem:[%s52 + $0x20] sm:$0xff]
  %v3854 = vld [vmem:[%s52 + $0x28] sm:$0xff]
  %v3855 = vld [vmem:[%s52 + $0x30] sm:$0xff]
  %v3856 = vld [vmem:[%s52 + $0x38] sm:$0xff]
  %v3857 = vld [vmem:[%s52 + $0x40] sm:$0xff]
  %v3858 = vld [vmem:[%s52 + $0x48] sm:$0xff]
  %v3859 = vld [vmem:[%s52 + $0x50] sm:$0xff]
  %v3860 = vld [vmem:[%s52 + $0x58] sm:$0xff]
  %v3861 = vld [vmem:[%s52 + $0x60] sm:$0xff]
  %v3862 = vld [vmem:[%s52 + $0x68] sm:$0xff]
  %v3863 = vld [vmem:[%s52 + $0x70] sm:$0xff]
  %v3864 = vpack.c.bf16 %v3850, %v3849
  %v3865 = vpack.c.bf16 %v3852, %v3851
  %v3866 = vpack.c.bf16 %v3854, %v3853
  %v3867 = vpack.c.bf16 %v3856, %v3855
  %v3868 = vpack.c.bf16 %v3858, %v3857
  %v3869 = vpack.c.bf16 %v3860, %v3859
  %v3870 = vpack.c.bf16 %v3862, %v3861
  %v3871 = vpack.c.bf16 %v3863, %v3863
  %3872 = vst [vmem:[#allocation3 + $0x8] sm:$0xff] %v3864
  %3873 = vst [vmem:[#allocation3 + $0x50] sm:$0xff] %v3865
  %3874 = vst [vmem:[#allocation3 + $0x98] sm:$0xff] %v3866
  %3875 = vst [vmem:[#allocation3 + $0xe0] sm:$0xff] %v3867
  %3876 = vst [vmem:[#allocation3 + $0x128] sm:$0xff] %v3868
  %3877 = vst [vmem:[#allocation3 + $0x170] sm:$0xff] %v3869
  %3878 = vst [vmem:[#allocation3 + $0x1b8] sm:$0xff] %v3870
  %3879 = vst [vmem:[#allocation3 + $0x200] sm:$0xf] %v3871
  %v3880 = vld [vmem:[#allocation2 + $0x1] sm:$0xff]
  %v3881 = vld [vmem:[#allocation2 + $0x9] sm:$0xff]
  %v3882 = vld [vmem:[#allocation2 + $0x11] sm:$0xff]
  %v3883 = vld [vmem:[#allocation2 + $0x19] sm:$0xff]
  %v3884 = vld [vmem:[#allocation2 + $0x21] sm:$0xff]
  %v3885 = vld [vmem:[#allocation2 + $0x29] sm:$0xff]
  %v3886 = vld [vmem:[#allocation2 + $0x31] sm:$0xff]
  %v3887 = vld [vmem:[#allocation2 + $0x39] sm:$0xff]
  %v3888 = vld [vmem:[#allocation2 + $0x41] sm:$0xff]
  %v3889 = vld [vmem:[#allocation2 + $0x49] sm:$0xff]
  %v3890 = vld [vmem:[#allocation2 + $0x51] sm:$0xff]
  %v3891 = vld [vmem:[#allocation2 + $0x59] sm:$0xff]
  %v3892 = vld [vmem:[#allocation2 + $0x61] sm:$0xff]
  %v3893 = vld [vmem:[#allocation2 + $0x69] sm:$0xff]
  %v3894 = vld [vmem:[#allocation2 + $0x71] sm:$0xff]
  %v3895 = vpack.c.bf16 %v3881, %v3880
  %v3896 = vpack.c.bf16 %v3883, %v3882
  %v3897 = vpack.c.bf16 %v3885, %v3884
  %v3898 = vpack.c.bf16 %v3887, %v3886
  %v3899 = vpack.c.bf16 %v3889, %v3888
  %v3900 = vpack.c.bf16 %v3891, %v3890
  %v3901 = vpack.c.bf16 %v3893, %v3892
  %v3902 = vpack.c.bf16 %v3894, %v3894
  %3903 = vst [vmem:[#allocation3 + $0x10] sm:$0xff] %v3895
  %3904 = vst [vmem:[#allocation3 + $0x58] sm:$0xff] %v3896
  %3905 = vst [vmem:[#allocation3 + $0xa0] sm:$0xff] %v3897
  %3906 = vst [vmem:[#allocation3 + $0xe8] sm:$0xff] %v3898
  %3907 = vst [vmem:[#allocation3 + $0x130] sm:$0xff] %v3899
  %3908 = vst [vmem:[#allocation3 + $0x178] sm:$0xff] %v3900
  %3909 = vst [vmem:[#allocation3 + $0x1c0] sm:$0xff] %v3901
  %3910 = vst [vmem:[#allocation3 + $0x208] sm:$0xf] %v3902
  %v3911 = vld [vmem:[%s54] sm:$0xff]
  %v3912 = vld [vmem:[%s54 + $0x8] sm:$0xff]
  %v3913 = vld [vmem:[%s54 + $0x10] sm:$0xff]
  %v3914 = vld [vmem:[%s54 + $0x18] sm:$0xff]
  %v3915 = vld [vmem:[%s54 + $0x20] sm:$0xff]
  %v3916 = vld [vmem:[%s54 + $0x28] sm:$0xff]
  %v3917 = vld [vmem:[%s54 + $0x30] sm:$0xff]
  %v3918 = vld [vmem:[%s54 + $0x38] sm:$0xff]
  %v3919 = vld [vmem:[%s54 + $0x40] sm:$0xff]
  %v3920 = vld [vmem:[%s54 + $0x48] sm:$0xff]
  %v3921 = vld [vmem:[%s54 + $0x50] sm:$0xff]
  %v3922 = vld [vmem:[%s54 + $0x58] sm:$0xff]
  %v3923 = vld [vmem:[%s54 + $0x60] sm:$0xff]
  %v3924 = vld [vmem:[%s54 + $0x68] sm:$0xff]
  %v3925 = vld [vmem:[%s54 + $0x70] sm:$0xff]
  %v3926 = vpack.c.bf16 %v3912, %v3911
  %v3927 = vpack.c.bf16 %v3914, %v3913
  %v3928 = vpack.c.bf16 %v3916, %v3915
  %v3929 = vpack.c.bf16 %v3918, %v3917
  %v3930 = vpack.c.bf16 %v3920, %v3919
  %v3931 = vpack.c.bf16 %v3922, %v3921
  %v3932 = vpack.c.bf16 %v3924, %v3923
  %v3933 = vpack.c.bf16 %v3925, %v3925
  %3934 = vst [vmem:[#allocation3 + $0x18] sm:$0xff] %v3926
  %3935 = vst [vmem:[#allocation3 + $0x60] sm:$0xff] %v3927
  %3936 = vst [vmem:[#allocation3 + $0xa8] sm:$0xff] %v3928
  %3937 = vst [vmem:[#allocation3 + $0xf0] sm:$0xff] %v3929
  %3938 = vst [vmem:[#allocation3 + $0x138] sm:$0xff] %v3930
  %3939 = vst [vmem:[#allocation3 + $0x180] sm:$0xff] %v3931
  %3940 = vst [vmem:[#allocation3 + $0x1c8] sm:$0xff] %v3932
  %3941 = vst [vmem:[#allocation3 + $0x210] sm:$0xf] %v3933
  %v3942 = vld [vmem:[%s56] sm:$0xff]
  %v3943 = vld [vmem:[%s56 + $0x8] sm:$0xff]
  %v3944 = vld [vmem:[%s56 + $0x10] sm:$0xff]
  %v3945 = vld [vmem:[%s56 + $0x18] sm:$0xff]
  %v3946 = vld [vmem:[%s56 + $0x20] sm:$0xff]
  %v3947 = vld [vmem:[%s56 + $0x28] sm:$0xff]
  %v3948 = vld [vmem:[%s56 + $0x30] sm:$0xff]
  %v3949 = vld [vmem:[%s56 + $0x38] sm:$0xff]
  %v3950 = vld [vmem:[%s56 + $0x40] sm:$0xff]
  %v3951 = vld [vmem:[%s56 + $0x48] sm:$0xff]
  %v3952 = vld [vmem:[%s56 + $0x50] sm:$0xff]
  %v3953 = vld [vmem:[%s56 + $0x58] sm:$0xff]
  %v3954 = vld [vmem:[%s56 + $0x60] sm:$0xff]
  %v3955 = vld [vmem:[%s56 + $0x68] sm:$0xff]
  %v3956 = vld [vmem:[%s56 + $0x70] sm:$0xff]
  %v3957 = vpack.c.bf16 %v3943, %v3942
  %v3958 = vpack.c.bf16 %v3945, %v3944
  %v3959 = vpack.c.bf16 %v3947, %v3946
  %v3960 = vpack.c.bf16 %v3949, %v3948
  %v3961 = vpack.c.bf16 %v3951, %v3950
  %v3962 = vpack.c.bf16 %v3953, %v3952
  %v3963 = vpack.c.bf16 %v3955, %v3954
  %v3964 = vpack.c.bf16 %v3956, %v3956
  %3965 = vst [vmem:[#allocation3 + $0x20] sm:$0xff] %v3957
  %3966 = vst [vmem:[#allocation3 + $0x68] sm:$0xff] %v3958
  %3967 = vst [vmem:[#allocation3 + $0xb0] sm:$0xff] %v3959
  %3968 = vst [vmem:[#allocation3 + $0xf8] sm:$0xff] %v3960
  %3969 = vst [vmem:[#allocation3 + $0x140] sm:$0xff] %v3961
  %3970 = vst [vmem:[#allocation3 + $0x188] sm:$0xff] %v3962
  %3971 = vst [vmem:[#allocation3 + $0x1d0] sm:$0xff] %v3963
  %3972 = vst [vmem:[#allocation3 + $0x218] sm:$0xf] %v3964
  %v3973 = vld [vmem:[%s54 + $0x1] sm:$0xff]
  %v3974 = vld [vmem:[%s54 + $0x9] sm:$0xff]
  %v3975 = vld [vmem:[%s54 + $0x11] sm:$0xff]
  %v3976 = vld [vmem:[%s54 + $0x19] sm:$0xff]
  %v3977 = vld [vmem:[%s54 + $0x21] sm:$0xff]
  %v3978 = vld [vmem:[%s54 + $0x29] sm:$0xff]
  %v3979 = vld [vmem:[%s54 + $0x31] sm:$0xff]
  %v3980 = vld [vmem:[%s54 + $0x39] sm:$0xff]
  %v3981 = vld [vmem:[%s54 + $0x41] sm:$0xff]
  %v3982 = vld [vmem:[%s54 + $0x49] sm:$0xff]
  %v3983 = vld [vmem:[%s54 + $0x51] sm:$0xff]
  %v3984 = vld [vmem:[%s54 + $0x59] sm:$0xff]
  %v3985 = vld [vmem:[%s54 + $0x61] sm:$0xff]
  %v3986 = vld [vmem:[%s54 + $0x69] sm:$0xff]
  %v3987 = vld [vmem:[%s54 + $0x71] sm:$0xff]
  %v3988 = vpack.c.bf16 %v3974, %v3973
  %v3989 = vpack.c.bf16 %v3976, %v3975
  %v3990 = vpack.c.bf16 %v3978, %v3977
  %v3991 = vpack.c.bf16 %v3980, %v3979
  %v3992 = vpack.c.bf16 %v3982, %v3981
  %v3993 = vpack.c.bf16 %v3984, %v3983
  %v3994 = vpack.c.bf16 %v3986, %v3985
  %v3995 = vpack.c.bf16 %v3987, %v3987
  %3996 = vst [vmem:[#allocation3 + $0x28] sm:$0xff] %v3988
  %3997 = vst [vmem:[#allocation3 + $0x70] sm:$0xff] %v3989
  %3998 = vst [vmem:[#allocation3 + $0xb8] sm:$0xff] %v3990
  %3999 = vst [vmem:[#allocation3 + $0x100] sm:$0xff] %v3991
  %4000 = vst [vmem:[#allocation3 + $0x148] sm:$0xff] %v3992
  %4001 = vst [vmem:[#allocation3 + $0x190] sm:$0xff] %v3993
  %4002 = vst [vmem:[#allocation3 + $0x1d8] sm:$0xff] %v3994
  %4003 = vst [vmem:[#allocation3 + $0x220] sm:$0xf] %v3995
  %v4004 = vld [vmem:[#allocation2 + $0xa] sm:$0xff]
  %v4005 = vld [vmem:[#allocation2 + $0x12] sm:$0xff]
  %v4006 = vld [vmem:[#allocation2 + $0x1a] sm:$0xff]
  %v4007 = vld [vmem:[#allocation2 + $0x22] sm:$0xff]
  %v4008 = vld [vmem:[#allocation2 + $0x2a] sm:$0xff]
  %v4009 = vld [vmem:[#allocation2 + $0x32] sm:$0xff]
  %v4010 = vld [vmem:[#allocation2 + $0x3a] sm:$0xff]
  %v4011 = vld [vmem:[#allocation2 + $0x42] sm:$0xff]
  %v4012 = vld [vmem:[#allocation2 + $0x4a] sm:$0xff]
  %v4013 = vld [vmem:[#allocation2 + $0x52] sm:$0xff]
  %v4014 = vld [vmem:[#allocation2 + $0x5a] sm:$0xff]
  %v4015 = vld [vmem:[#allocation2 + $0x62] sm:$0xff]
  %v4016 = vld [vmem:[#allocation2 + $0x6a] sm:$0xff]
  %v4017 = vld [vmem:[#allocation2 + $0x72] sm:$0xff]
  %v4018 = vld [vmem:[#allocation2 + $0x7a] sm:$0xff]
  %v4019 = vpack.c.bf16 %v4005, %v4004
  %v4020 = vpack.c.bf16 %v4007, %v4006
  %v4021 = vpack.c.bf16 %v4009, %v4008
  %v4022 = vpack.c.bf16 %v4011, %v4010
  %v4023 = vpack.c.bf16 %v4013, %v4012
  %v4024 = vpack.c.bf16 %v4015, %v4014
  %v4025 = vpack.c.bf16 %v4017, %v4016
  %v4026 = vpack.c.bf16 %v4018, %v4018
  %4027 = vst [vmem:[#allocation3 + $0x30] sm:$0xff] %v4019
  %4028 = vst [vmem:[#allocation3 + $0x78] sm:$0xff] %v4020
  %4029 = vst [vmem:[#allocation3 + $0xc0] sm:$0xff] %v4021
  %4030 = vst [vmem:[#allocation3 + $0x108] sm:$0xff] %v4022
  %4031 = vst [vmem:[#allocation3 + $0x150] sm:$0xff] %v4023
  %4032 = vst [vmem:[#allocation3 + $0x198] sm:$0xff] %v4024
  %4033 = vst [vmem:[#allocation3 + $0x1e0] sm:$0xff] %v4025
  %4034 = vst [vmem:[#allocation3 + $0x228] sm:$0xf] %v4026
  %v4035 = vld [vmem:[%s52 + $0xa] sm:$0xff]
  %v4036 = vld [vmem:[%s52 + $0x12] sm:$0xff]
  %v4037 = vld [vmem:[%s52 + $0x1a] sm:$0xff]
  %v4038 = vld [vmem:[%s52 + $0x22] sm:$0xff]
  %v4039 = vld [vmem:[%s52 + $0x2a] sm:$0xff]
  %v4040 = vld [vmem:[%s52 + $0x32] sm:$0xff]
  %v4041 = vld [vmem:[%s52 + $0x3a] sm:$0xff]
  %v4042 = vld [vmem:[%s52 + $0x42] sm:$0xff]
  %v4043 = vld [vmem:[%s52 + $0x4a] sm:$0xff]
  %v4044 = vld [vmem:[%s52 + $0x52] sm:$0xff]
  %v4045 = vld [vmem:[%s52 + $0x5a] sm:$0xff]
  %v4046 = vld [vmem:[%s52 + $0x62] sm:$0xff]
  %v4047 = vld [vmem:[%s52 + $0x6a] sm:$0xff]
  %v4048 = vld [vmem:[%s52 + $0x72] sm:$0xff]
  %v4049 = vld [vmem:[%s52 + $0x7a] sm:$0xff]
  %v4050 = vpack.c.bf16 %v4036, %v4035
  %v4051 = vpack.c.bf16 %v4038, %v4037
  %v4052 = vpack.c.bf16 %v4040, %v4039
  %v4053 = vpack.c.bf16 %v4042, %v4041
  %v4054 = vpack.c.bf16 %v4044, %v4043
  %v4055 = vpack.c.bf16 %v4046, %v4045
  %v4056 = vpack.c.bf16 %v4048, %v4047
  %v4057 = vpack.c.bf16 %v4049, %v4049
  %4058 = vst [vmem:[#allocation3 + $0x38] sm:$0xff] %v4050
  %4059 = vst [vmem:[#allocation3 + $0x80] sm:$0xff] %v4051
  %4060 = vst [vmem:[#allocation3 + $0xc8] sm:$0xff] %v4052
  %4061 = vst [vmem:[#allocation3 + $0x110] sm:$0xff] %v4053
  %4062 = vst [vmem:[#allocation3 + $0x158] sm:$0xff] %v4054
  %4063 = vst [vmem:[#allocation3 + $0x1a0] sm:$0xff] %v4055
  %4064 = vst [vmem:[#allocation3 + $0x1e8] sm:$0xff] %v4056
  %4065 = vst [vmem:[#allocation3 + $0x230] sm:$0xf] %v4057
  %v4066 = vld [vmem:[#allocation2 + $0xb] sm:$0xff]
  %v4067 = vld [vmem:[#allocation2 + $0x13] sm:$0xff]
  %v4068 = vld [vmem:[#allocation2 + $0x1b] sm:$0xff]
  %v4069 = vld [vmem:[#allocation2 + $0x23] sm:$0xff]
  %v4070 = vld [vmem:[#allocation2 + $0x2b] sm:$0xff]
  %v4071 = vld [vmem:[#allocation2 + $0x33] sm:$0xff]
  %v4072 = vld [vmem:[#allocation2 + $0x3b] sm:$0xff]
  %v4073 = vld [vmem:[#allocation2 + $0x43] sm:$0xff]
  %v4074 = vld [vmem:[#allocation2 + $0x4b] sm:$0xff]
  %v4075 = vld [vmem:[#allocation2 + $0x53] sm:$0xff]
  %v4076 = vld [vmem:[#allocation2 + $0x5b] sm:$0xff]
  %v4077 = vld [vmem:[#allocation2 + $0x63] sm:$0xff]
  %v4078 = vld [vmem:[#allocation2 + $0x6b] sm:$0xff]
  %v4079 = vld [vmem:[#allocation2 + $0x73] sm:$0xff]
  %v4080 = vld [vmem:[#allocation2 + $0x7b] sm:$0xff]
  %v4081 = vpack.c.bf16 %v4067, %v4066
  %v4082 = vpack.c.bf16 %v4069, %v4068
  %v4083 = vpack.c.bf16 %v4071, %v4070
  %v4084 = vpack.c.bf16 %v4073, %v4072
  %v4085 = vpack.c.bf16 %v4075, %v4074
  %v4086 = vpack.c.bf16 %v4077, %v4076
  %v4087 = vpack.c.bf16 %v4079, %v4078
  %v4088 = vpack.c.bf16 %v4080, %v4080
  %4089 = vst [vmem:[#allocation3 + $0x40] sm:$0xff] %v4081
  %4090 = vst [vmem:[#allocation3 + $0x88] sm:$0xff] %v4082
  %4091 = vst [vmem:[#allocation3 + $0xd0] sm:$0xff] %v4083
  %4092 = vst [vmem:[#allocation3 + $0x118] sm:$0xff] %v4084
  %4093 = vst [vmem:[#allocation3 + $0x160] sm:$0xff] %v4085
  %4094 = vst [vmem:[#allocation3 + $0x1a8] sm:$0xff] %v4086
  %4095 = vst [vmem:[#allocation3 + $0x1f0] sm:$0xff] %v4087
  %4096 = vst [vmem:[#allocation3 + $0x238] sm:$0xf] %v4088
  %v4097 = vld [vmem:[#allocation3] sm:$0xff]
  %v4098 = vld [vmem:[#allocation3 + $0x8] sm:$0xff]
  %v4099 = vld [vmem:[#allocation3 + $0x10] sm:$0xff]
  %v4100 = vld [vmem:[#allocation3 + $0x18] sm:$0xff]
  %v4101 = vld [vmem:[#allocation3 + $0x20] sm:$0xff]
  %v4102 = vld [vmem:[#allocation3 + $0x28] sm:$0xff]
  %v4103 = vld [vmem:[#allocation3 + $0x30] sm:$0xff]
  %v4104 = vld [vmem:[#allocation3 + $0x38] sm:$0xff]
  %v4105 = vld [vmem:[#allocation3 + $0x40] sm:$0xff]
  %v4106 = vld [vmem:[#allocation3 + $0x48] sm:$0xff]
  %v4107 = vld [vmem:[#allocation3 + $0x50] sm:$0xff]
  %v4108 = vld [vmem:[#allocation3 + $0x58] sm:$0xff]
  %v4109 = vld [vmem:[#allocation3 + $0x60] sm:$0xff]
  %v4110 = vld [vmem:[#allocation3 + $0x68] sm:$0xff]
  %v4111 = vld [vmem:[#allocation3 + $0x70] sm:$0xff]
  %v4112 = vld [vmem:[#allocation3 + $0x78] sm:$0xff]
  %v4113 = vld [vmem:[#allocation3 + $0x80] sm:$0xff]
  %v4114 = vld [vmem:[#allocation3 + $0x88] sm:$0xff]
  %v4115 = vld [vmem:[#allocation3 + $0x90] sm:$0xff]
  %v4116 = vld [vmem:[#allocation3 + $0x98] sm:$0xff]
  %v4117 = vld [vmem:[#allocation3 + $0xa0] sm:$0xff]
  %v4118 = vld [vmem:[#allocation3 + $0xa8] sm:$0xff]
  %v4119 = vld [vmem:[#allocation3 + $0xb0] sm:$0xff]
  %v4120 = vld [vmem:[#allocation3 + $0xb8] sm:$0xff]
  %v4121 = vld [vmem:[#allocation3 + $0xc0] sm:$0xff]
  %v4122 = vld [vmem:[#allocation3 + $0xc8] sm:$0xff]
  %v4123 = vld [vmem:[#allocation3 + $0xd0] sm:$0xff]
  %v4124 = vld [vmem:[#allocation3 + $0xd8] sm:$0xff]
  %v4125 = vld [vmem:[#allocation3 + $0xe0] sm:$0xff]
  %v4126 = vld [vmem:[#allocation3 + $0xe8] sm:$0xff]
  %v4127 = vld [vmem:[#allocation3 + $0xf0] sm:$0xff]
  %v4128 = vld [vmem:[#allocation3 + $0xf8] sm:$0xff]
  %v4129 = vld [vmem:[#allocation3 + $0x100] sm:$0xff]
  %v4130 = vld [vmem:[#allocation3 + $0x108] sm:$0xff]
  %v4131 = vld [vmem:[#allocation3 + $0x110] sm:$0xff]
  %v4132 = vld [vmem:[#allocation3 + $0x118] sm:$0xff]
  %v4133 = vld [vmem:[#allocation3 + $0x120] sm:$0xff]
  %v4134 = vld [vmem:[#allocation3 + $0x128] sm:$0xff]
  %v4135 = vld [vmem:[#allocation3 + $0x130] sm:$0xff]
  %v4136 = vld [vmem:[#allocation3 + $0x138] sm:$0xff]
  %v4137 = vld [vmem:[#allocation3 + $0x140] sm:$0xff]
  %v4138 = vld [vmem:[#allocation3 + $0x148] sm:$0xff]
  %v4139 = vld [vmem:[#allocation3 + $0x150] sm:$0xff]
  %v4140 = vld [vmem:[#allocation3 + $0x158] sm:$0xff]
  %v4141 = vld [vmem:[#allocation3 + $0x160] sm:$0xff]
  %v4142 = vld [vmem:[#allocation3 + $0x168] sm:$0xff]
  %v4143 = vld [vmem:[#allocation3 + $0x170] sm:$0xff]
  %v4144 = vld [vmem:[#allocation3 + $0x178] sm:$0xff]
  %v4145 = vld [vmem:[#allocation3 + $0x180] sm:$0xff]
  %v4146 = vld [vmem:[#allocation3 + $0x188] sm:$0xff]
  %v4147 = vld [vmem:[#allocation3 + $0x190] sm:$0xff]
  %v4148 = vld [vmem:[#allocation3 + $0x198] sm:$0xff]
  %v4149 = vld [vmem:[#allocation3 + $0x1a0] sm:$0xff]
  %v4150 = vld [vmem:[#allocation3 + $0x1a8] sm:$0xff]
  %v4151 = vld [vmem:[#allocation3 + $0x1b0] sm:$0xff]
  %v4152 = vld [vmem:[#allocation3 + $0x1b8] sm:$0xff]
  %v4153 = vld [vmem:[#allocation3 + $0x1c0] sm:$0xff]
  %v4154 = vld [vmem:[#allocation3 + $0x1c8] sm:$0xff]
  %v4155 = vld [vmem:[#allocation3 + $0x1d0] sm:$0xff]
  %v4156 = vld [vmem:[#allocation3 + $0x1d8] sm:$0xff]
  %v4157 = vld [vmem:[#allocation3 + $0x1e0] sm:$0xff]
  %v4158 = vld [vmem:[#allocation3 + $0x1e8] sm:$0xff]
  %v4159 = vld [vmem:[#allocation3 + $0x1f0] sm:$0xff]
  %v4160 = vld [vmem:[#allocation3 + $0x1f8] sm:$0xff]
  %v4161 = vld [vmem:[#allocation3 + $0x200] sm:$0xff]
  %v4162 = vld [vmem:[#allocation3 + $0x208] sm:$0xff]
  %v4163 = vld [vmem:[#allocation3 + $0x210] sm:$0xff]
  %v4164 = vld [vmem:[#allocation3 + $0x218] sm:$0xff]
  %v4165 = vld [vmem:[#allocation3 + $0x220] sm:$0xff]
  %v4166 = vld [vmem:[#allocation3 + $0x228] sm:$0xff]
  %v4167 = vld [vmem:[#allocation3 + $0x230] sm:$0xff]
  %v4168 = vld [vmem:[#allocation3 + $0x238] sm:$0xff]
  %v4169 = vld [vmem:[%s3] sm:$0xf]
  %v4170 = vld [vmem:[%s3 + $0x4] sm:$0xf]
  %v4171 = vld [vmem:[%s3 + $0x8] sm:$0xf]
  %v4172 = vld [vmem:[%s3 + $0xc] sm:$0xf]
  %v4173 = vld [vmem:[%s3 + $0x10] sm:$0xf]
  %v4174 = vld [vmem:[%s3 + $0x14] sm:$0xf]
  %v4175 = vld [vmem:[%s3 + $0x18] sm:$0xf]
  %v4176 = vld [vmem:[%s3 + $0x1c] sm:$0xf]
  %v4177 = vld [vmem:[%s3 + $0x20] sm:$0xf]
  %v4178 = vld [vmem:[%s3 + $0x24] sm:$0xf]
  %v4179 = vld [vmem:[%s3 + $0x28] sm:$0xf]
  %v4180 = vld [vmem:[%s3 + $0x2c] sm:$0xf]
  %v4181 = vld [vmem:[%s3 + $0x30] sm:$0xf]
  %v4182 = vld [vmem:[%s3 + $0x34] sm:$0xf]
  %v4183 = vld [vmem:[%s3 + $0x38] sm:$0xf]
  %v4184 = vld [vmem:[%s3 + $0x3c] sm:$0xf]
  %v4185 = vld [vmem:[%s3 + $0x40] sm:$0xf]
  %v4186 = vld [vmem:[%s3 + $0x44] sm:$0xf]
  %v4187 = vld [vmem:[%s3 + $0x48] sm:$0xf]
  %v4188 = vld [vmem:[%s3 + $0x4c] sm:$0xf]
  %v4189 = vld [vmem:[%s3 + $0x50] sm:$0xf]
  %v4190 = vld [vmem:[%s3 + $0x54] sm:$0xf]
  %v4191 = vld [vmem:[%s3 + $0x58] sm:$0xf]
  %v4192 = vld [vmem:[%s3 + $0x5c] sm:$0xf]
  %v4193 = vld [vmem:[%s3 + $0x60] sm:$0xf]
  %v4194 = vld [vmem:[%s3 + $0x64] sm:$0xf]
  %v4195 = vld [vmem:[%s3 + $0x68] sm:$0xf]
  %v4196 = vld [vmem:[%s3 + $0x6c] sm:$0xf]
  %v4197 = vld [vmem:[%s3 + $0x70] sm:$0xf]
  %v4198 = vld [vmem:[%s3 + $0x74] sm:$0xf]
  %v4199 = vld [vmem:[%s3 + $0x78] sm:$0xf]
  %v4200 = vld [vmem:[%s3 + $0x7c] sm:$0xf]
  %v4201 = vld [vmem:[%s3 + $0x80] sm:$0xf]
  %v4202 = vld [vmem:[%s3 + $0x84] sm:$0xf]
  %v4203 = vld [vmem:[%s3 + $0x88] sm:$0xf]
  %v4204 = vld [vmem:[%s3 + $0x8c] sm:$0xf]
  %v4205 = vld [vmem:[%s3 + $0x90] sm:$0xf]
  %v4206 = vld [vmem:[%s3 + $0x94] sm:$0xf]
  %v4207 = vld [vmem:[%s3 + $0x98] sm:$0xf]
  %v4208 = vld [vmem:[%s3 + $0x9c] sm:$0xf]
  %v4209 = vld [vmem:[%s3 + $0xa0] sm:$0xf]
  %v4210 = vld [vmem:[%s3 + $0xa4] sm:$0xf]
  %v4211 = vld [vmem:[%s3 + $0xa8] sm:$0xf]
  %v4212 = vld [vmem:[%s3 + $0xac] sm:$0xf]
  %v4213 = vld [vmem:[%s3 + $0xb0] sm:$0xf]
  %v4214 = vld [vmem:[%s3 + $0xb4] sm:$0xf]
  %v4215 = vld [vmem:[%s3 + $0xb8] sm:$0xf]
  %v4216 = vld [vmem:[%s3 + $0xbc] sm:$0xf]
  %v4217 = vld [vmem:[%s3 + $0xc0] sm:$0xf]
  %v4218 = vld [vmem:[%s3 + $0xc4] sm:$0xf]
  %v4219 = vld [vmem:[%s3 + $0xc8] sm:$0xf]
  %v4220 = vld [vmem:[%s3 + $0xcc] sm:$0xf]
  %v4221 = vld [vmem:[%s3 + $0xd0] sm:$0xf]
  %v4222 = vld [vmem:[%s3 + $0xd4] sm:$0xf]
  %v4223 = vld [vmem:[%s3 + $0xd8] sm:$0xf]
  %v4224 = vld [vmem:[%s3 + $0xdc] sm:$0xf]
  %v4225 = vld [vmem:[%s3 + $0xe0] sm:$0xf]
  %v4226 = vld [vmem:[%s3 + $0xe4] sm:$0xf]
  %v4227 = vld [vmem:[%s3 + $0xe8] sm:$0xf]
  %v4228 = vld [vmem:[%s3 + $0xec] sm:$0xf]
  %v4229 = vld [vmem:[%s3 + $0xf0] sm:$0xf]
  %v4230 = vld [vmem:[%s3 + $0xf4] sm:$0xf]
  %v4231 = vld [vmem:[%s3 + $0xf8] sm:$0xf]
  %v4232 = vld [vmem:[%s3 + $0xfc] sm:$0xf]
  %v4233 = vld [vmem:[%s3 + $0x100] sm:$0xf]
  %v4234 = vld [vmem:[%s3 + $0x104] sm:$0xf]
  %v4235 = vld [vmem:[%s3 + $0x108] sm:$0xf]
  %v4236 = vld [vmem:[%s3 + $0x10c] sm:$0xf]
  %v4237 = vld [vmem:[%s3 + $0x110] sm:$0xf]
  %v4238 = vld [vmem:[%s3 + $0x114] sm:$0xf]
  %v4239 = vld [vmem:[%s3 + $0x118] sm:$0xf]
  %v4240 = vld [vmem:[%s3 + $0x11c] sm:$0xf]
  %v4241 = vld [vmem:[%s3 + $0x120] sm:$0xf]
  %v4242 = vld [vmem:[%s3 + $0x124] sm:$0xf]
  %v4243 = vld [vmem:[%s3 + $0x128] sm:$0xf]
  %v4244 = vld [vmem:[%s3 + $0x12c] sm:$0xf]
  %v4245 = vld [vmem:[%s3 + $0x130] sm:$0xf]
  %v4246 = vld [vmem:[%s3 + $0x134] sm:$0xf]
  %v4247 = vld [vmem:[%s3 + $0x138] sm:$0xf]
  %v4248 = vld [vmem:[%s3 + $0x13c] sm:$0xf]
  %v4249 = vld [vmem:[%s3 + $0x140] sm:$0xf]
  %v4250 = vld [vmem:[%s3 + $0x144] sm:$0xf]
  %v4251 = vld [vmem:[%s3 + $0x148] sm:$0xf]
  %v4252 = vld [vmem:[%s3 + $0x14c] sm:$0xf]
  %v4253 = vld [vmem:[%s3 + $0x150] sm:$0xf]
  %v4254 = vld [vmem:[%s3 + $0x154] sm:$0xf]
  %v4255 = vld [vmem:[%s3 + $0x158] sm:$0xf]
  %v4256 = vld [vmem:[%s3 + $0x15c] sm:$0xf]
  %v4257 = vld [vmem:[%s3 + $0x160] sm:$0xf]
  %v4258 = vld [vmem:[%s3 + $0x164] sm:$0xf]
  %v4259 = vld [vmem:[%s3 + $0x168] sm:$0xf]
  %v4260 = vld [vmem:[%s3 + $0x16c] sm:$0xf]
  %v4261 = vld [vmem:[%s3 + $0x170] sm:$0xf]
  %v4262 = vld [vmem:[%s3 + $0x174] sm:$0xf]
  %v4263 = vld [vmem:[%s3 + $0x178] sm:$0xf]
  %v4264 = vld [vmem:[%s3 + $0x17c] sm:$0xf]
  %v4265 = vld [vmem:[%s3 + $0x180] sm:$0xf]
  %v4266 = vld [vmem:[%s3 + $0x184] sm:$0xf]
  %v4267 = vld [vmem:[%s3 + $0x188] sm:$0xf]
  %v4268 = vld [vmem:[%s3 + $0x18c] sm:$0xf]
  %v4269 = vld [vmem:[%s3 + $0x190] sm:$0xf]
  %v4270 = vld [vmem:[%s3 + $0x194] sm:$0xf]
  %v4271 = vld [vmem:[%s3 + $0x198] sm:$0xf]
  %v4272 = vld [vmem:[%s3 + $0x19c] sm:$0xf]
  %v4273 = vld [vmem:[%s3 + $0x1a0] sm:$0xf]
  %v4274 = vld [vmem:[%s3 + $0x1a4] sm:$0xf]
  %v4275 = vld [vmem:[%s3 + $0x1a8] sm:$0xf]
  %v4276 = vld [vmem:[%s3 + $0x1ac] sm:$0xf]
  %v4277 = vld [vmem:[%s3 + $0x1b0] sm:$0xf]
  %v4278 = vld [vmem:[%s3 + $0x1b4] sm:$0xf]
  %v4279 = vld [vmem:[%s3 + $0x1b8] sm:$0xf]
  %v4280 = vld [vmem:[%s3 + $0x1bc] sm:$0xf]
  %v4281 = vld [vmem:[%s3 + $0x1c0] sm:$0xf]
  %v4282 = vld [vmem:[%s3 + $0x1c4] sm:$0xf]
  %v4283 = vld [vmem:[%s3 + $0x1c8] sm:$0xf]
  %v4284 = vld [vmem:[%s3 + $0x1cc] sm:$0xf]
  %v4285 = vld [vmem:[%s3 + $0x1d0] sm:$0xf]
  %v4286 = vld [vmem:[%s3 + $0x1d4] sm:$0xf]
  %v4287 = vld [vmem:[%s3 + $0x1d8] sm:$0xf]
  %v4288 = vld [vmem:[%s3 + $0x1dc] sm:$0xf]
  %v4289 = vld [vmem:[%s3 + $0x1e0] sm:$0xf]
  %v4290 = vld [vmem:[%s3 + $0x1e4] sm:$0xf]
  %v4291 = vld [vmem:[%s3 + $0x1e8] sm:$0xf]
  %v4292 = vld [vmem:[%s3 + $0x1ec] sm:$0xf]
  %v4293 = vld [vmem:[%s3 + $0x1f0] sm:$0xf]
  %v4294 = vld [vmem:[%s3 + $0x1f4] sm:$0xf]
  %v4295 = vld [vmem:[%s3 + $0x1f8] sm:$0xf]
  %v4296 = vld [vmem:[%s3 + $0x1fc] sm:$0xf]
  %v4297 = vld [vmem:[%s3 + $0x200] sm:$0xf]
  %v4298 = vld [vmem:[%s3 + $0x204] sm:$0xf]
  %v4299 = vld [vmem:[%s3 + $0x208] sm:$0xf]
  %v4300 = vld [vmem:[%s3 + $0x20c] sm:$0xf]
  %v4301 = vld [vmem:[%s3 + $0x210] sm:$0xf]
  %v4302 = vld [vmem:[%s3 + $0x214] sm:$0xf]
  %v4303 = vld [vmem:[%s3 + $0x218] sm:$0xf]
  %v4304 = vld [vmem:[%s3 + $0x21c] sm:$0xf]
  %v4305 = vld [vmem:[%s3 + $0x220] sm:$0xf]
  %v4306 = vld [vmem:[%s3 + $0x224] sm:$0xf]
  %v4307 = vld [vmem:[%s3 + $0x228] sm:$0xf]
  %v4308 = vld [vmem:[%s3 + $0x22c] sm:$0xf]
  %v4309 = vld [vmem:[%s3 + $0x230] sm:$0xf]
  %v4310 = vld [vmem:[%s3 + $0x234] sm:$0xf]
  %v4311 = vld [vmem:[%s3 + $0x238] sm:$0xf]
  %v4312 = vld [vmem:[%s3 + $0x23c] sm:$0xf]
  %v4313 = vld [vmem:[%s4] sm:$0x1]
  %v4315 = vlaneseq
  %v4316 = vshrl.u32 %v4315, 7
  %v4317 = vsub.s32 0, %v4316
  %v4318 = vrot.slane %v4313, %v4317
  %v4464 = vunpack.c.l.b16 %v4169
  %v4465 = vunpack.c.l.b16 %v4170
  %v4466 = vunpack.c.l.b16 %v4171
  %v4467 = vunpack.c.l.b16 %v4172
  %v4468 = vunpack.c.l.b16 %v4173
  %v4469 = vunpack.c.l.b16 %v4174
  %v4470 = vunpack.c.l.b16 %v4175
  %v4471 = vunpack.c.l.b16 %v4176
  %v4472 = vunpack.c.l.b16 %v4177
  %v4473 = vunpack.c.l.b16 %v4178
  %v4474 = vunpack.c.l.b16 %v4179
  %v4475 = vunpack.c.l.b16 %v4180
  %v4476 = vunpack.c.l.b16 %v4181
  %v4477 = vunpack.c.l.b16 %v4182
  %v4478 = vunpack.c.l.b16 %v4183
  %v4479 = vunpack.c.l.b16 %v4184
  %v4480 = vunpack.c.l.b16 %v4185
  %v4481 = vunpack.c.l.b16 %v4186
  %v4482 = vunpack.c.l.b16 %v4187
  %v4483 = vunpack.c.l.b16 %v4188
  %v4484 = vunpack.c.l.b16 %v4189
  %v4485 = vunpack.c.l.b16 %v4190
  %v4486 = vunpack.c.l.b16 %v4191
  %v4487 = vunpack.c.l.b16 %v4192
  %v4488 = vunpack.c.l.b16 %v4193
  %v4489 = vunpack.c.l.b16 %v4194
  %v4490 = vunpack.c.l.b16 %v4195
  %v4491 = vunpack.c.l.b16 %v4196
  %v4492 = vunpack.c.l.b16 %v4197
  %v4493 = vunpack.c.l.b16 %v4198
  %v4494 = vunpack.c.l.b16 %v4199
  %v4495 = vunpack.c.l.b16 %v4200
  %v4496 = vunpack.c.l.b16 %v4201
  %v4497 = vunpack.c.l.b16 %v4202
  %v4498 = vunpack.c.l.b16 %v4203
  %v4499 = vunpack.c.l.b16 %v4204
  %v4500 = vunpack.c.l.b16 %v4205
  %v4501 = vunpack.c.l.b16 %v4206
  %v4502 = vunpack.c.l.b16 %v4207
  %v4503 = vunpack.c.l.b16 %v4208
  %v4504 = vunpack.c.l.b16 %v4209
  %v4505 = vunpack.c.l.b16 %v4210
  %v4506 = vunpack.c.l.b16 %v4211
  %v4507 = vunpack.c.l.b16 %v4212
  %v4508 = vunpack.c.l.b16 %v4213
  %v4509 = vunpack.c.l.b16 %v4214
  %v4510 = vunpack.c.l.b16 %v4215
  %v4511 = vunpack.c.l.b16 %v4216
  %v4512 = vunpack.c.l.b16 %v4217
  %v4513 = vunpack.c.l.b16 %v4218
  %v4514 = vunpack.c.l.b16 %v4219
  %v4515 = vunpack.c.l.b16 %v4220
  %v4516 = vunpack.c.l.b16 %v4221
  %v4517 = vunpack.c.l.b16 %v4222
  %v4518 = vunpack.c.l.b16 %v4223
  %v4519 = vunpack.c.l.b16 %v4224
  %v4520 = vunpack.c.l.b16 %v4225
  %v4521 = vunpack.c.l.b16 %v4226
  %v4522 = vunpack.c.l.b16 %v4227
  %v4523 = vunpack.c.l.b16 %v4228
  %v4524 = vunpack.c.l.b16 %v4229
  %v4525 = vunpack.c.l.b16 %v4230
  %v4526 = vunpack.c.l.b16 %v4231
  %v4527 = vunpack.c.l.b16 %v4232
  %v4528 = vunpack.c.l.b16 %v4233
  %v4529 = vunpack.c.l.b16 %v4234
  %v4530 = vunpack.c.l.b16 %v4235
  %v4531 = vunpack.c.l.b16 %v4236
  %v4532 = vunpack.c.l.b16 %v4237
  %v4533 = vunpack.c.l.b16 %v4238
  %v4534 = vunpack.c.l.b16 %v4239
  %v4535 = vunpack.c.l.b16 %v4240
  %v4536 = vunpack.c.l.b16 %v4241
  %v4537 = vunpack.c.l.b16 %v4242
  %v4538 = vunpack.c.l.b16 %v4243
  %v4539 = vunpack.c.l.b16 %v4244
  %v4540 = vunpack.c.l.b16 %v4245
  %v4541 = vunpack.c.l.b16 %v4246
  %v4542 = vunpack.c.l.b16 %v4247
  %v4543 = vunpack.c.l.b16 %v4248
  %v4544 = vunpack.c.l.b16 %v4249
  %v4545 = vunpack.c.l.b16 %v4250
  %v4546 = vunpack.c.l.b16 %v4251
  %v4547 = vunpack.c.l.b16 %v4252
  %v4548 = vunpack.c.l.b16 %v4253
  %v4549 = vunpack.c.l.b16 %v4254
  %v4550 = vunpack.c.l.b16 %v4255
  %v4551 = vunpack.c.l.b16 %v4256
  %v4552 = vunpack.c.l.b16 %v4257
  %v4553 = vunpack.c.l.b16 %v4258
  %v4554 = vunpack.c.l.b16 %v4259
  %v4555 = vunpack.c.l.b16 %v4260
  %v4556 = vunpack.c.l.b16 %v4261
  %v4557 = vunpack.c.l.b16 %v4262
  %v4558 = vunpack.c.l.b16 %v4263
  %v4559 = vunpack.c.l.b16 %v4264
  %v4560 = vunpack.c.l.b16 %v4265
  %v4561 = vunpack.c.l.b16 %v4266
  %v4562 = vunpack.c.l.b16 %v4267
  %v4563 = vunpack.c.l.b16 %v4268
  %v4564 = vunpack.c.l.b16 %v4269
  %v4565 = vunpack.c.l.b16 %v4270
  %v4566 = vunpack.c.l.b16 %v4271
  %v4567 = vunpack.c.l.b16 %v4272
  %v4568 = vunpack.c.l.b16 %v4273
  %v4569 = vunpack.c.l.b16 %v4274
  %v4570 = vunpack.c.l.b16 %v4275
  %v4571 = vunpack.c.l.b16 %v4276
  %v4572 = vunpack.c.l.b16 %v4277
  %v4573 = vunpack.c.l.b16 %v4278
  %v4574 = vunpack.c.l.b16 %v4279
  %v4575 = vunpack.c.l.b16 %v4280
  %v4576 = vunpack.c.l.b16 %v4281
  %v4577 = vunpack.c.l.b16 %v4282
  %v4578 = vunpack.c.l.b16 %v4283
  %v4579 = vunpack.c.l.b16 %v4284
  %v4580 = vunpack.c.l.b16 %v4285
  %v4581 = vunpack.c.l.b16 %v4286
  %v4582 = vunpack.c.l.b16 %v4287
  %v4583 = vunpack.c.l.b16 %v4288
  %v4584 = vunpack.c.l.b16 %v4289
  %v4585 = vunpack.c.l.b16 %v4290
  %v4586 = vunpack.c.l.b16 %v4291
  %v4587 = vunpack.c.l.b16 %v4292
  %v4588 = vunpack.c.l.b16 %v4293
  %v4589 = vunpack.c.l.b16 %v4294
  %v4590 = vunpack.c.l.b16 %v4295
  %v4591 = vunpack.c.l.b16 %v4296
  %v4592 = vunpack.c.l.b16 %v4297
  %v4593 = vunpack.c.l.b16 %v4298
  %v4594 = vunpack.c.l.b16 %v4299
  %v4595 = vunpack.c.l.b16 %v4300
  %v4596 = vunpack.c.l.b16 %v4301
  %v4597 = vunpack.c.l.b16 %v4302
  %v4598 = vunpack.c.l.b16 %v4303
  %v4599 = vunpack.c.l.b16 %v4304
  %v4600 = vunpack.c.l.b16 %v4305
  %v4601 = vunpack.c.l.b16 %v4306
  %v4602 = vunpack.c.l.b16 %v4307
  %v4603 = vunpack.c.l.b16 %v4308
  %v4604 = vunpack.c.l.b16 %v4309
  %v4605 = vunpack.c.l.b16 %v4310
  %v4606 = vunpack.c.l.b16 %v4311
  %v4607 = vunpack.c.l.b16 %v4312
  %v4608 = vpack.c.b16 %v4465, %v4464
  %v4609 = vpack.c.b16 %v4467, %v4466
  %v4610 = vpack.c.b16 %v4469, %v4468
  %v4611 = vpack.c.b16 %v4471, %v4470
  %v4612 = vpack.c.b16 %v4473, %v4472
  %v4613 = vpack.c.b16 %v4475, %v4474
  %v4614 = vpack.c.b16 %v4477, %v4476
  %v4615 = vpack.c.b16 %v4479, %v4478
  %v4616 = vpack.c.b16 %v4481, %v4480
  %v4617 = vpack.c.b16 %v4483, %v4482
  %v4618 = vpack.c.b16 %v4485, %v4484
  %v4619 = vpack.c.b16 %v4487, %v4486
  %v4620 = vpack.c.b16 %v4489, %v4488
  %v4621 = vpack.c.b16 %v4491, %v4490
  %v4622 = vpack.c.b16 %v4493, %v4492
  %v4623 = vpack.c.b16 %v4495, %v4494
  %v4624 = vpack.c.b16 %v4497, %v4496
  %v4625 = vpack.c.b16 %v4499, %v4498
  %v4626 = vpack.c.b16 %v4501, %v4500
  %v4627 = vpack.c.b16 %v4503, %v4502
  %v4628 = vpack.c.b16 %v4505, %v4504
  %v4629 = vpack.c.b16 %v4507, %v4506
  %v4630 = vpack.c.b16 %v4509, %v4508
  %v4631 = vpack.c.b16 %v4511, %v4510
  %v4632 = vpack.c.b16 %v4513, %v4512
  %v4633 = vpack.c.b16 %v4515, %v4514
  %v4634 = vpack.c.b16 %v4517, %v4516
  %v4635 = vpack.c.b16 %v4519, %v4518
  %v4636 = vpack.c.b16 %v4521, %v4520
  %v4637 = vpack.c.b16 %v4523, %v4522
  %v4638 = vpack.c.b16 %v4525, %v4524
  %v4639 = vpack.c.b16 %v4527, %v4526
  %v4640 = vpack.c.b16 %v4529, %v4528
  %v4641 = vpack.c.b16 %v4531, %v4530
  %v4642 = vpack.c.b16 %v4533, %v4532
  %v4643 = vpack.c.b16 %v4535, %v4534
  %v4644 = vpack.c.b16 %v4537, %v4536
  %v4645 = vpack.c.b16 %v4539, %v4538
  %v4646 = vpack.c.b16 %v4541, %v4540
  %v4647 = vpack.c.b16 %v4543, %v4542
  %v4648 = vpack.c.b16 %v4545, %v4544
  %v4649 = vpack.c.b16 %v4547, %v4546
  %v4650 = vpack.c.b16 %v4549, %v4548
  %v4651 = vpack.c.b16 %v4551, %v4550
  %v4652 = vpack.c.b16 %v4553, %v4552
  %v4653 = vpack.c.b16 %v4555, %v4554
  %v4654 = vpack.c.b16 %v4557, %v4556
  %v4655 = vpack.c.b16 %v4559, %v4558
  %v4656 = vpack.c.b16 %v4561, %v4560
  %v4657 = vpack.c.b16 %v4563, %v4562
  %v4658 = vpack.c.b16 %v4565, %v4564
  %v4659 = vpack.c.b16 %v4567, %v4566
  %v4660 = vpack.c.b16 %v4569, %v4568
  %v4661 = vpack.c.b16 %v4571, %v4570
  %v4662 = vpack.c.b16 %v4573, %v4572
  %v4663 = vpack.c.b16 %v4575, %v4574
  %v4664 = vpack.c.b16 %v4577, %v4576
  %v4665 = vpack.c.b16 %v4579, %v4578
  %v4666 = vpack.c.b16 %v4581, %v4580
  %v4667 = vpack.c.b16 %v4583, %v4582
  %v4668 = vpack.c.b16 %v4585, %v4584
  %v4669 = vpack.c.b16 %v4587, %v4586
  %v4670 = vpack.c.b16 %v4589, %v4588
  %v4671 = vpack.c.b16 %v4591, %v4590
  %v4672 = vpack.c.b16 %v4593, %v4592
  %v4673 = vpack.c.b16 %v4595, %v4594
  %v4674 = vpack.c.b16 %v4597, %v4596
  %v4675 = vpack.c.b16 %v4599, %v4598
  %v4676 = vpack.c.b16 %v4601, %v4600
  %v4677 = vpack.c.b16 %v4603, %v4602
  %v4678 = vpack.c.b16 %v4605, %v4604
  %v4679 = vpack.c.b16 %v4607, %v4606
  %4752 = vmatprep.subr.bf16.mxu0 0
  %4753 = vmatpush1.bf16.msra.mxu0 %v4608
  %4754 = vmatprep.subr.bf16.mxu0 0
  %4755 = vmatpush1.bf16.msra.mxu0 %v4609
  %4756 = vmatprep.subr.bf16.mxu0 0
  %4757 = vmatpush1.bf16.msra.mxu0 %v4610
  %4758 = vmatprep.subr.bf16.mxu0 0
  %4759 = vmatpush1.bf16.msra.mxu0 %v4611
  %4760 = vmatprep.subr.bf16.mxu0 0
  %4761 = vmatpush1.bf16.msra.mxu0 %v4612
  %4762 = vmatprep.subr.bf16.mxu0 0
  %4763 = vmatpush1.bf16.msra.mxu0 %v4613
  %4764 = vmatprep.subr.bf16.mxu0 0
  %4765 = vmatpush1.bf16.msra.mxu0 %v4614
  %4766 = vmatprep.subr.bf16.mxu0 0
  %4767 = vmatpush1.bf16.msra.mxu0 %v4615
  %4768 = vmatprep.subr.bf16.mxu0 0
  %4769 = vmatpush1.bf16.msra.mxu0 %v4616
  %4770 = vmatprep.subr.bf16.mxu0 0
  %4771 = vmatpush1.bf16.msra.mxu0 %v4617
  %4772 = vmatprep.subr.bf16.mxu0 0
  %4773 = vmatpush1.bf16.msra.mxu0 %v4618
  %4774 = vmatprep.subr.bf16.mxu0 0
  %4775 = vmatpush1.bf16.msra.mxu0 %v4619
  %4776 = vmatprep.subr.bf16.mxu0 0
  %4777 = vmatpush1.bf16.msra.mxu0 %v4620
  %4778 = vmatprep.subr.bf16.mxu0 0
  %4779 = vmatpush1.bf16.msra.mxu0 %v4621
  %4780 = vmatprep.subr.bf16.mxu0 0
  %4781 = vmatpush1.bf16.msra.mxu0 %v4622
  %4782 = vmatprep.subr.bf16.mxu0 0
  %4783 = vmatpush1.bf16.msra.mxu0 %v4623
  %4784 = vmatprep.mubr.bf16.mxu0 %v4098
  %4785 = vmatmul.mubr.bf16.gmra.mrb[0].mxu0 %v4097
  %v4786 = vpop.f32.mrb[0].mxu0
  %v4787 = vadd.f32 %v4318, %v4786
  %v4788 = vpop.f32.mrb[0].mxu0
  %v4789 = vpop.f32.mrb[0].mxu0
  %v4790 = vadd.f32 %v4318, %v4789
  %v4791 = vpop.f32.mrb[0].mxu0
  %4792 = vmatprep.mubr.bf16.mxu0 %v4107
  %4793 = vmatmul.mubr.bf16.gmra.mrb[0].mxu0 %v4106
  %v4794 = vpop.f32.mrb[0].mxu0
  %v4795 = vadd.f32 %v4318, %v4794
  %v4796 = vpop.f32.mrb[0].mxu0
  %v4797 = vpop.f32.mrb[0].mxu0
  %v4798 = vadd.f32 %v4318, %v4797
  %v4799 = vpop.f32.mrb[0].mxu0
  %4800 = vmatprep.mubr.bf16.mxu0 %v4116
  %4801 = vmatmul.mubr.bf16.gmra.mrb[0].mxu0 %v4115
  %v4802 = vpop.f32.mrb[0].mxu0
  %v4803 = vadd.f32 %v4318, %v4802
  %v4804 = vpop.f32.mrb[0].mxu0
  %v4805 = vpop.f32.mrb[0].mxu0
  %v4806 = vadd.f32 %v4318, %v4805
  %v4807 = vpop.f32.mrb[0].mxu0
  %4808 = vmatprep.mubr.bf16.mxu0 %v4125
  %4809 = vmatmul.mubr.bf16.gmra.mrb[0].mxu0 %v4124
  %v4810 = vpop.f32.mrb[0].mxu0
  %v4811 = vadd.f32 %v4318, %v4810
  %v4812 = vpop.f32.mrb[0].mxu0
  %v4813 = vpop.f32.mrb[0].mxu0
  %v4814 = vadd.f32 %v4318, %v4813
  %v4815 = vpop.f32.mrb[0].mxu0
  %4816 = vmatprep.mubr.bf16.mxu0 %v4134
  %4817 = vmatmul.mubr.bf16.gmra.mrb[0].mxu0 %v4133
  %v4818 = vpop.f32.mrb[0].mxu0
  %v4819 = vadd.f32 %v4318, %v4818
  %v4820 = vpop.f32.mrb[0].mxu0
  %v4821 = vpop.f32.mrb[0].mxu0
  %v4822 = vadd.f32 %v4318, %v4821
  %v4823 = vpop.f32.mrb[0].mxu0
  %4824 = vmatprep.mubr.bf16.mxu0 %v4143
  %4825 = vmatmul.mubr.bf16.gmra.mrb[0].mxu0 %v4142
  %v4826 = vpop.f32.mrb[0].mxu0
  %v4827 = vadd.f32 %v4318, %v4826
  %v4828 = vpop.f32.mrb[0].mxu0
  %v4829 = vpop.f32.mrb[0].mxu0
  %v4830 = vadd.f32 %v4318, %v4829
  %v4831 = vpop.f32.mrb[0].mxu0
  %4832 = vmatprep.mubr.bf16.mxu0 %v4152
  %4833 = vmatmul.mubr.bf16.gmra.mrb[0].mxu0 %v4151
  %v4834 = vpop.f32.mrb[0].mxu0
  %v4835 = vadd.f32 %v4318, %v4834
  %v4836 = vpop.f32.mrb[0].mxu0
  %v4837 = vpop.f32.mrb[0].mxu0
  %v4838 = vadd.f32 %v4318, %v4837
  %v4839 = vpop.f32.mrb[0].mxu0
  %4840 = vmatprep.mubr.bf16.mxu0 %v4161
  %4841 = vmatmul.mubr.bf16.gmra.mrb[0].mxu0 %v4160
  %v4842 = vpop.f32.mrb[0].mxu0
  %v4843 = vadd.f32 %v4318, %v4842
  %v4844 = vpop.f32.mrb[0].mxu0
  %v4845 = vpop.f32.mrb[0].mxu0
  %v4846 = vadd.f32 %v4318, %v4845
  %v4847 = vpop.f32.mrb[0].mxu0
  %4848 = vdwg.mxu0
  %4849 = vmatprep.subr.bf16.mxu0 0
  %4850 = vmatpush1.bf16.msra.mxu0 %v4624
  %4851 = vmatprep.subr.bf16.mxu0 0
  %4852 = vmatpush1.bf16.msra.mxu0 %v4625
  %4853 = vmatprep.subr.bf16.mxu0 0
  %4854 = vmatpush1.bf16.msra.mxu0 %v4626
  %4855 = vmatprep.subr.bf16.mxu0 0
  %4856 = vmatpush1.bf16.msra.mxu0 %v4627
  %4857 = vmatprep.subr.bf16.mxu0 0
  %4858 = vmatpush1.bf16.msra.mxu0 %v4628
  %4859 = vmatprep.subr.bf16.mxu0 0
  %4860 = vmatpush1.bf16.msra.mxu0 %v4629
  %4861 = vmatprep.subr.bf16.mxu0 0
  %4862 = vmatpush1.bf16.msra.mxu0 %v4630
  %4863 = vmatprep.subr.bf16.mxu0 0
  %4864 = vmatpush1.bf16.msra.mxu0 %v4631
  %4865 = vmatprep.subr.bf16.mxu0 0
  %4866 = vmatpush1.bf16.msra.mxu0 %v4632
  %4867 = vmatprep.subr.bf16.mxu0 0
  %4868 = vmatpush1.bf16.msra.mxu0 %v4633
  %4869 = vmatprep.subr.bf16.mxu0 0
  %4870 = vmatpush1.bf16.msra.mxu0 %v4634
  %4871 = vmatprep.subr.bf16.mxu0 0
  %4872 = vmatpush1.bf16.msra.mxu0 %v4635
  %4873 = vmatprep.subr.bf16.mxu0 0
  %4874 = vmatpush1.bf16.msra.mxu0 %v4636
  %4875 = vmatprep.subr.bf16.mxu0 0
  %4876 = vmatpush1.bf16.msra.mxu0 %v4637
  %4877 = vmatprep.subr.bf16.mxu0 0
  %4878 = vmatpush1.bf16.msra.mxu0 %v4638
  %4879 = vmatprep.subr.bf16.mxu0 0
  %4880 = vmatpush1.bf16.msra.mxu0 %v4639
  %4881 = vmatprep.mubr.bf16.mxu0 %v4100
  %4882 = vmatmul.mubr.bf16.gmra.mrb[0].mxu0 %v4099
  %v4883 = vpop.f32.mrb[0].mxu0
  %v4884 = vadd.f32 %v4787, %v4883
  %v4885 = vpop.f32.mrb[0].mxu0
  %v4886 = vpop.f32.mrb[0].mxu0
  %v4887 = vadd.f32 %v4790, %v4886
  %v4888 = vpop.f32.mrb[0].mxu0
  %4889 = vmatprep.mubr.bf16.mxu0 %v4109
  %4890 = vmatmul.mubr.bf16.gmra.mrb[0].mxu0 %v4108
  %v4891 = vpop.f32.mrb[0].mxu0
  %v4892 = vadd.f32 %v4795, %v4891
  %v4893 = vpop.f32.mrb[0].mxu0
  %v4894 = vpop.f32.mrb[0].mxu0
  %v4895 = vadd.f32 %v4798, %v4894
  %v4896 = vpop.f32.mrb[0].mxu0
  %4897 = vmatprep.mubr.bf16.mxu0 %v4118
  %4898 = vmatmul.mubr.bf16.gmra.mrb[0].mxu0 %v4117
  %v4899 = vpop.f32.mrb[0].mxu0
  %v4900 = vadd.f32 %v4803, %v4899
  %v4901 = vpop.f32.mrb[0].mxu0
  %v4902 = vpop.f32.mrb[0].mxu0
  %v4903 = vadd.f32 %v4806, %v4902
  %v4904 = vpop.f32.mrb[0].mxu0
  %4905 = vmatprep.mubr.bf16.mxu0 %v4127
  %4906 = vmatmul.mubr.bf16.gmra.mrb[0].mxu0 %v4126
  %v4907 = vpop.f32.mrb[0].mxu0
  %v4908 = vadd.f32 %v4811, %v4907
  %v4909 = vpop.f32.mrb[0].mxu0
  %v4910 = vpop.f32.mrb[0].mxu0
  %v4911 = vadd.f32 %v4814, %v4910
  %v4912 = vpop.f32.mrb[0].mxu0
  %4913 = vmatprep.mubr.bf16.mxu0 %v4136
  %4914 = vmatmul.mubr.bf16.gmra.mrb[0].mxu0 %v4135
  %v4915 = vpop.f32.mrb[0].mxu0
  %v4916 = vadd.f32 %v4819, %v4915
  %v4917 = vpop.f32.mrb[0].mxu0
  %v4918 = vpop.f32.mrb[0].mxu0
  %v4919 = vadd.f32 %v4822, %v4918
  %v4920 = vpop.f32.mrb[0].mxu0
  %4921 = vmatprep.mubr.bf16.mxu0 %v4145
  %4922 = vmatmul.mubr.bf16.gmra.mrb[0].mxu0 %v4144
  %v4923 = vpop.f32.mrb[0].mxu0
  %v4924 = vadd.f32 %v4827, %v4923
  %v4925 = vpop.f32.mrb[0].mxu0
  %v4926 = vpop.f32.mrb[0].mxu0
  %v4927 = vadd.f32 %v4830, %v4926
  %v4928 = vpop.f32.mrb[0].mxu0
  %4929 = vmatprep.mubr.bf16.mxu0 %v4154
  %4930 = vmatmul.mubr.bf16.gmra.mrb[0].mxu0 %v4153
  %v4931 = vpop.f32.mrb[0].mxu0
  %v4932 = vadd.f32 %v4835, %v4931
  %v4933 = vpop.f32.mrb[0].mxu0
  %v4934 = vpop.f32.mrb[0].mxu0
  %v4935 = vadd.f32 %v4838, %v4934
  %v4936 = vpop.f32.mrb[0].mxu0
  %4937 = vmatprep.mubr.bf16.mxu0 %v4163
  %4938 = vmatmul.mubr.bf16.gmra.mrb[0].mxu0 %v4162
  %v4939 = vpop.f32.mrb[0].mxu0
  %v4940 = vadd.f32 %v4843, %v4939
  %v4941 = vpop.f32.mrb[0].mxu0
  %v4942 = vpop.f32.mrb[0].mxu0
  %v4943 = vadd.f32 %v4846, %v4942
  %v4944 = vpop.f32.mrb[0].mxu0
  %4945 = vdwg.mxu0
  %4946 = vmatprep.subr.bf16.mxu0 0
  %4947 = vmatpush1.bf16.msra.mxu0 %v4640
  %4948 = vmatprep.subr.bf16.mxu0 0
  %4949 = vmatpush1.bf16.msra.mxu0 %v4641
  %4950 = vmatprep.subr.bf16.mxu0 0
  %4951 = vmatpush1.bf16.msra.mxu0 %v4642
  %4952 = vmatprep.subr.bf16.mxu0 0
  %4953 = vmatpush1.bf16.msra.mxu0 %v4643
  %4954 = vmatprep.subr.bf16.mxu0 0
  %4955 = vmatpush1.bf16.msra.mxu0 %v4644
  %4956 = vmatprep.subr.bf16.mxu0 0
  %4957 = vmatpush1.bf16.msra.mxu0 %v4645
  %4958 = vmatprep.subr.bf16.mxu0 0
  %4959 = vmatpush1.bf16.msra.mxu0 %v4646
  %4960 = vmatprep.subr.bf16.mxu0 0
  %4961 = vmatpush1.bf16.msra.mxu0 %v4647
  %4962 = vmatprep.subr.bf16.mxu0 0
  %4963 = vmatpush1.bf16.msra.mxu0 %v4648
  %4964 = vmatprep.subr.bf16.mxu0 0
  %4965 = vmatpush1.bf16.msra.mxu0 %v4649
  %4966 = vmatprep.subr.bf16.mxu0 0
  %4967 = vmatpush1.bf16.msra.mxu0 %v4650
  %4968 = vmatprep.subr.bf16.mxu0 0
  %4969 = vmatpush1.bf16.msra.mxu0 %v4651
  %4970 = vmatprep.subr.bf16.mxu0 0
  %4971 = vmatpush1.bf16.msra.mxu0 %v4652
  %4972 = vmatprep.subr.bf16.mxu0 0
  %4973 = vmatpush1.bf16.msra.mxu0 %v4653
  %4974 = vmatprep.subr.bf16.mxu0 0
  %4975 = vmatpush1.bf16.msra.mxu0 %v4654
  %4976 = vmatprep.subr.bf16.mxu0 0
  %4977 = vmatpush1.bf16.msra.mxu0 %v4655
  %4978 = vmatprep.mubr.bf16.mxu0 %v4102
  %4979 = vmatmul.mubr.bf16.gmra.mrb[0].mxu0 %v4101
  %v4980 = vpop.f32.mrb[0].mxu0
  %v4981 = vadd.f32 %v4884, %v4980
  %v4982 = vpop.f32.mrb[0].mxu0
  %v4983 = vpop.f32.mrb[0].mxu0
  %v4984 = vadd.f32 %v4887, %v4983
  %v4985 = vpop.f32.mrb[0].mxu0
  %4986 = vmatprep.mubr.bf16.mxu0 %v4111
  %4987 = vmatmul.mubr.bf16.gmra.mrb[0].mxu0 %v4110
  %v4988 = vpop.f32.mrb[0].mxu0
  %v4989 = vadd.f32 %v4892, %v4988
  %v4990 = vpop.f32.mrb[0].mxu0
  %v4991 = vpop.f32.mrb[0].mxu0
  %v4992 = vadd.f32 %v4895, %v4991
  %v4993 = vpop.f32.mrb[0].mxu0
  %4994 = vmatprep.mubr.bf16.mxu0 %v4120
  %4995 = vmatmul.mubr.bf16.gmra.mrb[0].mxu0 %v4119
  %v4996 = vpop.f32.mrb[0].mxu0
  %v4997 = vadd.f32 %v4900, %v4996
  %v4998 = vpop.f32.mrb[0].mxu0
  %v4999 = vpop.f32.mrb[0].mxu0
  %v5000 = vadd.f32 %v4903, %v4999
  %v5001 = vpop.f32.mrb[0].mxu0
  %5002 = vmatprep.mubr.bf16.mxu0 %v4129
  %5003 = vmatmul.mubr.bf16.gmra.mrb[0].mxu0 %v4128
  %v5004 = vpop.f32.mrb[0].mxu0
  %v5005 = vadd.f32 %v4908, %v5004
  %v5006 = vpop.f32.mrb[0].mxu0
  %v5007 = vpop.f32.mrb[0].mxu0
  %v5008 = vadd.f32 %v4911, %v5007
  %v5009 = vpop.f32.mrb[0].mxu0
  %5010 = vmatprep.mubr.bf16.mxu0 %v4138
  %5011 = vmatmul.mubr.bf16.gmra.mrb[0].mxu0 %v4137
  %v5012 = vpop.f32.mrb[0].mxu0
  %v5013 = vadd.f32 %v4916, %v5012
  %v5014 = vpop.f32.mrb[0].mxu0
  %v5015 = vpop.f32.mrb[0].mxu0
  %v5016 = vadd.f32 %v4919, %v5015
  %v5017 = vpop.f32.mrb[0].mxu0
  %5018 = vmatprep.mubr.bf16.mxu0 %v4147
  %5019 = vmatmul.mubr.bf16.gmra.mrb[0].mxu0 %v4146
  %v5020 = vpop.f32.mrb[0].mxu0
  %v5021 = vadd.f32 %v4924, %v5020
  %v5022 = vpop.f32.mrb[0].mxu0
  %v5023 = vpop.f32.mrb[0].mxu0
  %v5024 = vadd.f32 %v4927, %v5023
  %v5025 = vpop.f32.mrb[0].mxu0
  %5026 = vmatprep.mubr.bf16.mxu0 %v4156
  %5027 = vmatmul.mubr.bf16.gmra.mrb[0].mxu0 %v4155
  %v5028 = vpop.f32.mrb[0].mxu0
  %v5029 = vadd.f32 %v4932, %v5028
  %v5030 = vpop.f32.mrb[0].mxu0
  %v5031 = vpop.f32.mrb[0].mxu0
  %v5032 = vadd.f32 %v4935, %v5031
  %v5033 = vpop.f32.mrb[0].mxu0
  %5034 = vmatprep.mubr.bf16.mxu0 %v4165
  %5035 = vmatmul.mubr.bf16.gmra.mrb[0].mxu0 %v4164
  %v5036 = vpop.f32.mrb[0].mxu0
  %v5037 = vadd.f32 %v4940, %v5036
  %v5038 = vpop.f32.mrb[0].mxu0
  %v5039 = vpop.f32.mrb[0].mxu0
  %v5040 = vadd.f32 %v4943, %v5039
  %v5041 = vpop.f32.mrb[0].mxu0
  %5042 = vdwg.mxu0
  %5043 = vmatprep.subr.bf16.mxu0 0
  %5044 = vmatpush1.bf16.msra.mxu0 %v4656
  %5045 = vmatprep.subr.bf16.mxu0 0
  %5046 = vmatpush1.bf16.msra.mxu0 %v4657
  %5047 = vmatprep.subr.bf16.mxu0 0
  %5048 = vmatpush1.bf16.msra.mxu0 %v4658
  %5049 = vmatprep.subr.bf16.mxu0 0
  %5050 = vmatpush1.bf16.msra.mxu0 %v4659
  %5051 = vmatprep.subr.bf16.mxu0 0
  %5052 = vmatpush1.bf16.msra.mxu0 %v4660
  %5053 = vmatprep.subr.bf16.mxu0 0
  %5054 = vmatpush1.bf16.msra.mxu0 %v4661
  %5055 = vmatprep.subr.bf16.mxu0 0
  %5056 = vmatpush1.bf16.msra.mxu0 %v4662
  %5057 = vmatprep.subr.bf16.mxu0 0
  %5058 = vmatpush1.bf16.msra.mxu0 %v4663
  %5059 = vmatprep.subr.bf16.mxu0 0
  %5060 = vmatpush1.bf16.msra.mxu0 %v4664
  %5061 = vmatprep.subr.bf16.mxu0 0
  %5062 = vmatpush1.bf16.msra.mxu0 %v4665
  %5063 = vmatprep.subr.bf16.mxu0 0
  %5064 = vmatpush1.bf16.msra.mxu0 %v4666
  %5065 = vmatprep.subr.bf16.mxu0 0
  %5066 = vmatpush1.bf16.msra.mxu0 %v4667
  %5067 = vmatprep.subr.bf16.mxu0 0
  %5068 = vmatpush1.bf16.msra.mxu0 %v4668
  %5069 = vmatprep.subr.bf16.mxu0 0
  %5070 = vmatpush1.bf16.msra.mxu0 %v4669
  %5071 = vmatprep.subr.bf16.mxu0 0
  %5072 = vmatpush1.bf16.msra.mxu0 %v4670
  %5073 = vmatprep.subr.bf16.mxu0 0
  %5074 = vmatpush1.bf16.msra.mxu0 %v4671
  %5075 = vmatprep.mubr.bf16.mxu0 %v4104
  %5076 = vmatmul.mubr.bf16.gmra.mrb[0].mxu0 %v4103
  %v5077 = vpop.f32.mrb[0].mxu0
  %v5078 = vadd.f32 %v4981, %v5077
  %v5079 = vpop.f32.mrb[0].mxu0
  %v5080 = vpop.f32.mrb[0].mxu0
  %v5081 = vadd.f32 %v4984, %v5080
  %v5082 = vpop.f32.mrb[0].mxu0
  %5083 = vmatprep.mubr.bf16.mxu0 %v4113
  %5084 = vmatmul.mubr.bf16.gmra.mrb[0].mxu0 %v4112
  %v5085 = vpop.f32.mrb[0].mxu0
  %v5086 = vadd.f32 %v4989, %v5085
  %v5087 = vpop.f32.mrb[0].mxu0
  %v5088 = vpop.f32.mrb[0].mxu0
  %v5089 = vadd.f32 %v4992, %v5088
  %v5090 = vpop.f32.mrb[0].mxu0
  %5091 = vmatprep.mubr.bf16.mxu0 %v4122
  %5092 = vmatmul.mubr.bf16.gmra.mrb[0].mxu0 %v4121
  %v5093 = vpop.f32.mrb[0].mxu0
  %v5094 = vadd.f32 %v4997, %v5093
  %v5095 = vpop.f32.mrb[0].mxu0
  %v5096 = vpop.f32.mrb[0].mxu0
  %v5097 = vadd.f32 %v5000, %v5096
  %v5098 = vpop.f32.mrb[0].mxu0
  %5099 = vmatprep.mubr.bf16.mxu0 %v4131
  %5100 = vmatmul.mubr.bf16.gmra.mrb[0].mxu0 %v4130
  %v5101 = vpop.f32.mrb[0].mxu0
  %v5102 = vadd.f32 %v5005, %v5101
  %v5103 = vpop.f32.mrb[0].mxu0
  %v5104 = vpop.f32.mrb[0].mxu0
  %v5105 = vadd.f32 %v5008, %v5104
  %v5106 = vpop.f32.mrb[0].mxu0
  %5107 = vmatprep.mubr.bf16.mxu0 %v4140
  %5108 = vmatmul.mubr.bf16.gmra.mrb[0].mxu0 %v4139
  %v5109 = vpop.f32.mrb[0].mxu0
  %v5110 = vadd.f32 %v5013, %v5109
  %v5111 = vpop.f32.mrb[0].mxu0
  %v5112 = vpop.f32.mrb[0].mxu0
  %v5113 = vadd.f32 %v5016, %v5112
  %v5114 = vpop.f32.mrb[0].mxu0
  %5115 = vmatprep.mubr.bf16.mxu0 %v4149
  %5116 = vmatmul.mubr.bf16.gmra.mrb[0].mxu0 %v4148
  %v5117 = vpop.f32.mrb[0].mxu0
  %v5118 = vadd.f32 %v5021, %v5117
  %v5119 = vpop.f32.mrb[0].mxu0
  %v5120 = vpop.f32.mrb[0].mxu0
  %v5121 = vadd.f32 %v5024, %v5120
  %v5122 = vpop.f32.mrb[0].mxu0
  %5123 = vmatprep.mubr.bf16.mxu0 %v4158
  %5124 = vmatmul.mubr.bf16.gmra.mrb[0].mxu0 %v4157
  %v5125 = vpop.f32.mrb[0].mxu0
  %v5126 = vadd.f32 %v5029, %v5125
  %v5127 = vpop.f32.mrb[0].mxu0
  %v5128 = vpop.f32.mrb[0].mxu0
  %v5129 = vadd.f32 %v5032, %v5128
  %v5130 = vpop.f32.mrb[0].mxu0
  %5131 = vmatprep.mubr.bf16.mxu0 %v4167
  %5132 = vmatmul.mubr.bf16.gmra.mrb[0].mxu0 %v4166
  %v5133 = vpop.f32.mrb[0].mxu0
  %v5134 = vadd.f32 %v5037, %v5133
  %v5135 = vpop.f32.mrb[0].mxu0
  %v5136 = vpop.f32.mrb[0].mxu0
  %v5137 = vadd.f32 %v5040, %v5136
  %v5138 = vpop.f32.mrb[0].mxu0
  %5139 = vdwg.mxu0
  %5140 = vmatprep.subr.bf16.mxu0 0
  %5141 = vmatpush1.bf16.msra.mxu0 %v4672
  %5142 = vmatprep.subr.bf16.mxu0 0
  %5143 = vmatpush1.bf16.msra.mxu0 %v4673
  %5144 = vmatprep.subr.bf16.mxu0 0
  %5145 = vmatpush1.bf16.msra.mxu0 %v4674
  %5146 = vmatprep.subr.bf16.mxu0 0
  %5147 = vmatpush1.bf16.msra.mxu0 %v4675
  %5148 = vmatprep.subr.bf16.mxu0 0
  %5149 = vmatpush1.bf16.msra.mxu0 %v4676
  %5150 = vmatprep.subr.bf16.mxu0 0
  %5151 = vmatpush1.bf16.msra.mxu0 %v4677
  %5152 = vmatprep.subr.bf16.mxu0 0
  %5153 = vmatpush1.bf16.msra.mxu0 %v4678
  %5154 = vmatprep.subr.bf16.mxu0 0
  %5155 = vmatpush1.bf16.msra.mxu0 %v4679
  %5156 = vmatprep.subr.bf16.mxu0 0
  %5157 = vmatpush1.bf16.msra.mxu0 0
  %5158 = vmatprep.subr.bf16.mxu0 0
  %5159 = vmatpush1.bf16.msra.mxu0 0
  %5160 = vmatprep.subr.bf16.mxu0 0
  %5161 = vmatpush1.bf16.msra.mxu0 0
  %5162 = vmatprep.subr.bf16.mxu0 0
  %5163 = vmatpush1.bf16.msra.mxu0 0
  %5164 = vmatprep.subr.bf16.mxu0 0
  %5165 = vmatpush1.bf16.msra.mxu0 0
  %5166 = vmatprep.subr.bf16.mxu0 0
  %5167 = vmatpush1.bf16.msra.mxu0 0
  %5168 = vmatprep.subr.bf16.mxu0 0
  %5169 = vmatpush1.bf16.msra.mxu0 0
  %5170 = vmatprep.subr.bf16.mxu0 0
  %5171 = vmatpush1.bf16.msra.mxu0 0
  %5172 = vmatprep.mubr.bf16.mxu0 0
  %5173 = vmatmul.mubr.bf16.gmra.mrb[0].mxu0 %v4105
  %v5174 = vpop.f32.mrb[0].mxu0
  %v5175 = vadd.f32 %v5078, %v5174
  %v5176 = vpop.f32.mrb[0].mxu0
  %v5177 = vpop.f32.mrb[0].mxu0
  %v5178 = vadd.f32 %v5081, %v5177
  %v5179 = vpop.f32.mrb[0].mxu0
  %5180 = vmatprep.mubr.bf16.mxu0 0
  %5181 = vmatmul.mubr.bf16.gmra.mrb[0].mxu0 %v4114
  %v5182 = vpop.f32.mrb[0].mxu0
  %v5183 = vadd.f32 %v5086, %v5182
  %v5184 = vpop.f32.mrb[0].mxu0
  %v5185 = vpop.f32.mrb[0].mxu0
  %v5186 = vadd.f32 %v5089, %v5185
  %v5187 = vpop.f32.mrb[0].mxu0
  %5188 = vmatprep.mubr.bf16.mxu0 0
  %5189 = vmatmul.mubr.bf16.gmra.mrb[0].mxu0 %v4123
  %v5190 = vpop.f32.mrb[0].mxu0
  %v5191 = vadd.f32 %v5094, %v5190
  %v5192 = vpop.f32.mrb[0].mxu0
  %v5193 = vpop.f32.mrb[0].mxu0
  %v5194 = vadd.f32 %v5097, %v5193
  %v5195 = vpop.f32.mrb[0].mxu0
  %5196 = vmatprep.mubr.bf16.mxu0 0
  %5197 = vmatmul.mubr.bf16.gmra.mrb[0].mxu0 %v4132
  %v5198 = vpop.f32.mrb[0].mxu0
  %v5199 = vadd.f32 %v5102, %v5198
  %v5200 = vpop.f32.mrb[0].mxu0
  %v5201 = vpop.f32.mrb[0].mxu0
  %v5202 = vadd.f32 %v5105, %v5201
  %v5203 = vpop.f32.mrb[0].mxu0
  %5204 = vmatprep.mubr.bf16.mxu0 0
  %5205 = vmatmul.mubr.bf16.gmra.mrb[0].mxu0 %v4141
  %v5206 = vpop.f32.mrb[0].mxu0
  %v5207 = vadd.f32 %v5110, %v5206
  %v5208 = vpop.f32.mrb[0].mxu0
  %v5209 = vpop.f32.mrb[0].mxu0
  %v5210 = vadd.f32 %v5113, %v5209
  %v5211 = vpop.f32.mrb[0].mxu0
  %5212 = vmatprep.mubr.bf16.mxu0 0
  %5213 = vmatmul.mubr.bf16.gmra.mrb[0].mxu0 %v4150
  %v5214 = vpop.f32.mrb[0].mxu0
  %v5215 = vadd.f32 %v5118, %v5214
  %v5216 = vpop.f32.mrb[0].mxu0
  %v5217 = vpop.f32.mrb[0].mxu0
  %v5218 = vadd.f32 %v5121, %v5217
  %v5219 = vpop.f32.mrb[0].mxu0
  %5220 = vmatprep.mubr.bf16.mxu0 0
  %5221 = vmatmul.mubr.bf16.gmra.mrb[0].mxu0 %v4159
  %v5222 = vpop.f32.mrb[0].mxu0
  %v5223 = vadd.f32 %v5126, %v5222
  %v5224 = vpop.f32.mrb[0].mxu0
  %v5225 = vpop.f32.mrb[0].mxu0
  %v5226 = vadd.f32 %v5129, %v5225
  %v5227 = vpop.f32.mrb[0].mxu0
  %5228 = vmatprep.mubr.bf16.mxu0 0
  %5229 = vmatmul.mubr.bf16.gmra.mrb[0].mxu0 %v4168
  %v5230 = vpop.f32.mrb[0].mxu0
  %v5231 = vadd.f32 %v5134, %v5230
  %v5232 = vpop.f32.mrb[0].mxu0
  %v5233 = vpop.f32.mrb[0].mxu0
  %v5234 = vadd.f32 %v5137, %v5233
  %v5235 = vpop.f32.mrb[0].mxu0
  %5236 = vdwg.mxu0
  %v5237 = vmax.f32 %v5175, 0.0
  %v5238 = vmax.f32 %v5178, 0.0
  %v5239 = vmax.f32 %v5183, 0.0
  %v5240 = vmax.f32 %v5186, 0.0
  %v5241 = vmax.f32 %v5191, 0.0
  %v5242 = vmax.f32 %v5194, 0.0
  %v5243 = vmax.f32 %v5199, 0.0
  %v5244 = vmax.f32 %v5202, 0.0
  %v5245 = vmax.f32 %v5207, 0.0
  %v5246 = vmax.f32 %v5210, 0.0
  %v5247 = vmax.f32 %v5215, 0.0
  %v5248 = vmax.f32 %v5218, 0.0
  %v5249 = vmax.f32 %v5223, 0.0
  %v5250 = vmax.f32 %v5226, 0.0
  %v5251 = vmax.f32 %v5231, 0.0
  %v5252 = vmax.f32 %v5234, 0.0
  %v5253 = vpack.c.bf16 %v5238, %v5237
  %v5254 = vpack.c.bf16 %v5240, %v5239
  %v5255 = vpack.c.bf16 %v5242, %v5241
  %v5256 = vpack.c.bf16 %v5244, %v5243
  %v5257 = vpack.c.bf16 %v5246, %v5245
  %v5258 = vpack.c.bf16 %v5248, %v5247
  %v5259 = vpack.c.bf16 %v5250, %v5249
  %v5260 = vpack.c.bf16 %v5252, %v5251
  %v5261 = vld [vmem:[%s7] sm:$0xff]
  %v5262 = vld [vmem:[%s7 + $0x8] sm:$0xff]
  %v5263 = vld [vmem:[%s7 + $0x10] sm:$0xff]
  %v5264 = vpack.c.bf16 %v5262, %v5261
  %v5265 = vpack.c.bf16 %v5263, %v5263
  %5266 = vmatprep.subr.bf16.mxu0 0
  %5267 = vmatpush1.bf16.msra.mxu0 %v5253
  %5268 = vmatprep.subr.bf16.mxu0 0
  %5269 = vmatpush1.bf16.msra.mxu0 %v5254
  %5270 = vmatprep.subr.bf16.mxu0 0
  %5271 = vmatpush1.bf16.msra.mxu0 %v5255
  %5272 = vmatprep.subr.bf16.mxu0 0
  %5273 = vmatpush1.bf16.msra.mxu0 %v5256
  %5274 = vmatprep.subr.bf16.mxu0 0
  %5275 = vmatpush1.bf16.msra.mxu0 %v5257
  %5276 = vmatprep.subr.bf16.mxu0 0
  %5277 = vmatpush1.bf16.msra.mxu0 %v5258
  %5278 = vmatprep.subr.bf16.mxu0 0
  %5279 = vmatpush1.bf16.msra.mxu0 %v5259
  %5280 = vmatprep.subr.bf16.mxu0 0
  %5281 = vmatpush1.bf16.msra.mxu0 %v5260
  %5282 = vmatprep.subr.bf16.mxu0 0
  %5283 = vmatpush1.bf16.msra.mxu0 0
  %5284 = vmatprep.subr.bf16.mxu0 0
  %5285 = vmatpush1.bf16.msra.mxu0 0
  %5286 = vmatprep.subr.bf16.mxu0 0
  %5287 = vmatpush1.bf16.msra.mxu0 0
  %5288 = vmatprep.subr.bf16.mxu0 0
  %5289 = vmatpush1.bf16.msra.mxu0 0
  %5290 = vmatprep.subr.bf16.mxu0 0
  %5291 = vmatpush1.bf16.msra.mxu0 0
  %5292 = vmatprep.subr.bf16.mxu0 0
  %5293 = vmatpush1.bf16.msra.mxu0 0
  %5294 = vmatprep.subr.bf16.mxu0 0
  %5295 = vmatpush1.bf16.msra.mxu0 0
  %5296 = vmatprep.subr.bf16.mxu0 0
  %5297 = vmatpush1.bf16.msra.mxu0 0
  %5298 = vmatprep.mubr.bf16.mxu0 0
  %5299 = vmatmul.mubr.bf16.gmra.mrb[0].mxu0 %v5264
  %v5300 = vpop.f32.mrb[0].mxu0
  %v5301 = vadd.f32 0.0, %v5300
  %v5302 = vpop.f32.mrb[0].mxu0
  %v5303 = vpop.f32.mrb[0].mxu0
  %v5304 = vadd.f32 0.0, %v5303
  %v5305 = vpop.f32.mrb[0].mxu0
  %5306 = vmatprep.mubr.bf16.mxu0 0
  %5307 = vmatmul.mubr.bf16.gmra.mrb[0].mxu0 %v5265
  %v5308 = vpop.f32.mrb[0].mxu0
  %v5309 = vadd.f32 0.0, %v5308
  %v5310 = vpop.f32.mrb[0].mxu0
  %v5311 = vpop.f32.mrb[0].mxu0
  %v5312 = vpop.f32.mrb[0].mxu0
  %5313 = vdwg.mxu0
  %s5314 = scalar_lea.vmem %s7, 24
  %v5315 = vld [vmem:[%s5314] sm:$0xff]
  %v5316 = vld [vmem:[%s5314 + $0x8] sm:$0xff]
  %v5317 = vld [vmem:[%s5314 + $0x10] sm:$0xff]
  %v5318 = vpack.c.bf16 %v5316, %v5315
  %v5319 = vpack.c.bf16 %v5317, %v5317
  %5320 = vmatprep.subr.bf16.mxu0 0
  %5321 = vmatpush1.bf16.msra.mxu0 %v5253
  %5322 = vmatprep.subr.bf16.mxu0 0
  %5323 = vmatpush1.bf16.msra.mxu0 %v5254
  %5324 = vmatprep.subr.bf16.mxu0 0
  %5325 = vmatpush1.bf16.msra.mxu0 %v5255
  %5326 = vmatprep.subr.bf16.mxu0 0
  %5327 = vmatpush1.bf16.msra.mxu0 %v5256
  %5328 = vmatprep.subr.bf16.mxu0 0
  %5329 = vmatpush1.bf16.msra.mxu0 %v5257
  %5330 = vmatprep.subr.bf16.mxu0 0
  %5331 = vmatpush1.bf16.msra.mxu0 %v5258
  %5332 = vmatprep.subr.bf16.mxu0 0
  %5333 = vmatpush1.bf16.msra.mxu0 %v5259
  %5334 = vmatprep.subr.bf16.mxu0 0
  %5335 = vmatpush1.bf16.msra.mxu0 %v5260
  %5336 = vmatprep.subr.bf16.mxu0 0
  %5337 = vmatpush1.bf16.msra.mxu0 0
  %5338 = vmatprep.subr.bf16.mxu0 0
  %5339 = vmatpush1.bf16.msra.mxu0 0
  %5340 = vmatprep.subr.bf16.mxu0 0
  %5341 = vmatpush1.bf16.msra.mxu0 0
  %5342 = vmatprep.subr.bf16.mxu0 0
  %5343 = vmatpush1.bf16.msra.mxu0 0
  %5344 = vmatprep.subr.bf16.mxu0 0
  %5345 = vmatpush1.bf16.msra.mxu0 0
  %5346 = vmatprep.subr.bf16.mxu0 0
  %5347 = vmatpush1.bf16.msra.mxu0 0
  %5348 = vmatprep.subr.bf16.mxu0 0
  %5349 = vmatpush1.bf16.msra.mxu0 0
  %5350 = vmatprep.subr.bf16.mxu0 0
  %5351 = vmatpush1.bf16.msra.mxu0 0
  %5352 = vmatprep.mubr.bf16.mxu0 0
  %5353 = vmatmul.mubr.bf16.gmra.mrb[0].mxu0 %v5318
  %v5354 = vpop.f32.mrb[0].mxu0
  %v5355 = vadd.f32 0.0, %v5354
  %v5356 = vpop.f32.mrb[0].mxu0
  %v5357 = vpop.f32.mrb[0].mxu0
  %v5358 = vadd.f32 0.0, %v5357
  %v5359 = vpop.f32.mrb[0].mxu0
  %5360 = vmatprep.mubr.bf16.mxu0 0
  %5361 = vmatmul.mubr.bf16.gmra.mrb[0].mxu0 %v5319
  %v5362 = vpop.f32.mrb[0].mxu0
  %v5363 = vadd.f32 0.0, %v5362
  %v5364 = vpop.f32.mrb[0].mxu0
  %v5365 = vpop.f32.mrb[0].mxu0
  %v5366 = vpop.f32.mrb[0].mxu0
  %5367 = vdwg.mxu0
  %v5368 = vmax.f32 %v5301, %v5355
  %v5369 = vmax.f32 %v5304, %v5358
  %v5370 = vmax.f32 %v5309, %v5363
  %s5371 = scalar_lea.vmem %s7, 48
  %v5372 = vld [vmem:[%s5371] sm:$0xff]
  %v5373 = vld [vmem:[%s5371 + $0x8] sm:$0xff]
  %v5374 = vld [vmem:[%s5371 + $0x10] sm:$0xff]
  %v5375 = vpack.c.bf16 %v5373, %v5372
  %v5376 = vpack.c.bf16 %v5374, %v5374
  %5377 = vmatprep.subr.bf16.mxu0 0
  %5378 = vmatpush1.bf16.msra.mxu0 %v5253
  %5379 = vmatprep.subr.bf16.mxu0 0
  %5380 = vmatpush1.bf16.msra.mxu0 %v5254
  %5381 = vmatprep.subr.bf16.mxu0 0
  %5382 = vmatpush1.bf16.msra.mxu0 %v5255
  %5383 = vmatprep.subr.bf16.mxu0 0
  %5384 = vmatpush1.bf16.msra.mxu0 %v5256
  %5385 = vmatprep.subr.bf16.mxu0 0
  %5386 = vmatpush1.bf16.msra.mxu0 %v5257
  %5387 = vmatprep.subr.bf16.mxu0 0
  %5388 = vmatpush1.bf16.msra.mxu0 %v5258
  %5389 = vmatprep.subr.bf16.mxu0 0
  %5390 = vmatpush1.bf16.msra.mxu0 %v5259
  %5391 = vmatprep.subr.bf16.mxu0 0
  %5392 = vmatpush1.bf16.msra.mxu0 %v5260
  %5393 = vmatprep.subr.bf16.mxu0 0
  %5394 = vmatpush1.bf16.msra.mxu0 0
  %5395 = vmatprep.subr.bf16.mxu0 0
  %5396 = vmatpush1.bf16.msra.mxu0 0
  %5397 = vmatprep.subr.bf16.mxu0 0
  %5398 = vmatpush1.bf16.msra.mxu0 0
  %5399 = vmatprep.subr.bf16.mxu0 0
  %5400 = vmatpush1.bf16.msra.mxu0 0
  %5401 = vmatprep.subr.bf16.mxu0 0
  %5402 = vmatpush1.bf16.msra.mxu0 0
  %5403 = vmatprep.subr.bf16.mxu0 0
  %5404 = vmatpush1.bf16.msra.mxu0 0
  %5405 = vmatprep.subr.bf16.mxu0 0
  %5406 = vmatpush1.bf16.msra.mxu0 0
  %5407 = vmatprep.subr.bf16.mxu0 0
  %5408 = vmatpush1.bf16.msra.mxu0 0
  %5409 = vmatprep.mubr.bf16.mxu0 0
  %5410 = vmatmul.mubr.bf16.gmra.mrb[0].mxu0 %v5375
  %v5411 = vpop.f32.mrb[0].mxu0
  %v5412 = vadd.f32 0.0, %v5411
  %v5413 = vpop.f32.mrb[0].mxu0
  %v5414 = vpop.f32.mrb[0].mxu0
  %v5415 = vadd.f32 0.0, %v5414
  %v5416 = vpop.f32.mrb[0].mxu0
  %5417 = vmatprep.mubr.bf16.mxu0 0
  %5418 = vmatmul.mubr.bf16.gmra.mrb[0].mxu0 %v5376
  %v5419 = vpop.f32.mrb[0].mxu0
  %v5420 = vadd.f32 0.0, %v5419
  %v5421 = vpop.f32.mrb[0].mxu0
  %v5422 = vpop.f32.mrb[0].mxu0
  %v5423 = vpop.f32.mrb[0].mxu0
  %5424 = vdwg.mxu0
  %v5425 = vmax.f32 %v5368, %v5412
  %v5426 = vmax.f32 %v5369, %v5415
  %v5427 = vmax.f32 %v5370, %v5420
  %s5428 = scalar_lea.vmem %s7, 72
  %v5429 = vld [vmem:[%s5428] sm:$0xff]
  %v5430 = vld [vmem:[%s5428 + $0x8] sm:$0xff]
  %v5431 = vld [vmem:[%s5428 + $0x10] sm:$0xff]
  %v5432 = vpack.c.bf16 %v5430, %v5429
  %v5433 = vpack.c.bf16 %v5431, %v5431
  %5434 = vmatprep.subr.bf16.mxu0 0
  %5435 = vmatpush1.bf16.msra.mxu0 %v5253
  %5436 = vmatprep.subr.bf16.mxu0 0
  %5437 = vmatpush1.bf16.msra.mxu0 %v5254
  %5438 = vmatprep.subr.bf16.mxu0 0
  %5439 = vmatpush1.bf16.msra.mxu0 %v5255
  %5440 = vmatprep.subr.bf16.mxu0 0
  %5441 = vmatpush1.bf16.msra.mxu0 %v5256
  %5442 = vmatprep.subr.bf16.mxu0 0
  %5443 = vmatpush1.bf16.msra.mxu0 %v5257
  %5444 = vmatprep.subr.bf16.mxu0 0
  %5445 = vmatpush1.bf16.msra.mxu0 %v5258
  %5446 = vmatprep.subr.bf16.mxu0 0
  %5447 = vmatpush1.bf16.msra.mxu0 %v5259
  %5448 = vmatprep.subr.bf16.mxu0 0
  %5449 = vmatpush1.bf16.msra.mxu0 %v5260
  %5450 = vmatprep.subr.bf16.mxu0 0
  %5451 = vmatpush1.bf16.msra.mxu0 0
  %5452 = vmatprep.subr.bf16.mxu0 0
  %5453 = vmatpush1.bf16.msra.mxu0 0
  %5454 = vmatprep.subr.bf16.mxu0 0
  %5455 = vmatpush1.bf16.msra.mxu0 0
  %5456 = vmatprep.subr.bf16.mxu0 0
  %5457 = vmatpush1.bf16.msra.mxu0 0
  %5458 = vmatprep.subr.bf16.mxu0 0
  %5459 = vmatpush1.bf16.msra.mxu0 0
  %5460 = vmatprep.subr.bf16.mxu0 0
  %5461 = vmatpush1.bf16.msra.mxu0 0
  %5462 = vmatprep.subr.bf16.mxu0 0
  %5463 = vmatpush1.bf16.msra.mxu0 0
  %5464 = vmatprep.subr.bf16.mxu0 0
  %5465 = vmatpush1.bf16.msra.mxu0 0
  %5466 = vmatprep.mubr.bf16.mxu0 0
  %5467 = vmatmul.mubr.bf16.gmra.mrb[0].mxu0 %v5432
  %v5468 = vpop.f32.mrb[0].mxu0
  %v5469 = vadd.f32 0.0, %v5468
  %v5470 = vpop.f32.mrb[0].mxu0
  %v5471 = vpop.f32.mrb[0].mxu0
  %v5472 = vadd.f32 0.0, %v5471
  %v5473 = vpop.f32.mrb[0].mxu0
  %5474 = vmatprep.mubr.bf16.mxu0 0
  %5475 = vmatmul.mubr.bf16.gmra.mrb[0].mxu0 %v5433
  %v5476 = vpop.f32.mrb[0].mxu0
  %v5477 = vadd.f32 0.0, %v5476
  %v5478 = vpop.f32.mrb[0].mxu0
  %v5479 = vpop.f32.mrb[0].mxu0
  %v5480 = vpop.f32.mrb[0].mxu0
  %5481 = vdwg.mxu0
  %v5482 = vmax.f32 %v5425, %v5469
  %v5483 = vmax.f32 %v5426, %v5472
  %v5484 = vmax.f32 %v5427, %v5477
  %v5485 = vpack.c.bf16 %v5483, %v5482
  %v5486 = vpack.c.bf16 %v5484, %v5484
  %v5487 = vld [vmem:[%s5] sm:$0xf]
  %v5488 = vld [vmem:[%s5 + $0x4] sm:$0xf]
  %v5489 = vld [vmem:[%s5 + $0x8] sm:$0xf]
  %v5490 = vld [vmem:[%s5 + $0xc] sm:$0xf]
  %v5491 = vld [vmem:[%s5 + $0x10] sm:$0xf]
  %v5492 = vld [vmem:[%s5 + $0x14] sm:$0xf]
  %v5493 = vld [vmem:[%s5 + $0x18] sm:$0xf]
  %v5494 = vld [vmem:[%s5 + $0x1c] sm:$0xf]
  %v5495 = vld [vmem:[%s5 + $0x20] sm:$0xf]
  %v5496 = vld [vmem:[%s5 + $0x24] sm:$0xf]
  %v5497 = vld [vmem:[%s5 + $0x28] sm:$0xf]
  %v5498 = vld [vmem:[%s5 + $0x2c] sm:$0xf]
  %v5499 = vld [vmem:[%s5 + $0x30] sm:$0xf]
  %v5500 = vld [vmem:[%s5 + $0x34] sm:$0xf]
  %v5501 = vld [vmem:[%s5 + $0x38] sm:$0xf]
  %v5502 = vld [vmem:[%s5 + $0x3c] sm:$0xf]
  %v5519 = vunpack.c.l.b16 %v5487
  %v5520 = vunpack.c.l.b16 %v5488
  %v5521 = vunpack.c.l.b16 %v5489
  %v5522 = vunpack.c.l.b16 %v5490
  %v5523 = vunpack.c.l.b16 %v5491
  %v5524 = vunpack.c.l.b16 %v5492
  %v5525 = vunpack.c.l.b16 %v5493
  %v5526 = vunpack.c.l.b16 %v5494
  %v5527 = vunpack.c.l.b16 %v5495
  %v5528 = vunpack.c.l.b16 %v5496
  %v5529 = vunpack.c.l.b16 %v5497
  %v5530 = vunpack.c.l.b16 %v5498
  %v5531 = vunpack.c.l.b16 %v5499
  %v5532 = vunpack.c.l.b16 %v5500
  %v5533 = vunpack.c.l.b16 %v5501
  %v5534 = vunpack.c.l.b16 %v5502
  %v5535 = vpack.c.b16 %v5520, %v5519
  %v5536 = vpack.c.b16 %v5522, %v5521
  %v5537 = vpack.c.b16 %v5524, %v5523
  %v5538 = vpack.c.b16 %v5526, %v5525
  %v5539 = vpack.c.b16 %v5528, %v5527
  %v5540 = vpack.c.b16 %v5530, %v5529
  %v5541 = vpack.c.b16 %v5532, %v5531
  %v5542 = vpack.c.b16 %v5534, %v5533
  %5551 = vmatprep.subr.bf16.mxu0 0
  %5552 = vmatpush1.bf16.msra.mxu0 %v5535
  %5553 = vmatprep.subr.bf16.mxu0 0
  %5554 = vmatpush1.bf16.msra.mxu0 %v5536
  %5555 = vmatprep.subr.bf16.mxu0 0
  %5556 = vmatpush1.bf16.msra.mxu0 %v5537
  %5557 = vmatprep.subr.bf16.mxu0 0
  %5558 = vmatpush1.bf16.msra.mxu0 %v5538
  %5559 = vmatprep.subr.bf16.mxu0 0
  %5560 = vmatpush1.bf16.msra.mxu0 %v5539
  %5561 = vmatprep.subr.bf16.mxu0 0
  %5562 = vmatpush1.bf16.msra.mxu0 %v5540
  %5563 = vmatprep.subr.bf16.mxu0 0
  %5564 = vmatpush1.bf16.msra.mxu0 %v5541
  %5565 = vmatprep.subr.bf16.mxu0 0
  %5566 = vmatpush1.bf16.msra.mxu0 %v5542
  %5567 = vmatprep.subr.bf16.mxu0 0
  %5568 = vmatpush1.bf16.msra.mxu0 0
  %5569 = vmatprep.subr.bf16.mxu0 0
  %5570 = vmatpush1.bf16.msra.mxu0 0
  %5571 = vmatprep.subr.bf16.mxu0 0
  %5572 = vmatpush1.bf16.msra.mxu0 0
  %5573 = vmatprep.subr.bf16.mxu0 0
  %5574 = vmatpush1.bf16.msra.mxu0 0
  %5575 = vmatprep.subr.bf16.mxu0 0
  %5576 = vmatpush1.bf16.msra.mxu0 0
  %5577 = vmatprep.subr.bf16.mxu0 0
  %5578 = vmatpush1.bf16.msra.mxu0 0
  %5579 = vmatprep.subr.bf16.mxu0 0
  %5580 = vmatpush1.bf16.msra.mxu0 0
  %5581 = vmatprep.subr.bf16.mxu0 0
  %5582 = vmatpush1.bf16.msra.mxu0 0
  %5583 = vmatprep.mubr.bf16.mxu0 0
  %5584 = vmatmul.mubr.bf16.gmra.mrb[0].mxu0 %v5485
  %v5585 = vpop.f32.mrb[0].mxu0
  %v5586 = vadd.f32 0.0, %v5585
  %v5587 = vpop.f32.mrb[0].mxu0
  %v5588 = vpop.f32.mrb[0].mxu0
  %v5589 = vadd.f32 0.0, %v5588
  %v5590 = vpop.f32.mrb[0].mxu0
  %5591 = vmatprep.mubr.bf16.mxu0 0
  %5592 = vmatmul.mubr.bf16.gmra.mrb[0].mxu0 %v5486
  %v5593 = vpop.f32.mrb[0].mxu0
  %v5594 = vpop.f32.mrb[0].mxu0
  %v5595 = vpop.f32.mrb[0].mxu0
  %v5596 = vpop.f32.mrb[0].mxu0
  %5597 = vdwg.mxu0
  %v5598 = vadd.f32 %v5586, 0.0
  %v5599 = vadd.f32 %v5589, 0.0
  %s5600 = scalar_lea.vmem %s5, 64
  %v5601 = vld [vmem:[%s5600] sm:$0xf]
  %v5602 = vld [vmem:[%s5600 + $0x4] sm:$0xf]
  %v5603 = vld [vmem:[%s5600 + $0x8] sm:$0xf]
  %v5604 = vld [vmem:[%s5600 + $0xc] sm:$0xf]
  %v5605 = vld [vmem:[%s5600 + $0x10] sm:$0xf]
  %v5606 = vld [vmem:[%s5600 + $0x14] sm:$0xf]
  %v5607 = vld [vmem:[%s5600 + $0x18] sm:$0xf]
  %v5608 = vld [vmem:[%s5600 + $0x1c] sm:$0xf]
  %v5609 = vld [vmem:[%s5600 + $0x20] sm:$0xf]
  %v5610 = vld [vmem:[%s5600 + $0x24] sm:$0xf]
  %v5611 = vld [vmem:[%s5600 + $0x28] sm:$0xf]
  %v5612 = vld [vmem:[%s5600 + $0x2c] sm:$0xf]
  %v5613 = vld [vmem:[%s5600 + $0x30] sm:$0xf]
  %v5614 = vld [vmem:[%s5600 + $0x34] sm:$0xf]
  %v5615 = vld [vmem:[%s5600 + $0x38] sm:$0xf]
  %v5616 = vld [vmem:[%s5600 + $0x3c] sm:$0xf]
  %v5633 = vunpack.c.l.b16 %v5601
  %v5634 = vunpack.c.l.b16 %v5602
  %v5635 = vunpack.c.l.b16 %v5603
  %v5636 = vunpack.c.l.b16 %v5604
  %v5637 = vunpack.c.l.b16 %v5605
  %v5638 = vunpack.c.l.b16 %v5606
  %v5639 = vunpack.c.l.b16 %v5607
  %v5640 = vunpack.c.l.b16 %v5608
  %v5641 = vunpack.c.l.b16 %v5609
  %v5642 = vunpack.c.l.b16 %v5610
  %v5643 = vunpack.c.l.b16 %v5611
  %v5644 = vunpack.c.l.b16 %v5612
  %v5645 = vunpack.c.l.b16 %v5613
  %v5646 = vunpack.c.l.b16 %v5614
  %v5647 = vunpack.c.l.b16 %v5615
  %v5648 = vunpack.c.l.b16 %v5616
  %v5649 = vpack.c.b16 %v5634, %v5633
  %v5650 = vpack.c.b16 %v5636, %v5635
  %v5651 = vpack.c.b16 %v5638, %v5637
  %v5652 = vpack.c.b16 %v5640, %v5639
  %v5653 = vpack.c.b16 %v5642, %v5641
  %v5654 = vpack.c.b16 %v5644, %v5643
  %v5655 = vpack.c.b16 %v5646, %v5645
  %v5656 = vpack.c.b16 %v5648, %v5647
  %5665 = vmatprep.subr.bf16.mxu0 0
  %5666 = vmatpush1.bf16.msra.mxu0 %v5649
  %5667 = vmatprep.subr.bf16.mxu0 0
  %5668 = vmatpush1.bf16.msra.mxu0 %v5650
  %5669 = vmatprep.subr.bf16.mxu0 0
  %5670 = vmatpush1.bf16.msra.mxu0 %v5651
  %5671 = vmatprep.subr.bf16.mxu0 0
  %5672 = vmatpush1.bf16.msra.mxu0 %v5652
  %5673 = vmatprep.subr.bf16.mxu0 0
  %5674 = vmatpush1.bf16.msra.mxu0 %v5653
  %5675 = vmatprep.subr.bf16.mxu0 0
  %5676 = vmatpush1.bf16.msra.mxu0 %v5654
  %5677 = vmatprep.subr.bf16.mxu0 0
  %5678 = vmatpush1.bf16.msra.mxu0 %v5655
  %5679 = vmatprep.subr.bf16.mxu0 0
  %5680 = vmatpush1.bf16.msra.mxu0 %v5656
  %5681 = vmatprep.subr.bf16.mxu0 0
  %5682 = vmatpush1.bf16.msra.mxu0 0
  %5683 = vmatprep.subr.bf16.mxu0 0
  %5684 = vmatpush1.bf16.msra.mxu0 0
  %5685 = vmatprep.subr.bf16.mxu0 0
  %5686 = vmatpush1.bf16.msra.mxu0 0
  %5687 = vmatprep.subr.bf16.mxu0 0
  %5688 = vmatpush1.bf16.msra.mxu0 0
  %5689 = vmatprep.subr.bf16.mxu0 0
  %5690 = vmatpush1.bf16.msra.mxu0 0
  %5691 = vmatprep.subr.bf16.mxu0 0
  %5692 = vmatpush1.bf16.msra.mxu0 0
  %5693 = vmatprep.subr.bf16.mxu0 0
  %5694 = vmatpush1.bf16.msra.mxu0 0
  %5695 = vmatprep.subr.bf16.mxu0 0
  %5696 = vmatpush1.bf16.msra.mxu0 0
  %5697 = vmatprep.mubr.bf16.mxu0 0
  %5698 = vmatmul.mubr.bf16.gmra.mrb[0].mxu0 %v5485
  %v5699 = vpop.f32.mrb[0].mxu0
  %v5700 = vadd.f32 0.0, %v5699
  %v5701 = vpop.f32.mrb[0].mxu0
  %v5702 = vpop.f32.mrb[0].mxu0
  %v5703 = vadd.f32 0.0, %v5702
  %v5704 = vpop.f32.mrb[0].mxu0
  %5705 = vmatprep.mubr.bf16.mxu0 0
  %5706 = vmatmul.mubr.bf16.gmra.mrb[0].mxu0 %v5486
  %v5707 = vpop.f32.mrb[0].mxu0
  %v5708 = vpop.f32.mrb[0].mxu0
  %v5709 = vpop.f32.mrb[0].mxu0
  %v5710 = vpop.f32.mrb[0].mxu0
  %5711 = vdwg.mxu0
  %v5713 = vrot.slane %v5700, 1
  %v5715 = vadd.f32 %v5598, %v5713
  %v5717 = vrot.slane %v5703, 1
  %v5719 = vadd.f32 %v5599, %v5717
  %s5720 = scalar_lea.vmem %s5, 128
  %v5721 = vld [vmem:[%s5720] sm:$0xf]
  %v5722 = vld [vmem:[%s5720 + $0x4] sm:$0xf]
  %v5723 = vld [vmem:[%s5720 + $0x8] sm:$0xf]
  %v5724 = vld [vmem:[%s5720 + $0xc] sm:$0xf]
  %v5725 = vld [vmem:[%s5720 + $0x10] sm:$0xf]
  %v5726 = vld [vmem:[%s5720 + $0x14] sm:$0xf]
  %v5727 = vld [vmem:[%s5720 + $0x18] sm:$0xf]
  %v5728 = vld [vmem:[%s5720 + $0x1c] sm:$0xf]
  %v5729 = vld [vmem:[%s5720 + $0x20] sm:$0xf]
  %v5730 = vld [vmem:[%s5720 + $0x24] sm:$0xf]
  %v5731 = vld [vmem:[%s5720 + $0x28] sm:$0xf]
  %v5732 = vld [vmem:[%s5720 + $0x2c] sm:$0xf]
  %v5733 = vld [vmem:[%s5720 + $0x30] sm:$0xf]
  %v5734 = vld [vmem:[%s5720 + $0x34] sm:$0xf]
  %v5735 = vld [vmem:[%s5720 + $0x38] sm:$0xf]
  %v5736 = vld [vmem:[%s5720 + $0x3c] sm:$0xf]
  %v5753 = vunpack.c.l.b16 %v5721
  %v5754 = vunpack.c.l.b16 %v5722
  %v5755 = vunpack.c.l.b16 %v5723
  %v5756 = vunpack.c.l.b16 %v5724
  %v5757 = vunpack.c.l.b16 %v5725
  %v5758 = vunpack.c.l.b16 %v5726
  %v5759 = vunpack.c.l.b16 %v5727
  %v5760 = vunpack.c.l.b16 %v5728
  %v5761 = vunpack.c.l.b16 %v5729
  %v5762 = vunpack.c.l.b16 %v5730
  %v5763 = vunpack.c.l.b16 %v5731
  %v5764 = vunpack.c.l.b16 %v5732
  %v5765 = vunpack.c.l.b16 %v5733
  %v5766 = vunpack.c.l.b16 %v5734
  %v5767 = vunpack.c.l.b16 %v5735
  %v5768 = vunpack.c.l.b16 %v5736
  %v5769 = vpack.c.b16 %v5754, %v5753
  %v5770 = vpack.c.b16 %v5756, %v5755
  %v5771 = vpack.c.b16 %v5758, %v5757
  %v5772 = vpack.c.b16 %v5760, %v5759
  %v5773 = vpack.c.b16 %v5762, %v5761
  %v5774 = vpack.c.b16 %v5764, %v5763
  %v5775 = vpack.c.b16 %v5766, %v5765
  %v5776 = vpack.c.b16 %v5768, %v5767
  %5785 = vmatprep.subr.bf16.mxu0 0
  %5786 = vmatpush1.bf16.msra.mxu0 %v5769
  %5787 = vmatprep.subr.bf16.mxu0 0
  %5788 = vmatpush1.bf16.msra.mxu0 %v5770
  %5789 = vmatprep.subr.bf16.mxu0 0
  %5790 = vmatpush1.bf16.msra.mxu0 %v5771
  %5791 = vmatprep.subr.bf16.mxu0 0
  %5792 = vmatpush1.bf16.msra.mxu0 %v5772
  %5793 = vmatprep.subr.bf16.mxu0 0
  %5794 = vmatpush1.bf16.msra.mxu0 %v5773
  %5795 = vmatprep.subr.bf16.mxu0 0
  %5796 = vmatpush1.bf16.msra.mxu0 %v5774
  %5797 = vmatprep.subr.bf16.mxu0 0
  %5798 = vmatpush1.bf16.msra.mxu0 %v5775
  %5799 = vmatprep.subr.bf16.mxu0 0
  %5800 = vmatpush1.bf16.msra.mxu0 %v5776
  %5801 = vmatprep.subr.bf16.mxu0 0
  %5802 = vmatpush1.bf16.msra.mxu0 0
  %5803 = vmatprep.subr.bf16.mxu0 0
  %5804 = vmatpush1.bf16.msra.mxu0 0
  %5805 = vmatprep.subr.bf16.mxu0 0
  %5806 = vmatpush1.bf16.msra.mxu0 0
  %5807 = vmatprep.subr.bf16.mxu0 0
  %5808 = vmatpush1.bf16.msra.mxu0 0
  %5809 = vmatprep.subr.bf16.mxu0 0
  %5810 = vmatpush1.bf16.msra.mxu0 0
  %5811 = vmatprep.subr.bf16.mxu0 0
  %5812 = vmatpush1.bf16.msra.mxu0 0
  %5813 = vmatprep.subr.bf16.mxu0 0
  %5814 = vmatpush1.bf16.msra.mxu0 0
  %5815 = vmatprep.subr.bf16.mxu0 0
  %5816 = vmatpush1.bf16.msra.mxu0 0
  %5817 = vmatprep.mubr.bf16.mxu0 0
  %5818 = vmatmul.mubr.bf16.gmra.mrb[0].mxu0 %v5485
  %v5819 = vpop.f32.mrb[0].mxu0
  %v5820 = vadd.f32 0.0, %v5819
  %v5821 = vpop.f32.mrb[0].mxu0
  %v5822 = vpop.f32.mrb[0].mxu0
  %v5823 = vadd.f32 0.0, %v5822
  %v5824 = vpop.f32.mrb[0].mxu0
  %5825 = vmatprep.mubr.bf16.mxu0 0
  %5826 = vmatmul.mubr.bf16.gmra.mrb[0].mxu0 %v5486
  %v5827 = vpop.f32.mrb[0].mxu0
  %v5828 = vpop.f32.mrb[0].mxu0
  %v5829 = vpop.f32.mrb[0].mxu0
  %v5830 = vpop.f32.mrb[0].mxu0
  %5831 = vdwg.mxu0
  %v5833 = vrot.slane %v5820, 2
  %v5835 = vadd.f32 %v5715, %v5833
  %v5837 = vrot.slane %v5823, 2
  %v5839 = vadd.f32 %v5719, %v5837
  %s5840 = scalar_lea.vmem %s5, 192
  %v5841 = vld [vmem:[%s5840] sm:$0xf]
  %v5842 = vld [vmem:[%s5840 + $0x4] sm:$0xf]
  %v5843 = vld [vmem:[%s5840 + $0x8] sm:$0xf]
  %v5844 = vld [vmem:[%s5840 + $0xc] sm:$0xf]
  %v5845 = vld [vmem:[%s5840 + $0x10] sm:$0xf]
  %v5846 = vld [vmem:[%s5840 + $0x14] sm:$0xf]
  %v5847 = vld [vmem:[%s5840 + $0x18] sm:$0xf]
  %v5848 = vld [vmem:[%s5840 + $0x1c] sm:$0xf]
  %v5849 = vld [vmem:[%s5840 + $0x20] sm:$0xf]
  %v5850 = vld [vmem:[%s5840 + $0x24] sm:$0xf]
  %v5851 = vld [vmem:[%s5840 + $0x28] sm:$0xf]
  %v5852 = vld [vmem:[%s5840 + $0x2c] sm:$0xf]
  %v5853 = vld [vmem:[%s5840 + $0x30] sm:$0xf]
  %v5854 = vld [vmem:[%s5840 + $0x34] sm:$0xf]
  %v5855 = vld [vmem:[%s5840 + $0x38] sm:$0xf]
  %v5856 = vld [vmem:[%s5840 + $0x3c] sm:$0xf]
  %v5873 = vunpack.c.l.b16 %v5841
  %v5874 = vunpack.c.l.b16 %v5842
  %v5875 = vunpack.c.l.b16 %v5843
  %v5876 = vunpack.c.l.b16 %v5844
  %v5877 = vunpack.c.l.b16 %v5845
  %v5878 = vunpack.c.l.b16 %v5846
  %v5879 = vunpack.c.l.b16 %v5847
  %v5880 = vunpack.c.l.b16 %v5848
  %v5881 = vunpack.c.l.b16 %v5849
  %v5882 = vunpack.c.l.b16 %v5850
  %v5883 = vunpack.c.l.b16 %v5851
  %v5884 = vunpack.c.l.b16 %v5852
  %v5885 = vunpack.c.l.b16 %v5853
  %v5886 = vunpack.c.l.b16 %v5854
  %v5887 = vunpack.c.l.b16 %v5855
  %v5888 = vunpack.c.l.b16 %v5856
  %v5889 = vpack.c.b16 %v5874, %v5873
  %v5890 = vpack.c.b16 %v5876, %v5875
  %v5891 = vpack.c.b16 %v5878, %v5877
  %v5892 = vpack.c.b16 %v5880, %v5879
  %v5893 = vpack.c.b16 %v5882, %v5881
  %v5894 = vpack.c.b16 %v5884, %v5883
  %v5895 = vpack.c.b16 %v5886, %v5885
  %v5896 = vpack.c.b16 %v5888, %v5887
  %5905 = vmatprep.subr.bf16.mxu0 0
  %5906 = vmatpush1.bf16.msra.mxu0 %v5889
  %5907 = vmatprep.subr.bf16.mxu0 0
  %5908 = vmatpush1.bf16.msra.mxu0 %v5890
  %5909 = vmatprep.subr.bf16.mxu0 0
  %5910 = vmatpush1.bf16.msra.mxu0 %v5891
  %5911 = vmatprep.subr.bf16.mxu0 0
  %5912 = vmatpush1.bf16.msra.mxu0 %v5892
  %5913 = vmatprep.subr.bf16.mxu0 0
  %5914 = vmatpush1.bf16.msra.mxu0 %v5893
  %5915 = vmatprep.subr.bf16.mxu0 0
  %5916 = vmatpush1.bf16.msra.mxu0 %v5894
  %5917 = vmatprep.subr.bf16.mxu0 0
  %5918 = vmatpush1.bf16.msra.mxu0 %v5895
  %5919 = vmatprep.subr.bf16.mxu0 0
  %5920 = vmatpush1.bf16.msra.mxu0 %v5896
  %5921 = vmatprep.subr.bf16.mxu0 0
  %5922 = vmatpush1.bf16.msra.mxu0 0
  %5923 = vmatprep.subr.bf16.mxu0 0
  %5924 = vmatpush1.bf16.msra.mxu0 0
  %5925 = vmatprep.subr.bf16.mxu0 0
  %5926 = vmatpush1.bf16.msra.mxu0 0
  %5927 = vmatprep.subr.bf16.mxu0 0
  %5928 = vmatpush1.bf16.msra.mxu0 0
  %5929 = vmatprep.subr.bf16.mxu0 0
  %5930 = vmatpush1.bf16.msra.mxu0 0
  %5931 = vmatprep.subr.bf16.mxu0 0
  %5932 = vmatpush1.bf16.msra.mxu0 0
  %5933 = vmatprep.subr.bf16.mxu0 0
  %5934 = vmatpush1.bf16.msra.mxu0 0
  %5935 = vmatprep.subr.bf16.mxu0 0
  %5936 = vmatpush1.bf16.msra.mxu0 0
  %5937 = vmatprep.mubr.bf16.mxu0 0
  %5938 = vmatmul.mubr.bf16.gmra.mrb[0].mxu0 %v5485
  %v5939 = vpop.f32.mrb[0].mxu0
  %v5940 = vadd.f32 0.0, %v5939
  %v5941 = vpop.f32.mrb[0].mxu0
  %v5942 = vpop.f32.mrb[0].mxu0
  %v5943 = vadd.f32 0.0, %v5942
  %v5944 = vpop.f32.mrb[0].mxu0
  %5945 = vmatprep.mubr.bf16.mxu0 0
  %5946 = vmatmul.mubr.bf16.gmra.mrb[0].mxu0 %v5486
  %v5947 = vpop.f32.mrb[0].mxu0
  %v5948 = vpop.f32.mrb[0].mxu0
  %v5949 = vpop.f32.mrb[0].mxu0
  %v5950 = vpop.f32.mrb[0].mxu0
  %5951 = vdwg.mxu0
  %v5953 = vrot.slane %v5940, 4
  %v5955 = vadd.f32 %v5835, %v5953
  %v5957 = vrot.slane %v5943, 4
  %v5959 = vadd.f32 %v5839, %v5957
  %s5960 = scalar_lea.vmem %s5, 256
  %v5961 = vld [vmem:[%s5960] sm:$0xf]
  %v5962 = vld [vmem:[%s5960 + $0x4] sm:$0xf]
  %v5963 = vld [vmem:[%s5960 + $0x8] sm:$0xf]
  %v5964 = vld [vmem:[%s5960 + $0xc] sm:$0xf]
  %v5965 = vld [vmem:[%s5960 + $0x10] sm:$0xf]
  %v5966 = vld [vmem:[%s5960 + $0x14] sm:$0xf]
  %v5967 = vld [vmem:[%s5960 + $0x18] sm:$0xf]
  %v5968 = vld [vmem:[%s5960 + $0x1c] sm:$0xf]
  %v5969 = vld [vmem:[%s5960 + $0x20] sm:$0xf]
  %v5970 = vld [vmem:[%s5960 + $0x24] sm:$0xf]
  %v5971 = vld [vmem:[%s5960 + $0x28] sm:$0xf]
  %v5972 = vld [vmem:[%s5960 + $0x2c] sm:$0xf]
  %v5973 = vld [vmem:[%s5960 + $0x30] sm:$0xf]
  %v5974 = vld [vmem:[%s5960 + $0x34] sm:$0xf]
  %v5975 = vld [vmem:[%s5960 + $0x38] sm:$0xf]
  %v5976 = vld [vmem:[%s5960 + $0x3c] sm:$0xf]
  %v5993 = vunpack.c.l.b16 %v5961
  %v5994 = vunpack.c.l.b16 %v5962
  %v5995 = vunpack.c.l.b16 %v5963
  %v5996 = vunpack.c.l.b16 %v5964
  %v5997 = vunpack.c.l.b16 %v5965
  %v5998 = vunpack.c.l.b16 %v5966
  %v5999 = vunpack.c.l.b16 %v5967
  %v6000 = vunpack.c.l.b16 %v5968
  %v6001 = vunpack.c.l.b16 %v5969
  %v6002 = vunpack.c.l.b16 %v5970
  %v6003 = vunpack.c.l.b16 %v5971
  %v6004 = vunpack.c.l.b16 %v5972
  %v6005 = vunpack.c.l.b16 %v5973
  %v6006 = vunpack.c.l.b16 %v5974
  %v6007 = vunpack.c.l.b16 %v5975
  %v6008 = vunpack.c.l.b16 %v5976
  %v6009 = vpack.c.b16 %v5994, %v5993
  %v6010 = vpack.c.b16 %v5996, %v5995
  %v6011 = vpack.c.b16 %v5998, %v5997
  %v6012 = vpack.c.b16 %v6000, %v5999
  %v6013 = vpack.c.b16 %v6002, %v6001
  %v6014 = vpack.c.b16 %v6004, %v6003
  %v6015 = vpack.c.b16 %v6006, %v6005
  %v6016 = vpack.c.b16 %v6008, %v6007
  %6025 = vmatprep.subr.bf16.mxu0 0
  %6026 = vmatpush1.bf16.msra.mxu0 %v6009
  %6027 = vmatprep.subr.bf16.mxu0 0
  %6028 = vmatpush1.bf16.msra.mxu0 %v6010
  %6029 = vmatprep.subr.bf16.mxu0 0
  %6030 = vmatpush1.bf16.msra.mxu0 %v6011
  %6031 = vmatprep.subr.bf16.mxu0 0
  %6032 = vmatpush1.bf16.msra.mxu0 %v6012
  %6033 = vmatprep.subr.bf16.mxu0 0
  %6034 = vmatpush1.bf16.msra.mxu0 %v6013
  %6035 = vmatprep.subr.bf16.mxu0 0
  %6036 = vmatpush1.bf16.msra.mxu0 %v6014
  %6037 = vmatprep.subr.bf16.mxu0 0
  %6038 = vmatpush1.bf16.msra.mxu0 %v6015
  %6039 = vmatprep.subr.bf16.mxu0 0
  %6040 = vmatpush1.bf16.msra.mxu0 %v6016
  %6041 = vmatprep.subr.bf16.mxu0 0
  %6042 = vmatpush1.bf16.msra.mxu0 0
  %6043 = vmatprep.subr.bf16.mxu0 0
  %6044 = vmatpush1.bf16.msra.mxu0 0
  %6045 = vmatprep.subr.bf16.mxu0 0
  %6046 = vmatpush1.bf16.msra.mxu0 0
  %6047 = vmatprep.subr.bf16.mxu0 0
  %6048 = vmatpush1.bf16.msra.mxu0 0
  %6049 = vmatprep.subr.bf16.mxu0 0
  %6050 = vmatpush1.bf16.msra.mxu0 0
  %6051 = vmatprep.subr.bf16.mxu0 0
  %6052 = vmatpush1.bf16.msra.mxu0 0
  %6053 = vmatprep.subr.bf16.mxu0 0
  %6054 = vmatpush1.bf16.msra.mxu0 0
  %6055 = vmatprep.subr.bf16.mxu0 0
  %6056 = vmatpush1.bf16.msra.mxu0 0
  %6057 = vmatprep.mubr.bf16.mxu0 0
  %6058 = vmatmul.mubr.bf16.gmra.mrb[0].mxu0 %v5485
  %v6059 = vpop.f32.mrb[0].mxu0
  %v6060 = vadd.f32 0.0, %v6059
  %v6061 = vpop.f32.mrb[0].mxu0
  %v6062 = vpop.f32.mrb[0].mxu0
  %v6063 = vadd.f32 0.0, %v6062
  %v6064 = vpop.f32.mrb[0].mxu0
  %6065 = vmatprep.mubr.bf16.mxu0 0
  %6066 = vmatmul.mubr.bf16.gmra.mrb[0].mxu0 %v5486
  %v6067 = vpop.f32.mrb[0].mxu0
  %v6068 = vpop.f32.mrb[0].mxu0
  %v6069 = vpop.f32.mrb[0].mxu0
  %v6070 = vpop.f32.mrb[0].mxu0
  %6071 = vdwg.mxu0
  %v6073 = vrot.slane %v6060, 5
  %v6075 = vadd.f32 %v5955, %v6073
  %v6077 = vrot.slane %v6063, 5
  %v6079 = vadd.f32 %v5959, %v6077
  %s6080 = scalar_lea.vmem %s5, 320
  %v6081 = vld [vmem:[%s6080] sm:$0xf]
  %v6082 = vld [vmem:[%s6080 + $0x4] sm:$0xf]
  %v6083 = vld [vmem:[%s6080 + $0x8] sm:$0xf]
  %v6084 = vld [vmem:[%s6080 + $0xc] sm:$0xf]
  %v6085 = vld [vmem:[%s6080 + $0x10] sm:$0xf]
  %v6086 = vld [vmem:[%s6080 + $0x14] sm:$0xf]
  %v6087 = vld [vmem:[%s6080 + $0x18] sm:$0xf]
  %v6088 = vld [vmem:[%s6080 + $0x1c] sm:$0xf]
  %v6089 = vld [vmem:[%s6080 + $0x20] sm:$0xf]
  %v6090 = vld [vmem:[%s6080 + $0x24] sm:$0xf]
  %v6091 = vld [vmem:[%s6080 + $0x28] sm:$0xf]
  %v6092 = vld [vmem:[%s6080 + $0x2c] sm:$0xf]
  %v6093 = vld [vmem:[%s6080 + $0x30] sm:$0xf]
  %v6094 = vld [vmem:[%s6080 + $0x34] sm:$0xf]
  %v6095 = vld [vmem:[%s6080 + $0x38] sm:$0xf]
  %v6096 = vld [vmem:[%s6080 + $0x3c] sm:$0xf]
  %v6113 = vunpack.c.l.b16 %v6081
  %v6114 = vunpack.c.l.b16 %v6082
  %v6115 = vunpack.c.l.b16 %v6083
  %v6116 = vunpack.c.l.b16 %v6084
  %v6117 = vunpack.c.l.b16 %v6085
  %v6118 = vunpack.c.l.b16 %v6086
  %v6119 = vunpack.c.l.b16 %v6087
  %v6120 = vunpack.c.l.b16 %v6088
  %v6121 = vunpack.c.l.b16 %v6089
  %v6122 = vunpack.c.l.b16 %v6090
  %v6123 = vunpack.c.l.b16 %v6091
  %v6124 = vunpack.c.l.b16 %v6092
  %v6125 = vunpack.c.l.b16 %v6093
  %v6126 = vunpack.c.l.b16 %v6094
  %v6127 = vunpack.c.l.b16 %v6095
  %v6128 = vunpack.c.l.b16 %v6096
  %v6129 = vpack.c.b16 %v6114, %v6113
  %v6130 = vpack.c.b16 %v6116, %v6115
  %v6131 = vpack.c.b16 %v6118, %v6117
  %v6132 = vpack.c.b16 %v6120, %v6119
  %v6133 = vpack.c.b16 %v6122, %v6121
  %v6134 = vpack.c.b16 %v6124, %v6123
  %v6135 = vpack.c.b16 %v6126, %v6125
  %v6136 = vpack.c.b16 %v6128, %v6127
  %6145 = vmatprep.subr.bf16.mxu0 0
  %6146 = vmatpush1.bf16.msra.mxu0 %v6129
  %6147 = vmatprep.subr.bf16.mxu0 0
  %6148 = vmatpush1.bf16.msra.mxu0 %v6130
  %6149 = vmatprep.subr.bf16.mxu0 0
  %6150 = vmatpush1.bf16.msra.mxu0 %v6131
  %6151 = vmatprep.subr.bf16.mxu0 0
  %6152 = vmatpush1.bf16.msra.mxu0 %v6132
  %6153 = vmatprep.subr.bf16.mxu0 0
  %6154 = vmatpush1.bf16.msra.mxu0 %v6133
  %6155 = vmatprep.subr.bf16.mxu0 0
  %6156 = vmatpush1.bf16.msra.mxu0 %v6134
  %6157 = vmatprep.subr.bf16.mxu0 0
  %6158 = vmatpush1.bf16.msra.mxu0 %v6135
  %6159 = vmatprep.subr.bf16.mxu0 0
  %6160 = vmatpush1.bf16.msra.mxu0 %v6136
  %6161 = vmatprep.subr.bf16.mxu0 0
  %6162 = vmatpush1.bf16.msra.mxu0 0
  %6163 = vmatprep.subr.bf16.mxu0 0
  %6164 = vmatpush1.bf16.msra.mxu0 0
  %6165 = vmatprep.subr.bf16.mxu0 0
  %6166 = vmatpush1.bf16.msra.mxu0 0
  %6167 = vmatprep.subr.bf16.mxu0 0
  %6168 = vmatpush1.bf16.msra.mxu0 0
  %6169 = vmatprep.subr.bf16.mxu0 0
  %6170 = vmatpush1.bf16.msra.mxu0 0
  %6171 = vmatprep.subr.bf16.mxu0 0
  %6172 = vmatpush1.bf16.msra.mxu0 0
  %6173 = vmatprep.subr.bf16.mxu0 0
  %6174 = vmatpush1.bf16.msra.mxu0 0
  %6175 = vmatprep.subr.bf16.mxu0 0
  %6176 = vmatpush1.bf16.msra.mxu0 0
  %6177 = vmatprep.mubr.bf16.mxu0 0
  %6178 = vmatmul.mubr.bf16.gmra.mrb[0].mxu0 %v5485
  %v6179 = vpop.f32.mrb[0].mxu0
  %v6180 = vadd.f32 0.0, %v6179
  %v6181 = vpop.f32.mrb[0].mxu0
  %v6182 = vpop.f32.mrb[0].mxu0
  %v6183 = vadd.f32 0.0, %v6182
  %v6184 = vpop.f32.mrb[0].mxu0
  %6185 = vmatprep.mubr.bf16.mxu0 0
  %6186 = vmatmul.mubr.bf16.gmra.mrb[0].mxu0 %v5486
  %v6187 = vpop.f32.mrb[0].mxu0
  %v6188 = vpop.f32.mrb[0].mxu0
  %v6189 = vpop.f32.mrb[0].mxu0
  %v6190 = vpop.f32.mrb[0].mxu0
  %6191 = vdwg.mxu0
  %v6193 = vrot.slane %v6180, 6
  %v6195 = vadd.f32 %v6075, %v6193
  %v6197 = vrot.slane %v6183, 6
  %v6199 = vadd.f32 %v6079, %v6197
  %s6200 = scalar_lea.vmem %s5, 384
  %v6201 = vld [vmem:[%s6200] sm:$0xf]
  %v6202 = vld [vmem:[%s6200 + $0x4] sm:$0xf]
  %v6203 = vld [vmem:[%s6200 + $0x8] sm:$0xf]
  %v6204 = vld [vmem:[%s6200 + $0xc] sm:$0xf]
  %v6205 = vld [vmem:[%s6200 + $0x10] sm:$0xf]
  %v6206 = vld [vmem:[%s6200 + $0x14] sm:$0xf]
  %v6207 = vld [vmem:[%s6200 + $0x18] sm:$0xf]
  %v6208 = vld [vmem:[%s6200 + $0x1c] sm:$0xf]
  %v6209 = vld [vmem:[%s6200 + $0x20] sm:$0xf]
  %v6210 = vld [vmem:[%s6200 + $0x24] sm:$0xf]
  %v6211 = vld [vmem:[%s6200 + $0x28] sm:$0xf]
  %v6212 = vld [vmem:[%s6200 + $0x2c] sm:$0xf]
  %v6213 = vld [vmem:[%s6200 + $0x30] sm:$0xf]
  %v6214 = vld [vmem:[%s6200 + $0x34] sm:$0xf]
  %v6215 = vld [vmem:[%s6200 + $0x38] sm:$0xf]
  %v6216 = vld [vmem:[%s6200 + $0x3c] sm:$0xf]
  %v6233 = vunpack.c.l.b16 %v6201
  %v6234 = vunpack.c.l.b16 %v6202
  %v6235 = vunpack.c.l.b16 %v6203
  %v6236 = vunpack.c.l.b16 %v6204
  %v6237 = vunpack.c.l.b16 %v6205
  %v6238 = vunpack.c.l.b16 %v6206
  %v6239 = vunpack.c.l.b16 %v6207
  %v6240 = vunpack.c.l.b16 %v6208
  %v6241 = vunpack.c.l.b16 %v6209
  %v6242 = vunpack.c.l.b16 %v6210
  %v6243 = vunpack.c.l.b16 %v6211
  %v6244 = vunpack.c.l.b16 %v6212
  %v6245 = vunpack.c.l.b16 %v6213
  %v6246 = vunpack.c.l.b16 %v6214
  %v6247 = vunpack.c.l.b16 %v6215
  %v6248 = vunpack.c.l.b16 %v6216
  %v6249 = vpack.c.b16 %v6234, %v6233
  %v6250 = vpack.c.b16 %v6236, %v6235
  %v6251 = vpack.c.b16 %v6238, %v6237
  %v6252 = vpack.c.b16 %v6240, %v6239
  %v6253 = vpack.c.b16 %v6242, %v6241
  %v6254 = vpack.c.b16 %v6244, %v6243
  %v6255 = vpack.c.b16 %v6246, %v6245
  %v6256 = vpack.c.b16 %v6248, %v6247
  %6265 = vmatprep.subr.bf16.mxu0 0
  %6266 = vmatpush1.bf16.msra.mxu0 %v6249
  %6267 = vmatprep.subr.bf16.mxu0 0
  %6268 = vmatpush1.bf16.msra.mxu0 %v6250
  %6269 = vmatprep.subr.bf16.mxu0 0
  %6270 = vmatpush1.bf16.msra.mxu0 %v6251
  %6271 = vmatprep.subr.bf16.mxu0 0
  %6272 = vmatpush1.bf16.msra.mxu0 %v6252
  %6273 = vmatprep.subr.bf16.mxu0 0
  %6274 = vmatpush1.bf16.msra.mxu0 %v6253
  %6275 = vmatprep.subr.bf16.mxu0 0
  %6276 = vmatpush1.bf16.msra.mxu0 %v6254
  %6277 = vmatprep.subr.bf16.mxu0 0
  %6278 = vmatpush1.bf16.msra.mxu0 %v6255
  %6279 = vmatprep.subr.bf16.mxu0 0
  %6280 = vmatpush1.bf16.msra.mxu0 %v6256
  %6281 = vmatprep.subr.bf16.mxu0 0
  %6282 = vmatpush1.bf16.msra.mxu0 0
  %6283 = vmatprep.subr.bf16.mxu0 0
  %6284 = vmatpush1.bf16.msra.mxu0 0
  %6285 = vmatprep.subr.bf16.mxu0 0
  %6286 = vmatpush1.bf16.msra.mxu0 0
  %6287 = vmatprep.subr.bf16.mxu0 0
  %6288 = vmatpush1.bf16.msra.mxu0 0
  %6289 = vmatprep.subr.bf16.mxu0 0
  %6290 = vmatpush1.bf16.msra.mxu0 0
  %6291 = vmatprep.subr.bf16.mxu0 0
  %6292 = vmatpush1.bf16.msra.mxu0 0
  %6293 = vmatprep.subr.bf16.mxu0 0
  %6294 = vmatpush1.bf16.msra.mxu0 0
  %6295 = vmatprep.subr.bf16.mxu0 0
  %6296 = vmatpush1.bf16.msra.mxu0 0
  %6297 = vmatprep.mubr.bf16.mxu0 0
  %6298 = vmatmul.mubr.bf16.gmra.mrb[0].mxu0 %v5485
  %v6299 = vpop.f32.mrb[0].mxu0
  %v6300 = vpop.f32.mrb[0].mxu0
  %v6301 = vpop.f32.mrb[0].mxu0
  %v6302 = vadd.f32 0.0, %v6301
  %v6303 = vpop.f32.mrb[0].mxu0
  %6304 = vmatprep.mubr.bf16.mxu0 0
  %6305 = vmatmul.mubr.bf16.gmra.mrb[0].mxu0 %v5486
  %v6306 = vpop.f32.mrb[0].mxu0
  %v6307 = vadd.f32 0.0, %v6306
  %v6308 = vpop.f32.mrb[0].mxu0
  %v6309 = vpop.f32.mrb[0].mxu0
  %v6310 = vpop.f32.mrb[0].mxu0
  %6311 = vdwg.mxu0
  %v6312 = vadd.f32 %v6195, %v6302
  %v6313 = vadd.f32 %v6199, %v6307
  %s6314 = scalar_lea.vmem %s5, 448
  %v6315 = vld [vmem:[%s6314] sm:$0xf]
  %v6316 = vld [vmem:[%s6314 + $0x4] sm:$0xf]
  %v6317 = vld [vmem:[%s6314 + $0x8] sm:$0xf]
  %v6318 = vld [vmem:[%s6314 + $0xc] sm:$0xf]
  %v6319 = vld [vmem:[%s6314 + $0x10] sm:$0xf]
  %v6320 = vld [vmem:[%s6314 + $0x14] sm:$0xf]
  %v6321 = vld [vmem:[%s6314 + $0x18] sm:$0xf]
  %v6322 = vld [vmem:[%s6314 + $0x1c] sm:$0xf]
  %v6323 = vld [vmem:[%s6314 + $0x20] sm:$0xf]
  %v6324 = vld [vmem:[%s6314 + $0x24] sm:$0xf]
  %v6325 = vld [vmem:[%s6314 + $0x28] sm:$0xf]
  %v6326 = vld [vmem:[%s6314 + $0x2c] sm:$0xf]
  %v6327 = vld [vmem:[%s6314 + $0x30] sm:$0xf]
  %v6328 = vld [vmem:[%s6314 + $0x34] sm:$0xf]
  %v6329 = vld [vmem:[%s6314 + $0x38] sm:$0xf]
  %v6330 = vld [vmem:[%s6314 + $0x3c] sm:$0xf]
  %v6347 = vunpack.c.l.b16 %v6315
  %v6348 = vunpack.c.l.b16 %v6316
  %v6349 = vunpack.c.l.b16 %v6317
  %v6350 = vunpack.c.l.b16 %v6318
  %v6351 = vunpack.c.l.b16 %v6319
  %v6352 = vunpack.c.l.b16 %v6320
  %v6353 = vunpack.c.l.b16 %v6321
  %v6354 = vunpack.c.l.b16 %v6322
  %v6355 = vunpack.c.l.b16 %v6323
  %v6356 = vunpack.c.l.b16 %v6324
  %v6357 = vunpack.c.l.b16 %v6325
  %v6358 = vunpack.c.l.b16 %v6326
  %v6359 = vunpack.c.l.b16 %v6327
  %v6360 = vunpack.c.l.b16 %v6328
  %v6361 = vunpack.c.l.b16 %v6329
  %v6362 = vunpack.c.l.b16 %v6330
  %v6363 = vpack.c.b16 %v6348, %v6347
  %v6364 = vpack.c.b16 %v6350, %v6349
  %v6365 = vpack.c.b16 %v6352, %v6351
  %v6366 = vpack.c.b16 %v6354, %v6353
  %v6367 = vpack.c.b16 %v6356, %v6355
  %v6368 = vpack.c.b16 %v6358, %v6357
  %v6369 = vpack.c.b16 %v6360, %v6359
  %v6370 = vpack.c.b16 %v6362, %v6361
  %6379 = vmatprep.subr.bf16.mxu0 0
  %6380 = vmatpush1.bf16.msra.mxu0 %v6363
  %6381 = vmatprep.subr.bf16.mxu0 0
  %6382 = vmatpush1.bf16.msra.mxu0 %v6364
  %6383 = vmatprep.subr.bf16.mxu0 0
  %6384 = vmatpush1.bf16.msra.mxu0 %v6365
  %6385 = vmatprep.subr.bf16.mxu0 0
  %6386 = vmatpush1.bf16.msra.mxu0 %v6366
  %6387 = vmatprep.subr.bf16.mxu0 0
  %6388 = vmatpush1.bf16.msra.mxu0 %v6367
  %6389 = vmatprep.subr.bf16.mxu0 0
  %6390 = vmatpush1.bf16.msra.mxu0 %v6368
  %6391 = vmatprep.subr.bf16.mxu0 0
  %6392 = vmatpush1.bf16.msra.mxu0 %v6369
  %6393 = vmatprep.subr.bf16.mxu0 0
  %6394 = vmatpush1.bf16.msra.mxu0 %v6370
  %6395 = vmatprep.subr.bf16.mxu0 0
  %6396 = vmatpush1.bf16.msra.mxu0 0
  %6397 = vmatprep.subr.bf16.mxu0 0
  %6398 = vmatpush1.bf16.msra.mxu0 0
  %6399 = vmatprep.subr.bf16.mxu0 0
  %6400 = vmatpush1.bf16.msra.mxu0 0
  %6401 = vmatprep.subr.bf16.mxu0 0
  %6402 = vmatpush1.bf16.msra.mxu0 0
  %6403 = vmatprep.subr.bf16.mxu0 0
  %6404 = vmatpush1.bf16.msra.mxu0 0
  %6405 = vmatprep.subr.bf16.mxu0 0
  %6406 = vmatpush1.bf16.msra.mxu0 0
  %6407 = vmatprep.subr.bf16.mxu0 0
  %6408 = vmatpush1.bf16.msra.mxu0 0
  %6409 = vmatprep.subr.bf16.mxu0 0
  %6410 = vmatpush1.bf16.msra.mxu0 0
  %6411 = vmatprep.mubr.bf16.mxu0 0
  %6412 = vmatmul.mubr.bf16.gmra.mrb[0].mxu0 %v5485
  %v6413 = vpop.f32.mrb[0].mxu0
  %v6414 = vpop.f32.mrb[0].mxu0
  %v6415 = vpop.f32.mrb[0].mxu0
  %v6416 = vadd.f32 0.0, %v6415
  %v6417 = vpop.f32.mrb[0].mxu0
  %6418 = vmatprep.mubr.bf16.mxu0 0
  %6419 = vmatmul.mubr.bf16.gmra.mrb[0].mxu0 %v5486
  %v6420 = vpop.f32.mrb[0].mxu0
  %v6421 = vadd.f32 0.0, %v6420
  %v6422 = vpop.f32.mrb[0].mxu0
  %v6423 = vpop.f32.mrb[0].mxu0
  %v6424 = vpop.f32.mrb[0].mxu0
  %6425 = vdwg.mxu0
  %v6427 = vrot.slane %v6416, 1
  %v6429 = vadd.f32 %v6312, %v6427
  %v6431 = vrot.slane %v6421, 1
  %v6433 = vadd.f32 %v6313, %v6431
  %s6434 = scalar_lea.vmem %s5, 512
  %v6435 = vld [vmem:[%s6434] sm:$0xf]
  %v6436 = vld [vmem:[%s6434 + $0x4] sm:$0xf]
  %v6437 = vld [vmem:[%s6434 + $0x8] sm:$0xf]
  %v6438 = vld [vmem:[%s6434 + $0xc] sm:$0xf]
  %v6439 = vld [vmem:[%s6434 + $0x10] sm:$0xf]
  %v6440 = vld [vmem:[%s6434 + $0x14] sm:$0xf]
  %v6441 = vld [vmem:[%s6434 + $0x18] sm:$0xf]
  %v6442 = vld [vmem:[%s6434 + $0x1c] sm:$0xf]
  %v6443 = vld [vmem:[%s6434 + $0x20] sm:$0xf]
  %v6444 = vld [vmem:[%s6434 + $0x24] sm:$0xf]
  %v6445 = vld [vmem:[%s6434 + $0x28] sm:$0xf]
  %v6446 = vld [vmem:[%s6434 + $0x2c] sm:$0xf]
  %v6447 = vld [vmem:[%s6434 + $0x30] sm:$0xf]
  %v6448 = vld [vmem:[%s6434 + $0x34] sm:$0xf]
  %v6449 = vld [vmem:[%s6434 + $0x38] sm:$0xf]
  %v6450 = vld [vmem:[%s6434 + $0x3c] sm:$0xf]
  %v6467 = vunpack.c.l.b16 %v6435
  %v6468 = vunpack.c.l.b16 %v6436
  %v6469 = vunpack.c.l.b16 %v6437
  %v6470 = vunpack.c.l.b16 %v6438
  %v6471 = vunpack.c.l.b16 %v6439
  %v6472 = vunpack.c.l.b16 %v6440
  %v6473 = vunpack.c.l.b16 %v6441
  %v6474 = vunpack.c.l.b16 %v6442
  %v6475 = vunpack.c.l.b16 %v6443
  %v6476 = vunpack.c.l.b16 %v6444
  %v6477 = vunpack.c.l.b16 %v6445
  %v6478 = vunpack.c.l.b16 %v6446
  %v6479 = vunpack.c.l.b16 %v6447
  %v6480 = vunpack.c.l.b16 %v6448
  %v6481 = vunpack.c.l.b16 %v6449
  %v6482 = vunpack.c.l.b16 %v6450
  %v6483 = vpack.c.b16 %v6468, %v6467
  %v6484 = vpack.c.b16 %v6470, %v6469
  %v6485 = vpack.c.b16 %v6472, %v6471
  %v6486 = vpack.c.b16 %v6474, %v6473
  %v6487 = vpack.c.b16 %v6476, %v6475
  %v6488 = vpack.c.b16 %v6478, %v6477
  %v6489 = vpack.c.b16 %v6480, %v6479
  %v6490 = vpack.c.b16 %v6482, %v6481
  %6499 = vmatprep.subr.bf16.mxu0 0
  %6500 = vmatpush1.bf16.msra.mxu0 %v6483
  %6501 = vmatprep.subr.bf16.mxu0 0
  %6502 = vmatpush1.bf16.msra.mxu0 %v6484
  %6503 = vmatprep.subr.bf16.mxu0 0
  %6504 = vmatpush1.bf16.msra.mxu0 %v6485
  %6505 = vmatprep.subr.bf16.mxu0 0
  %6506 = vmatpush1.bf16.msra.mxu0 %v6486
  %6507 = vmatprep.subr.bf16.mxu0 0
  %6508 = vmatpush1.bf16.msra.mxu0 %v6487
  %6509 = vmatprep.subr.bf16.mxu0 0
  %6510 = vmatpush1.bf16.msra.mxu0 %v6488
  %6511 = vmatprep.subr.bf16.mxu0 0
  %6512 = vmatpush1.bf16.msra.mxu0 %v6489
  %6513 = vmatprep.subr.bf16.mxu0 0
  %6514 = vmatpush1.bf16.msra.mxu0 %v6490
  %6515 = vmatprep.subr.bf16.mxu0 0
  %6516 = vmatpush1.bf16.msra.mxu0 0
  %6517 = vmatprep.subr.bf16.mxu0 0
  %6518 = vmatpush1.bf16.msra.mxu0 0
  %6519 = vmatprep.subr.bf16.mxu0 0
  %6520 = vmatpush1.bf16.msra.mxu0 0
  %6521 = vmatprep.subr.bf16.mxu0 0
  %6522 = vmatpush1.bf16.msra.mxu0 0
  %6523 = vmatprep.subr.bf16.mxu0 0
  %6524 = vmatpush1.bf16.msra.mxu0 0
  %6525 = vmatprep.subr.bf16.mxu0 0
  %6526 = vmatpush1.bf16.msra.mxu0 0
  %6527 = vmatprep.subr.bf16.mxu0 0
  %6528 = vmatpush1.bf16.msra.mxu0 0
  %6529 = vmatprep.subr.bf16.mxu0 0
  %6530 = vmatpush1.bf16.msra.mxu0 0
  %6531 = vmatprep.mubr.bf16.mxu0 0
  %6532 = vmatmul.mubr.bf16.gmra.mrb[0].mxu0 %v5485
  %v6533 = vpop.f32.mrb[0].mxu0
  %v6534 = vpop.f32.mrb[0].mxu0
  %v6535 = vpop.f32.mrb[0].mxu0
  %v6536 = vadd.f32 0.0, %v6535
  %v6537 = vpop.f32.mrb[0].mxu0
  %6538 = vmatprep.mubr.bf16.mxu0 0
  %6539 = vmatmul.mubr.bf16.gmra.mrb[0].mxu0 %v5486
  %v6540 = vpop.f32.mrb[0].mxu0
  %v6541 = vadd.f32 0.0, %v6540
  %v6542 = vpop.f32.mrb[0].mxu0
  %v6543 = vpop.f32.mrb[0].mxu0
  %v6544 = vpop.f32.mrb[0].mxu0
  %6545 = vdwg.mxu0
  %v6547 = vrot.slane %v6536, 2
  %v6549 = vadd.f32 %v6429, %v6547
  %v6551 = vrot.slane %v6541, 2
  %v6553 = vadd.f32 %v6433, %v6551
  %v6555 = vrot.slane %v6553, 7
  %vm6557 = vcmask 1040384
  %v6558 = vsel %vm6557, %v6549, %v6555
  %v6559 = vld [vmem:[%s6] sm:$0x1]
  %v6561 = vlaneseq
  %v6562 = vshrl.u32 %v6561, 7
  %v6563 = vsub.s32 0, %v6562
  %v6564 = vrot.slane %v6559, %v6563
  %v6566 = vadd.f32 %v6558, %v6564
  %v6567 = vmax.f32 %v6566, 0.0
  %v6568 = vpack.c.bf16 %v6567, %v6567
  %v6569 = vld [vmem:[%s8] sm:$0xff]
  %v6570 = vld [vmem:[%s8 + $0x8] sm:$0xf]
  %v6571 = vld [vmem:[%s8 + $0xc] sm:$0xff]
  %v6572 = vld [vmem:[%s8 + $0x14] sm:$0xf]
  %v6573 = vld [vmem:[%s8 + $0x18] sm:$0xff]
  %v6574 = vld [vmem:[%s8 + $0x20] sm:$0xf]
  %v6575 = vld [vmem:[%s8 + $0x24] sm:$0xff]
  %v6576 = vld [vmem:[%s8 + $0x2c] sm:$0xf]
  %v6577 = vld [vmem:[%s8 + $0x30] sm:$0xff]
  %v6578 = vld [vmem:[%s8 + $0x38] sm:$0xf]
  %v6579 = vld [vmem:[%s8 + $0x3c] sm:$0xff]
  %v6580 = vld [vmem:[%s8 + $0x44] sm:$0xf]
  %v6581 = vld [vmem:[%s8 + $0x48] sm:$0xff]
  %v6582 = vld [vmem:[%s8 + $0x50] sm:$0xf]
  %v6583 = vld [vmem:[%s8 + $0x54] sm:$0xff]
  %v6584 = vld [vmem:[%s8 + $0x5c] sm:$0xf]
  %v6585 = vld [vmem:[%s8 + $0x60] sm:$0xff]
  %v6586 = vld [vmem:[%s8 + $0x68] sm:$0xf]
  %v6587 = vld [vmem:[%s8 + $0x6c] sm:$0xff]
  %v6588 = vld [vmem:[%s8 + $0x74] sm:$0xf]
  %v6589 = vld [vmem:[%s8 + $0x78] sm:$0xff]
  %v6590 = vld [vmem:[%s8 + $0x80] sm:$0xf]
  %v6591 = vld [vmem:[%s8 + $0x84] sm:$0xff]
  %v6592 = vld [vmem:[%s8 + $0x8c] sm:$0xf]
  %v6593 = vld [vmem:[%s8 + $0x90] sm:$0xff]
  %v6594 = vld [vmem:[%s8 + $0x98] sm:$0xf]
  %v6595 = vld [vmem:[%s8 + $0x9c] sm:$0xff]
  %v6596 = vld [vmem:[%s8 + $0xa4] sm:$0xf]
  %v6597 = vld [vmem:[%s8 + $0xa8] sm:$0xff]
  %v6598 = vld [vmem:[%s8 + $0xb0] sm:$0xf]
  %v6599 = vld [vmem:[%s8 + $0xb4] sm:$0xff]
  %v6600 = vld [vmem:[%s8 + $0xbc] sm:$0xf]
  %v6601 = vld [vmem:[%s9] sm:$0xff]
  %v6602 = vld [vmem:[%s9 + $0x8] sm:$0xf]
  %v6603 = vld [vmem:[%s9 + $0xc] sm:$0xff]
  %v6604 = vld [vmem:[%s9 + $0x14] sm:$0xf]
  %v6605 = vld [vmem:[%s9 + $0x18] sm:$0xff]
  %v6606 = vld [vmem:[%s9 + $0x20] sm:$0xf]
  %v6607 = vld [vmem:[%s9 + $0x24] sm:$0xff]
  %v6608 = vld [vmem:[%s9 + $0x2c] sm:$0xf]
  %v6609 = vld [vmem:[%s9 + $0x30] sm:$0xff]
  %v6610 = vld [vmem:[%s9 + $0x38] sm:$0xf]
  %v6611 = vld [vmem:[%s9 + $0x3c] sm:$0xff]
  %v6612 = vld [vmem:[%s9 + $0x44] sm:$0xf]
  %v6613 = vld [vmem:[%s9 + $0x48] sm:$0xff]
  %v6614 = vld [vmem:[%s9 + $0x50] sm:$0xf]
  %v6615 = vld [vmem:[%s9 + $0x54] sm:$0xff]
  %v6616 = vld [vmem:[%s9 + $0x5c] sm:$0xf]
  %v6617 = vld [vmem:[%s9 + $0x60] sm:$0xff]
  %v6618 = vld [vmem:[%s9 + $0x68] sm:$0xf]
  %v6619 = vld [vmem:[%s9 + $0x6c] sm:$0xff]
  %v6620 = vld [vmem:[%s9 + $0x74] sm:$0xf]
  %v6621 = vld [vmem:[%s9 + $0x78] sm:$0xff]
  %v6622 = vld [vmem:[%s9 + $0x80] sm:$0xf]
  %v6623 = vld [vmem:[%s9 + $0x84] sm:$0xff]
  %v6624 = vld [vmem:[%s9 + $0x8c] sm:$0xf]
  %v6625 = vld [vmem:[%s9 + $0x90] sm:$0xff]
  %v6626 = vld [vmem:[%s9 + $0x98] sm:$0xf]
  %v6627 = vld [vmem:[%s9 + $0x9c] sm:$0xff]
  %v6628 = vld [vmem:[%s9 + $0xa4] sm:$0xf]
  %v6629 = vld [vmem:[%s9 + $0xa8] sm:$0xff]
  %v6630 = vld [vmem:[%s9 + $0xb0] sm:$0xf]
  %v6631 = vld [vmem:[%s9 + $0xb4] sm:$0xff]
  %v6632 = vld [vmem:[%s9 + $0xbc] sm:$0xf]
  %v6634 = vshrl.u32 %v6568, 16
  %v6669 = vunpack.c.l.b16 %v6601
  %v6670 = vunpack.c.h.b16 %v6601
  %v6671 = vunpack.c.l.b16 %v6602
  %v6672 = vunpack.c.l.b16 %v6603
  %v6673 = vunpack.c.h.b16 %v6603
  %v6674 = vunpack.c.l.b16 %v6604
  %v6675 = vunpack.c.l.b16 %v6605
  %v6676 = vunpack.c.h.b16 %v6605
  %v6677 = vunpack.c.l.b16 %v6606
  %v6678 = vunpack.c.l.b16 %v6607
  %v6679 = vunpack.c.h.b16 %v6607
  %v6680 = vunpack.c.l.b16 %v6608
  %v6681 = vunpack.c.l.b16 %v6609
  %v6682 = vunpack.c.h.b16 %v6609
  %v6683 = vunpack.c.l.b16 %v6610
  %v6684 = vunpack.c.l.b16 %v6611
  %v6685 = vunpack.c.h.b16 %v6611
  %v6686 = vunpack.c.l.b16 %v6612
  %v6687 = vunpack.c.l.b16 %v6613
  %v6688 = vunpack.c.h.b16 %v6613
  %v6689 = vunpack.c.l.b16 %v6614
  %v6690 = vunpack.c.l.b16 %v6615
  %v6691 = vunpack.c.h.b16 %v6615
  %v6692 = vunpack.c.l.b16 %v6616
  %v6693 = vunpack.c.l.b16 %v6617
  %v6694 = vunpack.c.h.b16 %v6617
  %v6695 = vunpack.c.l.b16 %v6618
  %v6696 = vunpack.c.l.b16 %v6619
  %v6697 = vunpack.c.h.b16 %v6619
  %v6698 = vunpack.c.l.b16 %v6620
  %v6699 = vunpack.c.l.b16 %v6621
  %v6700 = vunpack.c.h.b16 %v6621
  %v6701 = vunpack.c.l.b16 %v6622
  %v6702 = vunpack.c.l.b16 %v6623
  %v6703 = vunpack.c.h.b16 %v6623
  %v6704 = vunpack.c.l.b16 %v6624
  %v6705 = vunpack.c.l.b16 %v6625
  %v6706 = vunpack.c.h.b16 %v6625
  %v6707 = vunpack.c.l.b16 %v6626
  %v6708 = vunpack.c.l.b16 %v6627
  %v6709 = vunpack.c.h.b16 %v6627
  %v6710 = vunpack.c.l.b16 %v6628
  %v6711 = vunpack.c.l.b16 %v6629
  %v6712 = vunpack.c.h.b16 %v6629
  %v6713 = vunpack.c.l.b16 %v6630
  %v6714 = vunpack.c.l.b16 %v6631
  %v6715 = vunpack.c.h.b16 %v6631
  %v6716 = vunpack.c.l.b16 %v6632
  %v6717 = vpack.c.b16 %v6672, %v6669
  %v6718 = vpack.c.b16 %v6673, %v6670
  %v6719 = vpack.c.b16 %v6674, %v6671
  %v6720 = vpack.c.b16 %v6678, %v6675
  %v6721 = vpack.c.b16 %v6679, %v6676
  %v6722 = vpack.c.b16 %v6680, %v6677
  %v6723 = vpack.c.b16 %v6684, %v6681
  %v6724 = vpack.c.b16 %v6685, %v6682
  %v6725 = vpack.c.b16 %v6686, %v6683
  %v6726 = vpack.c.b16 %v6690, %v6687
  %v6727 = vpack.c.b16 %v6691, %v6688
  %v6728 = vpack.c.b16 %v6692, %v6689
  %v6729 = vpack.c.b16 %v6696, %v6693
  %v6730 = vpack.c.b16 %v6697, %v6694
  %v6731 = vpack.c.b16 %v6698, %v6695
  %v6732 = vpack.c.b16 %v6702, %v6699
  %v6733 = vpack.c.b16 %v6703, %v6700
  %v6734 = vpack.c.b16 %v6704, %v6701
  %v6735 = vpack.c.b16 %v6708, %v6705
  %v6736 = vpack.c.b16 %v6709, %v6706
  %v6737 = vpack.c.b16 %v6710, %v6707
  %v6738 = vpack.c.b16 %v6714, %v6711
  %v6739 = vpack.c.b16 %v6715, %v6712
  %v6740 = vpack.c.b16 %v6716, %v6713
  %6765 = vmatprep.subr.bf16.mxu0 %v6718
  %6766 = vmatpush1.bf16.msra.mxu0 %v6717
  %6767 = vmatprep.subr.bf16.mxu0 %v6721
  %6768 = vmatpush1.bf16.msra.mxu0 %v6720
  %6769 = vmatprep.subr.bf16.mxu0 %v6724
  %6770 = vmatpush1.bf16.msra.mxu0 %v6723
  %6771 = vmatprep.subr.bf16.mxu0 %v6727
  %6772 = vmatpush1.bf16.msra.mxu0 %v6726
  %6773 = vmatprep.subr.bf16.mxu0 %v6730
  %6774 = vmatpush1.bf16.msra.mxu0 %v6729
  %6775 = vmatprep.subr.bf16.mxu0 %v6733
  %6776 = vmatpush1.bf16.msra.mxu0 %v6732
  %6777 = vmatprep.subr.bf16.mxu0 %v6736
  %6778 = vmatpush1.bf16.msra.mxu0 %v6735
  %6779 = vmatprep.subr.bf16.mxu0 %v6739
  %6780 = vmatpush1.bf16.msra.mxu0 %v6738
  %6781 = vmatprep.subr.bf16.mxu0 0
  %6782 = vmatpush1.bf16.msra.mxu0 0
  %6783 = vmatprep.subr.bf16.mxu0 0
  %6784 = vmatpush1.bf16.msra.mxu0 0
  %6785 = vmatprep.subr.bf16.mxu0 0
  %6786 = vmatpush1.bf16.msra.mxu0 0
  %6787 = vmatprep.subr.bf16.mxu0 0
  %6788 = vmatpush1.bf16.msra.mxu0 0
  %6789 = vmatprep.subr.bf16.mxu0 0
  %6790 = vmatpush1.bf16.msra.mxu0 0
  %6791 = vmatprep.subr.bf16.mxu0 0
  %6792 = vmatpush1.bf16.msra.mxu0 0
  %6793 = vmatprep.subr.bf16.mxu0 0
  %6794 = vmatpush1.bf16.msra.mxu0 0
  %6795 = vmatprep.subr.bf16.mxu0 0
  %6796 = vmatpush1.bf16.msra.mxu0 0
  %6797 = vmatprep.mubr.bf16.mxu0 0
  %6798 = vmatmul.mubr.bf16.gmra.mrb[0].mxu0 %v6634
  %v6799 = vpop.f32.mrb[0].mxu0
  %v6800 = vadd.f32 0.0, %v6799
  %v6801 = vpop.f32.mrb[0].mxu0
  %v6802 = vadd.f32 0.0, %v6801
  %v6803 = vpop.f32.mrb[0].mxu0
  %v6804 = vpop.f32.mrb[0].mxu0
  %6805 = vdwg.mxu0
  %6806 = vmatprep.subr.bf16.mxu0 0
  %6807 = vmatpush1.bf16.msra.mxu0 %v6719
  %6808 = vmatprep.subr.bf16.mxu0 0
  %6809 = vmatpush1.bf16.msra.mxu0 %v6722
  %6810 = vmatprep.subr.bf16.mxu0 0
  %6811 = vmatpush1.bf16.msra.mxu0 %v6725
  %6812 = vmatprep.subr.bf16.mxu0 0
  %6813 = vmatpush1.bf16.msra.mxu0 %v6728
  %6814 = vmatprep.subr.bf16.mxu0 0
  %6815 = vmatpush1.bf16.msra.mxu0 %v6731
  %6816 = vmatprep.subr.bf16.mxu0 0
  %6817 = vmatpush1.bf16.msra.mxu0 %v6734
  %6818 = vmatprep.subr.bf16.mxu0 0
  %6819 = vmatpush1.bf16.msra.mxu0 %v6737
  %6820 = vmatprep.subr.bf16.mxu0 0
  %6821 = vmatpush1.bf16.msra.mxu0 %v6740
  %6822 = vmatprep.subr.bf16.mxu0 0
  %6823 = vmatpush1.bf16.msra.mxu0 0
  %6824 = vmatprep.subr.bf16.mxu0 0
  %6825 = vmatpush1.bf16.msra.mxu0 0
  %6826 = vmatprep.subr.bf16.mxu0 0
  %6827 = vmatpush1.bf16.msra.mxu0 0
  %6828 = vmatprep.subr.bf16.mxu0 0
  %6829 = vmatpush1.bf16.msra.mxu0 0
  %6830 = vmatprep.subr.bf16.mxu0 0
  %6831 = vmatpush1.bf16.msra.mxu0 0
  %6832 = vmatprep.subr.bf16.mxu0 0
  %6833 = vmatpush1.bf16.msra.mxu0 0
  %6834 = vmatprep.subr.bf16.mxu0 0
  %6835 = vmatpush1.bf16.msra.mxu0 0
  %6836 = vmatprep.subr.bf16.mxu0 0
  %6837 = vmatpush1.bf16.msra.mxu0 0
  %6838 = vmatprep.mubr.bf16.mxu0 0
  %6839 = vmatmul.mubr.bf16.gmra.mrb[0].mxu0 %v6634
  %v6840 = vpop.f32.mrb[0].mxu0
  %v6841 = vadd.f32 0.0, %v6840
  %v6842 = vpop.f32.mrb[0].mxu0
  %v6843 = vpop.f32.mrb[0].mxu0
  %v6844 = vpop.f32.mrb[0].mxu0
  %6845 = vdwg.mxu0
  %v6878 = vunpack.c.l.b16 %v6569
  %v6879 = vunpack.c.h.b16 %v6569
  %v6880 = vunpack.c.l.b16 %v6570
  %v6881 = vunpack.c.l.b16 %v6571
  %v6882 = vunpack.c.h.b16 %v6571
  %v6883 = vunpack.c.l.b16 %v6572
  %v6884 = vunpack.c.l.b16 %v6573
  %v6885 = vunpack.c.h.b16 %v6573
  %v6886 = vunpack.c.l.b16 %v6574
  %v6887 = vunpack.c.l.b16 %v6575
  %v6888 = vunpack.c.h.b16 %v6575
  %v6889 = vunpack.c.l.b16 %v6576
  %v6890 = vunpack.c.l.b16 %v6577
  %v6891 = vunpack.c.h.b16 %v6577
  %v6892 = vunpack.c.l.b16 %v6578
  %v6893 = vunpack.c.l.b16 %v6579
  %v6894 = vunpack.c.h.b16 %v6579
  %v6895 = vunpack.c.l.b16 %v6580
  %v6896 = vunpack.c.l.b16 %v6581
  %v6897 = vunpack.c.h.b16 %v6581
  %v6898 = vunpack.c.l.b16 %v6582
  %v6899 = vunpack.c.l.b16 %v6583
  %v6900 = vunpack.c.h.b16 %v6583
  %v6901 = vunpack.c.l.b16 %v6584
  %v6902 = vunpack.c.l.b16 %v6585
  %v6903 = vunpack.c.h.b16 %v6585
  %v6904 = vunpack.c.l.b16 %v6586
  %v6905 = vunpack.c.l.b16 %v6587
  %v6906 = vunpack.c.h.b16 %v6587
  %v6907 = vunpack.c.l.b16 %v6588
  %v6908 = vunpack.c.l.b16 %v6589
  %v6909 = vunpack.c.h.b16 %v6589
  %v6910 = vunpack.c.l.b16 %v6590
  %v6911 = vunpack.c.l.b16 %v6591
  %v6912 = vunpack.c.h.b16 %v6591
  %v6913 = vunpack.c.l.b16 %v6592
  %v6914 = vunpack.c.l.b16 %v6593
  %v6915 = vunpack.c.h.b16 %v6593
  %v6916 = vunpack.c.l.b16 %v6594
  %v6917 = vunpack.c.l.b16 %v6595
  %v6918 = vunpack.c.h.b16 %v6595
  %v6919 = vunpack.c.l.b16 %v6596
  %v6920 = vunpack.c.l.b16 %v6597
  %v6921 = vunpack.c.h.b16 %v6597
  %v6922 = vunpack.c.l.b16 %v6598
  %v6923 = vunpack.c.l.b16 %v6599
  %v6924 = vunpack.c.h.b16 %v6599
  %v6925 = vunpack.c.l.b16 %v6600
  %v6926 = vpack.c.b16 %v6881, %v6878
  %v6927 = vpack.c.b16 %v6882, %v6879
  %v6928 = vpack.c.b16 %v6883, %v6880
  %v6929 = vpack.c.b16 %v6887, %v6884
  %v6930 = vpack.c.b16 %v6888, %v6885
  %v6931 = vpack.c.b16 %v6889, %v6886
  %v6932 = vpack.c.b16 %v6893, %v6890
  %v6933 = vpack.c.b16 %v6894, %v6891
  %v6934 = vpack.c.b16 %v6895, %v6892
  %v6935 = vpack.c.b16 %v6899, %v6896
  %v6936 = vpack.c.b16 %v6900, %v6897
  %v6937 = vpack.c.b16 %v6901, %v6898
  %v6938 = vpack.c.b16 %v6905, %v6902
  %v6939 = vpack.c.b16 %v6906, %v6903
  %v6940 = vpack.c.b16 %v6907, %v6904
  %v6941 = vpack.c.b16 %v6911, %v6908
  %v6942 = vpack.c.b16 %v6912, %v6909
  %v6943 = vpack.c.b16 %v6913, %v6910
  %v6944 = vpack.c.b16 %v6917, %v6914
  %v6945 = vpack.c.b16 %v6918, %v6915
  %v6946 = vpack.c.b16 %v6919, %v6916
  %v6947 = vpack.c.b16 %v6923, %v6920
  %v6948 = vpack.c.b16 %v6924, %v6921
  %v6949 = vpack.c.b16 %v6925, %v6922
  %6974 = vmatprep.subr.bf16.mxu0 %v6927
  %6975 = vmatpush1.bf16.msra.mxu0 %v6926
  %6976 = vmatprep.subr.bf16.mxu0 %v6930
  %6977 = vmatpush1.bf16.msra.mxu0 %v6929
  %6978 = vmatprep.subr.bf16.mxu0 %v6933
  %6979 = vmatpush1.bf16.msra.mxu0 %v6932
  %6980 = vmatprep.subr.bf16.mxu0 %v6936
  %6981 = vmatpush1.bf16.msra.mxu0 %v6935
  %6982 = vmatprep.subr.bf16.mxu0 %v6939
  %6983 = vmatpush1.bf16.msra.mxu0 %v6938
  %6984 = vmatprep.subr.bf16.mxu0 %v6942
  %6985 = vmatpush1.bf16.msra.mxu0 %v6941
  %6986 = vmatprep.subr.bf16.mxu0 %v6945
  %6987 = vmatpush1.bf16.msra.mxu0 %v6944
  %6988 = vmatprep.subr.bf16.mxu0 %v6948
  %6989 = vmatpush1.bf16.msra.mxu0 %v6947
  %6990 = vmatprep.subr.bf16.mxu0 0
  %6991 = vmatpush1.bf16.msra.mxu0 0
  %6992 = vmatprep.subr.bf16.mxu0 0
  %6993 = vmatpush1.bf16.msra.mxu0 0
  %6994 = vmatprep.subr.bf16.mxu0 0
  %6995 = vmatpush1.bf16.msra.mxu0 0
  %6996 = vmatprep.subr.bf16.mxu0 0
  %6997 = vmatpush1.bf16.msra.mxu0 0
  %6998 = vmatprep.subr.bf16.mxu0 0
  %6999 = vmatpush1.bf16.msra.mxu0 0
  %7000 = vmatprep.subr.bf16.mxu0 0
  %7001 = vmatpush1.bf16.msra.mxu0 0
  %7002 = vmatprep.subr.bf16.mxu0 0
  %7003 = vmatpush1.bf16.msra.mxu0 0
  %7004 = vmatprep.subr.bf16.mxu0 0
  %7005 = vmatpush1.bf16.msra.mxu0 0
  %7006 = vmatprep.mubr.bf16.mxu0 0
  %7007 = vmatmul.mubr.bf16.gmra.mrb[0].mxu0 %v6568
  %v7008 = vpop.f32.mrb[0].mxu0
  %v7009 = vadd.f32 %v6800, %v7008
  %v7010 = vpop.f32.mrb[0].mxu0
  %v7011 = vadd.f32 %v6802, %v7010
  %v7012 = vpop.f32.mrb[0].mxu0
  %v7013 = vpop.f32.mrb[0].mxu0
  %7014 = vdwg.mxu0
  %7015 = vmatprep.subr.bf16.mxu0 0
  %7016 = vmatpush1.bf16.msra.mxu0 %v6928
  %7017 = vmatprep.subr.bf16.mxu0 0
  %7018 = vmatpush1.bf16.msra.mxu0 %v6931
  %7019 = vmatprep.subr.bf16.mxu0 0
  %7020 = vmatpush1.bf16.msra.mxu0 %v6934
  %7021 = vmatprep.subr.bf16.mxu0 0
  %7022 = vmatpush1.bf16.msra.mxu0 %v6937
  %7023 = vmatprep.subr.bf16.mxu0 0
  %7024 = vmatpush1.bf16.msra.mxu0 %v6940
  %7025 = vmatprep.subr.bf16.mxu0 0
  %7026 = vmatpush1.bf16.msra.mxu0 %v6943
  %7027 = vmatprep.subr.bf16.mxu0 0
  %7028 = vmatpush1.bf16.msra.mxu0 %v6946
  %7029 = vmatprep.subr.bf16.mxu0 0
  %7030 = vmatpush1.bf16.msra.mxu0 %v6949
  %7031 = vmatprep.subr.bf16.mxu0 0
  %7032 = vmatpush1.bf16.msra.mxu0 0
  %7033 = vmatprep.subr.bf16.mxu0 0
  %7034 = vmatpush1.bf16.msra.mxu0 0
  %7035 = vmatprep.subr.bf16.mxu0 0
  %7036 = vmatpush1.bf16.msra.mxu0 0
  %7037 = vmatprep.subr.bf16.mxu0 0
  %7038 = vmatpush1.bf16.msra.mxu0 0
  %7039 = vmatprep.subr.bf16.mxu0 0
  %7040 = vmatpush1.bf16.msra.mxu0 0
  %7041 = vmatprep.subr.bf16.mxu0 0
  %7042 = vmatpush1.bf16.msra.mxu0 0
  %7043 = vmatprep.subr.bf16.mxu0 0
  %7044 = vmatpush1.bf16.msra.mxu0 0
  %7045 = vmatprep.subr.bf16.mxu0 0
  %7046 = vmatpush1.bf16.msra.mxu0 0
  %7047 = vmatprep.mubr.bf16.mxu0 0
  %7048 = vmatmul.mubr.bf16.gmra.mrb[0].mxu0 %v6568
  %v7049 = vpop.f32.mrb[0].mxu0
  %v7050 = vadd.f32 %v6841, %v7049
  %v7051 = vpop.f32.mrb[0].mxu0
  %v7052 = vpop.f32.mrb[0].mxu0
  %v7053 = vpop.f32.mrb[0].mxu0
  %7054 = vdwg.mxu0
  %v7055 = vld [vmem:[%s10] sm:$0x7]
  %v7057 = vlaneseq
  %v7058 = vshrl.u32 %v7057, 7
  %v7059 = vsub.s32 0, %v7058
  %v7060 = vrot.slane %v7055, %v7059
  %v7061 = vlaneseq
  %v7062 = vshrl.u32 %v7061, 7
  %v7063 = vsub.s32 1, %v7062
  %v7064 = vrot.slane %v7055, %v7063
  %v7065 = vlaneseq
  %v7066 = vshrl.u32 %v7065, 7
  %v7067 = vsub.s32 2, %v7066
  %v7068 = vrot.slane %v7055, %v7067
  %v7072 = vadd.f32 %v7009, %v7060
  %v7073 = vadd.f32 %v7011, %v7064
  %v7074 = vadd.f32 %v7050, %v7068
  %v7075 = vmax.f32 %v7072, 0.0
  %v7076 = vmax.f32 %v7073, 0.0
  %v7077 = vmax.f32 %v7074, 0.0
  %v7078 = vpack.c.bf16 %v7075, %v7075
  %v7079 = vpack.c.bf16 %v7076, %v7076
  %v7080 = vpack.c.bf16 %v7077, %v7077
  %v7081 = vld [vmem:[%s11] sm:$0xf]
  %v7082 = vld [vmem:[%s11 + $0x4] sm:$0xf]
  %v7083 = vld [vmem:[%s11 + $0x8] sm:$0xf]
  %v7084 = vld [vmem:[%s11 + $0xc] sm:$0xf]
  %v7085 = vld [vmem:[%s11 + $0x10] sm:$0xf]
  %v7086 = vld [vmem:[%s11 + $0x14] sm:$0xf]
  %v7087 = vld [vmem:[%s11 + $0x18] sm:$0xf]
  %v7088 = vld [vmem:[%s11 + $0x1c] sm:$0xf]
  %v7089 = vld [vmem:[%s11 + $0x20] sm:$0xf]
  %v7090 = vld [vmem:[%s11 + $0x24] sm:$0xf]
  %v7091 = vld [vmem:[%s11 + $0x28] sm:$0xf]
  %v7092 = vld [vmem:[%s11 + $0x2c] sm:$0xf]
  %v7093 = vld [vmem:[%s11 + $0x30] sm:$0xf]
  %v7094 = vld [vmem:[%s11 + $0x34] sm:$0xf]
  %v7095 = vld [vmem:[%s11 + $0x38] sm:$0xf]
  %v7096 = vld [vmem:[%s11 + $0x3c] sm:$0xf]
  %v7097 = vld [vmem:[%s11 + $0x40] sm:$0xf]
  %v7098 = vld [vmem:[%s11 + $0x44] sm:$0xf]
  %v7099 = vld [vmem:[%s11 + $0x48] sm:$0xf]
  %v7100 = vld [vmem:[%s11 + $0x4c] sm:$0xf]
  %v7101 = vld [vmem:[%s11 + $0x50] sm:$0xf]
  %v7102 = vld [vmem:[%s11 + $0x54] sm:$0xf]
  %v7103 = vld [vmem:[%s11 + $0x58] sm:$0xf]
  %v7104 = vld [vmem:[%s11 + $0x5c] sm:$0xf]
  %v7105 = vld [vmem:[%s11 + $0x60] sm:$0xf]
  %v7106 = vld [vmem:[%s11 + $0x64] sm:$0xf]
  %v7107 = vld [vmem:[%s11 + $0x68] sm:$0xf]
  %v7108 = vld [vmem:[%s11 + $0x6c] sm:$0xf]
  %v7109 = vld [vmem:[%s11 + $0x70] sm:$0xf]
  %v7110 = vld [vmem:[%s11 + $0x74] sm:$0xf]
  %v7111 = vld [vmem:[%s11 + $0x78] sm:$0xf]
  %v7112 = vld [vmem:[%s11 + $0x7c] sm:$0xf]
  %v7113 = vld [vmem:[%s11 + $0x80] sm:$0xf]
  %v7114 = vld [vmem:[%s11 + $0x84] sm:$0xf]
  %v7115 = vld [vmem:[%s11 + $0x88] sm:$0xf]
  %v7116 = vld [vmem:[%s11 + $0x8c] sm:$0xf]
  %v7117 = vld [vmem:[%s11 + $0x90] sm:$0xf]
  %v7118 = vld [vmem:[%s11 + $0x94] sm:$0xf]
  %v7119 = vld [vmem:[%s11 + $0x98] sm:$0xf]
  %v7120 = vld [vmem:[%s11 + $0x9c] sm:$0xf]
  %v7121 = vld [vmem:[%s11 + $0xa0] sm:$0xf]
  %v7122 = vld [vmem:[%s11 + $0xa4] sm:$0xf]
  %v7123 = vld [vmem:[%s11 + $0xa8] sm:$0xf]
  %v7124 = vld [vmem:[%s11 + $0xac] sm:$0xf]
  %v7125 = vld [vmem:[%s11 + $0xb0] sm:$0xf]
  %v7126 = vld [vmem:[%s11 + $0xb4] sm:$0xf]
  %v7127 = vld [vmem:[%s11 + $0xb8] sm:$0xf]
  %v7128 = vld [vmem:[%s11 + $0xbc] sm:$0xf]
  %v7129 = vld [vmem:[%s12] sm:$0x1]
  %v7178 = vunpack.c.l.b16 %v7081
  %v7179 = vunpack.c.l.b16 %v7082
  %v7180 = vunpack.c.l.b16 %v7083
  %v7181 = vunpack.c.l.b16 %v7084
  %v7182 = vunpack.c.l.b16 %v7085
  %v7183 = vunpack.c.l.b16 %v7086
  %v7184 = vunpack.c.l.b16 %v7087
  %v7185 = vunpack.c.l.b16 %v7088
  %v7186 = vunpack.c.l.b16 %v7089
  %v7187 = vunpack.c.l.b16 %v7090
  %v7188 = vunpack.c.l.b16 %v7091
  %v7189 = vunpack.c.l.b16 %v7092
  %v7190 = vunpack.c.l.b16 %v7093
  %v7191 = vunpack.c.l.b16 %v7094
  %v7192 = vunpack.c.l.b16 %v7095
  %v7193 = vunpack.c.l.b16 %v7096
  %v7194 = vunpack.c.l.b16 %v7097
  %v7195 = vunpack.c.l.b16 %v7098
  %v7196 = vunpack.c.l.b16 %v7099
  %v7197 = vunpack.c.l.b16 %v7100
  %v7198 = vunpack.c.l.b16 %v7101
  %v7199 = vunpack.c.l.b16 %v7102
  %v7200 = vunpack.c.l.b16 %v7103
  %v7201 = vunpack.c.l.b16 %v7104
  %v7202 = vunpack.c.l.b16 %v7105
  %v7203 = vunpack.c.l.b16 %v7106
  %v7204 = vunpack.c.l.b16 %v7107
  %v7205 = vunpack.c.l.b16 %v7108
  %v7206 = vunpack.c.l.b16 %v7109
  %v7207 = vunpack.c.l.b16 %v7110
  %v7208 = vunpack.c.l.b16 %v7111
  %v7209 = vunpack.c.l.b16 %v7112
  %v7210 = vunpack.c.l.b16 %v7113
  %v7211 = vunpack.c.l.b16 %v7114
  %v7212 = vunpack.c.l.b16 %v7115
  %v7213 = vunpack.c.l.b16 %v7116
  %v7214 = vunpack.c.l.b16 %v7117
  %v7215 = vunpack.c.l.b16 %v7118
  %v7216 = vunpack.c.l.b16 %v7119
  %v7217 = vunpack.c.l.b16 %v7120
  %v7218 = vunpack.c.l.b16 %v7121
  %v7219 = vunpack.c.l.b16 %v7122
  %v7220 = vunpack.c.l.b16 %v7123
  %v7221 = vunpack.c.l.b16 %v7124
  %v7222 = vunpack.c.l.b16 %v7125
  %v7223 = vunpack.c.l.b16 %v7126
  %v7224 = vunpack.c.l.b16 %v7127
  %v7225 = vunpack.c.l.b16 %v7128
  %v7226 = vpack.c.b16 %v7179, %v7178
  %v7227 = vpack.c.b16 %v7181, %v7180
  %v7228 = vpack.c.b16 %v7183, %v7182
  %v7229 = vpack.c.b16 %v7185, %v7184
  %v7230 = vpack.c.b16 %v7187, %v7186
  %v7231 = vpack.c.b16 %v7189, %v7188
  %v7232 = vpack.c.b16 %v7191, %v7190
  %v7233 = vpack.c.b16 %v7193, %v7192
  %v7234 = vpack.c.b16 %v7195, %v7194
  %v7235 = vpack.c.b16 %v7197, %v7196
  %v7236 = vpack.c.b16 %v7199, %v7198
  %v7237 = vpack.c.b16 %v7201, %v7200
  %v7238 = vpack.c.b16 %v7203, %v7202
  %v7239 = vpack.c.b16 %v7205, %v7204
  %v7240 = vpack.c.b16 %v7207, %v7206
  %v7241 = vpack.c.b16 %v7209, %v7208
  %v7242 = vpack.c.b16 %v7211, %v7210
  %v7243 = vpack.c.b16 %v7213, %v7212
  %v7244 = vpack.c.b16 %v7215, %v7214
  %v7245 = vpack.c.b16 %v7217, %v7216
  %v7246 = vpack.c.b16 %v7219, %v7218
  %v7247 = vpack.c.b16 %v7221, %v7220
  %v7248 = vpack.c.b16 %v7223, %v7222
  %v7249 = vpack.c.b16 %v7225, %v7224
  %7274 = vmatprep.subr.bf16.mxu0 0
  %7275 = vmatpush1.bf16.msra.mxu0 %v7226
  %7276 = vmatprep.subr.bf16.mxu0 0
  %7277 = vmatpush1.bf16.msra.mxu0 %v7227
  %7278 = vmatprep.subr.bf16.mxu0 0
  %7279 = vmatpush1.bf16.msra.mxu0 %v7228
  %7280 = vmatprep.subr.bf16.mxu0 0
  %7281 = vmatpush1.bf16.msra.mxu0 %v7229
  %7282 = vmatprep.subr.bf16.mxu0 0
  %7283 = vmatpush1.bf16.msra.mxu0 %v7230
  %7284 = vmatprep.subr.bf16.mxu0 0
  %7285 = vmatpush1.bf16.msra.mxu0 %v7231
  %7286 = vmatprep.subr.bf16.mxu0 0
  %7287 = vmatpush1.bf16.msra.mxu0 %v7232
  %7288 = vmatprep.subr.bf16.mxu0 0
  %7289 = vmatpush1.bf16.msra.mxu0 %v7233
  %7290 = vmatprep.subr.bf16.mxu0 0
  %7291 = vmatpush1.bf16.msra.mxu0 %v7234
  %7292 = vmatprep.subr.bf16.mxu0 0
  %7293 = vmatpush1.bf16.msra.mxu0 %v7235
  %7294 = vmatprep.subr.bf16.mxu0 0
  %7295 = vmatpush1.bf16.msra.mxu0 %v7236
  %7296 = vmatprep.subr.bf16.mxu0 0
  %7297 = vmatpush1.bf16.msra.mxu0 %v7237
  %7298 = vmatprep.subr.bf16.mxu0 0
  %7299 = vmatpush1.bf16.msra.mxu0 %v7238
  %7300 = vmatprep.subr.bf16.mxu0 0
  %7301 = vmatpush1.bf16.msra.mxu0 %v7239
  %7302 = vmatprep.subr.bf16.mxu0 0
  %7303 = vmatpush1.bf16.msra.mxu0 %v7240
  %7304 = vmatprep.subr.bf16.mxu0 0
  %7305 = vmatpush1.bf16.msra.mxu0 %v7241
  %7306 = vmatprep.mubr.bf16.mxu0 %v7079
  %7307 = vmatmul.mubr.bf16.gmra.mrb[0].mxu0 %v7078
  %v7308 = vpop.f32.mrb[0].mxu0
  %v7309 = vadd.f32 %v7129, %v7308
  %v7310 = vpop.f32.mrb[0].mxu0
  %v7311 = vpop.f32.mrb[0].mxu0
  %v7312 = vpop.f32.mrb[0].mxu0
  %7313 = vdwg.mxu0
  %7314 = vmatprep.subr.bf16.mxu0 0
  %7315 = vmatpush1.bf16.msra.mxu0 %v7242
  %7316 = vmatprep.subr.bf16.mxu0 0
  %7317 = vmatpush1.bf16.msra.mxu0 %v7243
  %7318 = vmatprep.subr.bf16.mxu0 0
  %7319 = vmatpush1.bf16.msra.mxu0 %v7244
  %7320 = vmatprep.subr.bf16.mxu0 0
  %7321 = vmatpush1.bf16.msra.mxu0 %v7245
  %7322 = vmatprep.subr.bf16.mxu0 0
  %7323 = vmatpush1.bf16.msra.mxu0 %v7246
  %7324 = vmatprep.subr.bf16.mxu0 0
  %7325 = vmatpush1.bf16.msra.mxu0 %v7247
  %7326 = vmatprep.subr.bf16.mxu0 0
  %7327 = vmatpush1.bf16.msra.mxu0 %v7248
  %7328 = vmatprep.subr.bf16.mxu0 0
  %7329 = vmatpush1.bf16.msra.mxu0 %v7249
  %7330 = vmatprep.subr.bf16.mxu0 0
  %7331 = vmatpush1.bf16.msra.mxu0 0
  %7332 = vmatprep.subr.bf16.mxu0 0
  %7333 = vmatpush1.bf16.msra.mxu0 0
  %7334 = vmatprep.subr.bf16.mxu0 0
  %7335 = vmatpush1.bf16.msra.mxu0 0
  %7336 = vmatprep.subr.bf16.mxu0 0
  %7337 = vmatpush1.bf16.msra.mxu0 0
  %7338 = vmatprep.subr.bf16.mxu0 0
  %7339 = vmatpush1.bf16.msra.mxu0 0
  %7340 = vmatprep.subr.bf16.mxu0 0
  %7341 = vmatpush1.bf16.msra.mxu0 0
  %7342 = vmatprep.subr.bf16.mxu0 0
  %7343 = vmatpush1.bf16.msra.mxu0 0
  %7344 = vmatprep.subr.bf16.mxu0 0
  %7345 = vmatpush1.bf16.msra.mxu0 0
  %7346 = vmatprep.mubr.bf16.mxu0 0
  %7347 = vmatmul.mubr.bf16.gmra.mrb[0].mxu0 %v7080
  %v7348 = vpop.f32.mrb[0].mxu0
  %v7349 = vadd.f32 %v7309, %v7348
  %v7350 = vpop.f32.mrb[0].mxu0
  %v7351 = vpop.f32.mrb[0].mxu0
  %v7352 = vpop.f32.mrb[0].mxu0
  %7353 = vdwg.mxu0
  %v7354 = vmax.f32 %v7349, 0.0
  %v7355 = vpack.c.bf16 %v7354, %v7354
  %v7356 = vld [vmem:[%s13] sm:$0xf]
  %v7357 = vld [vmem:[%s13 + $0x4] sm:$0xf]
  %v7358 = vld [vmem:[%s13 + $0x8] sm:$0xf]
  %v7359 = vld [vmem:[%s13 + $0xc] sm:$0xf]
  %v7360 = vld [vmem:[%s13 + $0x10] sm:$0xf]
  %v7361 = vld [vmem:[%s13 + $0x14] sm:$0xf]
  %v7362 = vld [vmem:[%s13 + $0x18] sm:$0xf]
  %v7363 = vld [vmem:[%s13 + $0x1c] sm:$0xf]
  %v7364 = vld [vmem:[%s13 + $0x20] sm:$0xf]
  %v7365 = vld [vmem:[%s13 + $0x24] sm:$0xf]
  %v7366 = vld [vmem:[%s13 + $0x28] sm:$0xf]
  %v7367 = vld [vmem:[%s13 + $0x2c] sm:$0xf]
  %v7368 = vld [vmem:[%s13 + $0x30] sm:$0xf]
  %v7369 = vld [vmem:[%s13 + $0x34] sm:$0xf]
  %v7370 = vld [vmem:[%s13 + $0x38] sm:$0xf]
  %v7371 = vld [vmem:[%s13 + $0x3c] sm:$0xf]
  %v7372 = vld [vmem:[%s14] sm:$0x1]
  %v7389 = vunpack.c.l.b16 %v7356
  %v7390 = vunpack.c.l.b16 %v7357
  %v7391 = vunpack.c.l.b16 %v7358
  %v7392 = vunpack.c.l.b16 %v7359
  %v7393 = vunpack.c.l.b16 %v7360
  %v7394 = vunpack.c.l.b16 %v7361
  %v7395 = vunpack.c.l.b16 %v7362
  %v7396 = vunpack.c.l.b16 %v7363
  %v7397 = vunpack.c.l.b16 %v7364
  %v7398 = vunpack.c.l.b16 %v7365
  %v7399 = vunpack.c.l.b16 %v7366
  %v7400 = vunpack.c.l.b16 %v7367
  %v7401 = vunpack.c.l.b16 %v7368
  %v7402 = vunpack.c.l.b16 %v7369
  %v7403 = vunpack.c.l.b16 %v7370
  %v7404 = vunpack.c.l.b16 %v7371
  %v7405 = vpack.c.b16 %v7390, %v7389
  %v7406 = vpack.c.b16 %v7392, %v7391
  %v7407 = vpack.c.b16 %v7394, %v7393
  %v7408 = vpack.c.b16 %v7396, %v7395
  %v7409 = vpack.c.b16 %v7398, %v7397
  %v7410 = vpack.c.b16 %v7400, %v7399
  %v7411 = vpack.c.b16 %v7402, %v7401
  %v7412 = vpack.c.b16 %v7404, %v7403
  %7421 = vmatprep.subr.bf16.mxu0 0
  %7422 = vmatpush1.bf16.msra.mxu0 %v7405
  %7423 = vmatprep.subr.bf16.mxu0 0
  %7424 = vmatpush1.bf16.msra.mxu0 %v7406
  %7425 = vmatprep.subr.bf16.mxu0 0
  %7426 = vmatpush1.bf16.msra.mxu0 %v7407
  %7427 = vmatprep.subr.bf16.mxu0 0
  %7428 = vmatpush1.bf16.msra.mxu0 %v7408
  %7429 = vmatprep.subr.bf16.mxu0 0
  %7430 = vmatpush1.bf16.msra.mxu0 %v7409
  %7431 = vmatprep.subr.bf16.mxu0 0
  %7432 = vmatpush1.bf16.msra.mxu0 %v7410
  %7433 = vmatprep.subr.bf16.mxu0 0
  %7434 = vmatpush1.bf16.msra.mxu0 %v7411
  %7435 = vmatprep.subr.bf16.mxu0 0
  %7436 = vmatpush1.bf16.msra.mxu0 %v7412
  %7437 = vmatprep.subr.bf16.mxu0 0
  %7438 = vmatpush1.bf16.msra.mxu0 0
  %7439 = vmatprep.subr.bf16.mxu0 0
  %7440 = vmatpush1.bf16.msra.mxu0 0
  %7441 = vmatprep.subr.bf16.mxu0 0
  %7442 = vmatpush1.bf16.msra.mxu0 0
  %7443 = vmatprep.subr.bf16.mxu0 0
  %7444 = vmatpush1.bf16.msra.mxu0 0
  %7445 = vmatprep.subr.bf16.mxu0 0
  %7446 = vmatpush1.bf16.msra.mxu0 0
  %7447 = vmatprep.subr.bf16.mxu0 0
  %7448 = vmatpush1.bf16.msra.mxu0 0
  %7449 = vmatprep.subr.bf16.mxu0 0
  %7450 = vmatpush1.bf16.msra.mxu0 0
  %7451 = vmatprep.subr.bf16.mxu0 0
  %7452 = vmatpush1.bf16.msra.mxu0 0
  %7453 = vmatprep.mubr.bf16.mxu0 0
  %7454 = vmatmul.mubr.bf16.gmra.mrb[0].mxu0 %v7355
  %v7455 = vpop.f32.mrb[0].mxu0
  %v7456 = vadd.f32 %v7372, %v7455
  %v7457 = vpop.f32.mrb[0].mxu0
  %v7458 = vpop.f32.mrb[0].mxu0
  %v7459 = vpop.f32.mrb[0].mxu0
  %7460 = vdwg.mxu0
  %v7461 = vlaneseq
  %v7462 = vshrl.u32 %v7461, 7
  %v7463 = vsub.s32 0, %v7462
  %v7464 = vrot.slane %v7456, %v7463
  %7465 = vst [vmem:[%s15] sm:$0xff] %v7464
  // Predicated region
  $region62: #{dqn_forward.1} parent=0 // pred_check
    _
  $region63: #{dqn_forward.1} parent=0 // pred_check_branch
    %7467 = sbr.rel (0) target = $region65
  $region64: #{dqn_forward.1} parent=0 // pred_region
    _
  $region65: #{dqn_forward.1} parent=0 // pred_fallthru
    _
  // Predicated region
  $region66: #{dqn_forward.1} parent=0 // pred_check
    _
  $region67: #{dqn_forward.1} parent=0 // pred_check_branch
    %7469 = sbr.rel (0) target = $region69
  $region68: #{dqn_forward.1} parent=0 // pred_region
    _
  $region69: #{dqn_forward.1} parent=0 // pred_fallthru
    _

</llo_original>
